<compile_context>
chip_gen: v5e
topology: v5e:2x2
jax: 0.10.0
libtpu: 0.0.40
codegen_flags: <defaults>
</compile_context>

<pallas_src>
import jax
import jax.numpy as jnp
from jax.experimental import pallas as pl
from jax.experimental.pallas import tpu as pltpu


def basic_block_kernel(x_ref, w1_ref, s1_ref, b1_ref, w2_ref, s2_ref, b2_ref,
                       o_ref, xcat, midcat):
    """One grid step = one batch element (fully resident in VMEM).

    x_ref  : (1, H, W, C) bf16  input (single HBM stream; also the identity)
    w1_ref : (3, 3C, P)  bf16   conv1 weights, dx-major, K index = dy*C + c
    s1_ref : (1, P)      f32    BN1 scale  (gamma * rsqrt(var + eps))
    b1_ref : (1, P)      f32    BN1 bias   (beta - mean * scale)
    w2_ref : (3, 3P, P)  bf16   conv2 weights (same packing)
    s2_ref : (1, P)      f32    BN2 scale
    b2_ref : (1, P)      f32    BN2 bias
    o_ref  : (1, H, W, P) f32   output
    xcat   : (H, W+2, 3C) bf16  conv1 input, dy bands pre-concatenated along K
    midcat : (H, W+2, 3P) bf16  conv2 input, same layout
    """
    _, H, W, C = x_ref.shape
    P = o_ref.shape[3]
    Wp = W + 2
    rows = H * Wp

    def stage_padded(dst, src, ch):
        """Write src (H, W, ch) into dst (H, Wp, 3*ch) so that
        dst[y, w, dy*ch + c] = zero-padded src[y + dy - 1, w - 1, c].

        The constant zero cells (image border for each dy band) are re-written
        every grid step, so megacore sharding of the batch axis stays correct.
        """
        zcol = jnp.zeros((H, 1, 3 * ch), dst.dtype)
        zrow = jnp.zeros((1, Wp, ch), dst.dtype)
        # width borders (all bands) and the missing top/bottom rows
        dst[:, 0:1, :] = zcol
        dst[:, W + 1:W + 2, :] = zcol
        dst[0:1, :, 0:ch] = zrow                    # dy=0: no row above image
        dst[H - 1:H, :, 2 * ch:3 * ch] = zrow       # dy=2: no row below image
        # dy-shifted copies of the interior: the K=3*ch concat, staged once
        dst[1:H, 1:W + 1, 0:ch] = src[0:H - 1]
        dst[0:H, 1:W + 1, ch:2 * ch] = src[0:H]
        dst[0:H - 1, 1:W + 1, 2 * ch:3 * ch] = src[1:H]

    def conv3x3(cat_ref, w_ref, ch):
        """3x3 conv, stride 1, pad 1 -> (H, W, P) f32.

        One deep (rows, 3*ch) x (3*ch, P) bf16 matmul per dx tap over the full
        padded width; the dx shift is realized on the f32 accumulator and each
        shifted accumulator is folded into the running result immediately.
        """
        lhs = cat_ref[...].reshape(rows, 3 * ch)          # (rows, 3*ch) bf16
        out = None
        for dx in range(3):
            acc = jnp.dot(lhs, w_ref[dx], preferred_element_type=jnp.float32)
            shifted = acc.reshape(H, Wp, P)[:, dx:dx + W, :]
            out = shifted if out is None else out + shifted
        return out

    # ---- stage conv1 input (single bf16 HBM stream) ----
    stage_padded(xcat, x_ref[0], C)

    # ---- conv1 -> bn1 (f32 scale + bias) -> relu ----
    h1 = jnp.maximum(conv3x3(xcat, w1_ref, C) * s1_ref[0] + b1_ref[0], 0.0)
    stage_padded(midcat, h1.astype(midcat.dtype), P)

    # ---- conv2 -> bn2 -> + identity -> relu ----
    out = (conv3x3(midcat, w2_ref, P) * s2_ref[0] + b2_ref[0]
           + x_ref[0].astype(jnp.float32))
    o_ref[0] = jnp.maximum(out, 0.0).astype(o_ref.dtype)


def _vmem_limit_bytes():
    """~3/4 of per-core VMEM (≈96 MiB on 128 MiB v5e/v6e, ≈48 MiB on 64 MiB
    v7x); conservative 32 MiB fallback if the query is unavailable."""
    try:
        cap = int(getattr(pltpu.get_tpu_info(), "vmem_capacity_bytes", 0))
    except Exception:
        cap = 0
    if cap <= 0:
        return 32 * 1024 * 1024
    return min((cap * 3) // 4, 96 * 1024 * 1024)


@jax.jit
def basic_block_forward(x_nchw, w1, gamma1, beta1, mean1, var1,
                        w2, gamma2, beta2, mean2, var2, eps=1e-5):
    """Fused BasicBlock forward. x_nchw: (N, C, H, W) f32 -> (N, C, H, W) f32."""
    # NCHW -> NHWC; ship the single input stream in bf16 (halves input DMA).
    x = jnp.transpose(x_nchw, (0, 2, 3, 1)).astype(jnp.bfloat16)
    N, H, W, Cin = x.shape
    P = w1.shape[0]
    # downsample=None path: shapes must match for the residual.
    assert Cin == P and w1.shape == (P, Cin, 3, 3) and w2.shape == (P, P, 3, 3)

    # Eval-mode BatchNorm as per-channel f32 scale + bias (applied in-kernel
    # after the matmul; weights stay unscaled bf16 to preserve mantissas).
    inv1 = gamma1 * jax.lax.rsqrt(var1 + eps)
    inv2 = gamma2 * jax.lax.rsqrt(var2 + eps)
    s1 = inv1.reshape(1, P).astype(jnp.float32)
    s2 = inv2.reshape(1, P).astype(jnp.float32)
    b1 = (beta1 - mean1 * inv1).reshape(1, P).astype(jnp.float32)
    b2 = (beta2 - mean2 * inv2).reshape(1, P).astype(jnp.float32)

    # torch (P, C, 3, 3)[p, c, dy, dx] -> (dx, dy*C + c, p): dx-major taps with
    # the dy bands stacked along K so each dx is one deep (3C) contraction.
    w1_k = jnp.transpose(w1, (3, 2, 1, 0)).reshape(3, 3 * Cin, P).astype(jnp.bfloat16)
    w2_k = jnp.transpose(w2, (3, 2, 1, 0)).reshape(3, 3 * P, P).astype(jnp.bfloat16)

    out_nhwc = pl.pallas_call(
        basic_block_kernel,
        out_shape=jax.ShapeDtypeStruct((N, H, W, P), jnp.float32),
        grid_spec=pltpu.PrefetchScalarGridSpec(
            num_scalar_prefetch=0,
            grid=(N,),
            in_specs=[
                pl.BlockSpec((1, H, W, Cin), lambda b: (b, 0, 0, 0)),
                pl.BlockSpec((3, 3 * Cin, P), lambda b: (0, 0, 0)),
                pl.BlockSpec((1, P), lambda b: (0, 0)),
                pl.BlockSpec((1, P), lambda b: (0, 0)),
                pl.BlockSpec((3, 3 * P, P), lambda b: (0, 0, 0)),
                pl.BlockSpec((1, P), lambda b: (0, 0)),
                pl.BlockSpec((1, P), lambda b: (0, 0)),
            ],
            out_specs=pl.BlockSpec((1, H, W, P), lambda b: (b, 0, 0, 0)),
            scratch_shapes=[
                pltpu.VMEM((H, W + 2, 3 * Cin), jnp.bfloat16),
                pltpu.VMEM((H, W + 2, 3 * P), jnp.bfloat16),
            ],
        ),
        # Batch elements are independent -> Mosaic may shard them across the
        # two TensorCores on v7x ("parallel" is a no-op on single-TC v5e/v6e).
        compiler_params=pltpu.CompilerParams(
            dimension_semantics=("parallel",),
            vmem_limit_bytes=_vmem_limit_bytes(),
        ),
    )(x, w1_k, s1, b1, w2_k, s2, b2)

    return jnp.transpose(out_nhwc, (0, 3, 1, 2))       # NHWC -> NCHW


def _reference_forward(x_nchw, w1, g1, be1, m1, v1, w2, g2, be2, m2, v2,
                       eps=1e-5):
    """Pure-JAX (XLA, f32) reference of the same forward, for verification."""
    def conv3x3(x, w):  # x NCHW, w (O, I, 3, 3)
        return jax.lax.conv_general_dilated(
            x, w, window_strides=(1, 1), padding=((1, 1), (1, 1)),
            dimension_numbers=("NCHW", "OIHW", "NCHW"))

    def bn(x, g, b, m, v):
        g = g.reshape(1, -1, 1, 1); b = b.reshape(1, -1, 1, 1)
        m = m.reshape(1, -1, 1, 1); v = v.reshape(1, -1, 1, 1)
        return (x - m) / jnp.sqrt(v + eps) * g + b

    out = jax.nn.relu(bn(conv3x3(x_nchw, w1), g1, be1, m1, v1))
    out = bn(conv3x3(out, w2), g2, be2, m2, v2)
    return jax.nn.relu(out + x_nchw)


if __name__ == "__main__":
    # Small deterministic problem: inplanes == planes (downsample=None), stride=1.
    N, C, H, W = 2, 8, 16, 16
    planes = C

    key = jax.random.PRNGKey(0)
    ks = jax.random.split(key, 9)
    x = jax.random.normal(ks[0], (N, C, H, W), jnp.float32)

    w1 = jax.random.normal(ks[1], (planes, C, 3, 3), jnp.float32) * 0.1
    w2 = jax.random.normal(ks[2], (planes, planes, 3, 3), jnp.float32) * 0.1
    gamma1 = 1.0 + 0.1 * jax.random.normal(ks[3], (planes,), jnp.float32)
    beta1 = 0.1 * jax.random.normal(ks[4], (planes,), jnp.float32)
    mean1 = 0.05 * jax.random.normal(ks[5], (planes,), jnp.float32)
    var1 = 1.0 + 0.1 * jax.random.uniform(ks[6], (planes,), jnp.float32)
    gamma2 = 1.0 + 0.1 * jax.random.normal(ks[7], (planes,), jnp.float32)
    beta2 = 0.1 * jax.random.normal(ks[8], (planes,), jnp.float32)
    mean2 = jnp.zeros((planes,), jnp.float32)
    var2 = jnp.ones((planes,), jnp.float32)

    out = basic_block_forward(x, w1, gamma1, beta1, mean1, var1,
                              w2, gamma2, beta2, mean2, var2)
    out = jax.block_until_ready(out)

    ref = _reference_forward(x, w1, gamma1, beta1, mean1, var1,
                             w2, gamma2, beta2, mean2, var2)
    assert out.shape == (N, C, H, W)
    # Tolerance loosened vs. the f32 reference because the kernel ships x and
    # the intermediate activation in bf16 and runs bf16 matmuls (f32 accum).
    err = float(jnp.max(jnp.abs(out - ref)))
    assert jnp.allclose(out, ref, atol=5e-2, rtol=5e-2), err

    print("KERNEL_OK")
</pallas_src>

<mosaic_0001>
module attributes {stable_mosaic.version = 11 : i64} {
  func.func @basic_block_kernel(%arg0: i32, %arg1: memref<1x16x16x8xbf16, #tpu.memory_space<vmem>>, %arg2: memref<3x24x8xbf16, #tpu.memory_space<vmem>>, %arg3: memref<1x8xf32, #tpu.memory_space<vmem>>, %arg4: memref<1x8xf32, #tpu.memory_space<vmem>>, %arg5: memref<3x24x8xbf16, #tpu.memory_space<vmem>>, %arg6: memref<1x8xf32, #tpu.memory_space<vmem>>, %arg7: memref<1x8xf32, #tpu.memory_space<vmem>>, %arg8: memref<1x16x16x8xf32, #tpu.memory_space<vmem>>, %arg9: memref<16x18x24xbf16, #tpu.memory_space<vmem>>, %arg10: memref<16x18x24xbf16, #tpu.memory_space<vmem>>) attributes {dimension_semantics = [#tpu.dimension_semantics<parallel>], iteration_bounds = array<i64: 2>, scalar_prefetch = 0 : i64, scratch_operands = 2 : i64, tpu.core_type = #tpu.core_type<tc>, window_params = [{transform_indices = @transform_0, window_bounds = array<i64: 1, 16, 16, 8>}, {pipeline_mode = #tpu.pipeline_mode<synchronous>, transform_indices = @transform_1, window_bounds = array<i64: 3, 24, 8>}, {pipeline_mode = #tpu.pipeline_mode<synchronous>, transform_indices = @transform_2, window_bounds = array<i64: 1, 8>}, {pipeline_mode = #tpu.pipeline_mode<synchronous>, transform_indices = @transform_3, window_bounds = array<i64: 1, 8>}, {pipeline_mode = #tpu.pipeline_mode<synchronous>, transform_indices = @transform_4, window_bounds = array<i64: 3, 24, 8>}, {pipeline_mode = #tpu.pipeline_mode<synchronous>, transform_indices = @transform_5, window_bounds = array<i64: 1, 8>}, {pipeline_mode = #tpu.pipeline_mode<synchronous>, transform_indices = @transform_6, window_bounds = array<i64: 1, 8>}, {transform_indices = @transform_7, window_bounds = array<i64: 1, 16, 16, 8>}]} {
    %c0 = arith.constant 0 : index
    %c0_0 = arith.constant 0 : index
    %c0_1 = arith.constant 0 : index
    %c0_2 = arith.constant 0 : index
    %0 = vector.load %arg1[%c0, %c0_0, %c0_1, %c0_2] : memref<1x16x16x8xbf16, #tpu.memory_space<vmem>>, vector<1x16x16x8xbf16>
    %1 = vector.shape_cast %0 : vector<1x16x16x8xbf16> to vector<16x16x8xbf16>
    %cst = arith.constant 0.000000e+00 : bf16
    %2 = vector.broadcast %cst : bf16 to vector<16x1x24xbf16>
    %cst_3 = arith.constant 0.000000e+00 : bf16
    %3 = vector.broadcast %cst_3 : bf16 to vector<1x18x8xbf16>
    %c0_4 = arith.constant 0 : index
    %c0_5 = arith.constant 0 : index
    %c0_6 = arith.constant 0 : index
    %4 = vector.load %arg9[%c0_4, %c0_5, %c0_6] : memref<16x18x24xbf16, #tpu.memory_space<vmem>>, vector<16x1x24xbf16>
    tpu.vector_store %arg9[%c0_4, %c0_5, %c0_6], %2 {strides = array<i32>} : memref<16x18x24xbf16, #tpu.memory_space<vmem>>, vector<16x1x24xbf16>,
    %c0_7 = arith.constant 0 : index
    %c17 = arith.constant 17 : index
    %c0_8 = arith.constant 0 : index
    %5 = vector.load %arg9[%c0_7, %c17, %c0_8] : memref<16x18x24xbf16, #tpu.memory_space<vmem>>, vector<16x1x24xbf16>
    tpu.vector_store %arg9[%c0_7, %c17, %c0_8], %2 {strides = array<i32>} : memref<16x18x24xbf16, #tpu.memory_space<vmem>>, vector<16x1x24xbf16>,
    %c0_9 = arith.constant 0 : index
    %c0_10 = arith.constant 0 : index
    %c0_11 = arith.constant 0 : index
    %6 = vector.load %arg9[%c0_9, %c0_10, %c0_11] : memref<16x18x24xbf16, #tpu.memory_space<vmem>>, vector<1x18x8xbf16>
    tpu.vector_store %arg9[%c0_9, %c0_10, %c0_11], %3 {strides = array<i32>} : memref<16x18x24xbf16, #tpu.memory_space<vmem>>, vector<1x18x8xbf16>,
    %c15 = arith.constant 15 : index
    %c0_12 = arith.constant 0 : index
    %c16 = arith.constant 16 : index
    %7 = vector.load %arg9[%c15, %c0_12, %c16] : memref<16x18x24xbf16, #tpu.memory_space<vmem>>, vector<1x18x8xbf16>
    tpu.vector_store %arg9[%c15, %c0_12, %c16], %3 {strides = array<i32>} : memref<16x18x24xbf16, #tpu.memory_space<vmem>>, vector<1x18x8xbf16>,
    %8 = vector.extract_strided_slice %1 {offsets = [0, 0, 0], sizes = [15, 16, 8], strides = [1, 1, 1]} : vector<16x16x8xbf16> to vector<15x16x8xbf16>
    %c1 = arith.constant 1 : index
    %c1_13 = arith.constant 1 : index
    %c0_14 = arith.constant 0 : index
    %9 = vector.load %arg9[%c1, %c1_13, %c0_14] : memref<16x18x24xbf16, #tpu.memory_space<vmem>>, vector<15x16x8xbf16>
    tpu.vector_store %arg9[%c1, %c1_13, %c0_14], %8 {strides = array<i32>} : memref<16x18x24xbf16, #tpu.memory_space<vmem>>, vector<15x16x8xbf16>,
    %c0_15 = arith.constant 0 : index
    %c1_16 = arith.constant 1 : index
    %c8 = arith.constant 8 : index
    %10 = vector.load %arg9[%c0_15, %c1_16, %c8] : memref<16x18x24xbf16, #tpu.memory_space<vmem>>, vector<16x16x8xbf16>
    tpu.vector_store %arg9[%c0_15, %c1_16, %c8], %1 {strides = array<i32>} : memref<16x18x24xbf16, #tpu.memory_space<vmem>>, vector<16x16x8xbf16>,
    %11 = vector.extract_strided_slice %1 {offsets = [1, 0, 0], sizes = [15, 16, 8], strides = [1, 1, 1]} : vector<16x16x8xbf16> to vector<15x16x8xbf16>
    %c0_17 = arith.constant 0 : index
    %c1_18 = arith.constant 1 : index
    %c16_19 = arith.constant 16 : index
    %12 = vector.load %arg9[%c0_17, %c1_18, %c16_19] : memref<16x18x24xbf16, #tpu.memory_space<vmem>>, vector<15x16x8xbf16>
    tpu.vector_store %arg9[%c0_17, %c1_18, %c16_19], %11 {strides = array<i32>} : memref<16x18x24xbf16, #tpu.memory_space<vmem>>, vector<15x16x8xbf16>,
    %c0_20 = arith.constant 0 : index
    %c0_21 = arith.constant 0 : index
    %c0_22 = arith.constant 0 : index
    %13 = vector.load %arg9[%c0_20, %c0_21, %c0_22] : memref<16x18x24xbf16, #tpu.memory_space<vmem>>, vector<16x18x24xbf16>
    %14 = vector.shape_cast %13 : vector<16x18x24xbf16> to vector<288x24xbf16>
    %c0_23 = arith.constant 0 : index
    %c0_24 = arith.constant 0 : index
    %c0_25 = arith.constant 0 : index
    %15 = vector.load %arg2[%c0_23, %c0_24, %c0_25] : memref<3x24x8xbf16, #tpu.memory_space<vmem>>, vector<1x24x8xbf16>
    %16 = vector.shape_cast %15 : vector<1x24x8xbf16> to vector<24x8xbf16>
    %cst_26 = arith.constant dense<0.000000e+00> : vector<288x8xf32>
    %17 = tpu.matmul %14, %16, %cst_26 {dimension_numbers = #tpu.dot_dimension_numbers<[1], [0], [0], [1], [0, 0, 1, 1], [], []>} : vector<288x24xbf16>, vector<24x8xbf16>, vector<288x8xf32> -> vector<288x8xf32>
    %18 = vector.shape_cast %17 : vector<288x8xf32> to vector<16x18x8xf32>
    %19 = vector.extract_strided_slice %18 {offsets = [0, 0, 0], sizes = [16, 16, 8], strides = [1, 1, 1]} : vector<16x18x8xf32> to vector<16x16x8xf32>
    %c1_27 = arith.constant 1 : index
    %c0_28 = arith.constant 0 : index
    %c0_29 = arith.constant 0 : index
    %20 = vector.load %arg2[%c1_27, %c0_28, %c0_29] : memref<3x24x8xbf16, #tpu.memory_space<vmem>>, vector<1x24x8xbf16>
    %21 = vector.shape_cast %20 : vector<1x24x8xbf16> to vector<24x8xbf16>
    %cst_30 = arith.constant dense<0.000000e+00> : vector<288x8xf32>
    %22 = tpu.matmul %14, %21, %cst_30 {dimension_numbers = #tpu.dot_dimension_numbers<[1], [0], [0], [1], [0, 0, 1, 1], [], []>} : vector<288x24xbf16>, vector<24x8xbf16>, vector<288x8xf32> -> vector<288x8xf32>
    %23 = vector.shape_cast %22 : vector<288x8xf32> to vector<16x18x8xf32>
    %24 = vector.extract_strided_slice %23 {offsets = [0, 1, 0], sizes = [16, 16, 8], strides = [1, 1, 1]} : vector<16x18x8xf32> to vector<16x16x8xf32>
    %25 = arith.addf %19, %24 : vector<16x16x8xf32>
    %c2 = arith.constant 2 : index
    %c0_31 = arith.constant 0 : index
    %c0_32 = arith.constant 0 : index
    %26 = vector.load %arg2[%c2, %c0_31, %c0_32] : memref<3x24x8xbf16, #tpu.memory_space<vmem>>, vector<1x24x8xbf16>
    %27 = vector.shape_cast %26 : vector<1x24x8xbf16> to vector<24x8xbf16>
    %cst_33 = arith.constant dense<0.000000e+00> : vector<288x8xf32>
    %28 = tpu.matmul %14, %27, %cst_33 {dimension_numbers = #tpu.dot_dimension_numbers<[1], [0], [0], [1], [0, 0, 1, 1], [], []>} : vector<288x24xbf16>, vector<24x8xbf16>, vector<288x8xf32> -> vector<288x8xf32>
    %29 = vector.shape_cast %28 : vector<288x8xf32> to vector<16x18x8xf32>
    %30 = vector.extract_strided_slice %29 {offsets = [0, 2, 0], sizes = [16, 16, 8], strides = [1, 1, 1]} : vector<16x18x8xf32> to vector<16x16x8xf32>
    %31 = arith.addf %25, %30 : vector<16x16x8xf32>
    %c0_34 = arith.constant 0 : index
    %c0_35 = arith.constant 0 : index
    %32 = vector.load %arg3[%c0_34, %c0_35] : memref<1x8xf32, #tpu.memory_space<vmem>>, vector<1x8xf32>
    %33 = vector.shape_cast %32 : vector<1x8xf32> to vector<8xf32>
    %34 = vector.shape_cast %33 : vector<8xf32> to vector<1x1x8xf32>
    %35 = vector.broadcast %34 : vector<1x1x8xf32> to vector<16x16x8xf32>
    %36 = arith.mulf %31, %35 : vector<16x16x8xf32>
    %c0_36 = arith.constant 0 : index
    %c0_37 = arith.constant 0 : index
    %37 = vector.load %arg4[%c0_36, %c0_37] : memref<1x8xf32, #tpu.memory_space<vmem>>, vector<1x8xf32>
    %38 = vector.shape_cast %37 : vector<1x8xf32> to vector<8xf32>
    %39 = vector.shape_cast %38 : vector<8xf32> to vector<1x1x8xf32>
    %40 = vector.broadcast %39 : vector<1x1x8xf32> to vector<16x16x8xf32>
    %41 = arith.addf %36, %40 : vector<16x16x8xf32>
    %cst_38 = arith.constant 0.000000e+00 : f32
    %42 = vector.broadcast %cst_38 : f32 to vector<16x16x8xf32>
    %43 = arith.maximumf %41, %42 : vector<16x16x8xf32>
    %44 = arith.truncf %43 : vector<16x16x8xf32> to vector<16x16x8xbf16>
    %cst_39 = arith.constant 0.000000e+00 : bf16
    %45 = vector.broadcast %cst_39 : bf16 to vector<16x1x24xbf16>
    %cst_40 = arith.constant 0.000000e+00 : bf16
    %46 = vector.broadcast %cst_40 : bf16 to vector<1x18x8xbf16>
    %c0_41 = arith.constant 0 : index
    %c0_42 = arith.constant 0 : index
    %c0_43 = arith.constant 0 : index
    %47 = vector.load %arg10[%c0_41, %c0_42, %c0_43] : memref<16x18x24xbf16, #tpu.memory_space<vmem>>, vector<16x1x24xbf16>
    tpu.vector_store %arg10[%c0_41, %c0_42, %c0_43], %45 {strides = array<i32>} : memref<16x18x24xbf16, #tpu.memory_space<vmem>>, vector<16x1x24xbf16>,
    %c0_44 = arith.constant 0 : index
    %c17_45 = arith.constant 17 : index
    %c0_46 = arith.constant 0 : index
    %48 = vector.load %arg10[%c0_44, %c17_45, %c0_46] : memref<16x18x24xbf16, #tpu.memory_space<vmem>>, vector<16x1x24xbf16>
    tpu.vector_store %arg10[%c0_44, %c17_45, %c0_46], %45 {strides = array<i32>} : memref<16x18x24xbf16, #tpu.memory_space<vmem>>, vector<16x1x24xbf16>,
    %c0_47 = arith.constant 0 : index
    %c0_48 = arith.constant 0 : index
    %c0_49 = arith.constant 0 : index
    %49 = vector.load %arg10[%c0_47, %c0_48, %c0_49] : memref<16x18x24xbf16, #tpu.memory_space<vmem>>, vector<1x18x8xbf16>
    tpu.vector_store %arg10[%c0_47, %c0_48, %c0_49], %46 {strides = array<i32>} : memref<16x18x24xbf16, #tpu.memory_space<vmem>>, vector<1x18x8xbf16>,
    %c15_50 = arith.constant 15 : index
    %c0_51 = arith.constant 0 : index
    %c16_52 = arith.constant 16 : index
    %50 = vector.load %arg10[%c15_50, %c0_51, %c16_52] : memref<16x18x24xbf16, #tpu.memory_space<vmem>>, vector<1x18x8xbf16>
    tpu.vector_store %arg10[%c15_50, %c0_51, %c16_52], %46 {strides = array<i32>} : memref<16x18x24xbf16, #tpu.memory_space<vmem>>, vector<1x18x8xbf16>,
    %51 = vector.extract_strided_slice %44 {offsets = [0, 0, 0], sizes = [15, 16, 8], strides = [1, 1, 1]} : vector<16x16x8xbf16> to vector<15x16x8xbf16>
    %c1_53 = arith.constant 1 : index
    %c1_54 = arith.constant 1 : index
    %c0_55 = arith.constant 0 : index
    %52 = vector.load %arg10[%c1_53, %c1_54, %c0_55] : memref<16x18x24xbf16, #tpu.memory_space<vmem>>, vector<15x16x8xbf16>
    tpu.vector_store %arg10[%c1_53, %c1_54, %c0_55], %51 {strides = array<i32>} : memref<16x18x24xbf16, #tpu.memory_space<vmem>>, vector<15x16x8xbf16>,
    %c0_56 = arith.constant 0 : index
    %c1_57 = arith.constant 1 : index
    %c8_58 = arith.constant 8 : index
    %53 = vector.load %arg10[%c0_56, %c1_57, %c8_58] : memref<16x18x24xbf16, #tpu.memory_space<vmem>>, vector<16x16x8xbf16>
    tpu.vector_store %arg10[%c0_56, %c1_57, %c8_58], %44 {strides = array<i32>} : memref<16x18x24xbf16, #tpu.memory_space<vmem>>, vector<16x16x8xbf16>,
    %54 = vector.extract_strided_slice %44 {offsets = [1, 0, 0], sizes = [15, 16, 8], strides = [1, 1, 1]} : vector<16x16x8xbf16> to vector<15x16x8xbf16>
    %c0_59 = arith.constant 0 : index
    %c1_60 = arith.constant 1 : index
    %c16_61 = arith.constant 16 : index
    %55 = vector.load %arg10[%c0_59, %c1_60, %c16_61] : memref<16x18x24xbf16, #tpu.memory_space<vmem>>, vector<15x16x8xbf16>
    tpu.vector_store %arg10[%c0_59, %c1_60, %c16_61], %54 {strides = array<i32>} : memref<16x18x24xbf16, #tpu.memory_space<vmem>>, vector<15x16x8xbf16>,
    %c0_62 = arith.constant 0 : index
    %c0_63 = arith.constant 0 : index
    %c0_64 = arith.constant 0 : index
    %56 = vector.load %arg10[%c0_62, %c0_63, %c0_64] : memref<16x18x24xbf16, #tpu.memory_space<vmem>>, vector<16x18x24xbf16>
    %57 = vector.shape_cast %56 : vector<16x18x24xbf16> to vector<288x24xbf16>
    %c0_65 = arith.constant 0 : index
    %c0_66 = arith.constant 0 : index
    %c0_67 = arith.constant 0 : index
    %58 = vector.load %arg5[%c0_65, %c0_66, %c0_67] : memref<3x24x8xbf16, #tpu.memory_space<vmem>>, vector<1x24x8xbf16>
    %59 = vector.shape_cast %58 : vector<1x24x8xbf16> to vector<24x8xbf16>
    %cst_68 = arith.constant dense<0.000000e+00> : vector<288x8xf32>
    %60 = tpu.matmul %57, %59, %cst_68 {dimension_numbers = #tpu.dot_dimension_numbers<[1], [0], [0], [1], [0, 0, 1, 1], [], []>} : vector<288x24xbf16>, vector<24x8xbf16>, vector<288x8xf32> -> vector<288x8xf32>
    %61 = vector.shape_cast %60 : vector<288x8xf32> to vector<16x18x8xf32>
    %62 = vector.extract_strided_slice %61 {offsets = [0, 0, 0], sizes = [16, 16, 8], strides = [1, 1, 1]} : vector<16x18x8xf32> to vector<16x16x8xf32>
    %c1_69 = arith.constant 1 : index
    %c0_70 = arith.constant 0 : index
    %c0_71 = arith.constant 0 : index
    %63 = vector.load %arg5[%c1_69, %c0_70, %c0_71] : memref<3x24x8xbf16, #tpu.memory_space<vmem>>, vector<1x24x8xbf16>
    %64 = vector.shape_cast %63 : vector<1x24x8xbf16> to vector<24x8xbf16>
    %cst_72 = arith.constant dense<0.000000e+00> : vector<288x8xf32>
    %65 = tpu.matmul %57, %64, %cst_72 {dimension_numbers = #tpu.dot_dimension_numbers<[1], [0], [0], [1], [0, 0, 1, 1], [], []>} : vector<288x24xbf16>, vector<24x8xbf16>, vector<288x8xf32> -> vector<288x8xf32>
    %66 = vector.shape_cast %65 : vector<288x8xf32> to vector<16x18x8xf32>
    %67 = vector.extract_strided_slice %66 {offsets = [0, 1, 0], sizes = [16, 16, 8], strides = [1, 1, 1]} : vector<16x18x8xf32> to vector<16x16x8xf32>
    %68 = arith.addf %62, %67 : vector<16x16x8xf32>
    %c2_73 = arith.constant 2 : index
    %c0_74 = arith.constant 0 : index
    %c0_75 = arith.constant 0 : index
    %69 = vector.load %arg5[%c2_73, %c0_74, %c0_75] : memref<3x24x8xbf16, #tpu.memory_space<vmem>>, vector<1x24x8xbf16>
    %70 = vector.shape_cast %69 : vector<1x24x8xbf16> to vector<24x8xbf16>
    %cst_76 = arith.constant dense<0.000000e+00> : vector<288x8xf32>
    %71 = tpu.matmul %57, %70, %cst_76 {dimension_numbers = #tpu.dot_dimension_numbers<[1], [0], [0], [1], [0, 0, 1, 1], [], []>} : vector<288x24xbf16>, vector<24x8xbf16>, vector<288x8xf32> -> vector<288x8xf32>
    %72 = vector.shape_cast %71 : vector<288x8xf32> to vector<16x18x8xf32>
    %73 = vector.extract_strided_slice %72 {offsets = [0, 2, 0], sizes = [16, 16, 8], strides = [1, 1, 1]} : vector<16x18x8xf32> to vector<16x16x8xf32>
    %74 = arith.addf %68, %73 : vector<16x16x8xf32>
    %c0_77 = arith.constant 0 : index
    %c0_78 = arith.constant 0 : index
    %75 = vector.load %arg6[%c0_77, %c0_78] : memref<1x8xf32, #tpu.memory_space<vmem>>, vector<1x8xf32>
    %76 = vector.shape_cast %75 : vector<1x8xf32> to vector<8xf32>
    %77 = vector.shape_cast %76 : vector<8xf32> to vector<1x1x8xf32>
    %78 = vector.broadcast %77 : vector<1x1x8xf32> to vector<16x16x8xf32>
    %79 = arith.mulf %74, %78 : vector<16x16x8xf32>
    %c0_79 = arith.constant 0 : index
    %c0_80 = arith.constant 0 : index
    %80 = vector.load %arg7[%c0_79, %c0_80] : memref<1x8xf32, #tpu.memory_space<vmem>>, vector<1x8xf32>
    %81 = vector.shape_cast %80 : vector<1x8xf32> to vector<8xf32>
    %82 = vector.shape_cast %81 : vector<8xf32> to vector<1x1x8xf32>
    %83 = vector.broadcast %82 : vector<1x1x8xf32> to vector<16x16x8xf32>
    %84 = arith.addf %79, %83 : vector<16x16x8xf32>
    %c0_81 = arith.constant 0 : index
    %c0_82 = arith.constant 0 : index
    %c0_83 = arith.constant 0 : index
    %c0_84 = arith.constant 0 : index
    %85 = vector.load %arg1[%c0_81, %c0_82, %c0_83, %c0_84] : memref<1x16x16x8xbf16, #tpu.memory_space<vmem>>, vector<1x16x16x8xbf16>
    %86 = vector.shape_cast %85 : vector<1x16x16x8xbf16> to vector<16x16x8xbf16>
    %87 = arith.extf %86 : vector<16x16x8xbf16> to vector<16x16x8xf32>
    %88 = arith.addf %84, %87 : vector<16x16x8xf32>
    %cst_85 = arith.constant 0.000000e+00 : f32
    %89 = vector.broadcast %cst_85 : f32 to vector<16x16x8xf32>
    %90 = arith.maximumf %88, %89 : vector<16x16x8xf32>
    %c0_86 = arith.constant 0 : index
    %c0_87 = arith.constant 0 : index
    %c0_88 = arith.constant 0 : index
    %c0_89 = arith.constant 0 : index
    %91 = vector.load %arg8[%c0_86, %c0_87, %c0_88, %c0_89] : memref<1x16x16x8xf32, #tpu.memory_space<vmem>>, vector<1x16x16x8xf32>
    %92 = vector.shape_cast %91 : vector<1x16x16x8xf32> to vector<16x16x8xf32>
    %93 = vector.shape_cast %90 : vector<16x16x8xf32> to vector<1x16x16x8xf32>
    tpu.vector_store %arg8[%c0_86, %c0_87, %c0_88, %c0_89], %93 {strides = array<i32>} : memref<1x16x16x8xf32, #tpu.memory_space<vmem>>, vector<1x16x16x8xf32>,
    return
  }
  func.func @transform_0(%arg0: i32) -> (i32, i32, i32, i32) {
    %c0_i32 = arith.constant 0 : i32
    %c0_i32_0 = arith.constant 0 : i32
    %c0_i32_1 = arith.constant 0 : i32
    %c0_i32_2 = arith.constant 0 : i32
    return %arg0, %c0_i32, %c0_i32_0, %c0_i32_1 : i32, i32, i32, i32
  }
  func.func @transform_1(%arg0: i32) -> (i32, i32, i32) {
    %c0_i32 = arith.constant 0 : i32
    %c0_i32_0 = arith.constant 0 : i32
    %c0_i32_1 = arith.constant 0 : i32
    %c0_i32_2 = arith.constant 0 : i32
    return %c0_i32, %c0_i32_0, %c0_i32_1 : i32, i32, i32
  }
  func.func @transform_2(%arg0: i32) -> (i32, i32) {
    %c0_i32 = arith.constant 0 : i32
    %c0_i32_0 = arith.constant 0 : i32
    %c0_i32_1 = arith.constant 0 : i32
    return %c0_i32, %c0_i32_0 : i32, i32
  }
  func.func @transform_3(%arg0: i32) -> (i32, i32) {
    %c0_i32 = arith.constant 0 : i32
    %c0_i32_0 = arith.constant 0 : i32
    %c0_i32_1 = arith.constant 0 : i32
    return %c0_i32, %c0_i32_0 : i32, i32
  }
  func.func @transform_4(%arg0: i32) -> (i32, i32, i32) {
    %c0_i32 = arith.constant 0 : i32
    %c0_i32_0 = arith.constant 0 : i32
    %c0_i32_1 = arith.constant 0 : i32
    %c0_i32_2 = arith.constant 0 : i32
    return %c0_i32, %c0_i32_0, %c0_i32_1 : i32, i32, i32
  }
  func.func @transform_5(%arg0: i32) -> (i32, i32) {
    %c0_i32 = arith.constant 0 : i32
    %c0_i32_0 = arith.constant 0 : i32
    %c0_i32_1 = arith.constant 0 : i32
    return %c0_i32, %c0_i32_0 : i32, i32
  }
  func.func @transform_6(%arg0: i32) -> (i32, i32) {
    %c0_i32 = arith.constant 0 : i32
    %c0_i32_0 = arith.constant 0 : i32
    %c0_i32_1 = arith.constant 0 : i32
    return %c0_i32, %c0_i32_0 : i32, i32
  }
  func.func @transform_7(%arg0: i32) -> (i32, i32, i32, i32) {
    %c0_i32 = arith.constant 0 : i32
    %c0_i32_0 = arith.constant 0 : i32
    %c0_i32_1 = arith.constant 0 : i32
    %c0_i32_2 = arith.constant 0 : i32
    return %arg0, %c0_i32, %c0_i32_0, %c0_i32_1 : i32, i32, i32, i32
  }
}

</mosaic_0001>

<llo_original>
// kernel: basic_block_forward.1
$region0: #{basic_block_forward.1}
  #allocation0 [shape = 'u32[]', space=smem, size = 0x4, offset = 0x4, fixed_abs, tag = 'smem constant byte address 0x4 - core index']
  #allocation1 [shape = 'u32[72,128]{1,0:T(1,128)}', space=vmem, size = 0x9000, scoped, tag = 'internal scratch']
  #allocation2 [shape = 'bf16[16,18,24]{2,1,0:T(8,128)(2,1)}', space=vmem, size = 0x18000, scoped, tag = 'scratch operand']
  #allocation3 [shape = 'bf16[16,18,24]{2,1,0:T(8,128)(2,1)}', space=vmem, size = 0x18000, scoped, tag = 'scratch operand']
  %s0 = inlined_call_operand.vmem [shape: bf16[2,16,16,8], index: 0, kind: input, shape index: {}]
  %s1 = inlined_call_operand.vmem [shape: bf16[3,24,8], index: 1, kind: input, shape index: {}]
  %s2 = inlined_call_operand.vmem [shape: f32[1,8], index: 2, kind: input, shape index: {}]
  %s3 = inlined_call_operand.vmem [shape: f32[1,8], index: 3, kind: input, shape index: {}]
  %s4 = inlined_call_operand.vmem [shape: bf16[3,24,8], index: 4, kind: input, shape index: {}]
  %s5 = inlined_call_operand.vmem [shape: f32[1,8], index: 5, kind: input, shape index: {}]
  %s6 = inlined_call_operand.vmem [shape: f32[1,8], index: 6, kind: input, shape index: {}]
  %s7 = inlined_call_operand.vmem [shape: f32[2,16,16,8], index: 7, kind: output, shape index: {}]
  %s8 = sld [smem:[#allocation0]]
  $region61: #{basic_block_forward.1} parent=0
    _
  %s10 = ssub.s32 1, %s8
  %s11 = scalar_select 0, %s10, %s8
  loop: start=0, step=1, limit=4
  $region2: #{basic_block_forward.1} parent=0 // loop_pre_header
    _
  $region3: #{basic_block_forward.1} parent=0 // loop_header
    %s13 = sphi 0, %s17
    %p14 = scmp.ge.s32.totalorder %s13, 4
    %s23 = sphi 0, %s25
    %s26 = sphi 0, %s23
    %s27 = sphi 0, %s26
    %s43 = sphi 0, %s27
    %s47 = sphi 0, %s47
    %s49 = sphi 0, %s47
    %s50 = sphi 0, %s49
    %s64 = sphi 0, %s50
    %s68 = sphi 0, %s68
    %s70 = sphi 0, %s68
    %s71 = sphi 0, %s70
    %s85 = sphi 0, %s71
    %s89 = sphi 0, %s89
    %s91 = sphi 0, %s89
    %s92 = sphi 0, %s91
    %s106 = sphi 0, %s92
    %s110 = sphi 0, %s110
    %s112 = sphi 0, %s110
    %s113 = sphi 0, %s112
    %s127 = sphi 0, %s113
    %s131 = sphi 0, %s131
    %s133 = sphi 0, %s131
    %s134 = sphi 0, %s133
    %s148 = sphi 0, %s134
    %s152 = sphi 0, %s152
    %s154 = sphi 0, %s152
    %s155 = sphi 0, %s154
    %s169 = sphi 0, %s155
    %s175 = sphi 0, %s177
    %s178 = sphi 0, %s175
    %s179 = sphi 0, %s178
    %s195 = sphi 0, %s179
  $region4: #{basic_block_forward.1} parent=0 // loop_header_branch
    %16 = sbr.rel (%p14) target = $region8
  $region5: #{basic_block_forward.1} parent=0 // loop_body
    %s18 = ssub.s32 %s13, 1
    %s19 = ssub.s32 %s13, 2
    %s20 = sadd.s32 %s13, 1
    %s21 = ssub.s32 %s13, %s20
    %p22 = scmp.eq.s32.totalorder %s21, 0
    %s24 = sadd.s32 %s23, 1
    %s25 = scalar_select %p22, %s23, %s24
    %p28 = pneg %p22
    %p29 = scmp.eq.s32.totalorder %s13, 1
    %p30 = por %p28, %p29
    %p31 = scmp.ne.s32.totalorder %s23, %s26
    %p32 = scmp.eq.s32.totalorder %s13, 0
    %p33 = por %p31, %p32
    %p34 = scmp.ne.s32.totalorder %s23, %s26
    %p35 = scmp.eq.s32.totalorder %s18, 1
    %p36 = por %p34, %p35
    %p37 = scmp.ne.s32.totalorder %s26, %s27
    %p38 = scmp.eq.s32.totalorder %s18, 0
    %p39 = por %p37, %p38
    %p40 = scmp.ne.s32.totalorder %s26, %s27
    %p41 = scmp.eq.s32.totalorder %s19, 1
    %p42 = por %p40, %p41
    %p44 = scmp.ne.s32.totalorder %s27, %s43
    %p45 = scmp.eq.s32.totalorder %s19, 0
    %p46 = por %p44, %p45
    %s48 = sadd.s32 %s47, 1
    %p51 = scmp.eq.s32.totalorder %s13, 1
    %p52 = scmp.ne.s32.totalorder %s47, %s49
    %p53 = scmp.eq.s32.totalorder %s13, 0
    %p54 = por %p52, %p53
    %p55 = scmp.ne.s32.totalorder %s47, %s49
    %p56 = scmp.eq.s32.totalorder %s18, 1
    %p57 = por %p55, %p56
    %p58 = scmp.ne.s32.totalorder %s49, %s50
    %p59 = scmp.eq.s32.totalorder %s18, 0
    %p60 = por %p58, %p59
    %p61 = scmp.ne.s32.totalorder %s49, %s50
    %p62 = scmp.eq.s32.totalorder %s19, 1
    %p63 = por %p61, %p62
    %p65 = scmp.ne.s32.totalorder %s50, %s64
    %p66 = scmp.eq.s32.totalorder %s19, 0
    %p67 = por %p65, %p66
    %s69 = sadd.s32 %s68, 1
    %p72 = scmp.eq.s32.totalorder %s13, 1
    %p73 = scmp.ne.s32.totalorder %s68, %s70
    %p74 = scmp.eq.s32.totalorder %s13, 0
    %p75 = por %p73, %p74
    %p76 = scmp.ne.s32.totalorder %s68, %s70
    %p77 = scmp.eq.s32.totalorder %s18, 1
    %p78 = por %p76, %p77
    %p79 = scmp.ne.s32.totalorder %s70, %s71
    %p80 = scmp.eq.s32.totalorder %s18, 0
    %p81 = por %p79, %p80
    %p82 = scmp.ne.s32.totalorder %s70, %s71
    %p83 = scmp.eq.s32.totalorder %s19, 1
    %p84 = por %p82, %p83
    %p86 = scmp.ne.s32.totalorder %s71, %s85
    %p87 = scmp.eq.s32.totalorder %s19, 0
    %p88 = por %p86, %p87
    %s90 = sadd.s32 %s89, 1
    %p93 = scmp.eq.s32.totalorder %s13, 1
    %p94 = scmp.ne.s32.totalorder %s89, %s91
    %p95 = scmp.eq.s32.totalorder %s13, 0
    %p96 = por %p94, %p95
    %p97 = scmp.ne.s32.totalorder %s89, %s91
    %p98 = scmp.eq.s32.totalorder %s18, 1
    %p99 = por %p97, %p98
    %p100 = scmp.ne.s32.totalorder %s91, %s92
    %p101 = scmp.eq.s32.totalorder %s18, 0
    %p102 = por %p100, %p101
    %p103 = scmp.ne.s32.totalorder %s91, %s92
    %p104 = scmp.eq.s32.totalorder %s19, 1
    %p105 = por %p103, %p104
    %p107 = scmp.ne.s32.totalorder %s92, %s106
    %p108 = scmp.eq.s32.totalorder %s19, 0
    %p109 = por %p107, %p108
    %s111 = sadd.s32 %s110, 1
    %p114 = scmp.eq.s32.totalorder %s13, 1
    %p115 = scmp.ne.s32.totalorder %s110, %s112
    %p116 = scmp.eq.s32.totalorder %s13, 0
    %p117 = por %p115, %p116
    %p118 = scmp.ne.s32.totalorder %s110, %s112
    %p119 = scmp.eq.s32.totalorder %s18, 1
    %p120 = por %p118, %p119
    %p121 = scmp.ne.s32.totalorder %s112, %s113
    %p122 = scmp.eq.s32.totalorder %s18, 0
    %p123 = por %p121, %p122
    %p124 = scmp.ne.s32.totalorder %s112, %s113
    %p125 = scmp.eq.s32.totalorder %s19, 1
    %p126 = por %p124, %p125
    %p128 = scmp.ne.s32.totalorder %s113, %s127
    %p129 = scmp.eq.s32.totalorder %s19, 0
    %p130 = por %p128, %p129
    %s132 = sadd.s32 %s131, 1
    %p135 = scmp.eq.s32.totalorder %s13, 1
    %p136 = scmp.ne.s32.totalorder %s131, %s133
    %p137 = scmp.eq.s32.totalorder %s13, 0
    %p138 = por %p136, %p137
    %p139 = scmp.ne.s32.totalorder %s131, %s133
    %p140 = scmp.eq.s32.totalorder %s18, 1
    %p141 = por %p139, %p140
    %p142 = scmp.ne.s32.totalorder %s133, %s134
    %p143 = scmp.eq.s32.totalorder %s18, 0
    %p144 = por %p142, %p143
    %p145 = scmp.ne.s32.totalorder %s133, %s134
    %p146 = scmp.eq.s32.totalorder %s19, 1
    %p147 = por %p145, %p146
    %p149 = scmp.ne.s32.totalorder %s134, %s148
    %p150 = scmp.eq.s32.totalorder %s19, 0
    %p151 = por %p149, %p150
    %s153 = sadd.s32 %s152, 1
    %p156 = scmp.eq.s32.totalorder %s13, 1
    %p157 = scmp.ne.s32.totalorder %s152, %s154
    %p158 = scmp.eq.s32.totalorder %s13, 0
    %p159 = por %p157, %p158
    %p160 = scmp.ne.s32.totalorder %s152, %s154
    %p161 = scmp.eq.s32.totalorder %s18, 1
    %p162 = por %p160, %p161
    %p163 = scmp.ne.s32.totalorder %s154, %s155
    %p164 = scmp.eq.s32.totalorder %s18, 0
    %p165 = por %p163, %p164
    %p166 = scmp.ne.s32.totalorder %s154, %s155
    %p167 = scmp.eq.s32.totalorder %s19, 1
    %p168 = por %p166, %p167
    %p170 = scmp.ne.s32.totalorder %s155, %s169
    %p171 = scmp.eq.s32.totalorder %s19, 0
    %p172 = por %p170, %p171
    %s173 = ssub.s32 %s13, %s20
    %p174 = scmp.eq.s32.totalorder %s173, 0
    %s176 = sadd.s32 %s175, 1
    %s177 = scalar_select %p174, %s175, %s176
    %p180 = pneg %p174
    %p181 = scmp.eq.s32.totalorder %s13, 1
    %p182 = por %p180, %p181
    %p183 = scmp.ne.s32.totalorder %s175, %s178
    %p184 = scmp.eq.s32.totalorder %s13, 0
    %p185 = por %p183, %p184
    %p186 = scmp.ne.s32.totalorder %s175, %s178
    %p187 = scmp.eq.s32.totalorder %s18, 1
    %p188 = por %p186, %p187
    %p189 = scmp.ne.s32.totalorder %s178, %s179
    %p190 = scmp.eq.s32.totalorder %s18, 0
    %p191 = por %p189, %p190
    %p192 = scmp.ne.s32.totalorder %s178, %s179
    %p193 = scmp.eq.s32.totalorder %s19, 1
    %p194 = por %p192, %p193
    %p196 = scmp.ne.s32.totalorder %s179, %s195
    %p197 = scmp.eq.s32.totalorder %s19, 0
    %p198 = por %p196, %p197
    %p199 = scmp.le.s32.totalorder 1, %s13
    %p200 = scmp.lt.s32.totalorder %s13, 3
    %p201 = pnand %p199, %p200
    %p202 = pneg %p201
    // Predicated region
    $region9: #{basic_block_forward.1} parent=5 // pred_check
      _
    $region10: #{basic_block_forward.1} parent=5 // pred_check_branch
      %204 = sbr.rel (%p201) target = $region12
    $region11: #{basic_block_forward.1} parent=5 // pred_region
      %s205 = ssub.s32 %s13, 1
      // Predicated region
      $region13: #{basic_block_forward.1} parent=11 // pred_check
        %p206 = pneg %p60
      $region14: #{basic_block_forward.1} parent=11 // pred_check_branch
        %208 = sbr.rel (%p206) target = $region16
      $region15: #{basic_block_forward.1} parent=11 // pred_region
        _
      $region16: #{basic_block_forward.1} parent=11 // pred_fallthru
        _
      // Predicated region
      $region17: #{basic_block_forward.1} parent=11 // pred_check
        %p209 = pneg %p81
      $region18: #{basic_block_forward.1} parent=11 // pred_check_branch
        %211 = sbr.rel (%p209) target = $region20
      $region19: #{basic_block_forward.1} parent=11 // pred_region
        _
      $region20: #{basic_block_forward.1} parent=11 // pred_fallthru
        _
      // Predicated region
      $region21: #{basic_block_forward.1} parent=11 // pred_check
        %p212 = pneg %p102
      $region22: #{basic_block_forward.1} parent=11 // pred_check_branch
        %214 = sbr.rel (%p212) target = $region24
      $region23: #{basic_block_forward.1} parent=11 // pred_region
        _
      $region24: #{basic_block_forward.1} parent=11 // pred_fallthru
        _
      // Predicated region
      $region25: #{basic_block_forward.1} parent=11 // pred_check
        %p215 = pneg %p123
      $region26: #{basic_block_forward.1} parent=11 // pred_check_branch
        %217 = sbr.rel (%p215) target = $region28
      $region27: #{basic_block_forward.1} parent=11 // pred_region
        _
      $region28: #{basic_block_forward.1} parent=11 // pred_fallthru
        _
      // Predicated region
      $region29: #{basic_block_forward.1} parent=11 // pred_check
        %p218 = pneg %p144
      $region30: #{basic_block_forward.1} parent=11 // pred_check_branch
        %220 = sbr.rel (%p218) target = $region32
      $region31: #{basic_block_forward.1} parent=11 // pred_region
        _
      $region32: #{basic_block_forward.1} parent=11 // pred_fallthru
        _
      // Predicated region
      $region33: #{basic_block_forward.1} parent=11 // pred_check
        %p221 = pneg %p165
      $region34: #{basic_block_forward.1} parent=11 // pred_check_branch
        %223 = sbr.rel (%p221) target = $region36
      $region35: #{basic_block_forward.1} parent=11 // pred_region
        _
      $region36: #{basic_block_forward.1} parent=11 // pred_fallthru
        _
    $region12: #{basic_block_forward.1} parent=5 // pred_fallthru
      _
    %p224 = scmp.lt.s32.totalorder %s13, 2
    // Predicated region
    $region37: #{basic_block_forward.1} parent=5 // pred_check
      %p225 = pneg %p224
    $region38: #{basic_block_forward.1} parent=5 // pred_check_branch
      %227 = sbr.rel (%p225) target = $region40
    $region39: #{basic_block_forward.1} parent=5 // pred_region
      // Predicated region
      $region41: #{basic_block_forward.1} parent=39 // pred_check
        %p228 = pneg %p33
      $region42: #{basic_block_forward.1} parent=39 // pred_check_branch
        %230 = sbr.rel (%p228) target = $region44
      $region43: #{basic_block_forward.1} parent=39 // pred_region
        %p231 = scmp.lt.s32.totalorder %s13, 1
        %s232 = scalar_select %p231, %s13, 1
        %s233 = smul.addr %s232, 32
        %s234 = smul.addr %s233, 4
        %s235 = scalar_lea.vmem %s0, %s234
      $region44: #{basic_block_forward.1} parent=39 // pred_fallthru
        _
    $region40: #{basic_block_forward.1} parent=5 // pred_fallthru
      _
    %p236 = scmp.le.s32.totalorder 1, %s13
    %p237 = scmp.lt.s32.totalorder %s13, 3
    %p238 = pnand %p236, %p237
    %p239 = pneg %p238
    // Predicated region
    $region45: #{basic_block_forward.1} parent=5 // pred_check
      _
    $region46: #{basic_block_forward.1} parent=5 // pred_check_branch
      %241 = sbr.rel (%p238) target = $region48
    $region47: #{basic_block_forward.1} parent=5 // pred_region
      %s242 = ssub.s32 %s13, 1
      %p243 = scmp.lt.s32.totalorder %s18, 1
      %s244 = scalar_select %p243, %s18, 1
      %s245 = smul.addr %s244, 32
      %s246 = smul.addr %s245, 4
      %s247 = scalar_lea.vmem %s0, %s246
      %p248 = pneg %p39
      %p249 = pneg %p36
      %p250 = pneg %p60
      %p251 = pneg %p57
      %p252 = pneg %p81
      %p253 = pneg %p78
      %p254 = pneg %p102
      %p255 = pneg %p99
      %p256 = pneg %p123
      %p257 = pneg %p120
      %p258 = pneg %p144
      %p259 = pneg %p141
      %p260 = pneg %p165
      %p261 = pneg %p162
      %p262 = pneg %p191
      %p263 = pneg %p188
      %p264 = scmp.lt.s32.totalorder %s18, 1
      %s265 = scalar_select %p264, %s18, 1
      %s266 = smul.addr %s265, 32
      %s267 = smul.addr %s266, 8
      %s268 = scalar_lea.vmem %s7, %s267
      %p269 = scmp.lt.s32.totalorder %s18, 1
      %s270 = scalar_select %p269, %s18, 1
      %s271 = smul.addr %s270, 32
      %s272 = smul.addr %s271, 4
      %s273 = scalar_lea.vmem %s0, %s272
      %p274 = scmp.lt.s32.totalorder %s18, 1
      %s275 = scalar_select %p274, %s18, 1
      %s276 = smul.addr %s275, 32
      %s277 = smul.addr %s276, 8
      %s278 = scalar_lea.vmem %s7, %s277
      %v280 = vld [vmem:[%s273] sm:$0xf]
      %v281 = vld [vmem:[%s273 + $0x4] sm:$0xf]
      %v282 = vld [vmem:[%s273 + $0x8] sm:$0xf]
      %v283 = vld [vmem:[%s273 + $0xc] sm:$0xf]
      %v284 = vld [vmem:[%s273 + $0x10] sm:$0xf]
      %v285 = vld [vmem:[%s273 + $0x14] sm:$0xf]
      %v286 = vld [vmem:[%s273 + $0x18] sm:$0xf]
      %v287 = vld [vmem:[%s273 + $0x1c] sm:$0xf]
      %v288 = vld [vmem:[%s273 + $0x20] sm:$0xf]
      %v289 = vld [vmem:[%s273 + $0x24] sm:$0xf]
      %v290 = vld [vmem:[%s273 + $0x28] sm:$0xf]
      %v291 = vld [vmem:[%s273 + $0x2c] sm:$0xf]
      %v292 = vld [vmem:[%s273 + $0x30] sm:$0xf]
      %v293 = vld [vmem:[%s273 + $0x34] sm:$0xf]
      %v294 = vld [vmem:[%s273 + $0x38] sm:$0xf]
      %v295 = vld [vmem:[%s273 + $0x3c] sm:$0xf]
      %v296 = vld [vmem:[%s273 + $0x40] sm:$0xf]
      %v297 = vld [vmem:[%s273 + $0x44] sm:$0xf]
      %v298 = vld [vmem:[%s273 + $0x48] sm:$0xf]
      %v299 = vld [vmem:[%s273 + $0x4c] sm:$0xf]
      %v300 = vld [vmem:[%s273 + $0x50] sm:$0xf]
      %v301 = vld [vmem:[%s273 + $0x54] sm:$0xf]
      %v302 = vld [vmem:[%s273 + $0x58] sm:$0xf]
      %v303 = vld [vmem:[%s273 + $0x5c] sm:$0xf]
      %v304 = vld [vmem:[%s273 + $0x60] sm:$0xf]
      %v305 = vld [vmem:[%s273 + $0x64] sm:$0xf]
      %v306 = vld [vmem:[%s273 + $0x68] sm:$0xf]
      %v307 = vld [vmem:[%s273 + $0x6c] sm:$0xf]
      %v308 = vld [vmem:[%s273 + $0x70] sm:$0xf]
      %v309 = vld [vmem:[%s273 + $0x74] sm:$0xf]
      %v310 = vld [vmem:[%s273 + $0x78] sm:$0xf]
      %v311 = vld [vmem:[%s273 + $0x7c] sm:$0xf]
      %vm312 = vcmask 188416
      %vm313 = vsmask.f32 256
      %vm314 = vmand %vm312, %vm313
      %v315 = vld [vmem:[#allocation2] sm:$0x1]
      %v316 = vsel %vm314, 0, %v315
      %317 = vst [vmem:[#allocation2] sm:$0x1] %v316
      %v318 = vld [vmem:[#allocation2 + $0xc] sm:$0x1]
      %v319 = vsel %vm314, 0, %v318
      %320 = vst [vmem:[#allocation2 + $0xc] sm:$0x1] %v319
      %v321 = vld [vmem:[#allocation2 + $0x18] sm:$0x1]
      %v322 = vsel %vm314, 0, %v321
      %323 = vst [vmem:[#allocation2 + $0x18] sm:$0x1] %v322
      %v324 = vld [vmem:[#allocation2 + $0x24] sm:$0x1]
      %v325 = vsel %vm314, 0, %v324
      %326 = vst [vmem:[#allocation2 + $0x24] sm:$0x1] %v325
      %v327 = vld [vmem:[#allocation2 + $0x30] sm:$0x1]
      %v328 = vsel %vm314, 0, %v327
      %329 = vst [vmem:[#allocation2 + $0x30] sm:$0x1] %v328
      %v330 = vld [vmem:[#allocation2 + $0x3c] sm:$0x1]
      %v331 = vsel %vm314, 0, %v330
      %332 = vst [vmem:[#allocation2 + $0x3c] sm:$0x1] %v331
      %v333 = vld [vmem:[#allocation2 + $0x48] sm:$0x1]
      %v334 = vsel %vm314, 0, %v333
      %335 = vst [vmem:[#allocation2 + $0x48] sm:$0x1] %v334
      %v336 = vld [vmem:[#allocation2 + $0x54] sm:$0x1]
      %v337 = vsel %vm314, 0, %v336
      %338 = vst [vmem:[#allocation2 + $0x54] sm:$0x1] %v337
      %v339 = vld [vmem:[#allocation2 + $0x60] sm:$0x1]
      %v340 = vsel %vm314, 0, %v339
      %341 = vst [vmem:[#allocation2 + $0x60] sm:$0x1] %v340
      %v342 = vld [vmem:[#allocation2 + $0x6c] sm:$0x1]
      %v343 = vsel %vm314, 0, %v342
      %344 = vst [vmem:[#allocation2 + $0x6c] sm:$0x1] %v343
      %v345 = vld [vmem:[#allocation2 + $0x78] sm:$0x1]
      %v346 = vsel %vm314, 0, %v345
      %347 = vst [vmem:[#allocation2 + $0x78] sm:$0x1] %v346
      %v348 = vld [vmem:[#allocation2 + $0x84] sm:$0x1]
      %v349 = vsel %vm314, 0, %v348
      %350 = vst [vmem:[#allocation2 + $0x84] sm:$0x1] %v349
      %v351 = vld [vmem:[#allocation2 + $0x90] sm:$0x1]
      %v352 = vsel %vm314, 0, %v351
      %353 = vst [vmem:[#allocation2 + $0x90] sm:$0x1] %v352
      %v354 = vld [vmem:[#allocation2 + $0x9c] sm:$0x1]
      %v355 = vsel %vm314, 0, %v354
      %356 = vst [vmem:[#allocation2 + $0x9c] sm:$0x1] %v355
      %v357 = vld [vmem:[#allocation2 + $0xa8] sm:$0x1]
      %v358 = vsel %vm314, 0, %v357
      %359 = vst [vmem:[#allocation2 + $0xa8] sm:$0x1] %v358
      %v360 = vld [vmem:[#allocation2 + $0xb4] sm:$0x1]
      %v361 = vsel %vm314, 0, %v360
      %362 = vst [vmem:[#allocation2 + $0xb4] sm:$0x1] %v361
      %vm363 = vsmask.f32 7938
      %vm364 = vmand %vm312, %vm363
      %v365 = vld [vmem:[#allocation2 + $0x8] sm:$0x1]
      %v366 = vsel %vm364, 0, %v365
      %367 = vst [vmem:[#allocation2 + $0x8] sm:$0x1] %v366
      %v368 = vld [vmem:[#allocation2 + $0x14] sm:$0x1]
      %v369 = vsel %vm364, 0, %v368
      %370 = vst [vmem:[#allocation2 + $0x14] sm:$0x1] %v369
      %v371 = vld [vmem:[#allocation2 + $0x20] sm:$0x1]
      %v372 = vsel %vm364, 0, %v371
      %373 = vst [vmem:[#allocation2 + $0x20] sm:$0x1] %v372
      %v374 = vld [vmem:[#allocation2 + $0x2c] sm:$0x1]
      %v375 = vsel %vm364, 0, %v374
      %376 = vst [vmem:[#allocation2 + $0x2c] sm:$0x1] %v375
      %v377 = vld [vmem:[#allocation2 + $0x38] sm:$0x1]
      %v378 = vsel %vm364, 0, %v377
      %379 = vst [vmem:[#allocation2 + $0x38] sm:$0x1] %v378
      %v380 = vld [vmem:[#allocation2 + $0x44] sm:$0x1]
      %v381 = vsel %vm364, 0, %v380
      %382 = vst [vmem:[#allocation2 + $0x44] sm:$0x1] %v381
      %v383 = vld [vmem:[#allocation2 + $0x50] sm:$0x1]
      %v384 = vsel %vm364, 0, %v383
      %385 = vst [vmem:[#allocation2 + $0x50] sm:$0x1] %v384
      %v386 = vld [vmem:[#allocation2 + $0x5c] sm:$0x1]
      %v387 = vsel %vm364, 0, %v386
      %388 = vst [vmem:[#allocation2 + $0x5c] sm:$0x1] %v387
      %v389 = vld [vmem:[#allocation2 + $0x68] sm:$0x1]
      %v390 = vsel %vm364, 0, %v389
      %391 = vst [vmem:[#allocation2 + $0x68] sm:$0x1] %v390
      %v392 = vld [vmem:[#allocation2 + $0x74] sm:$0x1]
      %v393 = vsel %vm364, 0, %v392
      %394 = vst [vmem:[#allocation2 + $0x74] sm:$0x1] %v393
      %v395 = vld [vmem:[#allocation2 + $0x80] sm:$0x1]
      %v396 = vsel %vm364, 0, %v395
      %397 = vst [vmem:[#allocation2 + $0x80] sm:$0x1] %v396
      %v398 = vld [vmem:[#allocation2 + $0x8c] sm:$0x1]
      %v399 = vsel %vm364, 0, %v398
      %400 = vst [vmem:[#allocation2 + $0x8c] sm:$0x1] %v399
      %v401 = vld [vmem:[#allocation2 + $0x98] sm:$0x1]
      %v402 = vsel %vm364, 0, %v401
      %403 = vst [vmem:[#allocation2 + $0x98] sm:$0x1] %v402
      %v404 = vld [vmem:[#allocation2 + $0xa4] sm:$0x1]
      %v405 = vsel %vm364, 0, %v404
      %406 = vst [vmem:[#allocation2 + $0xa4] sm:$0x1] %v405
      %v407 = vld [vmem:[#allocation2 + $0xb0] sm:$0x1]
      %v408 = vsel %vm364, 0, %v407
      %409 = vst [vmem:[#allocation2 + $0xb0] sm:$0x1] %v408
      %v410 = vld [vmem:[#allocation2 + $0xbc] sm:$0x1]
      %v411 = vsel %vm364, 0, %v410
      %412 = vst [vmem:[#allocation2 + $0xbc] sm:$0x1] %v411
      %vm413 = vcmask 60416
      %414 = vst.msk [vmem:[#allocation2] sm:$0xf] %vm413, 0
      %415 = vst.msk [vmem:[#allocation2 + $0x4] sm:$0xf] %vm413, 0
      %vm416 = vcmask 57344
      %417 = vst.msk [vmem:[#allocation2 + $0x8] sm:$0x1] %vm416, 0
      %s418 = scalar_lea.vmem [#allocation2], 180
      %vm419 = vcmask 191616
      %420 = vst.msk [vmem:[%s418] sm:$0xf] %vm419, 0
      %421 = vst.msk [vmem:[%s418 + $0x4] sm:$0xf] %vm419, 0
      %vm422 = vcmask 188544
      %423 = vst.msk [vmem:[%s418 + $0x8] sm:$0x1] %vm422, 0
      %vm424 = vsmask.f32 4368
      %vm425 = vmor %vm313, %vm424
      %v427 = vshrl.u32 %v280, 16
      %v429 = vrot.slane %v427, 7
      %v430 = vshll.u32 %v280, 16
      %v432 = vor.u32 %v429, %v430
      %v433 = vrot.slane %v429, 4
      %v435 = vshrl.u32 %v281, 16
      %v437 = vrot.slane %v435, 7
      %v438 = vshll.u32 %v281, 16
      %v440 = vor.u32 %v437, %v438
      %v441 = vsel %vm425, %v433, %v440
      %v442 = vrot.slane %v437, 4
      %v444 = vshrl.u32 %v282, 16
      %v446 = vrot.slane %v444, 7
      %v447 = vshll.u32 %v282, 16
      %v449 = vor.u32 %v446, %v447
      %v450 = vrot.slane %v446, 4
      %v452 = vshrl.u32 %v283, 16
      %v454 = vrot.slane %v452, 7
      %v455 = vshll.u32 %v283, 16
      %v457 = vor.u32 %v454, %v455
      %v458 = vsel %vm425, %v450, %v457
      %v459 = vrot.slane %v454, 4
      %v461 = vshrl.u32 %v284, 16
      %v463 = vrot.slane %v461, 7
      %v464 = vshll.u32 %v284, 16
      %v466 = vor.u32 %v463, %v464
      %v467 = vrot.slane %v463, 4
      %v469 = vshrl.u32 %v285, 16
      %v471 = vrot.slane %v469, 7
      %v472 = vshll.u32 %v285, 16
      %v474 = vor.u32 %v471, %v472
      %v475 = vsel %vm425, %v467, %v474
      %v476 = vrot.slane %v471, 4
      %v478 = vshrl.u32 %v286, 16
      %v480 = vrot.slane %v478, 7
      %v481 = vshll.u32 %v286, 16
      %v483 = vor.u32 %v480, %v481
      %v484 = vrot.slane %v480, 4
      %v486 = vshrl.u32 %v287, 16
      %v488 = vrot.slane %v486, 7
      %v489 = vshll.u32 %v287, 16
      %v491 = vor.u32 %v488, %v489
      %v492 = vsel %vm425, %v484, %v491
      %v493 = vrot.slane %v488, 4
      %v495 = vshrl.u32 %v288, 16
      %v497 = vrot.slane %v495, 7
      %v498 = vshll.u32 %v288, 16
      %v500 = vor.u32 %v497, %v498
      %v501 = vrot.slane %v497, 4
      %v503 = vshrl.u32 %v289, 16
      %v505 = vrot.slane %v503, 7
      %v506 = vshll.u32 %v289, 16
      %v508 = vor.u32 %v505, %v506
      %v509 = vsel %vm425, %v501, %v508
      %v510 = vrot.slane %v505, 4
      %v512 = vshrl.u32 %v290, 16
      %v514 = vrot.slane %v512, 7
      %v515 = vshll.u32 %v290, 16
      %v517 = vor.u32 %v514, %v515
      %v518 = vrot.slane %v514, 4
      %v520 = vshrl.u32 %v291, 16
      %v522 = vrot.slane %v520, 7
      %v523 = vshll.u32 %v291, 16
      %v525 = vor.u32 %v522, %v523
      %v526 = vsel %vm425, %v518, %v525
      %v527 = vrot.slane %v522, 4
      %v529 = vshrl.u32 %v292, 16
      %v531 = vrot.slane %v529, 7
      %v532 = vshll.u32 %v292, 16
      %v534 = vor.u32 %v531, %v532
      %v535 = vrot.slane %v531, 4
      %v537 = vshrl.u32 %v293, 16
      %v539 = vrot.slane %v537, 7
      %v540 = vshll.u32 %v293, 16
      %v542 = vor.u32 %v539, %v540
      %v543 = vsel %vm425, %v535, %v542
      %v544 = vrot.slane %v539, 4
      %v546 = vshrl.u32 %v294, 16
      %v548 = vrot.slane %v546, 7
      %v549 = vshll.u32 %v294, 16
      %v551 = vor.u32 %v548, %v549
      %v552 = vrot.slane %v548, 4
      %v554 = vshrl.u32 %v295, 16
      %v556 = vrot.slane %v554, 7
      %v557 = vshll.u32 %v295, 16
      %v559 = vor.u32 %v556, %v557
      %v560 = vsel %vm425, %v552, %v559
      %v561 = vrot.slane %v556, 4
      %v563 = vshrl.u32 %v296, 16
      %v565 = vrot.slane %v563, 7
      %v566 = vshll.u32 %v296, 16
      %v568 = vor.u32 %v565, %v566
      %v569 = vrot.slane %v565, 4
      %v571 = vshrl.u32 %v297, 16
      %v573 = vrot.slane %v571, 7
      %v574 = vshll.u32 %v297, 16
      %v576 = vor.u32 %v573, %v574
      %v577 = vsel %vm425, %v569, %v576
      %v578 = vrot.slane %v573, 4
      %v580 = vshrl.u32 %v298, 16
      %v582 = vrot.slane %v580, 7
      %v583 = vshll.u32 %v298, 16
      %v585 = vor.u32 %v582, %v583
      %v586 = vrot.slane %v582, 4
      %v588 = vshrl.u32 %v299, 16
      %v590 = vrot.slane %v588, 7
      %v591 = vshll.u32 %v299, 16
      %v593 = vor.u32 %v590, %v591
      %v594 = vsel %vm425, %v586, %v593
      %v595 = vrot.slane %v590, 4
      %v597 = vshrl.u32 %v300, 16
      %v599 = vrot.slane %v597, 7
      %v600 = vshll.u32 %v300, 16
      %v602 = vor.u32 %v599, %v600
      %v603 = vrot.slane %v599, 4
      %v605 = vshrl.u32 %v301, 16
      %v607 = vrot.slane %v605, 7
      %v608 = vshll.u32 %v301, 16
      %v610 = vor.u32 %v607, %v608
      %v611 = vsel %vm425, %v603, %v610
      %v612 = vrot.slane %v607, 4
      %v614 = vshrl.u32 %v302, 16
      %v616 = vrot.slane %v614, 7
      %v617 = vshll.u32 %v302, 16
      %v619 = vor.u32 %v616, %v617
      %v620 = vrot.slane %v616, 4
      %v622 = vshrl.u32 %v303, 16
      %v624 = vrot.slane %v622, 7
      %v625 = vshll.u32 %v303, 16
      %v627 = vor.u32 %v624, %v625
      %v628 = vsel %vm425, %v620, %v627
      %v629 = vrot.slane %v624, 4
      %v631 = vshrl.u32 %v304, 16
      %v633 = vrot.slane %v631, 7
      %v634 = vshll.u32 %v304, 16
      %v636 = vor.u32 %v633, %v634
      %v637 = vrot.slane %v633, 4
      %v639 = vshrl.u32 %v305, 16
      %v641 = vrot.slane %v639, 7
      %v642 = vshll.u32 %v305, 16
      %v644 = vor.u32 %v641, %v642
      %v645 = vsel %vm425, %v637, %v644
      %v646 = vrot.slane %v641, 4
      %v648 = vshrl.u32 %v306, 16
      %v650 = vrot.slane %v648, 7
      %v651 = vshll.u32 %v306, 16
      %v653 = vor.u32 %v650, %v651
      %v654 = vrot.slane %v650, 4
      %v656 = vshrl.u32 %v307, 16
      %v658 = vrot.slane %v656, 7
      %v659 = vshll.u32 %v307, 16
      %v661 = vor.u32 %v658, %v659
      %v662 = vsel %vm425, %v654, %v661
      %v663 = vrot.slane %v658, 4
      %v665 = vshrl.u32 %v308, 16
      %v667 = vrot.slane %v665, 7
      %v668 = vshll.u32 %v308, 16
      %v670 = vor.u32 %v667, %v668
      %v671 = vrot.slane %v667, 4
      %v673 = vshrl.u32 %v309, 16
      %v675 = vrot.slane %v673, 7
      %v676 = vshll.u32 %v309, 16
      %v678 = vor.u32 %v675, %v676
      %v679 = vsel %vm425, %v671, %v678
      %v680 = vrot.slane %v675, 4
      %s726 = scalar_lea.vmem [#allocation2], 12
      %vm727 = vcmask 60416
      %vm728 = vmand %vm727, %vm363
      %v729 = vld [vmem:[%s726] sm:$0xf]
      %v730 = vsel %vm728, %v432, %v729
      %731 = vst [vmem:[%s726] sm:$0xf] %v730
      %732 = vst.msk [vmem:[%s726 + $0x4] sm:$0xf] %vm413, %v441
      %vm733 = vcmask 57344
      %vm734 = vmand %vm733, %vm313
      %v735 = vld [vmem:[%s726 + $0x8] sm:$0x1]
      %v736 = vsel %vm734, %v442, %v735
      %737 = vst [vmem:[%s726 + $0x8] sm:$0x1] %v736
      %v738 = vld [vmem:[%s726 + $0xc] sm:$0xf]
      %v739 = vsel %vm728, %v449, %v738
      %740 = vst [vmem:[%s726 + $0xc] sm:$0xf] %v739
      %741 = vst.msk [vmem:[%s726 + $0x10] sm:$0xf] %vm413, %v458
      %v742 = vld [vmem:[%s726 + $0x14] sm:$0x1]
      %v743 = vsel %vm734, %v459, %v742
      %744 = vst [vmem:[%s726 + $0x14] sm:$0x1] %v743
      %v745 = vld [vmem:[%s726 + $0x18] sm:$0xf]
      %v746 = vsel %vm728, %v466, %v745
      %747 = vst [vmem:[%s726 + $0x18] sm:$0xf] %v746
      %748 = vst.msk [vmem:[%s726 + $0x1c] sm:$0xf] %vm413, %v475
      %v749 = vld [vmem:[%s726 + $0x20] sm:$0x1]
      %v750 = vsel %vm734, %v476, %v749
      %751 = vst [vmem:[%s726 + $0x20] sm:$0x1] %v750
      %v752 = vld [vmem:[%s726 + $0x24] sm:$0xf]
      %v753 = vsel %vm728, %v483, %v752
      %754 = vst [vmem:[%s726 + $0x24] sm:$0xf] %v753
      %755 = vst.msk [vmem:[%s726 + $0x28] sm:$0xf] %vm413, %v492
      %v756 = vld [vmem:[%s726 + $0x2c] sm:$0x1]
      %v757 = vsel %vm734, %v493, %v756
      %758 = vst [vmem:[%s726 + $0x2c] sm:$0x1] %v757
      %v759 = vld [vmem:[%s726 + $0x30] sm:$0xf]
      %v760 = vsel %vm728, %v500, %v759
      %761 = vst [vmem:[%s726 + $0x30] sm:$0xf] %v760
      %762 = vst.msk [vmem:[%s726 + $0x34] sm:$0xf] %vm413, %v509
      %v763 = vld [vmem:[%s726 + $0x38] sm:$0x1]
      %v764 = vsel %vm734, %v510, %v763
      %765 = vst [vmem:[%s726 + $0x38] sm:$0x1] %v764
      %v766 = vld [vmem:[%s726 + $0x3c] sm:$0xf]
      %v767 = vsel %vm728, %v517, %v766
      %768 = vst [vmem:[%s726 + $0x3c] sm:$0xf] %v767
      %769 = vst.msk [vmem:[%s726 + $0x40] sm:$0xf] %vm413, %v526
      %v770 = vld [vmem:[%s726 + $0x44] sm:$0x1]
      %v771 = vsel %vm734, %v527, %v770
      %772 = vst [vmem:[%s726 + $0x44] sm:$0x1] %v771
      %v773 = vld [vmem:[%s726 + $0x48] sm:$0xf]
      %v774 = vsel %vm728, %v534, %v773
      %775 = vst [vmem:[%s726 + $0x48] sm:$0xf] %v774
      %776 = vst.msk [vmem:[%s726 + $0x4c] sm:$0xf] %vm413, %v543
      %v777 = vld [vmem:[%s726 + $0x50] sm:$0x1]
      %v778 = vsel %vm734, %v544, %v777
      %779 = vst [vmem:[%s726 + $0x50] sm:$0x1] %v778
      %v780 = vld [vmem:[%s726 + $0x54] sm:$0xf]
      %v781 = vsel %vm728, %v551, %v780
      %782 = vst [vmem:[%s726 + $0x54] sm:$0xf] %v781
      %783 = vst.msk [vmem:[%s726 + $0x58] sm:$0xf] %vm413, %v560
      %v784 = vld [vmem:[%s726 + $0x5c] sm:$0x1]
      %v785 = vsel %vm734, %v561, %v784
      %786 = vst [vmem:[%s726 + $0x5c] sm:$0x1] %v785
      %v787 = vld [vmem:[%s726 + $0x60] sm:$0xf]
      %v788 = vsel %vm728, %v568, %v787
      %789 = vst [vmem:[%s726 + $0x60] sm:$0xf] %v788
      %790 = vst.msk [vmem:[%s726 + $0x64] sm:$0xf] %vm413, %v577
      %v791 = vld [vmem:[%s726 + $0x68] sm:$0x1]
      %v792 = vsel %vm734, %v578, %v791
      %793 = vst [vmem:[%s726 + $0x68] sm:$0x1] %v792
      %v794 = vld [vmem:[%s726 + $0x6c] sm:$0xf]
      %v795 = vsel %vm728, %v585, %v794
      %796 = vst [vmem:[%s726 + $0x6c] sm:$0xf] %v795
      %797 = vst.msk [vmem:[%s726 + $0x70] sm:$0xf] %vm413, %v594
      %v798 = vld [vmem:[%s726 + $0x74] sm:$0x1]
      %v799 = vsel %vm734, %v595, %v798
      %800 = vst [vmem:[%s726 + $0x74] sm:$0x1] %v799
      %v801 = vld [vmem:[%s726 + $0x78] sm:$0xf]
      %v802 = vsel %vm728, %v602, %v801
      %803 = vst [vmem:[%s726 + $0x78] sm:$0xf] %v802
      %804 = vst.msk [vmem:[%s726 + $0x7c] sm:$0xf] %vm413, %v611
      %v805 = vld [vmem:[%s726 + $0x80] sm:$0x1]
      %v806 = vsel %vm734, %v612, %v805
      %807 = vst [vmem:[%s726 + $0x80] sm:$0x1] %v806
      %v808 = vld [vmem:[%s726 + $0x84] sm:$0xf]
      %v809 = vsel %vm728, %v619, %v808
      %810 = vst [vmem:[%s726 + $0x84] sm:$0xf] %v809
      %811 = vst.msk [vmem:[%s726 + $0x88] sm:$0xf] %vm413, %v628
      %v812 = vld [vmem:[%s726 + $0x8c] sm:$0x1]
      %v813 = vsel %vm734, %v629, %v812
      %814 = vst [vmem:[%s726 + $0x8c] sm:$0x1] %v813
      %v815 = vld [vmem:[%s726 + $0x90] sm:$0xf]
      %v816 = vsel %vm728, %v636, %v815
      %817 = vst [vmem:[%s726 + $0x90] sm:$0xf] %v816
      %818 = vst.msk [vmem:[%s726 + $0x94] sm:$0xf] %vm413, %v645
      %v819 = vld [vmem:[%s726 + $0x98] sm:$0x1]
      %v820 = vsel %vm734, %v646, %v819
      %821 = vst [vmem:[%s726 + $0x98] sm:$0x1] %v820
      %v822 = vld [vmem:[%s726 + $0x9c] sm:$0xf]
      %v823 = vsel %vm728, %v653, %v822
      %824 = vst [vmem:[%s726 + $0x9c] sm:$0xf] %v823
      %825 = vst.msk [vmem:[%s726 + $0xa0] sm:$0xf] %vm413, %v662
      %v826 = vld [vmem:[%s726 + $0xa4] sm:$0x1]
      %v827 = vsel %vm734, %v663, %v826
      %828 = vst [vmem:[%s726 + $0xa4] sm:$0x1] %v827
      %v829 = vld [vmem:[%s726 + $0xa8] sm:$0xf]
      %v830 = vsel %vm728, %v670, %v829
      %831 = vst [vmem:[%s726 + $0xa8] sm:$0xf] %v830
      %832 = vst.msk [vmem:[%s726 + $0xac] sm:$0xf] %vm413, %v679
      %v833 = vld [vmem:[%s726 + $0xb0] sm:$0x1]
      %v834 = vsel %vm734, %v680, %v833
      %835 = vst [vmem:[%s726 + $0xb0] sm:$0x1] %v834
      %v837 = vshrl.u32 %v310, 16
      %v839 = vrot.slane %v837, 7
      %v840 = vshll.u32 %v310, 16
      %v842 = vor.u32 %v839, %v840
      %v843 = vrot.slane %v839, 4
      %v845 = vshrl.u32 %v311, 16
      %v847 = vrot.slane %v845, 7
      %v848 = vshll.u32 %v311, 16
      %v850 = vor.u32 %v847, %v848
      %v851 = vsel %vm425, %v843, %v850
      %v852 = vrot.slane %v847, 4
      %853 = vrot.lane.b32.xlu0 %v432, 8
      %v854 = vpop.permute.xlu0 %853
      %855 = vrot.lane.b32.xlu0 %v441, 8
      %v856 = vpop.permute.xlu0 %855
      %857 = vrot.lane.b32.xlu0 %v442, 8
      %v858 = vpop.permute.xlu0 %857
      %859 = vrot.lane.b32.xlu0 %v449, 8
      %v860 = vpop.permute.xlu0 %859
      %861 = vrot.lane.b32.xlu0 %v458, 8
      %v862 = vpop.permute.xlu0 %861
      %863 = vrot.lane.b32.xlu0 %v459, 8
      %v864 = vpop.permute.xlu0 %863
      %865 = vrot.lane.b32.xlu0 %v466, 8
      %v866 = vpop.permute.xlu0 %865
      %867 = vrot.lane.b32.xlu0 %v475, 8
      %v868 = vpop.permute.xlu0 %867
      %869 = vrot.lane.b32.xlu0 %v476, 8
      %v870 = vpop.permute.xlu0 %869
      %871 = vrot.lane.b32.xlu0 %v483, 8
      %v872 = vpop.permute.xlu0 %871
      %873 = vrot.lane.b32.xlu0 %v492, 8
      %v874 = vpop.permute.xlu0 %873
      %875 = vrot.lane.b32.xlu0 %v493, 8
      %v876 = vpop.permute.xlu0 %875
      %877 = vrot.lane.b32.xlu0 %v500, 8
      %v878 = vpop.permute.xlu0 %877
      %879 = vrot.lane.b32.xlu0 %v509, 8
      %v880 = vpop.permute.xlu0 %879
      %881 = vrot.lane.b32.xlu0 %v510, 8
      %v882 = vpop.permute.xlu0 %881
      %883 = vrot.lane.b32.xlu0 %v517, 8
      %v884 = vpop.permute.xlu0 %883
      %885 = vrot.lane.b32.xlu0 %v526, 8
      %v886 = vpop.permute.xlu0 %885
      %887 = vrot.lane.b32.xlu0 %v527, 8
      %v888 = vpop.permute.xlu0 %887
      %889 = vrot.lane.b32.xlu0 %v534, 8
      %v890 = vpop.permute.xlu0 %889
      %891 = vrot.lane.b32.xlu0 %v543, 8
      %v892 = vpop.permute.xlu0 %891
      %893 = vrot.lane.b32.xlu0 %v544, 8
      %v894 = vpop.permute.xlu0 %893
      %895 = vrot.lane.b32.xlu0 %v551, 8
      %v896 = vpop.permute.xlu0 %895
      %897 = vrot.lane.b32.xlu0 %v560, 8
      %v898 = vpop.permute.xlu0 %897
      %899 = vrot.lane.b32.xlu0 %v561, 8
      %v900 = vpop.permute.xlu0 %899
      %901 = vrot.lane.b32.xlu0 %v568, 8
      %v902 = vpop.permute.xlu0 %901
      %903 = vrot.lane.b32.xlu0 %v577, 8
      %v904 = vpop.permute.xlu0 %903
      %905 = vrot.lane.b32.xlu0 %v578, 8
      %v906 = vpop.permute.xlu0 %905
      %907 = vrot.lane.b32.xlu0 %v585, 8
      %v908 = vpop.permute.xlu0 %907
      %909 = vrot.lane.b32.xlu0 %v594, 8
      %v910 = vpop.permute.xlu0 %909
      %911 = vrot.lane.b32.xlu0 %v595, 8
      %v912 = vpop.permute.xlu0 %911
      %913 = vrot.lane.b32.xlu0 %v602, 8
      %v914 = vpop.permute.xlu0 %913
      %915 = vrot.lane.b32.xlu0 %v611, 8
      %v916 = vpop.permute.xlu0 %915
      %917 = vrot.lane.b32.xlu0 %v612, 8
      %v918 = vpop.permute.xlu0 %917
      %919 = vrot.lane.b32.xlu0 %v619, 8
      %v920 = vpop.permute.xlu0 %919
      %921 = vrot.lane.b32.xlu0 %v628, 8
      %v922 = vpop.permute.xlu0 %921
      %923 = vrot.lane.b32.xlu0 %v629, 8
      %v924 = vpop.permute.xlu0 %923
      %925 = vrot.lane.b32.xlu0 %v636, 8
      %v926 = vpop.permute.xlu0 %925
      %927 = vrot.lane.b32.xlu0 %v645, 8
      %v928 = vpop.permute.xlu0 %927
      %929 = vrot.lane.b32.xlu0 %v646, 8
      %v930 = vpop.permute.xlu0 %929
      %931 = vrot.lane.b32.xlu0 %v653, 8
      %v932 = vpop.permute.xlu0 %931
      %933 = vrot.lane.b32.xlu0 %v662, 8
      %v934 = vpop.permute.xlu0 %933
      %935 = vrot.lane.b32.xlu0 %v663, 8
      %v936 = vpop.permute.xlu0 %935
      %937 = vrot.lane.b32.xlu0 %v670, 8
      %v938 = vpop.permute.xlu0 %937
      %939 = vrot.lane.b32.xlu0 %v679, 8
      %v940 = vpop.permute.xlu0 %939
      %941 = vrot.lane.b32.xlu0 %v680, 8
      %v942 = vpop.permute.xlu0 %941
      %943 = vrot.lane.b32.xlu0 %v842, 8
      %v944 = vpop.permute.xlu0 %943
      %945 = vrot.lane.b32.xlu0 %v851, 8
      %v946 = vpop.permute.xlu0 %945
      %947 = vrot.lane.b32.xlu0 %v852, 8
      %v948 = vpop.permute.xlu0 %947
      %vm997 = vcmask 126016
      %vm998 = vmand %vm997, %vm363
      %v999 = vld [vmem:[#allocation2] sm:$0xf]
      %v1000 = vsel %vm998, %v854, %v999
      %1001 = vst [vmem:[#allocation2] sm:$0xf] %v1000
      %vm1002 = vcmask 126016
      %1003 = vst.msk [vmem:[#allocation2 + $0x4] sm:$0xf] %vm1002, %v856
      %vm1004 = vcmask 122944
      %vm1005 = vmand %vm1004, %vm313
      %v1006 = vld [vmem:[#allocation2 + $0x8] sm:$0x1]
      %v1007 = vsel %vm1005, %v858, %v1006
      %1008 = vst [vmem:[#allocation2 + $0x8] sm:$0x1] %v1007
      %v1009 = vld [vmem:[#allocation2 + $0xc] sm:$0xf]
      %v1010 = vsel %vm998, %v860, %v1009
      %1011 = vst [vmem:[#allocation2 + $0xc] sm:$0xf] %v1010
      %1012 = vst.msk [vmem:[#allocation2 + $0x10] sm:$0xf] %vm1002, %v862
      %v1013 = vld [vmem:[#allocation2 + $0x14] sm:$0x1]
      %v1014 = vsel %vm1005, %v864, %v1013
      %1015 = vst [vmem:[#allocation2 + $0x14] sm:$0x1] %v1014
      %v1016 = vld [vmem:[#allocation2 + $0x18] sm:$0xf]
      %v1017 = vsel %vm998, %v866, %v1016
      %1018 = vst [vmem:[#allocation2 + $0x18] sm:$0xf] %v1017
      %1019 = vst.msk [vmem:[#allocation2 + $0x1c] sm:$0xf] %vm1002, %v868
      %v1020 = vld [vmem:[#allocation2 + $0x20] sm:$0x1]
      %v1021 = vsel %vm1005, %v870, %v1020
      %1022 = vst [vmem:[#allocation2 + $0x20] sm:$0x1] %v1021
      %v1023 = vld [vmem:[#allocation2 + $0x24] sm:$0xf]
      %v1024 = vsel %vm998, %v872, %v1023
      %1025 = vst [vmem:[#allocation2 + $0x24] sm:$0xf] %v1024
      %1026 = vst.msk [vmem:[#allocation2 + $0x28] sm:$0xf] %vm1002, %v874
      %v1027 = vld [vmem:[#allocation2 + $0x2c] sm:$0x1]
      %v1028 = vsel %vm1005, %v876, %v1027
      %1029 = vst [vmem:[#allocation2 + $0x2c] sm:$0x1] %v1028
      %v1030 = vld [vmem:[#allocation2 + $0x30] sm:$0xf]
      %v1031 = vsel %vm998, %v878, %v1030
      %1032 = vst [vmem:[#allocation2 + $0x30] sm:$0xf] %v1031
      %1033 = vst.msk [vmem:[#allocation2 + $0x34] sm:$0xf] %vm1002, %v880
      %v1034 = vld [vmem:[#allocation2 + $0x38] sm:$0x1]
      %v1035 = vsel %vm1005, %v882, %v1034
      %1036 = vst [vmem:[#allocation2 + $0x38] sm:$0x1] %v1035
      %v1037 = vld [vmem:[#allocation2 + $0x3c] sm:$0xf]
      %v1038 = vsel %vm998, %v884, %v1037
      %1039 = vst [vmem:[#allocation2 + $0x3c] sm:$0xf] %v1038
      %1040 = vst.msk [vmem:[#allocation2 + $0x40] sm:$0xf] %vm1002, %v886
      %v1041 = vld [vmem:[#allocation2 + $0x44] sm:$0x1]
      %v1042 = vsel %vm1005, %v888, %v1041
      %1043 = vst [vmem:[#allocation2 + $0x44] sm:$0x1] %v1042
      %v1044 = vld [vmem:[#allocation2 + $0x48] sm:$0xf]
      %v1045 = vsel %vm998, %v890, %v1044
      %1046 = vst [vmem:[#allocation2 + $0x48] sm:$0xf] %v1045
      %1047 = vst.msk [vmem:[#allocation2 + $0x4c] sm:$0xf] %vm1002, %v892
      %v1048 = vld [vmem:[#allocation2 + $0x50] sm:$0x1]
      %v1049 = vsel %vm1005, %v894, %v1048
      %1050 = vst [vmem:[#allocation2 + $0x50] sm:$0x1] %v1049
      %v1051 = vld [vmem:[#allocation2 + $0x54] sm:$0xf]
      %v1052 = vsel %vm998, %v896, %v1051
      %1053 = vst [vmem:[#allocation2 + $0x54] sm:$0xf] %v1052
      %1054 = vst.msk [vmem:[#allocation2 + $0x58] sm:$0xf] %vm1002, %v898
      %v1055 = vld [vmem:[#allocation2 + $0x5c] sm:$0x1]
      %v1056 = vsel %vm1005, %v900, %v1055
      %1057 = vst [vmem:[#allocation2 + $0x5c] sm:$0x1] %v1056
      %v1058 = vld [vmem:[#allocation2 + $0x60] sm:$0xf]
      %v1059 = vsel %vm998, %v902, %v1058
      %1060 = vst [vmem:[#allocation2 + $0x60] sm:$0xf] %v1059
      %1061 = vst.msk [vmem:[#allocation2 + $0x64] sm:$0xf] %vm1002, %v904
      %v1062 = vld [vmem:[#allocation2 + $0x68] sm:$0x1]
      %v1063 = vsel %vm1005, %v906, %v1062
      %1064 = vst [vmem:[#allocation2 + $0x68] sm:$0x1] %v1063
      %v1065 = vld [vmem:[#allocation2 + $0x6c] sm:$0xf]
      %v1066 = vsel %vm998, %v908, %v1065
      %1067 = vst [vmem:[#allocation2 + $0x6c] sm:$0xf] %v1066
      %1068 = vst.msk [vmem:[#allocation2 + $0x70] sm:$0xf] %vm1002, %v910
      %v1069 = vld [vmem:[#allocation2 + $0x74] sm:$0x1]
      %v1070 = vsel %vm1005, %v912, %v1069
      %1071 = vst [vmem:[#allocation2 + $0x74] sm:$0x1] %v1070
      %v1072 = vld [vmem:[#allocation2 + $0x78] sm:$0xf]
      %v1073 = vsel %vm998, %v914, %v1072
      %1074 = vst [vmem:[#allocation2 + $0x78] sm:$0xf] %v1073
      %1075 = vst.msk [vmem:[#allocation2 + $0x7c] sm:$0xf] %vm1002, %v916
      %v1076 = vld [vmem:[#allocation2 + $0x80] sm:$0x1]
      %v1077 = vsel %vm1005, %v918, %v1076
      %1078 = vst [vmem:[#allocation2 + $0x80] sm:$0x1] %v1077
      %v1079 = vld [vmem:[#allocation2 + $0x84] sm:$0xf]
      %v1080 = vsel %vm998, %v920, %v1079
      %1081 = vst [vmem:[#allocation2 + $0x84] sm:$0xf] %v1080
      %1082 = vst.msk [vmem:[#allocation2 + $0x88] sm:$0xf] %vm1002, %v922
      %v1083 = vld [vmem:[#allocation2 + $0x8c] sm:$0x1]
      %v1084 = vsel %vm1005, %v924, %v1083
      %1085 = vst [vmem:[#allocation2 + $0x8c] sm:$0x1] %v1084
      %v1086 = vld [vmem:[#allocation2 + $0x90] sm:$0xf]
      %v1087 = vsel %vm998, %v926, %v1086
      %1088 = vst [vmem:[#allocation2 + $0x90] sm:$0xf] %v1087
      %1089 = vst.msk [vmem:[#allocation2 + $0x94] sm:$0xf] %vm1002, %v928
      %v1090 = vld [vmem:[#allocation2 + $0x98] sm:$0x1]
      %v1091 = vsel %vm1005, %v930, %v1090
      %1092 = vst [vmem:[#allocation2 + $0x98] sm:$0x1] %v1091
      %v1093 = vld [vmem:[#allocation2 + $0x9c] sm:$0xf]
      %v1094 = vsel %vm998, %v932, %v1093
      %1095 = vst [vmem:[#allocation2 + $0x9c] sm:$0xf] %v1094
      %1096 = vst.msk [vmem:[#allocation2 + $0xa0] sm:$0xf] %vm1002, %v934
      %v1097 = vld [vmem:[#allocation2 + $0xa4] sm:$0x1]
      %v1098 = vsel %vm1005, %v936, %v1097
      %1099 = vst [vmem:[#allocation2 + $0xa4] sm:$0x1] %v1098
      %v1100 = vld [vmem:[#allocation2 + $0xa8] sm:$0xf]
      %v1101 = vsel %vm998, %v938, %v1100
      %1102 = vst [vmem:[#allocation2 + $0xa8] sm:$0xf] %v1101
      %1103 = vst.msk [vmem:[#allocation2 + $0xac] sm:$0xf] %vm1002, %v940
      %v1104 = vld [vmem:[#allocation2 + $0xb0] sm:$0x1]
      %v1105 = vsel %vm1005, %v942, %v1104
      %1106 = vst [vmem:[#allocation2 + $0xb0] sm:$0x1] %v1105
      %v1107 = vld [vmem:[#allocation2 + $0xb4] sm:$0xf]
      %v1108 = vsel %vm998, %v944, %v1107
      %1109 = vst [vmem:[#allocation2 + $0xb4] sm:$0xf] %v1108
      %1110 = vst.msk [vmem:[#allocation2 + $0xb8] sm:$0xf] %vm1002, %v946
      %v1111 = vld [vmem:[#allocation2 + $0xbc] sm:$0x1]
      %v1112 = vsel %vm1005, %v948, %v1111
      %1113 = vst [vmem:[#allocation2 + $0xbc] sm:$0x1] %v1112
      %1114 = vrot.lane.b32.xlu0 %v449, 16
      %v1115 = vpop.permute.xlu0 %1114
      %1116 = vrot.lane.b32.xlu0 %v458, 16
      %v1117 = vpop.permute.xlu0 %1116
      %1118 = vrot.lane.b32.xlu0 %v459, 16
      %v1119 = vpop.permute.xlu0 %1118
      %1120 = vrot.lane.b32.xlu0 %v466, 16
      %v1121 = vpop.permute.xlu0 %1120
      %1122 = vrot.lane.b32.xlu0 %v475, 16
      %v1123 = vpop.permute.xlu0 %1122
      %1124 = vrot.lane.b32.xlu0 %v476, 16
      %v1125 = vpop.permute.xlu0 %1124
      %1126 = vrot.lane.b32.xlu0 %v483, 16
      %v1127 = vpop.permute.xlu0 %1126
      %1128 = vrot.lane.b32.xlu0 %v492, 16
      %v1129 = vpop.permute.xlu0 %1128
      %1130 = vrot.lane.b32.xlu0 %v493, 16
      %v1131 = vpop.permute.xlu0 %1130
      %1132 = vrot.lane.b32.xlu0 %v500, 16
      %v1133 = vpop.permute.xlu0 %1132
      %1134 = vrot.lane.b32.xlu0 %v509, 16
      %v1135 = vpop.permute.xlu0 %1134
      %1136 = vrot.lane.b32.xlu0 %v510, 16
      %v1137 = vpop.permute.xlu0 %1136
      %1138 = vrot.lane.b32.xlu0 %v517, 16
      %v1139 = vpop.permute.xlu0 %1138
      %1140 = vrot.lane.b32.xlu0 %v526, 16
      %v1141 = vpop.permute.xlu0 %1140
      %1142 = vrot.lane.b32.xlu0 %v527, 16
      %v1143 = vpop.permute.xlu0 %1142
      %1144 = vrot.lane.b32.xlu0 %v534, 16
      %v1145 = vpop.permute.xlu0 %1144
      %1146 = vrot.lane.b32.xlu0 %v543, 16
      %v1147 = vpop.permute.xlu0 %1146
      %1148 = vrot.lane.b32.xlu0 %v544, 16
      %v1149 = vpop.permute.xlu0 %1148
      %1150 = vrot.lane.b32.xlu0 %v551, 16
      %v1151 = vpop.permute.xlu0 %1150
      %1152 = vrot.lane.b32.xlu0 %v560, 16
      %v1153 = vpop.permute.xlu0 %1152
      %1154 = vrot.lane.b32.xlu0 %v561, 16
      %v1155 = vpop.permute.xlu0 %1154
      %1156 = vrot.lane.b32.xlu0 %v568, 16
      %v1157 = vpop.permute.xlu0 %1156
      %1158 = vrot.lane.b32.xlu0 %v577, 16
      %v1159 = vpop.permute.xlu0 %1158
      %1160 = vrot.lane.b32.xlu0 %v578, 16
      %v1161 = vpop.permute.xlu0 %1160
      %1162 = vrot.lane.b32.xlu0 %v585, 16
      %v1163 = vpop.permute.xlu0 %1162
      %1164 = vrot.lane.b32.xlu0 %v594, 16
      %v1165 = vpop.permute.xlu0 %1164
      %1166 = vrot.lane.b32.xlu0 %v595, 16
      %v1167 = vpop.permute.xlu0 %1166
      %1168 = vrot.lane.b32.xlu0 %v602, 16
      %v1169 = vpop.permute.xlu0 %1168
      %1170 = vrot.lane.b32.xlu0 %v611, 16
      %v1171 = vpop.permute.xlu0 %1170
      %1172 = vrot.lane.b32.xlu0 %v612, 16
      %v1173 = vpop.permute.xlu0 %1172
      %1174 = vrot.lane.b32.xlu0 %v619, 16
      %v1175 = vpop.permute.xlu0 %1174
      %1176 = vrot.lane.b32.xlu0 %v628, 16
      %v1177 = vpop.permute.xlu0 %1176
      %1178 = vrot.lane.b32.xlu0 %v629, 16
      %v1179 = vpop.permute.xlu0 %1178
      %1180 = vrot.lane.b32.xlu0 %v636, 16
      %v1181 = vpop.permute.xlu0 %1180
      %1182 = vrot.lane.b32.xlu0 %v645, 16
      %v1183 = vpop.permute.xlu0 %1182
      %1184 = vrot.lane.b32.xlu0 %v646, 16
      %v1185 = vpop.permute.xlu0 %1184
      %1186 = vrot.lane.b32.xlu0 %v653, 16
      %v1187 = vpop.permute.xlu0 %1186
      %1188 = vrot.lane.b32.xlu0 %v662, 16
      %v1189 = vpop.permute.xlu0 %1188
      %1190 = vrot.lane.b32.xlu0 %v663, 16
      %v1191 = vpop.permute.xlu0 %1190
      %1192 = vrot.lane.b32.xlu0 %v670, 16
      %v1193 = vpop.permute.xlu0 %1192
      %1194 = vrot.lane.b32.xlu0 %v679, 16
      %v1195 = vpop.permute.xlu0 %1194
      %1196 = vrot.lane.b32.xlu0 %v680, 16
      %v1197 = vpop.permute.xlu0 %1196
      %1198 = vrot.lane.b32.xlu0 %v842, 16
      %v1199 = vpop.permute.xlu0 %1198
      %1200 = vrot.lane.b32.xlu0 %v851, 16
      %v1201 = vpop.permute.xlu0 %1200
      %1202 = vrot.lane.b32.xlu0 %v852, 16
      %v1203 = vpop.permute.xlu0 %1202
      %vm1249 = vcmask 191616
      %vm1250 = vmand %vm1249, %vm363
      %v1251 = vld [vmem:[#allocation2] sm:$0xf]
      %v1252 = vsel %vm1250, %v1115, %v1251
      %1253 = vst [vmem:[#allocation2] sm:$0xf] %v1252
      %1254 = vst.msk [vmem:[#allocation2 + $0x4] sm:$0xf] %vm419, %v1117
      %vm1255 = vcmask 188544
      %vm1256 = vmand %vm1255, %vm313
      %v1257 = vld [vmem:[#allocation2 + $0x8] sm:$0x1]
      %v1258 = vsel %vm1256, %v1119, %v1257
      %1259 = vst [vmem:[#allocation2 + $0x8] sm:$0x1] %v1258
      %v1260 = vld [vmem:[#allocation2 + $0xc] sm:$0xf]
      %v1261 = vsel %vm1250, %v1121, %v1260
      %1262 = vst [vmem:[#allocation2 + $0xc] sm:$0xf] %v1261
      %1263 = vst.msk [vmem:[#allocation2 + $0x10] sm:$0xf] %vm419, %v1123
      %v1264 = vld [vmem:[#allocation2 + $0x14] sm:$0x1]
      %v1265 = vsel %vm1256, %v1125, %v1264
      %1266 = vst [vmem:[#allocation2 + $0x14] sm:$0x1] %v1265
      %v1267 = vld [vmem:[#allocation2 + $0x18] sm:$0xf]
      %v1268 = vsel %vm1250, %v1127, %v1267
      %1269 = vst [vmem:[#allocation2 + $0x18] sm:$0xf] %v1268
      %1270 = vst.msk [vmem:[#allocation2 + $0x1c] sm:$0xf] %vm419, %v1129
      %v1271 = vld [vmem:[#allocation2 + $0x20] sm:$0x1]
      %v1272 = vsel %vm1256, %v1131, %v1271
      %1273 = vst [vmem:[#allocation2 + $0x20] sm:$0x1] %v1272
      %v1274 = vld [vmem:[#allocation2 + $0x24] sm:$0xf]
      %v1275 = vsel %vm1250, %v1133, %v1274
      %1276 = vst [vmem:[#allocation2 + $0x24] sm:$0xf] %v1275
      %1277 = vst.msk [vmem:[#allocation2 + $0x28] sm:$0xf] %vm419, %v1135
      %v1278 = vld [vmem:[#allocation2 + $0x2c] sm:$0x1]
      %v1279 = vsel %vm1256, %v1137, %v1278
      %1280 = vst [vmem:[#allocation2 + $0x2c] sm:$0x1] %v1279
      %v1281 = vld [vmem:[#allocation2 + $0x30] sm:$0xf]
      %v1282 = vsel %vm1250, %v1139, %v1281
      %1283 = vst [vmem:[#allocation2 + $0x30] sm:$0xf] %v1282
      %1284 = vst.msk [vmem:[#allocation2 + $0x34] sm:$0xf] %vm419, %v1141
      %v1285 = vld [vmem:[#allocation2 + $0x38] sm:$0x1]
      %v1286 = vsel %vm1256, %v1143, %v1285
      %1287 = vst [vmem:[#allocation2 + $0x38] sm:$0x1] %v1286
      %v1288 = vld [vmem:[#allocation2 + $0x3c] sm:$0xf]
      %v1289 = vsel %vm1250, %v1145, %v1288
      %1290 = vst [vmem:[#allocation2 + $0x3c] sm:$0xf] %v1289
      %1291 = vst.msk [vmem:[#allocation2 + $0x40] sm:$0xf] %vm419, %v1147
      %v1292 = vld [vmem:[#allocation2 + $0x44] sm:$0x1]
      %v1293 = vsel %vm1256, %v1149, %v1292
      %1294 = vst [vmem:[#allocation2 + $0x44] sm:$0x1] %v1293
      %v1295 = vld [vmem:[#allocation2 + $0x48] sm:$0xf]
      %v1296 = vsel %vm1250, %v1151, %v1295
      %1297 = vst [vmem:[#allocation2 + $0x48] sm:$0xf] %v1296
      %1298 = vst.msk [vmem:[#allocation2 + $0x4c] sm:$0xf] %vm419, %v1153
      %v1299 = vld [vmem:[#allocation2 + $0x50] sm:$0x1]
      %v1300 = vsel %vm1256, %v1155, %v1299
      %1301 = vst [vmem:[#allocation2 + $0x50] sm:$0x1] %v1300
      %v1302 = vld [vmem:[#allocation2 + $0x54] sm:$0xf]
      %v1303 = vsel %vm1250, %v1157, %v1302
      %1304 = vst [vmem:[#allocation2 + $0x54] sm:$0xf] %v1303
      %1305 = vst.msk [vmem:[#allocation2 + $0x58] sm:$0xf] %vm419, %v1159
      %v1306 = vld [vmem:[#allocation2 + $0x5c] sm:$0x1]
      %v1307 = vsel %vm1256, %v1161, %v1306
      %1308 = vst [vmem:[#allocation2 + $0x5c] sm:$0x1] %v1307
      %v1309 = vld [vmem:[#allocation2 + $0x60] sm:$0xf]
      %v1310 = vsel %vm1250, %v1163, %v1309
      %1311 = vst [vmem:[#allocation2 + $0x60] sm:$0xf] %v1310
      %1312 = vst.msk [vmem:[#allocation2 + $0x64] sm:$0xf] %vm419, %v1165
      %v1313 = vld [vmem:[#allocation2 + $0x68] sm:$0x1]
      %v1314 = vsel %vm1256, %v1167, %v1313
      %1315 = vst [vmem:[#allocation2 + $0x68] sm:$0x1] %v1314
      %v1316 = vld [vmem:[#allocation2 + $0x6c] sm:$0xf]
      %v1317 = vsel %vm1250, %v1169, %v1316
      %1318 = vst [vmem:[#allocation2 + $0x6c] sm:$0xf] %v1317
      %1319 = vst.msk [vmem:[#allocation2 + $0x70] sm:$0xf] %vm419, %v1171
      %v1320 = vld [vmem:[#allocation2 + $0x74] sm:$0x1]
      %v1321 = vsel %vm1256, %v1173, %v1320
      %1322 = vst [vmem:[#allocation2 + $0x74] sm:$0x1] %v1321
      %v1323 = vld [vmem:[#allocation2 + $0x78] sm:$0xf]
      %v1324 = vsel %vm1250, %v1175, %v1323
      %1325 = vst [vmem:[#allocation2 + $0x78] sm:$0xf] %v1324
      %1326 = vst.msk [vmem:[#allocation2 + $0x7c] sm:$0xf] %vm419, %v1177
      %v1327 = vld [vmem:[#allocation2 + $0x80] sm:$0x1]
      %v1328 = vsel %vm1256, %v1179, %v1327
      %1329 = vst [vmem:[#allocation2 + $0x80] sm:$0x1] %v1328
      %v1330 = vld [vmem:[#allocation2 + $0x84] sm:$0xf]
      %v1331 = vsel %vm1250, %v1181, %v1330
      %1332 = vst [vmem:[#allocation2 + $0x84] sm:$0xf] %v1331
      %1333 = vst.msk [vmem:[#allocation2 + $0x88] sm:$0xf] %vm419, %v1183
      %v1334 = vld [vmem:[#allocation2 + $0x8c] sm:$0x1]
      %v1335 = vsel %vm1256, %v1185, %v1334
      %1336 = vst [vmem:[#allocation2 + $0x8c] sm:$0x1] %v1335
      %v1337 = vld [vmem:[#allocation2 + $0x90] sm:$0xf]
      %v1338 = vsel %vm1250, %v1187, %v1337
      %1339 = vst [vmem:[#allocation2 + $0x90] sm:$0xf] %v1338
      %1340 = vst.msk [vmem:[#allocation2 + $0x94] sm:$0xf] %vm419, %v1189
      %v1341 = vld [vmem:[#allocation2 + $0x98] sm:$0x1]
      %v1342 = vsel %vm1256, %v1191, %v1341
      %1343 = vst [vmem:[#allocation2 + $0x98] sm:$0x1] %v1342
      %v1344 = vld [vmem:[#allocation2 + $0x9c] sm:$0xf]
      %v1345 = vsel %vm1250, %v1193, %v1344
      %1346 = vst [vmem:[#allocation2 + $0x9c] sm:$0xf] %v1345
      %1347 = vst.msk [vmem:[#allocation2 + $0xa0] sm:$0xf] %vm419, %v1195
      %v1348 = vld [vmem:[#allocation2 + $0xa4] sm:$0x1]
      %v1349 = vsel %vm1256, %v1197, %v1348
      %1350 = vst [vmem:[#allocation2 + $0xa4] sm:$0x1] %v1349
      %v1351 = vld [vmem:[#allocation2 + $0xa8] sm:$0xf]
      %v1352 = vsel %vm1250, %v1199, %v1351
      %1353 = vst [vmem:[#allocation2 + $0xa8] sm:$0xf] %v1352
      %1354 = vst.msk [vmem:[#allocation2 + $0xac] sm:$0xf] %vm419, %v1201
      %v1355 = vld [vmem:[#allocation2 + $0xb0] sm:$0x1]
      %v1356 = vsel %vm1256, %v1203, %v1355
      %1357 = vst [vmem:[#allocation2 + $0xb0] sm:$0x1] %v1356
      %v1358 = vld [vmem:[#allocation2] sm:$0xf]
      %v1359 = vld [vmem:[#allocation2 + $0x4] sm:$0xf]
      %v1360 = vld [vmem:[#allocation2 + $0x8] sm:$0x1]
      %v1361 = vld [vmem:[#allocation2 + $0xc] sm:$0xf]
      %v1362 = vld [vmem:[#allocation2 + $0x10] sm:$0xf]
      %v1363 = vld [vmem:[#allocation2 + $0x14] sm:$0x1]
      %v1364 = vld [vmem:[#allocation2 + $0x18] sm:$0xf]
      %v1365 = vld [vmem:[#allocation2 + $0x1c] sm:$0xf]
      %v1366 = vld [vmem:[#allocation2 + $0x20] sm:$0x1]
      %v1367 = vld [vmem:[#allocation2 + $0x24] sm:$0xf]
      %v1368 = vld [vmem:[#allocation2 + $0x28] sm:$0xf]
      %v1369 = vld [vmem:[#allocation2 + $0x2c] sm:$0x1]
      %v1370 = vld [vmem:[#allocation2 + $0x30] sm:$0xf]
      %v1371 = vld [vmem:[#allocation2 + $0x34] sm:$0xf]
      %v1372 = vld [vmem:[#allocation2 + $0x38] sm:$0x1]
      %v1373 = vld [vmem:[#allocation2 + $0x3c] sm:$0xf]
      %v1374 = vld [vmem:[#allocation2 + $0x40] sm:$0xf]
      %v1375 = vld [vmem:[#allocation2 + $0x44] sm:$0x1]
      %v1376 = vld [vmem:[#allocation2 + $0x48] sm:$0xf]
      %v1377 = vld [vmem:[#allocation2 + $0x4c] sm:$0xf]
      %v1378 = vld [vmem:[#allocation2 + $0x50] sm:$0x1]
      %v1379 = vld [vmem:[#allocation2 + $0x54] sm:$0xf]
      %v1380 = vld [vmem:[#allocation2 + $0x58] sm:$0xf]
      %v1381 = vld [vmem:[#allocation2 + $0x5c] sm:$0x1]
      %v1382 = vld [vmem:[#allocation2 + $0x60] sm:$0xf]
      %v1383 = vld [vmem:[#allocation2 + $0x64] sm:$0xf]
      %v1384 = vld [vmem:[#allocation2 + $0x68] sm:$0x1]
      %v1385 = vld [vmem:[#allocation2 + $0x6c] sm:$0xf]
      %v1386 = vld [vmem:[#allocation2 + $0x70] sm:$0xf]
      %v1387 = vld [vmem:[#allocation2 + $0x74] sm:$0x1]
      %v1388 = vld [vmem:[#allocation2 + $0x78] sm:$0xf]
      %v1389 = vld [vmem:[#allocation2 + $0x7c] sm:$0xf]
      %v1390 = vld [vmem:[#allocation2 + $0x80] sm:$0x1]
      %v1391 = vld [vmem:[#allocation2 + $0x84] sm:$0xf]
      %v1392 = vld [vmem:[#allocation2 + $0x88] sm:$0xf]
      %v1393 = vld [vmem:[#allocation2 + $0x8c] sm:$0x1]
      %v1394 = vld [vmem:[#allocation2 + $0x90] sm:$0xf]
      %v1395 = vld [vmem:[#allocation2 + $0x94] sm:$0xf]
      %v1396 = vld [vmem:[#allocation2 + $0x98] sm:$0x1]
      %v1397 = vld [vmem:[#allocation2 + $0x9c] sm:$0xf]
      %v1398 = vld [vmem:[#allocation2 + $0xa0] sm:$0xf]
      %v1399 = vld [vmem:[#allocation2 + $0xa4] sm:$0x1]
      %v1400 = vld [vmem:[#allocation2 + $0xa8] sm:$0xf]
      %v1401 = vld [vmem:[#allocation2 + $0xac] sm:$0xf]
      %v1402 = vld [vmem:[#allocation2 + $0xb0] sm:$0x1]
      %v1403 = vld [vmem:[#allocation2 + $0xb4] sm:$0xf]
      %v1404 = vld [vmem:[#allocation2 + $0xb8] sm:$0xf]
      %v1405 = vld [vmem:[#allocation2 + $0xbc] sm:$0x1]
      %v1454 = vrot.slane %v1358, 3
      %v1455 = vrot.slane %v1359, 3
      %v1456 = vrot.slane %v1360, 3
      %v1457 = vrot.slane %v1361, 3
      %v1458 = vrot.slane %v1362, 3
      %v1459 = vrot.slane %v1363, 3
      %v1460 = vrot.slane %v1364, 3
      %v1461 = vrot.slane %v1365, 3
      %v1462 = vrot.slane %v1366, 3
      %v1463 = vrot.slane %v1367, 3
      %v1464 = vrot.slane %v1368, 3
      %v1465 = vrot.slane %v1369, 3
      %v1466 = vrot.slane %v1370, 3
      %v1467 = vrot.slane %v1371, 3
      %v1468 = vrot.slane %v1372, 3
      %v1469 = vrot.slane %v1373, 3
      %v1470 = vrot.slane %v1374, 3
      %v1471 = vrot.slane %v1375, 3
      %v1472 = vrot.slane %v1376, 3
      %v1473 = vrot.slane %v1377, 3
      %v1474 = vrot.slane %v1378, 3
      %v1475 = vrot.slane %v1379, 3
      %v1476 = vrot.slane %v1380, 3
      %v1477 = vrot.slane %v1381, 3
      %v1478 = vrot.slane %v1382, 3
      %v1479 = vrot.slane %v1383, 3
      %v1480 = vrot.slane %v1384, 3
      %v1481 = vrot.slane %v1385, 3
      %v1482 = vrot.slane %v1386, 3
      %v1483 = vrot.slane %v1387, 3
      %v1484 = vrot.slane %v1388, 3
      %v1485 = vrot.slane %v1389, 3
      %v1486 = vrot.slane %v1390, 3
      %v1487 = vrot.slane %v1391, 3
      %v1488 = vrot.slane %v1392, 3
      %v1489 = vrot.slane %v1393, 3
      %v1490 = vrot.slane %v1394, 3
      %v1491 = vrot.slane %v1395, 3
      %v1492 = vrot.slane %v1396, 3
      %v1493 = vrot.slane %v1397, 3
      %v1494 = vrot.slane %v1398, 3
      %v1495 = vrot.slane %v1399, 3
      %v1496 = vrot.slane %v1400, 3
      %v1497 = vrot.slane %v1401, 3
      %v1498 = vrot.slane %v1402, 3
      %v1499 = vrot.slane %v1403, 3
      %v1500 = vrot.slane %v1404, 3
      %v1501 = vrot.slane %v1405, 3
      %vm1502 = vcmask 1040384
      %v1505 = vsel %vm1502, %v1358, %v1454
      %vm1506 = vcmask 1041409
      %v1507 = vsel %vm1506, %v1358, %v1454
      %v1509 = vrot.slane %v1507, 1
      %vm1510 = vcmask 1042434
      %v1511 = vsel %vm1510, %v1358, %v1454
      %v1513 = vrot.slane %v1511, 2
      %vm1514 = vcmask 1043459
      %v1515 = vsel %vm1514, %v1358, %v1454
      %v1517 = vrot.slane %v1515, 3
      %v1520 = vsel %vm1502, %v1359, %v1455
      %v1521 = vsel %vm1506, %v1359, %v1455
      %v1523 = vrot.slane %v1521, 1
      %v1524 = vsel %vm1510, %v1359, %v1455
      %v1526 = vrot.slane %v1524, 2
      %v1527 = vsel %vm1514, %v1359, %v1455
      %v1529 = vrot.slane %v1527, 3
      %v1532 = vsel %vm1502, %v1360, %v1456
      %v1535 = vsel %vm1502, %v1361, %v1457
      %v1536 = vsel %vm1506, %v1361, %v1457
      %v1538 = vrot.slane %v1536, 1
      %v1539 = vsel %vm1510, %v1361, %v1457
      %v1541 = vrot.slane %v1539, 2
      %v1542 = vsel %vm1514, %v1361, %v1457
      %v1544 = vrot.slane %v1542, 3
      %v1547 = vsel %vm1502, %v1362, %v1458
      %v1548 = vsel %vm1506, %v1362, %v1458
      %v1550 = vrot.slane %v1548, 1
      %v1551 = vsel %vm1510, %v1362, %v1458
      %v1553 = vrot.slane %v1551, 2
      %v1554 = vsel %vm1514, %v1362, %v1458
      %v1556 = vrot.slane %v1554, 3
      %v1559 = vsel %vm1502, %v1363, %v1459
      %v1562 = vsel %vm1502, %v1364, %v1460
      %v1563 = vsel %vm1506, %v1364, %v1460
      %v1565 = vrot.slane %v1563, 1
      %v1566 = vsel %vm1510, %v1364, %v1460
      %v1568 = vrot.slane %v1566, 2
      %v1569 = vsel %vm1514, %v1364, %v1460
      %v1571 = vrot.slane %v1569, 3
      %v1574 = vsel %vm1502, %v1365, %v1461
      %v1575 = vsel %vm1506, %v1365, %v1461
      %v1577 = vrot.slane %v1575, 1
      %v1578 = vsel %vm1510, %v1365, %v1461
      %v1580 = vrot.slane %v1578, 2
      %v1581 = vsel %vm1514, %v1365, %v1461
      %v1583 = vrot.slane %v1581, 3
      %v1586 = vsel %vm1502, %v1366, %v1462
      %v1589 = vsel %vm1502, %v1367, %v1463
      %v1590 = vsel %vm1506, %v1367, %v1463
      %v1592 = vrot.slane %v1590, 1
      %v1593 = vsel %vm1510, %v1367, %v1463
      %v1595 = vrot.slane %v1593, 2
      %v1596 = vsel %vm1514, %v1367, %v1463
      %v1598 = vrot.slane %v1596, 3
      %v1601 = vsel %vm1502, %v1368, %v1464
      %v1602 = vsel %vm1506, %v1368, %v1464
      %v1604 = vrot.slane %v1602, 1
      %v1605 = vsel %vm1510, %v1368, %v1464
      %v1607 = vrot.slane %v1605, 2
      %v1608 = vsel %vm1514, %v1368, %v1464
      %v1610 = vrot.slane %v1608, 3
      %v1613 = vsel %vm1502, %v1369, %v1465
      %v1616 = vsel %vm1502, %v1370, %v1466
      %v1617 = vsel %vm1506, %v1370, %v1466
      %v1619 = vrot.slane %v1617, 1
      %v1620 = vsel %vm1510, %v1370, %v1466
      %v1622 = vrot.slane %v1620, 2
      %v1623 = vsel %vm1514, %v1370, %v1466
      %v1625 = vrot.slane %v1623, 3
      %v1628 = vsel %vm1502, %v1371, %v1467
      %v1629 = vsel %vm1506, %v1371, %v1467
      %v1631 = vrot.slane %v1629, 1
      %v1632 = vsel %vm1510, %v1371, %v1467
      %v1634 = vrot.slane %v1632, 2
      %v1635 = vsel %vm1514, %v1371, %v1467
      %v1637 = vrot.slane %v1635, 3
      %v1640 = vsel %vm1502, %v1372, %v1468
      %v1643 = vsel %vm1502, %v1373, %v1469
      %v1644 = vsel %vm1506, %v1373, %v1469
      %v1646 = vrot.slane %v1644, 1
      %v1647 = vsel %vm1510, %v1373, %v1469
      %v1649 = vrot.slane %v1647, 2
      %v1650 = vsel %vm1514, %v1373, %v1469
      %v1652 = vrot.slane %v1650, 3
      %v1655 = vsel %vm1502, %v1374, %v1470
      %v1656 = vsel %vm1506, %v1374, %v1470
      %v1658 = vrot.slane %v1656, 1
      %v1659 = vsel %vm1510, %v1374, %v1470
      %v1661 = vrot.slane %v1659, 2
      %v1662 = vsel %vm1514, %v1374, %v1470
      %v1664 = vrot.slane %v1662, 3
      %v1667 = vsel %vm1502, %v1375, %v1471
      %v1670 = vsel %vm1502, %v1376, %v1472
      %v1671 = vsel %vm1506, %v1376, %v1472
      %v1673 = vrot.slane %v1671, 1
      %v1674 = vsel %vm1510, %v1376, %v1472
      %v1676 = vrot.slane %v1674, 2
      %v1677 = vsel %vm1514, %v1376, %v1472
      %v1679 = vrot.slane %v1677, 3
      %v1682 = vsel %vm1502, %v1377, %v1473
      %v1683 = vsel %vm1506, %v1377, %v1473
      %v1685 = vrot.slane %v1683, 1
      %v1686 = vsel %vm1510, %v1377, %v1473
      %v1688 = vrot.slane %v1686, 2
      %v1689 = vsel %vm1514, %v1377, %v1473
      %v1691 = vrot.slane %v1689, 3
      %v1694 = vsel %vm1502, %v1378, %v1474
      %v1697 = vsel %vm1502, %v1379, %v1475
      %v1698 = vsel %vm1506, %v1379, %v1475
      %v1700 = vrot.slane %v1698, 1
      %v1701 = vsel %vm1510, %v1379, %v1475
      %v1703 = vrot.slane %v1701, 2
      %v1704 = vsel %vm1514, %v1379, %v1475
      %v1706 = vrot.slane %v1704, 3
      %v1709 = vsel %vm1502, %v1380, %v1476
      %v1710 = vsel %vm1506, %v1380, %v1476
      %v1712 = vrot.slane %v1710, 1
      %v1713 = vsel %vm1510, %v1380, %v1476
      %v1715 = vrot.slane %v1713, 2
      %v1716 = vsel %vm1514, %v1380, %v1476
      %v1718 = vrot.slane %v1716, 3
      %v1721 = vsel %vm1502, %v1381, %v1477
      %v1724 = vsel %vm1502, %v1382, %v1478
      %v1725 = vsel %vm1506, %v1382, %v1478
      %v1727 = vrot.slane %v1725, 1
      %v1728 = vsel %vm1510, %v1382, %v1478
      %v1730 = vrot.slane %v1728, 2
      %v1731 = vsel %vm1514, %v1382, %v1478
      %v1733 = vrot.slane %v1731, 3
      %v1736 = vsel %vm1502, %v1383, %v1479
      %v1737 = vsel %vm1506, %v1383, %v1479
      %v1739 = vrot.slane %v1737, 1
      %v1740 = vsel %vm1510, %v1383, %v1479
      %v1742 = vrot.slane %v1740, 2
      %v1743 = vsel %vm1514, %v1383, %v1479
      %v1745 = vrot.slane %v1743, 3
      %v1748 = vsel %vm1502, %v1384, %v1480
      %v1751 = vsel %vm1502, %v1385, %v1481
      %v1752 = vsel %vm1506, %v1385, %v1481
      %v1754 = vrot.slane %v1752, 1
      %v1755 = vsel %vm1510, %v1385, %v1481
      %v1757 = vrot.slane %v1755, 2
      %v1758 = vsel %vm1514, %v1385, %v1481
      %v1760 = vrot.slane %v1758, 3
      %v1763 = vsel %vm1502, %v1386, %v1482
      %v1764 = vsel %vm1506, %v1386, %v1482
      %v1766 = vrot.slane %v1764, 1
      %v1767 = vsel %vm1510, %v1386, %v1482
      %v1769 = vrot.slane %v1767, 2
      %v1770 = vsel %vm1514, %v1386, %v1482
      %v1772 = vrot.slane %v1770, 3
      %v1775 = vsel %vm1502, %v1387, %v1483
      %v1778 = vsel %vm1502, %v1388, %v1484
      %v1779 = vsel %vm1506, %v1388, %v1484
      %v1781 = vrot.slane %v1779, 1
      %v1782 = vsel %vm1510, %v1388, %v1484
      %v1784 = vrot.slane %v1782, 2
      %v1785 = vsel %vm1514, %v1388, %v1484
      %v1787 = vrot.slane %v1785, 3
      %v1790 = vsel %vm1502, %v1389, %v1485
      %v1791 = vsel %vm1506, %v1389, %v1485
      %v1793 = vrot.slane %v1791, 1
      %v1794 = vsel %vm1510, %v1389, %v1485
      %v1796 = vrot.slane %v1794, 2
      %v1797 = vsel %vm1514, %v1389, %v1485
      %v1799 = vrot.slane %v1797, 3
      %v1802 = vsel %vm1502, %v1390, %v1486
      %v1805 = vsel %vm1502, %v1391, %v1487
      %v1806 = vsel %vm1506, %v1391, %v1487
      %v1808 = vrot.slane %v1806, 1
      %v1809 = vsel %vm1510, %v1391, %v1487
      %v1811 = vrot.slane %v1809, 2
      %v1812 = vsel %vm1514, %v1391, %v1487
      %v1814 = vrot.slane %v1812, 3
      %v1817 = vsel %vm1502, %v1392, %v1488
      %v1818 = vsel %vm1506, %v1392, %v1488
      %v1820 = vrot.slane %v1818, 1
      %v1821 = vsel %vm1510, %v1392, %v1488
      %v1823 = vrot.slane %v1821, 2
      %v1824 = vsel %vm1514, %v1392, %v1488
      %v1826 = vrot.slane %v1824, 3
      %v1829 = vsel %vm1502, %v1393, %v1489
      %v1832 = vsel %vm1502, %v1394, %v1490
      %v1833 = vsel %vm1506, %v1394, %v1490
      %v1835 = vrot.slane %v1833, 1
      %v1836 = vsel %vm1510, %v1394, %v1490
      %v1838 = vrot.slane %v1836, 2
      %v1839 = vsel %vm1514, %v1394, %v1490
      %v1841 = vrot.slane %v1839, 3
      %v1844 = vsel %vm1502, %v1395, %v1491
      %v1845 = vsel %vm1506, %v1395, %v1491
      %v1847 = vrot.slane %v1845, 1
      %v1848 = vsel %vm1510, %v1395, %v1491
      %v1850 = vrot.slane %v1848, 2
      %v1851 = vsel %vm1514, %v1395, %v1491
      %v1853 = vrot.slane %v1851, 3
      %v1856 = vsel %vm1502, %v1396, %v1492
      %v1859 = vsel %vm1502, %v1397, %v1493
      %v1860 = vsel %vm1506, %v1397, %v1493
      %v1862 = vrot.slane %v1860, 1
      %v1863 = vsel %vm1510, %v1397, %v1493
      %v1865 = vrot.slane %v1863, 2
      %v1866 = vsel %vm1514, %v1397, %v1493
      %v1868 = vrot.slane %v1866, 3
      %v1871 = vsel %vm1502, %v1398, %v1494
      %v1872 = vsel %vm1506, %v1398, %v1494
      %v1874 = vrot.slane %v1872, 1
      %v1875 = vsel %vm1510, %v1398, %v1494
      %v1877 = vrot.slane %v1875, 2
      %v1878 = vsel %vm1514, %v1398, %v1494
      %v1880 = vrot.slane %v1878, 3
      %v1883 = vsel %vm1502, %v1399, %v1495
      %v1886 = vsel %vm1502, %v1400, %v1496
      %v1887 = vsel %vm1506, %v1400, %v1496
      %v1889 = vrot.slane %v1887, 1
      %v1890 = vsel %vm1510, %v1400, %v1496
      %v1892 = vrot.slane %v1890, 2
      %v1893 = vsel %vm1514, %v1400, %v1496
      %v1895 = vrot.slane %v1893, 3
      %v1898 = vsel %vm1502, %v1401, %v1497
      %v1899 = vsel %vm1506, %v1401, %v1497
      %v1901 = vrot.slane %v1899, 1
      %v1902 = vsel %vm1510, %v1401, %v1497
      %v1904 = vrot.slane %v1902, 2
      %v1905 = vsel %vm1514, %v1401, %v1497
      %v1907 = vrot.slane %v1905, 3
      %v1910 = vsel %vm1502, %v1402, %v1498
      %v1913 = vsel %vm1502, %v1403, %v1499
      %v1914 = vsel %vm1506, %v1403, %v1499
      %v1916 = vrot.slane %v1914, 1
      %v1917 = vsel %vm1510, %v1403, %v1499
      %v1919 = vrot.slane %v1917, 2
      %v1920 = vsel %vm1514, %v1403, %v1499
      %v1922 = vrot.slane %v1920, 3
      %v1925 = vsel %vm1502, %v1404, %v1500
      %v1926 = vsel %vm1506, %v1404, %v1500
      %v1928 = vrot.slane %v1926, 1
      %v1929 = vsel %vm1510, %v1404, %v1500
      %v1931 = vrot.slane %v1929, 2
      %v1932 = vsel %vm1514, %v1404, %v1500
      %v1934 = vrot.slane %v1932, 3
      %v1937 = vsel %vm1502, %v1405, %v1501
      %v1938 = vld [vmem:[%s1] sm:$0xf]
      %v1939 = vld [vmem:[%s1 + $0x4] sm:$0xf]
      %v1940 = vld [vmem:[%s1 + $0x8] sm:$0xf]
      %1941 = vst [vmem:[#allocation1] ss:$9 sm:$0xff] %v1505
      %s1943 = scalar_lea.vmem [#allocation1], 1
      %1944 = vst [vmem:[%s1943] ss:$9 sm:$0xff] %v1509
      %s1946 = scalar_lea.vmem [#allocation1], 2
      %1947 = vst [vmem:[%s1946] ss:$9 sm:$0xff] %v1513
      %s1949 = scalar_lea.vmem [#allocation1], 3
      %1950 = vst [vmem:[%s1949] ss:$9 sm:$0xff] %v1517
      %s1951 = scalar_lea.vmem [#allocation1], 4
      %1952 = vst [vmem:[%s1951] ss:$9 sm:$0xff] %v1520
      %s1954 = scalar_lea.vmem [#allocation1], 5
      %1955 = vst [vmem:[%s1954] ss:$9 sm:$0xff] %v1523
      %s1957 = scalar_lea.vmem [#allocation1], 6
      %1958 = vst [vmem:[%s1957] ss:$9 sm:$0xff] %v1526
      %s1960 = scalar_lea.vmem [#allocation1], 7
      %1961 = vst [vmem:[%s1960] ss:$9 sm:$0xff] %v1529
      %v1962 = vld [vmem:[#allocation1] sm:$0xff]
      %1963 = vst [vmem:[#allocation1] ss:$9 sm:$0xff] %v1532
      %1964 = vst [vmem:[%s1943] ss:$9 sm:$0xff] %v1535
      %1966 = vst [vmem:[%s1946] ss:$9 sm:$0xff] %v1538
      %1968 = vst [vmem:[%s1949] ss:$9 sm:$0xff] %v1541
      %1970 = vst [vmem:[%s1951] ss:$9 sm:$0xff] %v1544
      %1971 = vst [vmem:[%s1954] ss:$9 sm:$0xff] %v1547
      %1973 = vst [vmem:[%s1957] ss:$9 sm:$0xff] %v1550
      %1975 = vst [vmem:[%s1960] ss:$9 sm:$0xff] %v1553
      %v1976 = vld [vmem:[#allocation1] sm:$0xff]
      %1978 = vst [vmem:[#allocation1] ss:$9 sm:$0xff] %v1556
      %1979 = vst [vmem:[%s1943] ss:$9 sm:$0xff] %v1559
      %1980 = vst [vmem:[%s1946] ss:$9 sm:$0xff] %v1562
      %1982 = vst [vmem:[%s1949] ss:$9 sm:$0xff] %v1565
      %1984 = vst [vmem:[%s1951] ss:$9 sm:$0xff] %v1568
      %1986 = vst [vmem:[%s1954] ss:$9 sm:$0xff] %v1571
      %1987 = vst [vmem:[%s1957] ss:$9 sm:$0xff] %v1574
      %1989 = vst [vmem:[%s1960] ss:$9 sm:$0xff] %v1577
      %v1990 = vld [vmem:[#allocation1] sm:$0xff]
      %1992 = vst [vmem:[#allocation1] ss:$9 sm:$0xff] %v1580
      %1994 = vst [vmem:[%s1943] ss:$9 sm:$0xff] %v1583
      %1995 = vst [vmem:[%s1946] ss:$9 sm:$0xff] %v1586
      %1996 = vst [vmem:[%s1949] ss:$9 sm:$0xff] %v1589
      %1998 = vst [vmem:[%s1951] ss:$9 sm:$0xff] %v1592
      %2000 = vst [vmem:[%s1954] ss:$9 sm:$0xff] %v1595
      %2002 = vst [vmem:[%s1957] ss:$9 sm:$0xff] %v1598
      %2003 = vst [vmem:[%s1960] ss:$9 sm:$0xff] %v1601
      %v2004 = vld [vmem:[#allocation1] sm:$0xff]
      %2006 = vst [vmem:[#allocation1] ss:$9 sm:$0xff] %v1604
      %2008 = vst [vmem:[%s1943] ss:$9 sm:$0xff] %v1607
      %2010 = vst [vmem:[%s1946] ss:$9 sm:$0xff] %v1610
      %2011 = vst [vmem:[%s1949] ss:$9 sm:$0xff] %v1613
      %2012 = vst [vmem:[%s1951] ss:$9 sm:$0xff] %v1616
      %2014 = vst [vmem:[%s1954] ss:$9 sm:$0xff] %v1619
      %2016 = vst [vmem:[%s1957] ss:$9 sm:$0xff] %v1622
      %2018 = vst [vmem:[%s1960] ss:$9 sm:$0xff] %v1625
      %v2019 = vld [vmem:[#allocation1] sm:$0xff]
      %2020 = vst [vmem:[#allocation1] ss:$9 sm:$0xff] %v1628
      %2022 = vst [vmem:[%s1943] ss:$9 sm:$0xff] %v1631
      %2024 = vst [vmem:[%s1946] ss:$9 sm:$0xff] %v1634
      %2026 = vst [vmem:[%s1949] ss:$9 sm:$0xff] %v1637
      %2027 = vst [vmem:[%s1951] ss:$9 sm:$0xff] %v1640
      %2028 = vst [vmem:[%s1954] ss:$9 sm:$0xff] %v1643
      %2030 = vst [vmem:[%s1957] ss:$9 sm:$0xff] %v1646
      %2032 = vst [vmem:[%s1960] ss:$9 sm:$0xff] %v1649
      %v2033 = vld [vmem:[#allocation1] sm:$0xff]
      %2035 = vst [vmem:[#allocation1] ss:$9 sm:$0xff] %v1652
      %2036 = vst [vmem:[%s1943] ss:$9 sm:$0xff] %v1655
      %2038 = vst [vmem:[%s1946] ss:$9 sm:$0xff] %v1658
      %2040 = vst [vmem:[%s1949] ss:$9 sm:$0xff] %v1661
      %2042 = vst [vmem:[%s1951] ss:$9 sm:$0xff] %v1664
      %2043 = vst [vmem:[%s1954] ss:$9 sm:$0xff] %v1667
      %2044 = vst [vmem:[%s1957] ss:$9 sm:$0xff] %v1670
      %2046 = vst [vmem:[%s1960] ss:$9 sm:$0xff] %v1673
      %v2047 = vld [vmem:[#allocation1] sm:$0xff]
      %2049 = vst [vmem:[#allocation1] ss:$9 sm:$0xff] %v1676
      %2051 = vst [vmem:[%s1943] ss:$9 sm:$0xff] %v1679
      %2052 = vst [vmem:[%s1946] ss:$9 sm:$0xff] %v1682
      %2054 = vst [vmem:[%s1949] ss:$9 sm:$0xff] %v1685
      %2056 = vst [vmem:[%s1951] ss:$9 sm:$0xff] %v1688
      %2058 = vst [vmem:[%s1954] ss:$9 sm:$0xff] %v1691
      %2059 = vst [vmem:[%s1957] ss:$9 sm:$0xff] %v1694
      %2060 = vst [vmem:[%s1960] ss:$9 sm:$0xff] %v1697
      %v2061 = vld [vmem:[#allocation1] sm:$0xff]
      %2063 = vst [vmem:[#allocation1] ss:$9 sm:$0xff] %v1700
      %2065 = vst [vmem:[%s1943] ss:$9 sm:$0xff] %v1703
      %2067 = vst [vmem:[%s1946] ss:$9 sm:$0xff] %v1706
      %2068 = vst [vmem:[%s1949] ss:$9 sm:$0xff] %v1709
      %2070 = vst [vmem:[%s1951] ss:$9 sm:$0xff] %v1712
      %2072 = vst [vmem:[%s1954] ss:$9 sm:$0xff] %v1715
      %2074 = vst [vmem:[%s1957] ss:$9 sm:$0xff] %v1718
      %2075 = vst [vmem:[%s1960] ss:$9 sm:$0xff] %v1721
      %v2076 = vld [vmem:[#allocation1] sm:$0xff]
      %2077 = vst [vmem:[#allocation1] ss:$9 sm:$0xff] %v1724
      %2079 = vst [vmem:[%s1943] ss:$9 sm:$0xff] %v1727
      %2081 = vst [vmem:[%s1946] ss:$9 sm:$0xff] %v1730
      %2083 = vst [vmem:[%s1949] ss:$9 sm:$0xff] %v1733
      %2084 = vst [vmem:[%s1951] ss:$9 sm:$0xff] %v1736
      %2086 = vst [vmem:[%s1954] ss:$9 sm:$0xff] %v1739
      %2088 = vst [vmem:[%s1957] ss:$9 sm:$0xff] %v1742
      %2090 = vst [vmem:[%s1960] ss:$9 sm:$0xff] %v1745
      %v2091 = vld [vmem:[#allocation1] sm:$0xff]
      %2092 = vst [vmem:[#allocation1] ss:$9 sm:$0xff] %v1748
      %2093 = vst [vmem:[%s1943] ss:$9 sm:$0xff] %v1751
      %2095 = vst [vmem:[%s1946] ss:$9 sm:$0xff] %v1754
      %2097 = vst [vmem:[%s1949] ss:$9 sm:$0xff] %v1757
      %2099 = vst [vmem:[%s1951] ss:$9 sm:$0xff] %v1760
      %2100 = vst [vmem:[%s1954] ss:$9 sm:$0xff] %v1763
      %2102 = vst [vmem:[%s1957] ss:$9 sm:$0xff] %v1766
      %2104 = vst [vmem:[%s1960] ss:$9 sm:$0xff] %v1769
      %v2105 = vld [vmem:[#allocation1] sm:$0xff]
      %2107 = vst [vmem:[#allocation1] ss:$9 sm:$0xff] %v1772
      %2108 = vst [vmem:[%s1943] ss:$9 sm:$0xff] %v1775
      %2109 = vst [vmem:[%s1946] ss:$9 sm:$0xff] %v1778
      %2111 = vst [vmem:[%s1949] ss:$9 sm:$0xff] %v1781
      %2113 = vst [vmem:[%s1951] ss:$9 sm:$0xff] %v1784
      %2115 = vst [vmem:[%s1954] ss:$9 sm:$0xff] %v1787
      %2116 = vst [vmem:[%s1957] ss:$9 sm:$0xff] %v1790
      %2118 = vst [vmem:[%s1960] ss:$9 sm:$0xff] %v1793
      %v2119 = vld [vmem:[#allocation1] sm:$0xff]
      %2121 = vst [vmem:[#allocation1] ss:$9 sm:$0xff] %v1796
      %2123 = vst [vmem:[%s1943] ss:$9 sm:$0xff] %v1799
      %2124 = vst [vmem:[%s1946] ss:$9 sm:$0xff] %v1802
      %2125 = vst [vmem:[%s1949] ss:$9 sm:$0xff] %v1805
      %2127 = vst [vmem:[%s1951] ss:$9 sm:$0xff] %v1808
      %2129 = vst [vmem:[%s1954] ss:$9 sm:$0xff] %v1811
      %2131 = vst [vmem:[%s1957] ss:$9 sm:$0xff] %v1814
      %2132 = vst [vmem:[%s1960] ss:$9 sm:$0xff] %v1817
      %v2133 = vld [vmem:[#allocation1] sm:$0xff]
      %2135 = vst [vmem:[#allocation1] ss:$9 sm:$0xff] %v1820
      %2137 = vst [vmem:[%s1943] ss:$9 sm:$0xff] %v1823
      %2139 = vst [vmem:[%s1946] ss:$9 sm:$0xff] %v1826
      %2140 = vst [vmem:[%s1949] ss:$9 sm:$0xff] %v1829
      %2141 = vst [vmem:[%s1951] ss:$9 sm:$0xff] %v1832
      %2143 = vst [vmem:[%s1954] ss:$9 sm:$0xff] %v1835
      %2145 = vst [vmem:[%s1957] ss:$9 sm:$0xff] %v1838
      %2147 = vst [vmem:[%s1960] ss:$9 sm:$0xff] %v1841
      %v2148 = vld [vmem:[#allocation1] sm:$0xff]
      %2149 = vst [vmem:[#allocation1] ss:$9 sm:$0xff] %v1844
      %2151 = vst [vmem:[%s1943] ss:$9 sm:$0xff] %v1847
      %2153 = vst [vmem:[%s1946] ss:$9 sm:$0xff] %v1850
      %2155 = vst [vmem:[%s1949] ss:$9 sm:$0xff] %v1853
      %2156 = vst [vmem:[%s1951] ss:$9 sm:$0xff] %v1856
      %2157 = vst [vmem:[%s1954] ss:$9 sm:$0xff] %v1859
      %2159 = vst [vmem:[%s1957] ss:$9 sm:$0xff] %v1862
      %2161 = vst [vmem:[%s1960] ss:$9 sm:$0xff] %v1865
      %v2162 = vld [vmem:[#allocation1] sm:$0xff]
      %2164 = vst [vmem:[#allocation1] ss:$9 sm:$0xff] %v1868
      %2165 = vst [vmem:[%s1943] ss:$9 sm:$0xff] %v1871
      %2167 = vst [vmem:[%s1946] ss:$9 sm:$0xff] %v1874
      %2169 = vst [vmem:[%s1949] ss:$9 sm:$0xff] %v1877
      %2171 = vst [vmem:[%s1951] ss:$9 sm:$0xff] %v1880
      %2172 = vst [vmem:[%s1954] ss:$9 sm:$0xff] %v1883
      %2173 = vst [vmem:[%s1957] ss:$9 sm:$0xff] %v1886
      %2175 = vst [vmem:[%s1960] ss:$9 sm:$0xff] %v1889
      %v2176 = vld [vmem:[#allocation1] sm:$0xff]
      %2178 = vst [vmem:[#allocation1] ss:$9 sm:$0xff] %v1892
      %2180 = vst [vmem:[%s1943] ss:$9 sm:$0xff] %v1895
      %2181 = vst [vmem:[%s1946] ss:$9 sm:$0xff] %v1898
      %2183 = vst [vmem:[%s1949] ss:$9 sm:$0xff] %v1901
      %2185 = vst [vmem:[%s1951] ss:$9 sm:$0xff] %v1904
      %2187 = vst [vmem:[%s1954] ss:$9 sm:$0xff] %v1907
      %2188 = vst [vmem:[%s1957] ss:$9 sm:$0xff] %v1910
      %2189 = vst [vmem:[%s1960] ss:$9 sm:$0xff] %v1913
      %v2190 = vld [vmem:[#allocation1] sm:$0xff]
      %2192 = vst [vmem:[#allocation1] ss:$9 sm:$0xff] %v1916
      %2194 = vst [vmem:[%s1943] ss:$9 sm:$0xff] %v1919
      %2196 = vst [vmem:[%s1946] ss:$9 sm:$0xff] %v1922
      %2197 = vst [vmem:[%s1949] ss:$9 sm:$0xff] %v1925
      %2199 = vst [vmem:[%s1951] ss:$9 sm:$0xff] %v1928
      %2201 = vst [vmem:[%s1954] ss:$9 sm:$0xff] %v1931
      %2203 = vst [vmem:[%s1957] ss:$9 sm:$0xff] %v1934
      %2204 = vst [vmem:[%s1960] ss:$9 sm:$0xff] %v1937
      %v2205 = vld [vmem:[#allocation1] sm:$0xff]
      %v2209 = vunpack.c.l.b16 %v1938
      %v2210 = vunpack.c.l.b16 %v1939
      %v2211 = vunpack.c.l.b16 %v1940
      %v2212 = vpack.c.b16 %v2210, %v2209
      %v2213 = vpack.c.b16 %v2211, %v2211
      %vm2215 = vcmask 195584
      %v2216 = vsel %vm2215, %v1962, 0
      %v2218 = vsel %vm2215, %v1976, 0
      %v2220 = vsel %vm2215, %v1990, 0
      %v2222 = vsel %vm2215, %v2004, 0
      %v2224 = vsel %vm2215, %v2019, 0
      %v2226 = vsel %vm2215, %v2033, 0
      %v2228 = vsel %vm2215, %v2047, 0
      %v2230 = vsel %vm2215, %v2061, 0
      %v2232 = vsel %vm2215, %v2076, 0
      %v2234 = vsel %vm2215, %v2091, 0
      %v2236 = vsel %vm2215, %v2105, 0
      %v2238 = vsel %vm2215, %v2119, 0
      %v2240 = vsel %vm2215, %v2133, 0
      %v2242 = vsel %vm2215, %v2148, 0
      %v2244 = vsel %vm2215, %v2162, 0
      %v2246 = vsel %vm2215, %v2176, 0
      %v2248 = vsel %vm2215, %v2190, 0
      %v2250 = vsel %vm2215, %v2205, 0
      %vm2252 = vcmask 1043456
      %v2254 = vsel %vm2252, %v2213, 0
      %2256 = vmatpush.bf16.msra.mxu0 0
      %2257 = vmatpush.bf16.msra.mxu0 0
      %2258 = vmatpush.bf16.msra.mxu0 0
      %2259 = vmatpush.bf16.msra.mxu0 0
      %2260 = vmatpush.bf16.msra.mxu0 0
      %2261 = vmatpush.bf16.msra.mxu0 0
      %2262 = vmatpush.bf16.msra.mxu0 %v2254
      %2263 = vmatpush.bf16.msra.mxu0 %v2212
      %2264 = vmatmul.bf16.gmra.mxu0 %v2216
      %v2265 = vpop.f32.mrf.mxu0
      %v2266 = vadd.f32 0.0, %v2265
      %v2267 = vpop.f32.mrf.mxu0
      %v2268 = vadd.f32 0.0, %v2267
      %2269 = vmatmul.bf16.gmra.mxu0 %v2218
      %v2270 = vpop.f32.mrf.mxu0
      %v2271 = vadd.f32 0.0, %v2270
      %v2272 = vpop.f32.mrf.mxu0
      %v2273 = vadd.f32 0.0, %v2272
      %2274 = vmatmul.bf16.gmra.mxu0 %v2220
      %v2275 = vpop.f32.mrf.mxu0
      %v2276 = vadd.f32 0.0, %v2275
      %v2277 = vpop.f32.mrf.mxu0
      %v2278 = vadd.f32 0.0, %v2277
      %2279 = vmatmul.bf16.gmra.mxu0 %v2222
      %v2280 = vpop.f32.mrf.mxu0
      %v2281 = vadd.f32 0.0, %v2280
      %v2282 = vpop.f32.mrf.mxu0
      %v2283 = vadd.f32 0.0, %v2282
      %2284 = vmatmul.bf16.gmra.mxu0 %v2224
      %v2285 = vpop.f32.mrf.mxu0
      %v2286 = vadd.f32 0.0, %v2285
      %v2287 = vpop.f32.mrf.mxu0
      %v2288 = vadd.f32 0.0, %v2287
      %2289 = vmatmul.bf16.gmra.mxu0 %v2226
      %v2290 = vpop.f32.mrf.mxu0
      %v2291 = vadd.f32 0.0, %v2290
      %v2292 = vpop.f32.mrf.mxu0
      %v2293 = vadd.f32 0.0, %v2292
      %2294 = vmatmul.bf16.gmra.mxu0 %v2228
      %v2295 = vpop.f32.mrf.mxu0
      %v2296 = vadd.f32 0.0, %v2295
      %v2297 = vpop.f32.mrf.mxu0
      %v2298 = vadd.f32 0.0, %v2297
      %2299 = vmatmul.bf16.gmra.mxu0 %v2230
      %v2300 = vpop.f32.mrf.mxu0
      %v2301 = vadd.f32 0.0, %v2300
      %v2302 = vpop.f32.mrf.mxu0
      %v2303 = vadd.f32 0.0, %v2302
      %2304 = vmatmul.bf16.gmra.mxu0 %v2232
      %v2305 = vpop.f32.mrf.mxu0
      %v2306 = vadd.f32 0.0, %v2305
      %v2307 = vpop.f32.mrf.mxu0
      %v2308 = vadd.f32 0.0, %v2307
      %2309 = vmatmul.bf16.gmra.mxu0 %v2234
      %v2310 = vpop.f32.mrf.mxu0
      %v2311 = vadd.f32 0.0, %v2310
      %v2312 = vpop.f32.mrf.mxu0
      %v2313 = vadd.f32 0.0, %v2312
      %2314 = vmatmul.bf16.gmra.mxu0 %v2236
      %v2315 = vpop.f32.mrf.mxu0
      %v2316 = vadd.f32 0.0, %v2315
      %v2317 = vpop.f32.mrf.mxu0
      %v2318 = vadd.f32 0.0, %v2317
      %2319 = vmatmul.bf16.gmra.mxu0 %v2238
      %v2320 = vpop.f32.mrf.mxu0
      %v2321 = vadd.f32 0.0, %v2320
      %v2322 = vpop.f32.mrf.mxu0
      %v2323 = vadd.f32 0.0, %v2322
      %2324 = vmatmul.bf16.gmra.mxu0 %v2240
      %v2325 = vpop.f32.mrf.mxu0
      %v2326 = vadd.f32 0.0, %v2325
      %v2327 = vpop.f32.mrf.mxu0
      %v2328 = vadd.f32 0.0, %v2327
      %2329 = vmatmul.bf16.gmra.mxu0 %v2242
      %v2330 = vpop.f32.mrf.mxu0
      %v2331 = vadd.f32 0.0, %v2330
      %v2332 = vpop.f32.mrf.mxu0
      %v2333 = vadd.f32 0.0, %v2332
      %2334 = vmatmul.bf16.gmra.mxu0 %v2244
      %v2335 = vpop.f32.mrf.mxu0
      %v2336 = vadd.f32 0.0, %v2335
      %v2337 = vpop.f32.mrf.mxu0
      %v2338 = vadd.f32 0.0, %v2337
      %2339 = vmatmul.bf16.gmra.mxu0 %v2246
      %v2340 = vpop.f32.mrf.mxu0
      %v2341 = vadd.f32 0.0, %v2340
      %v2342 = vpop.f32.mrf.mxu0
      %v2343 = vadd.f32 0.0, %v2342
      %2344 = vmatmul.bf16.gmra.mxu0 %v2248
      %v2345 = vpop.f32.mrf.mxu0
      %v2346 = vadd.f32 0.0, %v2345
      %v2347 = vpop.f32.mrf.mxu0
      %v2348 = vadd.f32 0.0, %v2347
      %2349 = vmatmul.bf16.gmra.mxu0 %v2250
      %v2350 = vpop.f32.mrf.mxu0
      %v2351 = vadd.f32 0.0, %v2350
      %v2352 = vpop.f32.mrf.mxu0
      %v2353 = vadd.f32 0.0, %v2352
      %2354 = vdwg.mxu0
      %v2391 = vrot.slane %v2266, 2
      %v2392 = vrot.slane %v2266, 4
      %v2393 = vrot.slane %v2266, 6
      %v2394 = vrot.slane %v2268, 2
      %v2395 = vrot.slane %v2268, 4
      %v2396 = vrot.slane %v2268, 6
      %v2397 = vrot.slane %v2271, 2
      %v2398 = vrot.slane %v2271, 4
      %v2399 = vrot.slane %v2271, 6
      %v2400 = vrot.slane %v2273, 2
      %v2401 = vrot.slane %v2273, 4
      %v2402 = vrot.slane %v2273, 6
      %v2403 = vrot.slane %v2276, 4
      %v2404 = vrot.slane %v2276, 6
      %v2405 = vrot.slane %v2278, 2
      %v2406 = vrot.slane %v2278, 4
      %v2407 = vrot.slane %v2278, 6
      %v2408 = vrot.slane %v2281, 2
      %v2409 = vrot.slane %v2281, 6
      %v2410 = vrot.slane %v2283, 2
      %v2411 = vrot.slane %v2283, 4
      %v2412 = vrot.slane %v2283, 6
      %v2413 = vrot.slane %v2286, 2
      %v2414 = vrot.slane %v2286, 4
      %v2415 = vrot.slane %v2288, 2
      %v2416 = vrot.slane %v2288, 4
      %v2417 = vrot.slane %v2288, 6
      %v2418 = vrot.slane %v2291, 2
      %v2419 = vrot.slane %v2291, 4
      %v2420 = vrot.slane %v2291, 6
      %v2421 = vrot.slane %v2293, 2
      %v2422 = vrot.slane %v2293, 4
      %v2423 = vrot.slane %v2293, 6
      %v2424 = vrot.slane %v2296, 2
      %v2425 = vrot.slane %v2296, 4
      %v2426 = vrot.slane %v2296, 6
      %v2427 = vrot.slane %v2298, 4
      %v2428 = vrot.slane %v2298, 6
      %v2429 = vrot.slane %v2301, 2
      %v2430 = vrot.slane %v2301, 4
      %v2431 = vrot.slane %v2301, 6
      %v2432 = vrot.slane %v2303, 2
      %v2433 = vrot.slane %v2303, 6
      %v2434 = vrot.slane %v2306, 2
      %v2435 = vrot.slane %v2306, 4
      %v2436 = vrot.slane %v2306, 6
      %v2437 = vrot.slane %v2308, 2
      %v2438 = vrot.slane %v2308, 4
      %v2439 = vrot.slane %v2311, 2
      %v2440 = vrot.slane %v2311, 4
      %v2441 = vrot.slane %v2311, 6
      %v2442 = vrot.slane %v2313, 2
      %v2443 = vrot.slane %v2313, 4
      %v2444 = vrot.slane %v2313, 6
      %v2445 = vrot.slane %v2316, 2
      %v2446 = vrot.slane %v2316, 4
      %v2447 = vrot.slane %v2316, 6
      %v2448 = vrot.slane %v2318, 2
      %v2449 = vrot.slane %v2318, 4
      %v2450 = vrot.slane %v2318, 6
      %v2451 = vrot.slane %v2321, 4
      %v2452 = vrot.slane %v2321, 6
      %v2453 = vrot.slane %v2323, 2
      %v2454 = vrot.slane %v2323, 4
      %v2455 = vrot.slane %v2323, 6
      %v2456 = vrot.slane %v2326, 2
      %v2457 = vrot.slane %v2326, 6
      %v2458 = vrot.slane %v2328, 2
      %v2459 = vrot.slane %v2328, 4
      %v2460 = vrot.slane %v2328, 6
      %v2461 = vrot.slane %v2331, 2
      %v2462 = vrot.slane %v2331, 4
      %v2463 = vrot.slane %v2333, 2
      %v2464 = vrot.slane %v2333, 4
      %v2465 = vrot.slane %v2333, 6
      %v2466 = vrot.slane %v2336, 2
      %v2467 = vrot.slane %v2336, 4
      %v2468 = vrot.slane %v2336, 6
      %v2469 = vrot.slane %v2338, 2
      %v2470 = vrot.slane %v2338, 4
      %v2471 = vrot.slane %v2338, 6
      %v2472 = vrot.slane %v2341, 2
      %v2473 = vrot.slane %v2341, 4
      %v2474 = vrot.slane %v2341, 6
      %v2475 = vrot.slane %v2343, 4
      %v2476 = vrot.slane %v2343, 6
      %v2477 = vrot.slane %v2346, 2
      %v2478 = vrot.slane %v2346, 4
      %v2479 = vrot.slane %v2346, 6
      %v2480 = vrot.slane %v2348, 2
      %v2481 = vrot.slane %v2348, 6
      %v2482 = vrot.slane %v2351, 2
      %v2483 = vrot.slane %v2351, 4
      %v2484 = vrot.slane %v2351, 6
      %v2485 = vrot.slane %v2353, 2
      %v2486 = vrot.slane %v2353, 4
      %s2583 = scalar_lea.vmem %s1, 12
      %v2584 = vld [vmem:[%s2583] sm:$0xf]
      %v2585 = vld [vmem:[%s2583 + $0x4] sm:$0xf]
      %v2586 = vld [vmem:[%s2583 + $0x8] sm:$0xf]
      %2587 = vst [vmem:[#allocation1] ss:$9 sm:$0xff] %v1505
      %s2588 = scalar_lea.vmem [#allocation1], 1
      %2589 = vst [vmem:[%s2588] ss:$9 sm:$0xff] %v1509
      %s2590 = scalar_lea.vmem [#allocation1], 2
      %2591 = vst [vmem:[%s2590] ss:$9 sm:$0xff] %v1513
      %s2592 = scalar_lea.vmem [#allocation1], 3
      %2593 = vst [vmem:[%s2592] ss:$9 sm:$0xff] %v1517
      %s2594 = scalar_lea.vmem [#allocation1], 4
      %2595 = vst [vmem:[%s2594] ss:$9 sm:$0xff] %v1520
      %s2596 = scalar_lea.vmem [#allocation1], 5
      %2597 = vst [vmem:[%s2596] ss:$9 sm:$0xff] %v1523
      %s2598 = scalar_lea.vmem [#allocation1], 6
      %2599 = vst [vmem:[%s2598] ss:$9 sm:$0xff] %v1526
      %s2600 = scalar_lea.vmem [#allocation1], 7
      %2601 = vst [vmem:[%s2600] ss:$9 sm:$0xff] %v1529
      %v2602 = vld [vmem:[#allocation1] sm:$0xff]
      %2603 = vst [vmem:[#allocation1] ss:$9 sm:$0xff] %v1532
      %2604 = vst [vmem:[%s2588] ss:$9 sm:$0xff] %v1535
      %2605 = vst [vmem:[%s2590] ss:$9 sm:$0xff] %v1538
      %2606 = vst [vmem:[%s2592] ss:$9 sm:$0xff] %v1541
      %2607 = vst [vmem:[%s2594] ss:$9 sm:$0xff] %v1544
      %2608 = vst [vmem:[%s2596] ss:$9 sm:$0xff] %v1547
      %2609 = vst [vmem:[%s2598] ss:$9 sm:$0xff] %v1550
      %2610 = vst [vmem:[%s2600] ss:$9 sm:$0xff] %v1553
      %v2611 = vld [vmem:[#allocation1] sm:$0xff]
      %2612 = vst [vmem:[#allocation1] ss:$9 sm:$0xff] %v1556
      %2613 = vst [vmem:[%s2588] ss:$9 sm:$0xff] %v1559
      %2614 = vst [vmem:[%s2590] ss:$9 sm:$0xff] %v1562
      %2615 = vst [vmem:[%s2592] ss:$9 sm:$0xff] %v1565
      %2616 = vst [vmem:[%s2594] ss:$9 sm:$0xff] %v1568
      %2617 = vst [vmem:[%s2596] ss:$9 sm:$0xff] %v1571
      %2618 = vst [vmem:[%s2598] ss:$9 sm:$0xff] %v1574
      %2619 = vst [vmem:[%s2600] ss:$9 sm:$0xff] %v1577
      %v2620 = vld [vmem:[#allocation1] sm:$0xff]
      %2621 = vst [vmem:[#allocation1] ss:$9 sm:$0xff] %v1580
      %2622 = vst [vmem:[%s2588] ss:$9 sm:$0xff] %v1583
      %2623 = vst [vmem:[%s2590] ss:$9 sm:$0xff] %v1586
      %2624 = vst [vmem:[%s2592] ss:$9 sm:$0xff] %v1589
      %2625 = vst [vmem:[%s2594] ss:$9 sm:$0xff] %v1592
      %2626 = vst [vmem:[%s2596] ss:$9 sm:$0xff] %v1595
      %2627 = vst [vmem:[%s2598] ss:$9 sm:$0xff] %v1598
      %2628 = vst [vmem:[%s2600] ss:$9 sm:$0xff] %v1601
      %v2629 = vld [vmem:[#allocation1] sm:$0xff]
      %2630 = vst [vmem:[#allocation1] ss:$9 sm:$0xff] %v1604
      %2631 = vst [vmem:[%s2588] ss:$9 sm:$0xff] %v1607
      %2632 = vst [vmem:[%s2590] ss:$9 sm:$0xff] %v1610
      %2633 = vst [vmem:[%s2592] ss:$9 sm:$0xff] %v1613
      %2634 = vst [vmem:[%s2594] ss:$9 sm:$0xff] %v1616
      %2635 = vst [vmem:[%s2596] ss:$9 sm:$0xff] %v1619
      %2636 = vst [vmem:[%s2598] ss:$9 sm:$0xff] %v1622
      %2637 = vst [vmem:[%s2600] ss:$9 sm:$0xff] %v1625
      %v2638 = vld [vmem:[#allocation1] sm:$0xff]
      %2639 = vst [vmem:[#allocation1] ss:$9 sm:$0xff] %v1628
      %2640 = vst [vmem:[%s2588] ss:$9 sm:$0xff] %v1631
      %2641 = vst [vmem:[%s2590] ss:$9 sm:$0xff] %v1634
      %2642 = vst [vmem:[%s2592] ss:$9 sm:$0xff] %v1637
      %2643 = vst [vmem:[%s2594] ss:$9 sm:$0xff] %v1640
      %2644 = vst [vmem:[%s2596] ss:$9 sm:$0xff] %v1643
      %2645 = vst [vmem:[%s2598] ss:$9 sm:$0xff] %v1646
      %2646 = vst [vmem:[%s2600] ss:$9 sm:$0xff] %v1649
      %v2647 = vld [vmem:[#allocation1] sm:$0xff]
      %2648 = vst [vmem:[#allocation1] ss:$9 sm:$0xff] %v1652
      %2649 = vst [vmem:[%s2588] ss:$9 sm:$0xff] %v1655
      %2650 = vst [vmem:[%s2590] ss:$9 sm:$0xff] %v1658
      %2651 = vst [vmem:[%s2592] ss:$9 sm:$0xff] %v1661
      %2652 = vst [vmem:[%s2594] ss:$9 sm:$0xff] %v1664
      %2653 = vst [vmem:[%s2596] ss:$9 sm:$0xff] %v1667
      %2654 = vst [vmem:[%s2598] ss:$9 sm:$0xff] %v1670
      %2655 = vst [vmem:[%s2600] ss:$9 sm:$0xff] %v1673
      %v2656 = vld [vmem:[#allocation1] sm:$0xff]
      %2657 = vst [vmem:[#allocation1] ss:$9 sm:$0xff] %v1676
      %2658 = vst [vmem:[%s2588] ss:$9 sm:$0xff] %v1679
      %2659 = vst [vmem:[%s2590] ss:$9 sm:$0xff] %v1682
      %2660 = vst [vmem:[%s2592] ss:$9 sm:$0xff] %v1685
      %2661 = vst [vmem:[%s2594] ss:$9 sm:$0xff] %v1688
      %2662 = vst [vmem:[%s2596] ss:$9 sm:$0xff] %v1691
      %2663 = vst [vmem:[%s2598] ss:$9 sm:$0xff] %v1694
      %2664 = vst [vmem:[%s2600] ss:$9 sm:$0xff] %v1697
      %v2665 = vld [vmem:[#allocation1] sm:$0xff]
      %2666 = vst [vmem:[#allocation1] ss:$9 sm:$0xff] %v1700
      %2667 = vst [vmem:[%s2588] ss:$9 sm:$0xff] %v1703
      %2668 = vst [vmem:[%s2590] ss:$9 sm:$0xff] %v1706
      %2669 = vst [vmem:[%s2592] ss:$9 sm:$0xff] %v1709
      %2670 = vst [vmem:[%s2594] ss:$9 sm:$0xff] %v1712
      %2671 = vst [vmem:[%s2596] ss:$9 sm:$0xff] %v1715
      %2672 = vst [vmem:[%s2598] ss:$9 sm:$0xff] %v1718
      %2673 = vst [vmem:[%s2600] ss:$9 sm:$0xff] %v1721
      %v2674 = vld [vmem:[#allocation1] sm:$0xff]
      %2675 = vst [vmem:[#allocation1] ss:$9 sm:$0xff] %v1724
      %2676 = vst [vmem:[%s2588] ss:$9 sm:$0xff] %v1727
      %2677 = vst [vmem:[%s2590] ss:$9 sm:$0xff] %v1730
      %2678 = vst [vmem:[%s2592] ss:$9 sm:$0xff] %v1733
      %2679 = vst [vmem:[%s2594] ss:$9 sm:$0xff] %v1736
      %2680 = vst [vmem:[%s2596] ss:$9 sm:$0xff] %v1739
      %2681 = vst [vmem:[%s2598] ss:$9 sm:$0xff] %v1742
      %2682 = vst [vmem:[%s2600] ss:$9 sm:$0xff] %v1745
      %v2683 = vld [vmem:[#allocation1] sm:$0xff]
      %2684 = vst [vmem:[#allocation1] ss:$9 sm:$0xff] %v1748
      %2685 = vst [vmem:[%s2588] ss:$9 sm:$0xff] %v1751
      %2686 = vst [vmem:[%s2590] ss:$9 sm:$0xff] %v1754
      %2687 = vst [vmem:[%s2592] ss:$9 sm:$0xff] %v1757
      %2688 = vst [vmem:[%s2594] ss:$9 sm:$0xff] %v1760
      %2689 = vst [vmem:[%s2596] ss:$9 sm:$0xff] %v1763
      %2690 = vst [vmem:[%s2598] ss:$9 sm:$0xff] %v1766
      %2691 = vst [vmem:[%s2600] ss:$9 sm:$0xff] %v1769
      %v2692 = vld [vmem:[#allocation1] sm:$0xff]
      %2693 = vst [vmem:[#allocation1] ss:$9 sm:$0xff] %v1772
      %2694 = vst [vmem:[%s2588] ss:$9 sm:$0xff] %v1775
      %2695 = vst [vmem:[%s2590] ss:$9 sm:$0xff] %v1778
      %2696 = vst [vmem:[%s2592] ss:$9 sm:$0xff] %v1781
      %2697 = vst [vmem:[%s2594] ss:$9 sm:$0xff] %v1784
      %2698 = vst [vmem:[%s2596] ss:$9 sm:$0xff] %v1787
      %2699 = vst [vmem:[%s2598] ss:$9 sm:$0xff] %v1790
      %2700 = vst [vmem:[%s2600] ss:$9 sm:$0xff] %v1793
      %v2701 = vld [vmem:[#allocation1] sm:$0xff]
      %2702 = vst [vmem:[#allocation1] ss:$9 sm:$0xff] %v1796
      %2703 = vst [vmem:[%s2588] ss:$9 sm:$0xff] %v1799
      %2704 = vst [vmem:[%s2590] ss:$9 sm:$0xff] %v1802
      %2705 = vst [vmem:[%s2592] ss:$9 sm:$0xff] %v1805
      %2706 = vst [vmem:[%s2594] ss:$9 sm:$0xff] %v1808
      %2707 = vst [vmem:[%s2596] ss:$9 sm:$0xff] %v1811
      %2708 = vst [vmem:[%s2598] ss:$9 sm:$0xff] %v1814
      %2709 = vst [vmem:[%s2600] ss:$9 sm:$0xff] %v1817
      %v2710 = vld [vmem:[#allocation1] sm:$0xff]
      %2711 = vst [vmem:[#allocation1] ss:$9 sm:$0xff] %v1820
      %2712 = vst [vmem:[%s2588] ss:$9 sm:$0xff] %v1823
      %2713 = vst [vmem:[%s2590] ss:$9 sm:$0xff] %v1826
      %2714 = vst [vmem:[%s2592] ss:$9 sm:$0xff] %v1829
      %2715 = vst [vmem:[%s2594] ss:$9 sm:$0xff] %v1832
      %2716 = vst [vmem:[%s2596] ss:$9 sm:$0xff] %v1835
      %2717 = vst [vmem:[%s2598] ss:$9 sm:$0xff] %v1838
      %2718 = vst [vmem:[%s2600] ss:$9 sm:$0xff] %v1841
      %v2719 = vld [vmem:[#allocation1] sm:$0xff]
      %2720 = vst [vmem:[#allocation1] ss:$9 sm:$0xff] %v1844
      %2721 = vst [vmem:[%s2588] ss:$9 sm:$0xff] %v1847
      %2722 = vst [vmem:[%s2590] ss:$9 sm:$0xff] %v1850
      %2723 = vst [vmem:[%s2592] ss:$9 sm:$0xff] %v1853
      %2724 = vst [vmem:[%s2594] ss:$9 sm:$0xff] %v1856
      %2725 = vst [vmem:[%s2596] ss:$9 sm:$0xff] %v1859
      %2726 = vst [vmem:[%s2598] ss:$9 sm:$0xff] %v1862
      %2727 = vst [vmem:[%s2600] ss:$9 sm:$0xff] %v1865
      %v2728 = vld [vmem:[#allocation1] sm:$0xff]
      %2729 = vst [vmem:[#allocation1] ss:$9 sm:$0xff] %v1868
      %2730 = vst [vmem:[%s2588] ss:$9 sm:$0xff] %v1871
      %2731 = vst [vmem:[%s2590] ss:$9 sm:$0xff] %v1874
      %2732 = vst [vmem:[%s2592] ss:$9 sm:$0xff] %v1877
      %2733 = vst [vmem:[%s2594] ss:$9 sm:$0xff] %v1880
      %2734 = vst [vmem:[%s2596] ss:$9 sm:$0xff] %v1883
      %2735 = vst [vmem:[%s2598] ss:$9 sm:$0xff] %v1886
      %2736 = vst [vmem:[%s2600] ss:$9 sm:$0xff] %v1889
      %v2737 = vld [vmem:[#allocation1] sm:$0xff]
      %2738 = vst [vmem:[#allocation1] ss:$9 sm:$0xff] %v1892
      %2739 = vst [vmem:[%s2588] ss:$9 sm:$0xff] %v1895
      %2740 = vst [vmem:[%s2590] ss:$9 sm:$0xff] %v1898
      %2741 = vst [vmem:[%s2592] ss:$9 sm:$0xff] %v1901
      %2742 = vst [vmem:[%s2594] ss:$9 sm:$0xff] %v1904
      %2743 = vst [vmem:[%s2596] ss:$9 sm:$0xff] %v1907
      %2744 = vst [vmem:[%s2598] ss:$9 sm:$0xff] %v1910
      %2745 = vst [vmem:[%s2600] ss:$9 sm:$0xff] %v1913
      %v2746 = vld [vmem:[#allocation1] sm:$0xff]
      %2747 = vst [vmem:[#allocation1] ss:$9 sm:$0xff] %v1916
      %2748 = vst [vmem:[%s2588] ss:$9 sm:$0xff] %v1919
      %2749 = vst [vmem:[%s2590] ss:$9 sm:$0xff] %v1922
      %2750 = vst [vmem:[%s2592] ss:$9 sm:$0xff] %v1925
      %2751 = vst [vmem:[%s2594] ss:$9 sm:$0xff] %v1928
      %2752 = vst [vmem:[%s2596] ss:$9 sm:$0xff] %v1931
      %2753 = vst [vmem:[%s2598] ss:$9 sm:$0xff] %v1934
      %2754 = vst [vmem:[%s2600] ss:$9 sm:$0xff] %v1937
      %v2755 = vld [vmem:[#allocation1] sm:$0xff]
      %v2759 = vunpack.c.l.b16 %v2584
      %v2760 = vunpack.c.l.b16 %v2585
      %v2761 = vunpack.c.l.b16 %v2586
      %v2762 = vpack.c.b16 %v2760, %v2759
      %v2763 = vpack.c.b16 %v2761, %v2761
      %v2765 = vsel %vm2215, %v2602, 0
      %v2767 = vsel %vm2215, %v2611, 0
      %v2769 = vsel %vm2215, %v2620, 0
      %v2771 = vsel %vm2215, %v2629, 0
      %v2773 = vsel %vm2215, %v2638, 0
      %v2775 = vsel %vm2215, %v2647, 0
      %v2777 = vsel %vm2215, %v2656, 0
      %v2779 = vsel %vm2215, %v2665, 0
      %v2781 = vsel %vm2215, %v2674, 0
      %v2783 = vsel %vm2215, %v2683, 0
      %v2785 = vsel %vm2215, %v2692, 0
      %v2787 = vsel %vm2215, %v2701, 0
      %v2789 = vsel %vm2215, %v2710, 0
      %v2791 = vsel %vm2215, %v2719, 0
      %v2793 = vsel %vm2215, %v2728, 0
      %v2795 = vsel %vm2215, %v2737, 0
      %v2797 = vsel %vm2215, %v2746, 0
      %v2799 = vsel %vm2215, %v2755, 0
      %v2802 = vsel %vm2252, %v2763, 0
      %2804 = vmatpush.bf16.msra.mxu0 0
      %2805 = vmatpush.bf16.msra.mxu0 0
      %2806 = vmatpush.bf16.msra.mxu0 0
      %2807 = vmatpush.bf16.msra.mxu0 0
      %2808 = vmatpush.bf16.msra.mxu0 0
      %2809 = vmatpush.bf16.msra.mxu0 0
      %2810 = vmatpush.bf16.msra.mxu0 %v2802
      %2811 = vmatpush.bf16.msra.mxu0 %v2762
      %2812 = vmatmul.bf16.gmra.mxu0 %v2765
      %v2813 = vpop.f32.mrf.mxu0
      %v2814 = vadd.f32 0.0, %v2813
      %v2815 = vpop.f32.mrf.mxu0
      %v2816 = vadd.f32 0.0, %v2815
      %2817 = vmatmul.bf16.gmra.mxu0 %v2767
      %v2818 = vpop.f32.mrf.mxu0
      %v2819 = vadd.f32 0.0, %v2818
      %v2820 = vpop.f32.mrf.mxu0
      %v2821 = vadd.f32 0.0, %v2820
      %2822 = vmatmul.bf16.gmra.mxu0 %v2769
      %v2823 = vpop.f32.mrf.mxu0
      %v2824 = vadd.f32 0.0, %v2823
      %v2825 = vpop.f32.mrf.mxu0
      %v2826 = vadd.f32 0.0, %v2825
      %2827 = vmatmul.bf16.gmra.mxu0 %v2771
      %v2828 = vpop.f32.mrf.mxu0
      %v2829 = vadd.f32 0.0, %v2828
      %v2830 = vpop.f32.mrf.mxu0
      %v2831 = vadd.f32 0.0, %v2830
      %2832 = vmatmul.bf16.gmra.mxu0 %v2773
      %v2833 = vpop.f32.mrf.mxu0
      %v2834 = vadd.f32 0.0, %v2833
      %v2835 = vpop.f32.mrf.mxu0
      %v2836 = vadd.f32 0.0, %v2835
      %2837 = vmatmul.bf16.gmra.mxu0 %v2775
      %v2838 = vpop.f32.mrf.mxu0
      %v2839 = vadd.f32 0.0, %v2838
      %v2840 = vpop.f32.mrf.mxu0
      %v2841 = vadd.f32 0.0, %v2840
      %2842 = vmatmul.bf16.gmra.mxu0 %v2777
      %v2843 = vpop.f32.mrf.mxu0
      %v2844 = vadd.f32 0.0, %v2843
      %v2845 = vpop.f32.mrf.mxu0
      %v2846 = vadd.f32 0.0, %v2845
      %2847 = vmatmul.bf16.gmra.mxu0 %v2779
      %v2848 = vpop.f32.mrf.mxu0
      %v2849 = vadd.f32 0.0, %v2848
      %v2850 = vpop.f32.mrf.mxu0
      %v2851 = vadd.f32 0.0, %v2850
      %2852 = vmatmul.bf16.gmra.mxu0 %v2781
      %v2853 = vpop.f32.mrf.mxu0
      %v2854 = vadd.f32 0.0, %v2853
      %v2855 = vpop.f32.mrf.mxu0
      %v2856 = vadd.f32 0.0, %v2855
      %2857 = vmatmul.bf16.gmra.mxu0 %v2783
      %v2858 = vpop.f32.mrf.mxu0
      %v2859 = vadd.f32 0.0, %v2858
      %v2860 = vpop.f32.mrf.mxu0
      %v2861 = vadd.f32 0.0, %v2860
      %2862 = vmatmul.bf16.gmra.mxu0 %v2785
      %v2863 = vpop.f32.mrf.mxu0
      %v2864 = vadd.f32 0.0, %v2863
      %v2865 = vpop.f32.mrf.mxu0
      %v2866 = vadd.f32 0.0, %v2865
      %2867 = vmatmul.bf16.gmra.mxu0 %v2787
      %v2868 = vpop.f32.mrf.mxu0
      %v2869 = vadd.f32 0.0, %v2868
      %v2870 = vpop.f32.mrf.mxu0
      %v2871 = vadd.f32 0.0, %v2870
      %2872 = vmatmul.bf16.gmra.mxu0 %v2789
      %v2873 = vpop.f32.mrf.mxu0
      %v2874 = vadd.f32 0.0, %v2873
      %v2875 = vpop.f32.mrf.mxu0
      %v2876 = vadd.f32 0.0, %v2875
      %2877 = vmatmul.bf16.gmra.mxu0 %v2791
      %v2878 = vpop.f32.mrf.mxu0
      %v2879 = vadd.f32 0.0, %v2878
      %v2880 = vpop.f32.mrf.mxu0
      %v2881 = vadd.f32 0.0, %v2880
      %2882 = vmatmul.bf16.gmra.mxu0 %v2793
      %v2883 = vpop.f32.mrf.mxu0
      %v2884 = vadd.f32 0.0, %v2883
      %v2885 = vpop.f32.mrf.mxu0
      %v2886 = vadd.f32 0.0, %v2885
      %2887 = vmatmul.bf16.gmra.mxu0 %v2795
      %v2888 = vpop.f32.mrf.mxu0
      %v2889 = vadd.f32 0.0, %v2888
      %v2890 = vpop.f32.mrf.mxu0
      %v2891 = vadd.f32 0.0, %v2890
      %2892 = vmatmul.bf16.gmra.mxu0 %v2797
      %v2893 = vpop.f32.mrf.mxu0
      %v2894 = vadd.f32 0.0, %v2893
      %v2895 = vpop.f32.mrf.mxu0
      %v2896 = vadd.f32 0.0, %v2895
      %2897 = vmatmul.bf16.gmra.mxu0 %v2799
      %v2898 = vpop.f32.mrf.mxu0
      %v2899 = vadd.f32 0.0, %v2898
      %v2900 = vpop.f32.mrf.mxu0
      %v2901 = vadd.f32 0.0, %v2900
      %2902 = vdwg.mxu0
      %v2939 = vrot.slane %v2814, 2
      %v2940 = vrot.slane %v2814, 4
      %v2941 = vrot.slane %v2814, 6
      %v2942 = vrot.slane %v2816, 2
      %v2943 = vrot.slane %v2816, 4
      %v2944 = vrot.slane %v2816, 6
      %v2945 = vrot.slane %v2819, 2
      %v2946 = vrot.slane %v2819, 4
      %v2947 = vrot.slane %v2819, 6
      %v2948 = vrot.slane %v2821, 2
      %v2949 = vrot.slane %v2821, 4
      %v2950 = vrot.slane %v2821, 6
      %v2951 = vrot.slane %v2824, 2
      %v2952 = vrot.slane %v2824, 4
      %v2953 = vrot.slane %v2824, 6
      %v2954 = vrot.slane %v2826, 2
      %v2955 = vrot.slane %v2826, 4
      %v2956 = vrot.slane %v2826, 6
      %v2957 = vrot.slane %v2829, 2
      %v2958 = vrot.slane %v2829, 4
      %v2959 = vrot.slane %v2829, 6
      %v2960 = vrot.slane %v2831, 2
      %v2961 = vrot.slane %v2831, 4
      %v2962 = vrot.slane %v2831, 6
      %v2963 = vrot.slane %v2834, 2
      %v2964 = vrot.slane %v2834, 4
      %v2965 = vrot.slane %v2834, 6
      %v2966 = vrot.slane %v2836, 2
      %v2967 = vrot.slane %v2836, 4
      %v2968 = vrot.slane %v2836, 6
      %v2969 = vrot.slane %v2839, 2
      %v2970 = vrot.slane %v2839, 4
      %v2971 = vrot.slane %v2839, 6
      %v2972 = vrot.slane %v2841, 2
      %v2973 = vrot.slane %v2841, 4
      %v2974 = vrot.slane %v2841, 6
      %v2975 = vrot.slane %v2844, 2
      %v2976 = vrot.slane %v2844, 4
      %v2977 = vrot.slane %v2844, 6
      %v2978 = vrot.slane %v2846, 2
      %v2979 = vrot.slane %v2846, 4
      %v2980 = vrot.slane %v2846, 6
      %v2981 = vrot.slane %v2849, 2
      %v2982 = vrot.slane %v2849, 4
      %v2983 = vrot.slane %v2849, 6
      %v2984 = vrot.slane %v2851, 2
      %v2985 = vrot.slane %v2851, 4
      %v2986 = vrot.slane %v2851, 6
      %v2987 = vrot.slane %v2854, 2
      %v2988 = vrot.slane %v2854, 4
      %v2989 = vrot.slane %v2854, 6
      %v2990 = vrot.slane %v2856, 2
      %v2991 = vrot.slane %v2856, 4
      %v2992 = vrot.slane %v2856, 6
      %v2993 = vrot.slane %v2859, 2
      %v2994 = vrot.slane %v2859, 4
      %v2995 = vrot.slane %v2859, 6
      %v2996 = vrot.slane %v2861, 2
      %v2997 = vrot.slane %v2861, 4
      %v2998 = vrot.slane %v2861, 6
      %v2999 = vrot.slane %v2864, 2
      %v3000 = vrot.slane %v2864, 4
      %v3001 = vrot.slane %v2864, 6
      %v3002 = vrot.slane %v2866, 2
      %v3003 = vrot.slane %v2866, 4
      %v3004 = vrot.slane %v2866, 6
      %v3005 = vrot.slane %v2869, 2
      %v3006 = vrot.slane %v2869, 4
      %v3007 = vrot.slane %v2869, 6
      %v3008 = vrot.slane %v2871, 2
      %v3009 = vrot.slane %v2871, 4
      %v3010 = vrot.slane %v2871, 6
      %v3011 = vrot.slane %v2874, 2
      %v3012 = vrot.slane %v2874, 4
      %v3013 = vrot.slane %v2874, 6
      %v3014 = vrot.slane %v2876, 2
      %v3015 = vrot.slane %v2876, 4
      %v3016 = vrot.slane %v2876, 6
      %v3017 = vrot.slane %v2879, 2
      %v3018 = vrot.slane %v2879, 4
      %v3019 = vrot.slane %v2879, 6
      %v3020 = vrot.slane %v2881, 2
      %v3021 = vrot.slane %v2881, 4
      %v3022 = vrot.slane %v2881, 6
      %v3023 = vrot.slane %v2884, 2
      %v3024 = vrot.slane %v2884, 4
      %v3025 = vrot.slane %v2884, 6
      %v3026 = vrot.slane %v2886, 2
      %v3027 = vrot.slane %v2886, 4
      %v3028 = vrot.slane %v2886, 6
      %v3029 = vrot.slane %v2889, 2
      %v3030 = vrot.slane %v2889, 4
      %v3031 = vrot.slane %v2889, 6
      %v3032 = vrot.slane %v2891, 2
      %v3033 = vrot.slane %v2891, 4
      %v3034 = vrot.slane %v2891, 6
      %v3035 = vrot.slane %v2894, 2
      %v3036 = vrot.slane %v2894, 4
      %v3037 = vrot.slane %v2894, 6
      %v3038 = vrot.slane %v2896, 2
      %v3039 = vrot.slane %v2896, 4
      %v3040 = vrot.slane %v2896, 6
      %v3041 = vrot.slane %v2899, 2
      %v3042 = vrot.slane %v2899, 4
      %v3043 = vrot.slane %v2899, 6
      %v3044 = vrot.slane %v2901, 2
      %v3045 = vrot.slane %v2901, 4
      %v3046 = vrot.slane %v2901, 6
      %vm3047 = vmor %vm1502, %vm1510
      %vm3048 = vcmask 1044484
      %vm3049 = vmor %vm3047, %vm3048
      %vm3050 = vcmask 1046534
      %vm3051 = vmor %vm3049, %vm3050
      %v3052 = vrot.slane %v2814, 7
      %v3053 = vrot.slane %v3052, 2
      %v3054 = vrot.slane %v2939, 7
      %v3055 = vsel %vm3051, %v3053, %v3054
      %v3056 = vrot.slane %v3054, 2
      %v3057 = vrot.slane %v2940, 7
      %v3058 = vsel %vm3051, %v3056, %v3057
      %v3059 = vrot.slane %v3057, 2
      %v3060 = vrot.slane %v2941, 7
      %v3061 = vsel %vm3051, %v3059, %v3060
      %v3062 = vrot.slane %v3060, 2
      %v3063 = vrot.slane %v2816, 7
      %v3064 = vsel %vm3051, %v3062, %v3063
      %v3065 = vrot.slane %v3063, 2
      %v3066 = vrot.slane %v2942, 7
      %v3067 = vsel %vm3051, %v3065, %v3066
      %v3068 = vrot.slane %v3066, 2
      %v3069 = vrot.slane %v2943, 7
      %v3070 = vsel %vm3051, %v3068, %v3069
      %v3071 = vrot.slane %v3069, 2
      %v3072 = vrot.slane %v2944, 7
      %v3073 = vsel %vm3051, %v3071, %v3072
      %v3074 = vrot.slane %v3072, 2
      %v3075 = vrot.slane %v2819, 7
      %v3076 = vsel %vm3051, %v3074, %v3075
      %v3077 = vrot.slane %v2945, 7
      %v3078 = vrot.slane %v3077, 2
      %v3079 = vrot.slane %v2946, 7
      %v3080 = vsel %vm3051, %v3078, %v3079
      %v3081 = vrot.slane %v3079, 2
      %v3082 = vrot.slane %v2947, 7
      %v3083 = vsel %vm3051, %v3081, %v3082
      %v3084 = vrot.slane %v3082, 2
      %v3085 = vrot.slane %v2821, 7
      %v3086 = vsel %vm3051, %v3084, %v3085
      %v3087 = vrot.slane %v3085, 2
      %v3088 = vrot.slane %v2948, 7
      %v3089 = vsel %vm3051, %v3087, %v3088
      %v3090 = vrot.slane %v3088, 2
      %v3091 = vrot.slane %v2949, 7
      %v3092 = vsel %vm3051, %v3090, %v3091
      %v3093 = vrot.slane %v3091, 2
      %v3094 = vrot.slane %v2950, 7
      %v3095 = vsel %vm3051, %v3093, %v3094
      %v3096 = vrot.slane %v3094, 2
      %v3097 = vrot.slane %v2824, 7
      %v3098 = vsel %vm3051, %v3096, %v3097
      %v3099 = vrot.slane %v3097, 2
      %v3100 = vrot.slane %v2951, 7
      %v3101 = vsel %vm3051, %v3099, %v3100
      %v3102 = vrot.slane %v2952, 7
      %v3103 = vrot.slane %v3102, 2
      %v3104 = vrot.slane %v2953, 7
      %v3105 = vsel %vm3051, %v3103, %v3104
      %v3106 = vrot.slane %v3104, 2
      %v3107 = vrot.slane %v2826, 7
      %v3108 = vsel %vm3051, %v3106, %v3107
      %v3109 = vrot.slane %v3107, 2
      %v3110 = vrot.slane %v2954, 7
      %v3111 = vsel %vm3051, %v3109, %v3110
      %v3112 = vrot.slane %v3110, 2
      %v3113 = vrot.slane %v2955, 7
      %v3114 = vsel %vm3051, %v3112, %v3113
      %v3115 = vrot.slane %v3113, 2
      %v3116 = vrot.slane %v2956, 7
      %v3117 = vsel %vm3051, %v3115, %v3116
      %v3118 = vrot.slane %v3116, 2
      %v3119 = vrot.slane %v2829, 7
      %v3120 = vsel %vm3051, %v3118, %v3119
      %v3121 = vrot.slane %v3119, 2
      %v3122 = vrot.slane %v2957, 7
      %v3123 = vsel %vm3051, %v3121, %v3122
      %v3124 = vrot.slane %v3122, 2
      %v3125 = vrot.slane %v2958, 7
      %v3126 = vsel %vm3051, %v3124, %v3125
      %v3127 = vrot.slane %v2959, 7
      %v3128 = vrot.slane %v3127, 2
      %v3129 = vrot.slane %v2831, 7
      %v3130 = vsel %vm3051, %v3128, %v3129
      %v3131 = vrot.slane %v3129, 2
      %v3132 = vrot.slane %v2960, 7
      %v3133 = vsel %vm3051, %v3131, %v3132
      %v3134 = vrot.slane %v3132, 2
      %v3135 = vrot.slane %v2961, 7
      %v3136 = vsel %vm3051, %v3134, %v3135
      %v3137 = vrot.slane %v3135, 2
      %v3138 = vrot.slane %v2962, 7
      %v3139 = vsel %vm3051, %v3137, %v3138
      %v3140 = vrot.slane %v3138, 2
      %v3141 = vrot.slane %v2834, 7
      %v3142 = vsel %vm3051, %v3140, %v3141
      %v3143 = vrot.slane %v3141, 2
      %v3144 = vrot.slane %v2963, 7
      %v3145 = vsel %vm3051, %v3143, %v3144
      %v3146 = vrot.slane %v3144, 2
      %v3147 = vrot.slane %v2964, 7
      %v3148 = vsel %vm3051, %v3146, %v3147
      %v3149 = vrot.slane %v3147, 2
      %v3150 = vrot.slane %v2965, 7
      %v3151 = vsel %vm3051, %v3149, %v3150
      %v3152 = vrot.slane %v2836, 7
      %v3153 = vrot.slane %v3152, 2
      %v3154 = vrot.slane %v2966, 7
      %v3155 = vsel %vm3051, %v3153, %v3154
      %v3156 = vrot.slane %v3154, 2
      %v3157 = vrot.slane %v2967, 7
      %v3158 = vsel %vm3051, %v3156, %v3157
      %v3159 = vrot.slane %v3157, 2
      %v3160 = vrot.slane %v2968, 7
      %v3161 = vsel %vm3051, %v3159, %v3160
      %v3162 = vrot.slane %v3160, 2
      %v3163 = vrot.slane %v2839, 7
      %v3164 = vsel %vm3051, %v3162, %v3163
      %v3165 = vrot.slane %v3163, 2
      %v3166 = vrot.slane %v2969, 7
      %v3167 = vsel %vm3051, %v3165, %v3166
      %v3168 = vrot.slane %v3166, 2
      %v3169 = vrot.slane %v2970, 7
      %v3170 = vsel %vm3051, %v3168, %v3169
      %v3171 = vrot.slane %v3169, 2
      %v3172 = vrot.slane %v2971, 7
      %v3173 = vsel %vm3051, %v3171, %v3172
      %v3174 = vrot.slane %v3172, 2
      %v3175 = vrot.slane %v2841, 7
      %v3176 = vsel %vm3051, %v3174, %v3175
      %v3177 = vrot.slane %v2972, 7
      %v3178 = vrot.slane %v3177, 2
      %v3179 = vrot.slane %v2973, 7
      %v3180 = vsel %vm3051, %v3178, %v3179
      %v3181 = vrot.slane %v3179, 2
      %v3182 = vrot.slane %v2974, 7
      %v3183 = vsel %vm3051, %v3181, %v3182
      %v3184 = vrot.slane %v3182, 2
      %v3185 = vrot.slane %v2844, 7
      %v3186 = vsel %vm3051, %v3184, %v3185
      %v3187 = vrot.slane %v3185, 2
      %v3188 = vrot.slane %v2975, 7
      %v3189 = vsel %vm3051, %v3187, %v3188
      %v3190 = vrot.slane %v3188, 2
      %v3191 = vrot.slane %v2976, 7
      %v3192 = vsel %vm3051, %v3190, %v3191
      %v3193 = vrot.slane %v3191, 2
      %v3194 = vrot.slane %v2977, 7
      %v3195 = vsel %vm3051, %v3193, %v3194
      %v3196 = vrot.slane %v3194, 2
      %v3197 = vrot.slane %v2846, 7
      %v3198 = vsel %vm3051, %v3196, %v3197
      %v3199 = vrot.slane %v3197, 2
      %v3200 = vrot.slane %v2978, 7
      %v3201 = vsel %vm3051, %v3199, %v3200
      %v3202 = vrot.slane %v2979, 7
      %v3203 = vrot.slane %v3202, 2
      %v3204 = vrot.slane %v2980, 7
      %v3205 = vsel %vm3051, %v3203, %v3204
      %v3206 = vrot.slane %v3204, 2
      %v3207 = vrot.slane %v2849, 7
      %v3208 = vsel %vm3051, %v3206, %v3207
      %v3209 = vrot.slane %v3207, 2
      %v3210 = vrot.slane %v2981, 7
      %v3211 = vsel %vm3051, %v3209, %v3210
      %v3212 = vrot.slane %v3210, 2
      %v3213 = vrot.slane %v2982, 7
      %v3214 = vsel %vm3051, %v3212, %v3213
      %v3215 = vrot.slane %v3213, 2
      %v3216 = vrot.slane %v2983, 7
      %v3217 = vsel %vm3051, %v3215, %v3216
      %v3218 = vrot.slane %v3216, 2
      %v3219 = vrot.slane %v2851, 7
      %v3220 = vsel %vm3051, %v3218, %v3219
      %v3221 = vrot.slane %v3219, 2
      %v3222 = vrot.slane %v2984, 7
      %v3223 = vsel %vm3051, %v3221, %v3222
      %v3224 = vrot.slane %v3222, 2
      %v3225 = vrot.slane %v2985, 7
      %v3226 = vsel %vm3051, %v3224, %v3225
      %v3227 = vrot.slane %v2986, 7
      %v3228 = vrot.slane %v3227, 2
      %v3229 = vrot.slane %v2854, 7
      %v3230 = vsel %vm3051, %v3228, %v3229
      %v3231 = vrot.slane %v3229, 2
      %v3232 = vrot.slane %v2987, 7
      %v3233 = vsel %vm3051, %v3231, %v3232
      %v3234 = vrot.slane %v3232, 2
      %v3235 = vrot.slane %v2988, 7
      %v3236 = vsel %vm3051, %v3234, %v3235
      %v3237 = vrot.slane %v3235, 2
      %v3238 = vrot.slane %v2989, 7
      %v3239 = vsel %vm3051, %v3237, %v3238
      %v3240 = vrot.slane %v3238, 2
      %v3241 = vrot.slane %v2856, 7
      %v3242 = vsel %vm3051, %v3240, %v3241
      %v3243 = vrot.slane %v3241, 2
      %v3244 = vrot.slane %v2990, 7
      %v3245 = vsel %vm3051, %v3243, %v3244
      %v3246 = vrot.slane %v3244, 2
      %v3247 = vrot.slane %v2991, 7
      %v3248 = vsel %vm3051, %v3246, %v3247
      %v3249 = vrot.slane %v3247, 2
      %v3250 = vrot.slane %v2992, 7
      %v3251 = vsel %vm3051, %v3249, %v3250
      %v3252 = vrot.slane %v2859, 7
      %v3253 = vrot.slane %v3252, 2
      %v3254 = vrot.slane %v2993, 7
      %v3255 = vsel %vm3051, %v3253, %v3254
      %v3256 = vrot.slane %v3254, 2
      %v3257 = vrot.slane %v2994, 7
      %v3258 = vsel %vm3051, %v3256, %v3257
      %v3259 = vrot.slane %v3257, 2
      %v3260 = vrot.slane %v2995, 7
      %v3261 = vsel %vm3051, %v3259, %v3260
      %v3262 = vrot.slane %v3260, 2
      %v3263 = vrot.slane %v2861, 7
      %v3264 = vsel %vm3051, %v3262, %v3263
      %v3265 = vrot.slane %v3263, 2
      %v3266 = vrot.slane %v2996, 7
      %v3267 = vsel %vm3051, %v3265, %v3266
      %v3268 = vrot.slane %v3266, 2
      %v3269 = vrot.slane %v2997, 7
      %v3270 = vsel %vm3051, %v3268, %v3269
      %v3271 = vrot.slane %v3269, 2
      %v3272 = vrot.slane %v2998, 7
      %v3273 = vsel %vm3051, %v3271, %v3272
      %v3274 = vrot.slane %v3272, 2
      %v3275 = vrot.slane %v2864, 7
      %v3276 = vsel %vm3051, %v3274, %v3275
      %v3277 = vrot.slane %v2999, 7
      %v3278 = vrot.slane %v3277, 2
      %v3279 = vrot.slane %v3000, 7
      %v3280 = vsel %vm3051, %v3278, %v3279
      %v3281 = vrot.slane %v3279, 2
      %v3282 = vrot.slane %v3001, 7
      %v3283 = vsel %vm3051, %v3281, %v3282
      %v3284 = vrot.slane %v3282, 2
      %v3285 = vrot.slane %v2866, 7
      %v3286 = vsel %vm3051, %v3284, %v3285
      %v3287 = vrot.slane %v3285, 2
      %v3288 = vrot.slane %v3002, 7
      %v3289 = vsel %vm3051, %v3287, %v3288
      %v3290 = vrot.slane %v3288, 2
      %v3291 = vrot.slane %v3003, 7
      %v3292 = vsel %vm3051, %v3290, %v3291
      %v3293 = vrot.slane %v3291, 2
      %v3294 = vrot.slane %v3004, 7
      %v3295 = vsel %vm3051, %v3293, %v3294
      %v3296 = vrot.slane %v3294, 2
      %v3297 = vrot.slane %v2869, 7
      %v3298 = vsel %vm3051, %v3296, %v3297
      %v3299 = vrot.slane %v3297, 2
      %v3300 = vrot.slane %v3005, 7
      %v3301 = vsel %vm3051, %v3299, %v3300
      %v3302 = vrot.slane %v3006, 7
      %v3303 = vrot.slane %v3302, 2
      %v3304 = vrot.slane %v3007, 7
      %v3305 = vsel %vm3051, %v3303, %v3304
      %v3306 = vrot.slane %v3304, 2
      %v3307 = vrot.slane %v2871, 7
      %v3308 = vsel %vm3051, %v3306, %v3307
      %v3309 = vrot.slane %v3307, 2
      %v3310 = vrot.slane %v3008, 7
      %v3311 = vsel %vm3051, %v3309, %v3310
      %v3312 = vrot.slane %v3310, 2
      %v3313 = vrot.slane %v3009, 7
      %v3314 = vsel %vm3051, %v3312, %v3313
      %v3315 = vrot.slane %v3313, 2
      %v3316 = vrot.slane %v3010, 7
      %v3317 = vsel %vm3051, %v3315, %v3316
      %v3318 = vrot.slane %v3316, 2
      %v3319 = vrot.slane %v2874, 7
      %v3320 = vsel %vm3051, %v3318, %v3319
      %v3321 = vrot.slane %v3319, 2
      %v3322 = vrot.slane %v3011, 7
      %v3323 = vsel %vm3051, %v3321, %v3322
      %v3324 = vrot.slane %v3322, 2
      %v3325 = vrot.slane %v3012, 7
      %v3326 = vsel %vm3051, %v3324, %v3325
      %v3327 = vrot.slane %v3013, 7
      %v3328 = vrot.slane %v3327, 2
      %v3329 = vrot.slane %v2876, 7
      %v3330 = vsel %vm3051, %v3328, %v3329
      %v3331 = vrot.slane %v3329, 2
      %v3332 = vrot.slane %v3014, 7
      %v3333 = vsel %vm3051, %v3331, %v3332
      %v3334 = vrot.slane %v3332, 2
      %v3335 = vrot.slane %v3015, 7
      %v3336 = vsel %vm3051, %v3334, %v3335
      %v3337 = vrot.slane %v3335, 2
      %v3338 = vrot.slane %v3016, 7
      %v3339 = vsel %vm3051, %v3337, %v3338
      %v3340 = vrot.slane %v3338, 2
      %v3341 = vrot.slane %v2879, 7
      %v3342 = vsel %vm3051, %v3340, %v3341
      %v3343 = vrot.slane %v3341, 2
      %v3344 = vrot.slane %v3017, 7
      %v3345 = vsel %vm3051, %v3343, %v3344
      %v3346 = vrot.slane %v3344, 2
      %v3347 = vrot.slane %v3018, 7
      %v3348 = vsel %vm3051, %v3346, %v3347
      %v3349 = vrot.slane %v3347, 2
      %v3350 = vrot.slane %v3019, 7
      %v3351 = vsel %vm3051, %v3349, %v3350
      %v3352 = vrot.slane %v2881, 7
      %v3353 = vrot.slane %v3352, 2
      %v3354 = vrot.slane %v3020, 7
      %v3355 = vsel %vm3051, %v3353, %v3354
      %v3356 = vrot.slane %v3354, 2
      %v3357 = vrot.slane %v3021, 7
      %v3358 = vsel %vm3051, %v3356, %v3357
      %v3359 = vrot.slane %v3357, 2
      %v3360 = vrot.slane %v3022, 7
      %v3361 = vsel %vm3051, %v3359, %v3360
      %v3362 = vrot.slane %v3360, 2
      %v3363 = vrot.slane %v2884, 7
      %v3364 = vsel %vm3051, %v3362, %v3363
      %v3365 = vrot.slane %v3363, 2
      %v3366 = vrot.slane %v3023, 7
      %v3367 = vsel %vm3051, %v3365, %v3366
      %v3368 = vrot.slane %v3366, 2
      %v3369 = vrot.slane %v3024, 7
      %v3370 = vsel %vm3051, %v3368, %v3369
      %v3371 = vrot.slane %v3369, 2
      %v3372 = vrot.slane %v3025, 7
      %v3373 = vsel %vm3051, %v3371, %v3372
      %v3374 = vrot.slane %v3372, 2
      %v3375 = vrot.slane %v2886, 7
      %v3376 = vsel %vm3051, %v3374, %v3375
      %v3377 = vrot.slane %v3026, 7
      %v3378 = vrot.slane %v3377, 2
      %v3379 = vrot.slane %v3027, 7
      %v3380 = vsel %vm3051, %v3378, %v3379
      %v3381 = vrot.slane %v3379, 2
      %v3382 = vrot.slane %v3028, 7
      %v3383 = vsel %vm3051, %v3381, %v3382
      %v3384 = vrot.slane %v3382, 2
      %v3385 = vrot.slane %v2889, 7
      %v3386 = vsel %vm3051, %v3384, %v3385
      %v3387 = vrot.slane %v3385, 2
      %v3388 = vrot.slane %v3029, 7
      %v3389 = vsel %vm3051, %v3387, %v3388
      %v3390 = vrot.slane %v3388, 2
      %v3391 = vrot.slane %v3030, 7
      %v3392 = vsel %vm3051, %v3390, %v3391
      %v3393 = vrot.slane %v3391, 2
      %v3394 = vrot.slane %v3031, 7
      %v3395 = vsel %vm3051, %v3393, %v3394
      %v3396 = vrot.slane %v3394, 2
      %v3397 = vrot.slane %v2891, 7
      %v3398 = vsel %vm3051, %v3396, %v3397
      %v3399 = vrot.slane %v3397, 2
      %v3400 = vrot.slane %v3032, 7
      %v3401 = vsel %vm3051, %v3399, %v3400
      %v3402 = vrot.slane %v3033, 7
      %v3403 = vrot.slane %v3402, 2
      %v3404 = vrot.slane %v3034, 7
      %v3405 = vsel %vm3051, %v3403, %v3404
      %v3406 = vrot.slane %v3404, 2
      %v3407 = vrot.slane %v2894, 7
      %v3408 = vsel %vm3051, %v3406, %v3407
      %v3409 = vrot.slane %v3407, 2
      %v3410 = vrot.slane %v3035, 7
      %v3411 = vsel %vm3051, %v3409, %v3410
      %v3412 = vrot.slane %v3410, 2
      %v3413 = vrot.slane %v3036, 7
      %v3414 = vsel %vm3051, %v3412, %v3413
      %v3415 = vrot.slane %v3413, 2
      %v3416 = vrot.slane %v3037, 7
      %v3417 = vsel %vm3051, %v3415, %v3416
      %v3418 = vrot.slane %v3416, 2
      %v3419 = vrot.slane %v2896, 7
      %v3420 = vsel %vm3051, %v3418, %v3419
      %v3421 = vrot.slane %v3419, 2
      %v3422 = vrot.slane %v3038, 7
      %v3423 = vsel %vm3051, %v3421, %v3422
      %v3424 = vrot.slane %v3422, 2
      %v3425 = vrot.slane %v3039, 7
      %v3426 = vsel %vm3051, %v3424, %v3425
      %v3427 = vrot.slane %v3040, 7
      %v3428 = vrot.slane %v3427, 2
      %v3429 = vrot.slane %v2899, 7
      %v3430 = vsel %vm3051, %v3428, %v3429
      %v3431 = vrot.slane %v3429, 2
      %v3432 = vrot.slane %v3041, 7
      %v3433 = vsel %vm3051, %v3431, %v3432
      %v3434 = vrot.slane %v3432, 2
      %v3435 = vrot.slane %v3042, 7
      %v3436 = vsel %vm3051, %v3434, %v3435
      %v3437 = vrot.slane %v3435, 2
      %v3438 = vrot.slane %v3043, 7
      %v3439 = vsel %vm3051, %v3437, %v3438
      %v3440 = vrot.slane %v3438, 2
      %v3441 = vrot.slane %v2901, 7
      %v3442 = vsel %vm3051, %v3440, %v3441
      %v3443 = vrot.slane %v3441, 2
      %v3444 = vrot.slane %v3044, 7
      %v3445 = vsel %vm3051, %v3443, %v3444
      %v3446 = vrot.slane %v3444, 2
      %v3447 = vrot.slane %v3045, 7
      %v3448 = vsel %vm3051, %v3446, %v3447
      %v3449 = vrot.slane %v3447, 2
      %v3450 = vrot.slane %v3046, 7
      %v3451 = vsel %vm3051, %v3449, %v3450
      %v3580 = vadd.f32 %v2266, %v3055
      %v3581 = vadd.f32 %v2391, %v3058
      %v3582 = vadd.f32 %v2392, %v3061
      %v3583 = vadd.f32 %v2393, %v3064
      %v3584 = vadd.f32 %v2268, %v3067
      %v3585 = vadd.f32 %v2394, %v3070
      %v3586 = vadd.f32 %v2395, %v3073
      %v3587 = vadd.f32 %v2396, %v3076
      %v3588 = vadd.f32 %v2397, %v3080
      %v3589 = vadd.f32 %v2398, %v3083
      %v3590 = vadd.f32 %v2399, %v3086
      %v3591 = vadd.f32 %v2273, %v3089
      %v3592 = vadd.f32 %v2400, %v3092
      %v3593 = vadd.f32 %v2401, %v3095
      %v3594 = vadd.f32 %v2402, %v3098
      %v3595 = vadd.f32 %v2276, %v3101
      %v3596 = vadd.f32 %v2403, %v3105
      %v3597 = vadd.f32 %v2404, %v3108
      %v3598 = vadd.f32 %v2278, %v3111
      %v3599 = vadd.f32 %v2405, %v3114
      %v3600 = vadd.f32 %v2406, %v3117
      %v3601 = vadd.f32 %v2407, %v3120
      %v3602 = vadd.f32 %v2281, %v3123
      %v3603 = vadd.f32 %v2408, %v3126
      %v3604 = vadd.f32 %v2409, %v3130
      %v3605 = vadd.f32 %v2283, %v3133
      %v3606 = vadd.f32 %v2410, %v3136
      %v3607 = vadd.f32 %v2411, %v3139
      %v3608 = vadd.f32 %v2412, %v3142
      %v3609 = vadd.f32 %v2286, %v3145
      %v3610 = vadd.f32 %v2413, %v3148
      %v3611 = vadd.f32 %v2414, %v3151
      %v3612 = vadd.f32 %v2288, %v3155
      %v3613 = vadd.f32 %v2415, %v3158
      %v3614 = vadd.f32 %v2416, %v3161
      %v3615 = vadd.f32 %v2417, %v3164
      %v3616 = vadd.f32 %v2291, %v3167
      %v3617 = vadd.f32 %v2418, %v3170
      %v3618 = vadd.f32 %v2419, %v3173
      %v3619 = vadd.f32 %v2420, %v3176
      %v3620 = vadd.f32 %v2421, %v3180
      %v3621 = vadd.f32 %v2422, %v3183
      %v3622 = vadd.f32 %v2423, %v3186
      %v3623 = vadd.f32 %v2296, %v3189
      %v3624 = vadd.f32 %v2424, %v3192
      %v3625 = vadd.f32 %v2425, %v3195
      %v3626 = vadd.f32 %v2426, %v3198
      %v3627 = vadd.f32 %v2298, %v3201
      %v3628 = vadd.f32 %v2427, %v3205
      %v3629 = vadd.f32 %v2428, %v3208
      %v3630 = vadd.f32 %v2301, %v3211
      %v3631 = vadd.f32 %v2429, %v3214
      %v3632 = vadd.f32 %v2430, %v3217
      %v3633 = vadd.f32 %v2431, %v3220
      %v3634 = vadd.f32 %v2303, %v3223
      %v3635 = vadd.f32 %v2432, %v3226
      %v3636 = vadd.f32 %v2433, %v3230
      %v3637 = vadd.f32 %v2306, %v3233
      %v3638 = vadd.f32 %v2434, %v3236
      %v3639 = vadd.f32 %v2435, %v3239
      %v3640 = vadd.f32 %v2436, %v3242
      %v3641 = vadd.f32 %v2308, %v3245
      %v3642 = vadd.f32 %v2437, %v3248
      %v3643 = vadd.f32 %v2438, %v3251
      %v3644 = vadd.f32 %v2311, %v3255
      %v3645 = vadd.f32 %v2439, %v3258
      %v3646 = vadd.f32 %v2440, %v3261
      %v3647 = vadd.f32 %v2441, %v3264
      %v3648 = vadd.f32 %v2313, %v3267
      %v3649 = vadd.f32 %v2442, %v3270
      %v3650 = vadd.f32 %v2443, %v3273
      %v3651 = vadd.f32 %v2444, %v3276
      %v3652 = vadd.f32 %v2445, %v3280
      %v3653 = vadd.f32 %v2446, %v3283
      %v3654 = vadd.f32 %v2447, %v3286
      %v3655 = vadd.f32 %v2318, %v3289
      %v3656 = vadd.f32 %v2448, %v3292
      %v3657 = vadd.f32 %v2449, %v3295
      %v3658 = vadd.f32 %v2450, %v3298
      %v3659 = vadd.f32 %v2321, %v3301
      %v3660 = vadd.f32 %v2451, %v3305
      %v3661 = vadd.f32 %v2452, %v3308
      %v3662 = vadd.f32 %v2323, %v3311
      %v3663 = vadd.f32 %v2453, %v3314
      %v3664 = vadd.f32 %v2454, %v3317
      %v3665 = vadd.f32 %v2455, %v3320
      %v3666 = vadd.f32 %v2326, %v3323
      %v3667 = vadd.f32 %v2456, %v3326
      %v3668 = vadd.f32 %v2457, %v3330
      %v3669 = vadd.f32 %v2328, %v3333
      %v3670 = vadd.f32 %v2458, %v3336
      %v3671 = vadd.f32 %v2459, %v3339
      %v3672 = vadd.f32 %v2460, %v3342
      %v3673 = vadd.f32 %v2331, %v3345
      %v3674 = vadd.f32 %v2461, %v3348
      %v3675 = vadd.f32 %v2462, %v3351
      %v3676 = vadd.f32 %v2333, %v3355
      %v3677 = vadd.f32 %v2463, %v3358
      %v3678 = vadd.f32 %v2464, %v3361
      %v3679 = vadd.f32 %v2465, %v3364
      %v3680 = vadd.f32 %v2336, %v3367
      %v3681 = vadd.f32 %v2466, %v3370
      %v3682 = vadd.f32 %v2467, %v3373
      %v3683 = vadd.f32 %v2468, %v3376
      %v3684 = vadd.f32 %v2469, %v3380
      %v3685 = vadd.f32 %v2470, %v3383
      %v3686 = vadd.f32 %v2471, %v3386
      %v3687 = vadd.f32 %v2341, %v3389
      %v3688 = vadd.f32 %v2472, %v3392
      %v3689 = vadd.f32 %v2473, %v3395
      %v3690 = vadd.f32 %v2474, %v3398
      %v3691 = vadd.f32 %v2343, %v3401
      %v3692 = vadd.f32 %v2475, %v3405
      %v3693 = vadd.f32 %v2476, %v3408
      %v3694 = vadd.f32 %v2346, %v3411
      %v3695 = vadd.f32 %v2477, %v3414
      %v3696 = vadd.f32 %v2478, %v3417
      %v3697 = vadd.f32 %v2479, %v3420
      %v3698 = vadd.f32 %v2348, %v3423
      %v3699 = vadd.f32 %v2480, %v3426
      %v3700 = vadd.f32 %v2481, %v3430
      %v3701 = vadd.f32 %v2351, %v3433
      %v3702 = vadd.f32 %v2482, %v3436
      %v3703 = vadd.f32 %v2483, %v3439
      %v3704 = vadd.f32 %v2484, %v3442
      %v3705 = vadd.f32 %v2353, %v3445
      %v3706 = vadd.f32 %v2485, %v3448
      %v3707 = vadd.f32 %v2486, %v3451
      %s3708 = scalar_lea.vmem %s1, 24
      %v3709 = vld [vmem:[%s3708] sm:$0xf]
      %v3710 = vld [vmem:[%s3708 + $0x4] sm:$0xf]
      %v3711 = vld [vmem:[%s3708 + $0x8] sm:$0xf]
      %3712 = vst [vmem:[#allocation1] ss:$9 sm:$0xff] %v1505
      %s3713 = scalar_lea.vmem [#allocation1], 1
      %3714 = vst [vmem:[%s3713] ss:$9 sm:$0xff] %v1509
      %s3715 = scalar_lea.vmem [#allocation1], 2
      %3716 = vst [vmem:[%s3715] ss:$9 sm:$0xff] %v1513
      %s3717 = scalar_lea.vmem [#allocation1], 3
      %3718 = vst [vmem:[%s3717] ss:$9 sm:$0xff] %v1517
      %s3719 = scalar_lea.vmem [#allocation1], 4
      %3720 = vst [vmem:[%s3719] ss:$9 sm:$0xff] %v1520
      %s3721 = scalar_lea.vmem [#allocation1], 5
      %3722 = vst [vmem:[%s3721] ss:$9 sm:$0xff] %v1523
      %s3723 = scalar_lea.vmem [#allocation1], 6
      %3724 = vst [vmem:[%s3723] ss:$9 sm:$0xff] %v1526
      %s3725 = scalar_lea.vmem [#allocation1], 7
      %3726 = vst [vmem:[%s3725] ss:$9 sm:$0xff] %v1529
      %v3727 = vld [vmem:[#allocation1] sm:$0xff]
      %3728 = vst [vmem:[#allocation1] ss:$9 sm:$0xff] %v1532
      %3729 = vst [vmem:[%s3713] ss:$9 sm:$0xff] %v1535
      %3730 = vst [vmem:[%s3715] ss:$9 sm:$0xff] %v1538
      %3731 = vst [vmem:[%s3717] ss:$9 sm:$0xff] %v1541
      %3732 = vst [vmem:[%s3719] ss:$9 sm:$0xff] %v1544
      %3733 = vst [vmem:[%s3721] ss:$9 sm:$0xff] %v1547
      %3734 = vst [vmem:[%s3723] ss:$9 sm:$0xff] %v1550
      %3735 = vst [vmem:[%s3725] ss:$9 sm:$0xff] %v1553
      %v3736 = vld [vmem:[#allocation1] sm:$0xff]
      %3737 = vst [vmem:[#allocation1] ss:$9 sm:$0xff] %v1556
      %3738 = vst [vmem:[%s3713] ss:$9 sm:$0xff] %v1559
      %3739 = vst [vmem:[%s3715] ss:$9 sm:$0xff] %v1562
      %3740 = vst [vmem:[%s3717] ss:$9 sm:$0xff] %v1565
      %3741 = vst [vmem:[%s3719] ss:$9 sm:$0xff] %v1568
      %3742 = vst [vmem:[%s3721] ss:$9 sm:$0xff] %v1571
      %3743 = vst [vmem:[%s3723] ss:$9 sm:$0xff] %v1574
      %3744 = vst [vmem:[%s3725] ss:$9 sm:$0xff] %v1577
      %v3745 = vld [vmem:[#allocation1] sm:$0xff]
      %3746 = vst [vmem:[#allocation1] ss:$9 sm:$0xff] %v1580
      %3747 = vst [vmem:[%s3713] ss:$9 sm:$0xff] %v1583
      %3748 = vst [vmem:[%s3715] ss:$9 sm:$0xff] %v1586
      %3749 = vst [vmem:[%s3717] ss:$9 sm:$0xff] %v1589
      %3750 = vst [vmem:[%s3719] ss:$9 sm:$0xff] %v1592
      %3751 = vst [vmem:[%s3721] ss:$9 sm:$0xff] %v1595
      %3752 = vst [vmem:[%s3723] ss:$9 sm:$0xff] %v1598
      %3753 = vst [vmem:[%s3725] ss:$9 sm:$0xff] %v1601
      %v3754 = vld [vmem:[#allocation1] sm:$0xff]
      %3755 = vst [vmem:[#allocation1] ss:$9 sm:$0xff] %v1604
      %3756 = vst [vmem:[%s3713] ss:$9 sm:$0xff] %v1607
      %3757 = vst [vmem:[%s3715] ss:$9 sm:$0xff] %v1610
      %3758 = vst [vmem:[%s3717] ss:$9 sm:$0xff] %v1613
      %3759 = vst [vmem:[%s3719] ss:$9 sm:$0xff] %v1616
      %3760 = vst [vmem:[%s3721] ss:$9 sm:$0xff] %v1619
      %3761 = vst [vmem:[%s3723] ss:$9 sm:$0xff] %v1622
      %3762 = vst [vmem:[%s3725] ss:$9 sm:$0xff] %v1625
      %v3763 = vld [vmem:[#allocation1] sm:$0xff]
      %3764 = vst [vmem:[#allocation1] ss:$9 sm:$0xff] %v1628
      %3765 = vst [vmem:[%s3713] ss:$9 sm:$0xff] %v1631
      %3766 = vst [vmem:[%s3715] ss:$9 sm:$0xff] %v1634
      %3767 = vst [vmem:[%s3717] ss:$9 sm:$0xff] %v1637
      %3768 = vst [vmem:[%s3719] ss:$9 sm:$0xff] %v1640
      %3769 = vst [vmem:[%s3721] ss:$9 sm:$0xff] %v1643
      %3770 = vst [vmem:[%s3723] ss:$9 sm:$0xff] %v1646
      %3771 = vst [vmem:[%s3725] ss:$9 sm:$0xff] %v1649
      %v3772 = vld [vmem:[#allocation1] sm:$0xff]
      %3773 = vst [vmem:[#allocation1] ss:$9 sm:$0xff] %v1652
      %3774 = vst [vmem:[%s3713] ss:$9 sm:$0xff] %v1655
      %3775 = vst [vmem:[%s3715] ss:$9 sm:$0xff] %v1658
      %3776 = vst [vmem:[%s3717] ss:$9 sm:$0xff] %v1661
      %3777 = vst [vmem:[%s3719] ss:$9 sm:$0xff] %v1664
      %3778 = vst [vmem:[%s3721] ss:$9 sm:$0xff] %v1667
      %3779 = vst [vmem:[%s3723] ss:$9 sm:$0xff] %v1670
      %3780 = vst [vmem:[%s3725] ss:$9 sm:$0xff] %v1673
      %v3781 = vld [vmem:[#allocation1] sm:$0xff]
      %3782 = vst [vmem:[#allocation1] ss:$9 sm:$0xff] %v1676
      %3783 = vst [vmem:[%s3713] ss:$9 sm:$0xff] %v1679
      %3784 = vst [vmem:[%s3715] ss:$9 sm:$0xff] %v1682
      %3785 = vst [vmem:[%s3717] ss:$9 sm:$0xff] %v1685
      %3786 = vst [vmem:[%s3719] ss:$9 sm:$0xff] %v1688
      %3787 = vst [vmem:[%s3721] ss:$9 sm:$0xff] %v1691
      %3788 = vst [vmem:[%s3723] ss:$9 sm:$0xff] %v1694
      %3789 = vst [vmem:[%s3725] ss:$9 sm:$0xff] %v1697
      %v3790 = vld [vmem:[#allocation1] sm:$0xff]
      %3791 = vst [vmem:[#allocation1] ss:$9 sm:$0xff] %v1700
      %3792 = vst [vmem:[%s3713] ss:$9 sm:$0xff] %v1703
      %3793 = vst [vmem:[%s3715] ss:$9 sm:$0xff] %v1706
      %3794 = vst [vmem:[%s3717] ss:$9 sm:$0xff] %v1709
      %3795 = vst [vmem:[%s3719] ss:$9 sm:$0xff] %v1712
      %3796 = vst [vmem:[%s3721] ss:$9 sm:$0xff] %v1715
      %3797 = vst [vmem:[%s3723] ss:$9 sm:$0xff] %v1718
      %3798 = vst [vmem:[%s3725] ss:$9 sm:$0xff] %v1721
      %v3799 = vld [vmem:[#allocation1] sm:$0xff]
      %3800 = vst [vmem:[#allocation1] ss:$9 sm:$0xff] %v1724
      %3801 = vst [vmem:[%s3713] ss:$9 sm:$0xff] %v1727
      %3802 = vst [vmem:[%s3715] ss:$9 sm:$0xff] %v1730
      %3803 = vst [vmem:[%s3717] ss:$9 sm:$0xff] %v1733
      %3804 = vst [vmem:[%s3719] ss:$9 sm:$0xff] %v1736
      %3805 = vst [vmem:[%s3721] ss:$9 sm:$0xff] %v1739
      %3806 = vst [vmem:[%s3723] ss:$9 sm:$0xff] %v1742
      %3807 = vst [vmem:[%s3725] ss:$9 sm:$0xff] %v1745
      %v3808 = vld [vmem:[#allocation1] sm:$0xff]
      %3809 = vst [vmem:[#allocation1] ss:$9 sm:$0xff] %v1748
      %3810 = vst [vmem:[%s3713] ss:$9 sm:$0xff] %v1751
      %3811 = vst [vmem:[%s3715] ss:$9 sm:$0xff] %v1754
      %3812 = vst [vmem:[%s3717] ss:$9 sm:$0xff] %v1757
      %3813 = vst [vmem:[%s3719] ss:$9 sm:$0xff] %v1760
      %3814 = vst [vmem:[%s3721] ss:$9 sm:$0xff] %v1763
      %3815 = vst [vmem:[%s3723] ss:$9 sm:$0xff] %v1766
      %3816 = vst [vmem:[%s3725] ss:$9 sm:$0xff] %v1769
      %v3817 = vld [vmem:[#allocation1] sm:$0xff]
      %3818 = vst [vmem:[#allocation1] ss:$9 sm:$0xff] %v1772
      %3819 = vst [vmem:[%s3713] ss:$9 sm:$0xff] %v1775
      %3820 = vst [vmem:[%s3715] ss:$9 sm:$0xff] %v1778
      %3821 = vst [vmem:[%s3717] ss:$9 sm:$0xff] %v1781
      %3822 = vst [vmem:[%s3719] ss:$9 sm:$0xff] %v1784
      %3823 = vst [vmem:[%s3721] ss:$9 sm:$0xff] %v1787
      %3824 = vst [vmem:[%s3723] ss:$9 sm:$0xff] %v1790
      %3825 = vst [vmem:[%s3725] ss:$9 sm:$0xff] %v1793
      %v3826 = vld [vmem:[#allocation1] sm:$0xff]
      %3827 = vst [vmem:[#allocation1] ss:$9 sm:$0xff] %v1796
      %3828 = vst [vmem:[%s3713] ss:$9 sm:$0xff] %v1799
      %3829 = vst [vmem:[%s3715] ss:$9 sm:$0xff] %v1802
      %3830 = vst [vmem:[%s3717] ss:$9 sm:$0xff] %v1805
      %3831 = vst [vmem:[%s3719] ss:$9 sm:$0xff] %v1808
      %3832 = vst [vmem:[%s3721] ss:$9 sm:$0xff] %v1811
      %3833 = vst [vmem:[%s3723] ss:$9 sm:$0xff] %v1814
      %3834 = vst [vmem:[%s3725] ss:$9 sm:$0xff] %v1817
      %v3835 = vld [vmem:[#allocation1] sm:$0xff]
      %3836 = vst [vmem:[#allocation1] ss:$9 sm:$0xff] %v1820
      %3837 = vst [vmem:[%s3713] ss:$9 sm:$0xff] %v1823
      %3838 = vst [vmem:[%s3715] ss:$9 sm:$0xff] %v1826
      %3839 = vst [vmem:[%s3717] ss:$9 sm:$0xff] %v1829
      %3840 = vst [vmem:[%s3719] ss:$9 sm:$0xff] %v1832
      %3841 = vst [vmem:[%s3721] ss:$9 sm:$0xff] %v1835
      %3842 = vst [vmem:[%s3723] ss:$9 sm:$0xff] %v1838
      %3843 = vst [vmem:[%s3725] ss:$9 sm:$0xff] %v1841
      %v3844 = vld [vmem:[#allocation1] sm:$0xff]
      %3845 = vst [vmem:[#allocation1] ss:$9 sm:$0xff] %v1844
      %3846 = vst [vmem:[%s3713] ss:$9 sm:$0xff] %v1847
      %3847 = vst [vmem:[%s3715] ss:$9 sm:$0xff] %v1850
      %3848 = vst [vmem:[%s3717] ss:$9 sm:$0xff] %v1853
      %3849 = vst [vmem:[%s3719] ss:$9 sm:$0xff] %v1856
      %3850 = vst [vmem:[%s3721] ss:$9 sm:$0xff] %v1859
      %3851 = vst [vmem:[%s3723] ss:$9 sm:$0xff] %v1862
      %3852 = vst [vmem:[%s3725] ss:$9 sm:$0xff] %v1865
      %v3853 = vld [vmem:[#allocation1] sm:$0xff]
      %3854 = vst [vmem:[#allocation1] ss:$9 sm:$0xff] %v1868
      %3855 = vst [vmem:[%s3713] ss:$9 sm:$0xff] %v1871
      %3856 = vst [vmem:[%s3715] ss:$9 sm:$0xff] %v1874
      %3857 = vst [vmem:[%s3717] ss:$9 sm:$0xff] %v1877
      %3858 = vst [vmem:[%s3719] ss:$9 sm:$0xff] %v1880
      %3859 = vst [vmem:[%s3721] ss:$9 sm:$0xff] %v1883
      %3860 = vst [vmem:[%s3723] ss:$9 sm:$0xff] %v1886
      %3861 = vst [vmem:[%s3725] ss:$9 sm:$0xff] %v1889
      %v3862 = vld [vmem:[#allocation1] sm:$0xff]
      %3863 = vst [vmem:[#allocation1] ss:$9 sm:$0xff] %v1892
      %3864 = vst [vmem:[%s3713] ss:$9 sm:$0xff] %v1895
      %3865 = vst [vmem:[%s3715] ss:$9 sm:$0xff] %v1898
      %3866 = vst [vmem:[%s3717] ss:$9 sm:$0xff] %v1901
      %3867 = vst [vmem:[%s3719] ss:$9 sm:$0xff] %v1904
      %3868 = vst [vmem:[%s3721] ss:$9 sm:$0xff] %v1907
      %3869 = vst [vmem:[%s3723] ss:$9 sm:$0xff] %v1910
      %3870 = vst [vmem:[%s3725] ss:$9 sm:$0xff] %v1913
      %v3871 = vld [vmem:[#allocation1] sm:$0xff]
      %3872 = vst [vmem:[#allocation1] ss:$9 sm:$0xff] %v1916
      %3873 = vst [vmem:[%s3713] ss:$9 sm:$0xff] %v1919
      %3874 = vst [vmem:[%s3715] ss:$9 sm:$0xff] %v1922
      %3875 = vst [vmem:[%s3717] ss:$9 sm:$0xff] %v1925
      %3876 = vst [vmem:[%s3719] ss:$9 sm:$0xff] %v1928
      %3877 = vst [vmem:[%s3721] ss:$9 sm:$0xff] %v1931
      %3878 = vst [vmem:[%s3723] ss:$9 sm:$0xff] %v1934
      %3879 = vst [vmem:[%s3725] ss:$9 sm:$0xff] %v1937
      %v3880 = vld [vmem:[#allocation1] sm:$0xff]
      %v3884 = vunpack.c.l.b16 %v3709
      %v3885 = vunpack.c.l.b16 %v3710
      %v3886 = vunpack.c.l.b16 %v3711
      %v3887 = vpack.c.b16 %v3885, %v3884
      %v3888 = vpack.c.b16 %v3886, %v3886
      %v3890 = vsel %vm2215, %v3727, 0
      %v3892 = vsel %vm2215, %v3736, 0
      %v3894 = vsel %vm2215, %v3745, 0
      %v3896 = vsel %vm2215, %v3754, 0
      %v3898 = vsel %vm2215, %v3763, 0
      %v3900 = vsel %vm2215, %v3772, 0
      %v3902 = vsel %vm2215, %v3781, 0
      %v3904 = vsel %vm2215, %v3790, 0
      %v3906 = vsel %vm2215, %v3799, 0
      %v3908 = vsel %vm2215, %v3808, 0
      %v3910 = vsel %vm2215, %v3817, 0
      %v3912 = vsel %vm2215, %v3826, 0
      %v3914 = vsel %vm2215, %v3835, 0
      %v3916 = vsel %vm2215, %v3844, 0
      %v3918 = vsel %vm2215, %v3853, 0
      %v3920 = vsel %vm2215, %v3862, 0
      %v3922 = vsel %vm2215, %v3871, 0
      %v3924 = vsel %vm2215, %v3880, 0
      %v3927 = vsel %vm2252, %v3888, 0
      %3929 = vmatpush.bf16.msra.mxu0 0
      %3930 = vmatpush.bf16.msra.mxu0 0
      %3931 = vmatpush.bf16.msra.mxu0 0
      %3932 = vmatpush.bf16.msra.mxu0 0
      %3933 = vmatpush.bf16.msra.mxu0 0
      %3934 = vmatpush.bf16.msra.mxu0 0
      %3935 = vmatpush.bf16.msra.mxu0 %v3927
      %3936 = vmatpush.bf16.msra.mxu0 %v3887
      %3937 = vmatmul.bf16.gmra.mxu0 %v3890
      %v3938 = vpop.f32.mrf.mxu0
      %v3939 = vadd.f32 0.0, %v3938
      %v3940 = vpop.f32.mrf.mxu0
      %v3941 = vadd.f32 0.0, %v3940
      %3942 = vmatmul.bf16.gmra.mxu0 %v3892
      %v3943 = vpop.f32.mrf.mxu0
      %v3944 = vadd.f32 0.0, %v3943
      %v3945 = vpop.f32.mrf.mxu0
      %v3946 = vadd.f32 0.0, %v3945
      %3947 = vmatmul.bf16.gmra.mxu0 %v3894
      %v3948 = vpop.f32.mrf.mxu0
      %v3949 = vadd.f32 0.0, %v3948
      %v3950 = vpop.f32.mrf.mxu0
      %v3951 = vadd.f32 0.0, %v3950
      %3952 = vmatmul.bf16.gmra.mxu0 %v3896
      %v3953 = vpop.f32.mrf.mxu0
      %v3954 = vadd.f32 0.0, %v3953
      %v3955 = vpop.f32.mrf.mxu0
      %v3956 = vadd.f32 0.0, %v3955
      %3957 = vmatmul.bf16.gmra.mxu0 %v3898
      %v3958 = vpop.f32.mrf.mxu0
      %v3959 = vadd.f32 0.0, %v3958
      %v3960 = vpop.f32.mrf.mxu0
      %v3961 = vadd.f32 0.0, %v3960
      %3962 = vmatmul.bf16.gmra.mxu0 %v3900
      %v3963 = vpop.f32.mrf.mxu0
      %v3964 = vadd.f32 0.0, %v3963
      %v3965 = vpop.f32.mrf.mxu0
      %v3966 = vadd.f32 0.0, %v3965
      %3967 = vmatmul.bf16.gmra.mxu0 %v3902
      %v3968 = vpop.f32.mrf.mxu0
      %v3969 = vadd.f32 0.0, %v3968
      %v3970 = vpop.f32.mrf.mxu0
      %v3971 = vadd.f32 0.0, %v3970
      %3972 = vmatmul.bf16.gmra.mxu0 %v3904
      %v3973 = vpop.f32.mrf.mxu0
      %v3974 = vadd.f32 0.0, %v3973
      %v3975 = vpop.f32.mrf.mxu0
      %v3976 = vadd.f32 0.0, %v3975
      %3977 = vmatmul.bf16.gmra.mxu0 %v3906
      %v3978 = vpop.f32.mrf.mxu0
      %v3979 = vadd.f32 0.0, %v3978
      %v3980 = vpop.f32.mrf.mxu0
      %v3981 = vadd.f32 0.0, %v3980
      %3982 = vmatmul.bf16.gmra.mxu0 %v3908
      %v3983 = vpop.f32.mrf.mxu0
      %v3984 = vadd.f32 0.0, %v3983
      %v3985 = vpop.f32.mrf.mxu0
      %v3986 = vadd.f32 0.0, %v3985
      %3987 = vmatmul.bf16.gmra.mxu0 %v3910
      %v3988 = vpop.f32.mrf.mxu0
      %v3989 = vadd.f32 0.0, %v3988
      %v3990 = vpop.f32.mrf.mxu0
      %v3991 = vadd.f32 0.0, %v3990
      %3992 = vmatmul.bf16.gmra.mxu0 %v3912
      %v3993 = vpop.f32.mrf.mxu0
      %v3994 = vadd.f32 0.0, %v3993
      %v3995 = vpop.f32.mrf.mxu0
      %v3996 = vadd.f32 0.0, %v3995
      %3997 = vmatmul.bf16.gmra.mxu0 %v3914
      %v3998 = vpop.f32.mrf.mxu0
      %v3999 = vadd.f32 0.0, %v3998
      %v4000 = vpop.f32.mrf.mxu0
      %v4001 = vadd.f32 0.0, %v4000
      %4002 = vmatmul.bf16.gmra.mxu0 %v3916
      %v4003 = vpop.f32.mrf.mxu0
      %v4004 = vadd.f32 0.0, %v4003
      %v4005 = vpop.f32.mrf.mxu0
      %v4006 = vadd.f32 0.0, %v4005
      %4007 = vmatmul.bf16.gmra.mxu0 %v3918
      %v4008 = vpop.f32.mrf.mxu0
      %v4009 = vadd.f32 0.0, %v4008
      %v4010 = vpop.f32.mrf.mxu0
      %v4011 = vadd.f32 0.0, %v4010
      %4012 = vmatmul.bf16.gmra.mxu0 %v3920
      %v4013 = vpop.f32.mrf.mxu0
      %v4014 = vadd.f32 0.0, %v4013
      %v4015 = vpop.f32.mrf.mxu0
      %v4016 = vadd.f32 0.0, %v4015
      %4017 = vmatmul.bf16.gmra.mxu0 %v3922
      %v4018 = vpop.f32.mrf.mxu0
      %v4019 = vadd.f32 0.0, %v4018
      %v4020 = vpop.f32.mrf.mxu0
      %v4021 = vadd.f32 0.0, %v4020
      %4022 = vmatmul.bf16.gmra.mxu0 %v3924
      %v4023 = vpop.f32.mrf.mxu0
      %v4024 = vadd.f32 0.0, %v4023
      %v4025 = vpop.f32.mrf.mxu0
      %v4026 = vadd.f32 0.0, %v4025
      %4027 = vdwg.mxu0
      %v4064 = vrot.slane %v3939, 2
      %v4065 = vrot.slane %v3939, 4
      %v4066 = vrot.slane %v3939, 6
      %v4067 = vrot.slane %v3941, 2
      %v4068 = vrot.slane %v3941, 4
      %v4069 = vrot.slane %v3941, 6
      %v4070 = vrot.slane %v3944, 4
      %v4071 = vrot.slane %v3944, 6
      %v4072 = vrot.slane %v3946, 2
      %v4073 = vrot.slane %v3946, 4
      %v4074 = vrot.slane %v3946, 6
      %v4075 = vrot.slane %v3949, 2
      %v4076 = vrot.slane %v3949, 6
      %v4077 = vrot.slane %v3951, 2
      %v4078 = vrot.slane %v3951, 4
      %v4079 = vrot.slane %v3951, 6
      %v4080 = vrot.slane %v3954, 2
      %v4081 = vrot.slane %v3954, 4
      %v4082 = vrot.slane %v3956, 2
      %v4083 = vrot.slane %v3956, 4
      %v4084 = vrot.slane %v3956, 6
      %v4085 = vrot.slane %v3959, 2
      %v4086 = vrot.slane %v3959, 4
      %v4087 = vrot.slane %v3959, 6
      %v4088 = vrot.slane %v3961, 2
      %v4089 = vrot.slane %v3961, 4
      %v4090 = vrot.slane %v3961, 6
      %v4091 = vrot.slane %v3964, 2
      %v4092 = vrot.slane %v3964, 4
      %v4093 = vrot.slane %v3964, 6
      %v4094 = vrot.slane %v3966, 4
      %v4095 = vrot.slane %v3966, 6
      %v4096 = vrot.slane %v3969, 2
      %v4097 = vrot.slane %v3969, 4
      %v4098 = vrot.slane %v3969, 6
      %v4099 = vrot.slane %v3971, 2
      %v4100 = vrot.slane %v3971, 6
      %v4101 = vrot.slane %v3974, 2
      %v4102 = vrot.slane %v3974, 4
      %v4103 = vrot.slane %v3974, 6
      %v4104 = vrot.slane %v3976, 2
      %v4105 = vrot.slane %v3976, 4
      %v4106 = vrot.slane %v3979, 2
      %v4107 = vrot.slane %v3979, 4
      %v4108 = vrot.slane %v3979, 6
      %v4109 = vrot.slane %v3981, 2
      %v4110 = vrot.slane %v3981, 4
      %v4111 = vrot.slane %v3981, 6
      %v4112 = vrot.slane %v3984, 2
      %v4113 = vrot.slane %v3984, 4
      %v4114 = vrot.slane %v3984, 6
      %v4115 = vrot.slane %v3986, 2
      %v4116 = vrot.slane %v3986, 4
      %v4117 = vrot.slane %v3986, 6
      %v4118 = vrot.slane %v3989, 4
      %v4119 = vrot.slane %v3989, 6
      %v4120 = vrot.slane %v3991, 2
      %v4121 = vrot.slane %v3991, 4
      %v4122 = vrot.slane %v3991, 6
      %v4123 = vrot.slane %v3994, 2
      %v4124 = vrot.slane %v3994, 6
      %v4125 = vrot.slane %v3996, 2
      %v4126 = vrot.slane %v3996, 4
      %v4127 = vrot.slane %v3996, 6
      %v4128 = vrot.slane %v3999, 2
      %v4129 = vrot.slane %v3999, 4
      %v4130 = vrot.slane %v4001, 2
      %v4131 = vrot.slane %v4001, 4
      %v4132 = vrot.slane %v4001, 6
      %v4133 = vrot.slane %v4004, 2
      %v4134 = vrot.slane %v4004, 4
      %v4135 = vrot.slane %v4004, 6
      %v4136 = vrot.slane %v4006, 2
      %v4137 = vrot.slane %v4006, 4
      %v4138 = vrot.slane %v4006, 6
      %v4139 = vrot.slane %v4009, 2
      %v4140 = vrot.slane %v4009, 4
      %v4141 = vrot.slane %v4009, 6
      %v4142 = vrot.slane %v4011, 4
      %v4143 = vrot.slane %v4011, 6
      %v4144 = vrot.slane %v4014, 2
      %v4145 = vrot.slane %v4014, 4
      %v4146 = vrot.slane %v4014, 6
      %v4147 = vrot.slane %v4016, 2
      %v4148 = vrot.slane %v4016, 6
      %v4149 = vrot.slane %v4019, 2
      %v4150 = vrot.slane %v4019, 4
      %v4151 = vrot.slane %v4019, 6
      %v4152 = vrot.slane %v4021, 2
      %v4153 = vrot.slane %v4021, 4
      %v4154 = vrot.slane %v4024, 2
      %v4155 = vrot.slane %v4024, 4
      %v4156 = vrot.slane %v4024, 6
      %v4157 = vrot.slane %v4026, 2
      %v4158 = vrot.slane %v4026, 4
      %v4159 = vrot.slane %v4026, 6
      %v4256 = vadd.f32 %v3580, %v4064
      %v4257 = vadd.f32 %v3581, %v4065
      %v4258 = vadd.f32 %v3582, %v4066
      %v4259 = vadd.f32 %v3583, %v3941
      %v4260 = vadd.f32 %v3584, %v4067
      %v4261 = vadd.f32 %v3585, %v4068
      %v4262 = vadd.f32 %v3586, %v4069
      %v4263 = vadd.f32 %v3587, %v3944
      %v4264 = vadd.f32 %v3588, %v4070
      %v4265 = vadd.f32 %v3589, %v4071
      %v4266 = vadd.f32 %v3590, %v3946
      %v4267 = vadd.f32 %v3591, %v4072
      %v4268 = vadd.f32 %v3592, %v4073
      %v4269 = vadd.f32 %v3593, %v4074
      %v4270 = vadd.f32 %v3594, %v3949
      %v4271 = vadd.f32 %v3595, %v4075
      %v4272 = vadd.f32 %v3596, %v4076
      %v4273 = vadd.f32 %v3597, %v3951
      %v4274 = vadd.f32 %v3598, %v4077
      %v4275 = vadd.f32 %v3599, %v4078
      %v4276 = vadd.f32 %v3600, %v4079
      %v4277 = vadd.f32 %v3601, %v3954
      %v4278 = vadd.f32 %v3602, %v4080
      %v4279 = vadd.f32 %v3603, %v4081
      %v4280 = vadd.f32 %v3604, %v3956
      %v4281 = vadd.f32 %v3605, %v4082
      %v4282 = vadd.f32 %v3606, %v4083
      %v4283 = vadd.f32 %v3607, %v4084
      %v4284 = vadd.f32 %v3608, %v3959
      %v4285 = vadd.f32 %v3609, %v4085
      %v4286 = vadd.f32 %v3610, %v4086
      %v4287 = vadd.f32 %v3611, %v4087
      %v4288 = vadd.f32 %v3612, %v4088
      %v4289 = vadd.f32 %v3613, %v4089
      %v4290 = vadd.f32 %v3614, %v4090
      %v4291 = vadd.f32 %v3615, %v3964
      %v4292 = vadd.f32 %v3616, %v4091
      %v4293 = vadd.f32 %v3617, %v4092
      %v4294 = vadd.f32 %v3618, %v4093
      %v4295 = vadd.f32 %v3619, %v3966
      %v4296 = vadd.f32 %v3620, %v4094
      %v4297 = vadd.f32 %v3621, %v4095
      %v4298 = vadd.f32 %v3622, %v3969
      %v4299 = vadd.f32 %v3623, %v4096
      %v4300 = vadd.f32 %v3624, %v4097
      %v4301 = vadd.f32 %v3625, %v4098
      %v4302 = vadd.f32 %v3626, %v3971
      %v4303 = vadd.f32 %v3627, %v4099
      %v4304 = vadd.f32 %v3628, %v4100
      %v4305 = vadd.f32 %v3629, %v3974
      %v4306 = vadd.f32 %v3630, %v4101
      %v4307 = vadd.f32 %v3631, %v4102
      %v4308 = vadd.f32 %v3632, %v4103
      %v4309 = vadd.f32 %v3633, %v3976
      %v4310 = vadd.f32 %v3634, %v4104
      %v4311 = vadd.f32 %v3635, %v4105
      %v4312 = vadd.f32 %v3636, %v3979
      %v4313 = vadd.f32 %v3637, %v4106
      %v4314 = vadd.f32 %v3638, %v4107
      %v4315 = vadd.f32 %v3639, %v4108
      %v4316 = vadd.f32 %v3640, %v3981
      %v4317 = vadd.f32 %v3641, %v4109
      %v4318 = vadd.f32 %v3642, %v4110
      %v4319 = vadd.f32 %v3643, %v4111
      %v4320 = vadd.f32 %v3644, %v4112
      %v4321 = vadd.f32 %v3645, %v4113
      %v4322 = vadd.f32 %v3646, %v4114
      %v4323 = vadd.f32 %v3647, %v3986
      %v4324 = vadd.f32 %v3648, %v4115
      %v4325 = vadd.f32 %v3649, %v4116
      %v4326 = vadd.f32 %v3650, %v4117
      %v4327 = vadd.f32 %v3651, %v3989
      %v4328 = vadd.f32 %v3652, %v4118
      %v4329 = vadd.f32 %v3653, %v4119
      %v4330 = vadd.f32 %v3654, %v3991
      %v4331 = vadd.f32 %v3655, %v4120
      %v4332 = vadd.f32 %v3656, %v4121
      %v4333 = vadd.f32 %v3657, %v4122
      %v4334 = vadd.f32 %v3658, %v3994
      %v4335 = vadd.f32 %v3659, %v4123
      %v4336 = vadd.f32 %v3660, %v4124
      %v4337 = vadd.f32 %v3661, %v3996
      %v4338 = vadd.f32 %v3662, %v4125
      %v4339 = vadd.f32 %v3663, %v4126
      %v4340 = vadd.f32 %v3664, %v4127
      %v4341 = vadd.f32 %v3665, %v3999
      %v4342 = vadd.f32 %v3666, %v4128
      %v4343 = vadd.f32 %v3667, %v4129
      %v4344 = vadd.f32 %v3668, %v4001
      %v4345 = vadd.f32 %v3669, %v4130
      %v4346 = vadd.f32 %v3670, %v4131
      %v4347 = vadd.f32 %v3671, %v4132
      %v4348 = vadd.f32 %v3672, %v4004
      %v4349 = vadd.f32 %v3673, %v4133
      %v4350 = vadd.f32 %v3674, %v4134
      %v4351 = vadd.f32 %v3675, %v4135
      %v4352 = vadd.f32 %v3676, %v4136
      %v4353 = vadd.f32 %v3677, %v4137
      %v4354 = vadd.f32 %v3678, %v4138
      %v4355 = vadd.f32 %v3679, %v4009
      %v4356 = vadd.f32 %v3680, %v4139
      %v4357 = vadd.f32 %v3681, %v4140
      %v4358 = vadd.f32 %v3682, %v4141
      %v4359 = vadd.f32 %v3683, %v4011
      %v4360 = vadd.f32 %v3684, %v4142
      %v4361 = vadd.f32 %v3685, %v4143
      %v4362 = vadd.f32 %v3686, %v4014
      %v4363 = vadd.f32 %v3687, %v4144
      %v4364 = vadd.f32 %v3688, %v4145
      %v4365 = vadd.f32 %v3689, %v4146
      %v4366 = vadd.f32 %v3690, %v4016
      %v4367 = vadd.f32 %v3691, %v4147
      %v4368 = vadd.f32 %v3692, %v4148
      %v4369 = vadd.f32 %v3693, %v4019
      %v4370 = vadd.f32 %v3694, %v4149
      %v4371 = vadd.f32 %v3695, %v4150
      %v4372 = vadd.f32 %v3696, %v4151
      %v4373 = vadd.f32 %v3697, %v4021
      %v4374 = vadd.f32 %v3698, %v4152
      %v4375 = vadd.f32 %v3699, %v4153
      %v4376 = vadd.f32 %v3700, %v4024
      %v4377 = vadd.f32 %v3701, %v4154
      %v4378 = vadd.f32 %v3702, %v4155
      %v4379 = vadd.f32 %v3703, %v4156
      %v4380 = vadd.f32 %v3704, %v4026
      %v4381 = vadd.f32 %v3705, %v4157
      %v4382 = vadd.f32 %v3706, %v4158
      %v4383 = vadd.f32 %v3707, %v4159
      %v4384 = vld [vmem:[%s2] sm:$0x1]
      %v4386 = vperm.slane %v4384, 0
      %v4388 = vrot.slane %v4386, 2
      %v4389 = vrot.slane %v4386, 4
      %v4390 = vrot.slane %v4386, 6
      %v4394 = vmul.f32 %v4256, %v4386
      %v4395 = vmul.f32 %v4257, %v4388
      %v4396 = vmul.f32 %v4258, %v4389
      %v4397 = vmul.f32 %v4259, %v4390
      %v4398 = vmul.f32 %v4260, %v4386
      %v4399 = vmul.f32 %v4261, %v4388
      %v4400 = vmul.f32 %v4262, %v4389
      %v4401 = vmul.f32 %v4263, %v4390
      %v4402 = vmul.f32 %v4264, %v4386
      %v4403 = vmul.f32 %v4265, %v4388
      %v4404 = vmul.f32 %v4266, %v4389
      %v4405 = vmul.f32 %v4267, %v4390
      %v4406 = vmul.f32 %v4268, %v4386
      %v4407 = vmul.f32 %v4269, %v4388
      %v4408 = vmul.f32 %v4270, %v4389
      %v4409 = vmul.f32 %v4271, %v4390
      %v4410 = vmul.f32 %v4272, %v4386
      %v4411 = vmul.f32 %v4273, %v4388
      %v4412 = vmul.f32 %v4274, %v4389
      %v4413 = vmul.f32 %v4275, %v4390
      %v4414 = vmul.f32 %v4276, %v4386
      %v4415 = vmul.f32 %v4277, %v4388
      %v4416 = vmul.f32 %v4278, %v4389
      %v4417 = vmul.f32 %v4279, %v4390
      %v4418 = vmul.f32 %v4280, %v4386
      %v4419 = vmul.f32 %v4281, %v4388
      %v4420 = vmul.f32 %v4282, %v4389
      %v4421 = vmul.f32 %v4283, %v4390
      %v4422 = vmul.f32 %v4284, %v4386
      %v4423 = vmul.f32 %v4285, %v4388
      %v4424 = vmul.f32 %v4286, %v4389
      %v4425 = vmul.f32 %v4287, %v4390
      %v4426 = vmul.f32 %v4288, %v4386
      %v4427 = vmul.f32 %v4289, %v4388
      %v4428 = vmul.f32 %v4290, %v4389
      %v4429 = vmul.f32 %v4291, %v4390
      %v4430 = vmul.f32 %v4292, %v4386
      %v4431 = vmul.f32 %v4293, %v4388
      %v4432 = vmul.f32 %v4294, %v4389
      %v4433 = vmul.f32 %v4295, %v4390
      %v4434 = vmul.f32 %v4296, %v4386
      %v4435 = vmul.f32 %v4297, %v4388
      %v4436 = vmul.f32 %v4298, %v4389
      %v4437 = vmul.f32 %v4299, %v4390
      %v4438 = vmul.f32 %v4300, %v4386
      %v4439 = vmul.f32 %v4301, %v4388
      %v4440 = vmul.f32 %v4302, %v4389
      %v4441 = vmul.f32 %v4303, %v4390
      %v4442 = vmul.f32 %v4304, %v4386
      %v4443 = vmul.f32 %v4305, %v4388
      %v4444 = vmul.f32 %v4306, %v4389
      %v4445 = vmul.f32 %v4307, %v4390
      %v4446 = vmul.f32 %v4308, %v4386
      %v4447 = vmul.f32 %v4309, %v4388
      %v4448 = vmul.f32 %v4310, %v4389
      %v4449 = vmul.f32 %v4311, %v4390
      %v4450 = vmul.f32 %v4312, %v4386
      %v4451 = vmul.f32 %v4313, %v4388
      %v4452 = vmul.f32 %v4314, %v4389
      %v4453 = vmul.f32 %v4315, %v4390
      %v4454 = vmul.f32 %v4316, %v4386
      %v4455 = vmul.f32 %v4317, %v4388
      %v4456 = vmul.f32 %v4318, %v4389
      %v4457 = vmul.f32 %v4319, %v4390
      %v4458 = vmul.f32 %v4320, %v4386
      %v4459 = vmul.f32 %v4321, %v4388
      %v4460 = vmul.f32 %v4322, %v4389
      %v4461 = vmul.f32 %v4323, %v4390
      %v4462 = vmul.f32 %v4324, %v4386
      %v4463 = vmul.f32 %v4325, %v4388
      %v4464 = vmul.f32 %v4326, %v4389
      %v4465 = vmul.f32 %v4327, %v4390
      %v4466 = vmul.f32 %v4328, %v4386
      %v4467 = vmul.f32 %v4329, %v4388
      %v4468 = vmul.f32 %v4330, %v4389
      %v4469 = vmul.f32 %v4331, %v4390
      %v4470 = vmul.f32 %v4332, %v4386
      %v4471 = vmul.f32 %v4333, %v4388
      %v4472 = vmul.f32 %v4334, %v4389
      %v4473 = vmul.f32 %v4335, %v4390
      %v4474 = vmul.f32 %v4336, %v4386
      %v4475 = vmul.f32 %v4337, %v4388
      %v4476 = vmul.f32 %v4338, %v4389
      %v4477 = vmul.f32 %v4339, %v4390
      %v4478 = vmul.f32 %v4340, %v4386
      %v4479 = vmul.f32 %v4341, %v4388
      %v4480 = vmul.f32 %v4342, %v4389
      %v4481 = vmul.f32 %v4343, %v4390
      %v4482 = vmul.f32 %v4344, %v4386
      %v4483 = vmul.f32 %v4345, %v4388
      %v4484 = vmul.f32 %v4346, %v4389
      %v4485 = vmul.f32 %v4347, %v4390
      %v4486 = vmul.f32 %v4348, %v4386
      %v4487 = vmul.f32 %v4349, %v4388
      %v4488 = vmul.f32 %v4350, %v4389
      %v4489 = vmul.f32 %v4351, %v4390
      %v4490 = vmul.f32 %v4352, %v4386
      %v4491 = vmul.f32 %v4353, %v4388
      %v4492 = vmul.f32 %v4354, %v4389
      %v4493 = vmul.f32 %v4355, %v4390
      %v4494 = vmul.f32 %v4356, %v4386
      %v4495 = vmul.f32 %v4357, %v4388
      %v4496 = vmul.f32 %v4358, %v4389
      %v4497 = vmul.f32 %v4359, %v4390
      %v4498 = vmul.f32 %v4360, %v4386
      %v4499 = vmul.f32 %v4361, %v4388
      %v4500 = vmul.f32 %v4362, %v4389
      %v4501 = vmul.f32 %v4363, %v4390
      %v4502 = vmul.f32 %v4364, %v4386
      %v4503 = vmul.f32 %v4365, %v4388
      %v4504 = vmul.f32 %v4366, %v4389
      %v4505 = vmul.f32 %v4367, %v4390
      %v4506 = vmul.f32 %v4368, %v4386
      %v4507 = vmul.f32 %v4369, %v4388
      %v4508 = vmul.f32 %v4370, %v4389
      %v4509 = vmul.f32 %v4371, %v4390
      %v4510 = vmul.f32 %v4372, %v4386
      %v4511 = vmul.f32 %v4373, %v4388
      %v4512 = vmul.f32 %v4374, %v4389
      %v4513 = vmul.f32 %v4375, %v4390
      %v4514 = vmul.f32 %v4376, %v4386
      %v4515 = vmul.f32 %v4377, %v4388
      %v4516 = vmul.f32 %v4378, %v4389
      %v4517 = vmul.f32 %v4379, %v4390
      %v4518 = vmul.f32 %v4380, %v4386
      %v4519 = vmul.f32 %v4381, %v4388
      %v4520 = vmul.f32 %v4382, %v4389
      %v4521 = vmul.f32 %v4383, %v4390
      %v4522 = vld [vmem:[%s3] sm:$0x1]
      %v4524 = vperm.slane %v4522, 0
      %v4526 = vrot.slane %v4524, 2
      %v4527 = vrot.slane %v4524, 4
      %v4528 = vrot.slane %v4524, 6
      %v4532 = vadd.f32 %v4394, %v4524
      %v4533 = vadd.f32 %v4395, %v4526
      %v4534 = vadd.f32 %v4396, %v4527
      %v4535 = vadd.f32 %v4397, %v4528
      %v4536 = vadd.f32 %v4398, %v4524
      %v4537 = vadd.f32 %v4399, %v4526
      %v4538 = vadd.f32 %v4400, %v4527
      %v4539 = vadd.f32 %v4401, %v4528
      %v4540 = vadd.f32 %v4402, %v4524
      %v4541 = vadd.f32 %v4403, %v4526
      %v4542 = vadd.f32 %v4404, %v4527
      %v4543 = vadd.f32 %v4405, %v4528
      %v4544 = vadd.f32 %v4406, %v4524
      %v4545 = vadd.f32 %v4407, %v4526
      %v4546 = vadd.f32 %v4408, %v4527
      %v4547 = vadd.f32 %v4409, %v4528
      %v4548 = vadd.f32 %v4410, %v4524
      %v4549 = vadd.f32 %v4411, %v4526
      %v4550 = vadd.f32 %v4412, %v4527
      %v4551 = vadd.f32 %v4413, %v4528
      %v4552 = vadd.f32 %v4414, %v4524
      %v4553 = vadd.f32 %v4415, %v4526
      %v4554 = vadd.f32 %v4416, %v4527
      %v4555 = vadd.f32 %v4417, %v4528
      %v4556 = vadd.f32 %v4418, %v4524
      %v4557 = vadd.f32 %v4419, %v4526
      %v4558 = vadd.f32 %v4420, %v4527
      %v4559 = vadd.f32 %v4421, %v4528
      %v4560 = vadd.f32 %v4422, %v4524
      %v4561 = vadd.f32 %v4423, %v4526
      %v4562 = vadd.f32 %v4424, %v4527
      %v4563 = vadd.f32 %v4425, %v4528
      %v4564 = vadd.f32 %v4426, %v4524
      %v4565 = vadd.f32 %v4427, %v4526
      %v4566 = vadd.f32 %v4428, %v4527
      %v4567 = vadd.f32 %v4429, %v4528
      %v4568 = vadd.f32 %v4430, %v4524
      %v4569 = vadd.f32 %v4431, %v4526
      %v4570 = vadd.f32 %v4432, %v4527
      %v4571 = vadd.f32 %v4433, %v4528
      %v4572 = vadd.f32 %v4434, %v4524
      %v4573 = vadd.f32 %v4435, %v4526
      %v4574 = vadd.f32 %v4436, %v4527
      %v4575 = vadd.f32 %v4437, %v4528
      %v4576 = vadd.f32 %v4438, %v4524
      %v4577 = vadd.f32 %v4439, %v4526
      %v4578 = vadd.f32 %v4440, %v4527
      %v4579 = vadd.f32 %v4441, %v4528
      %v4580 = vadd.f32 %v4442, %v4524
      %v4581 = vadd.f32 %v4443, %v4526
      %v4582 = vadd.f32 %v4444, %v4527
      %v4583 = vadd.f32 %v4445, %v4528
      %v4584 = vadd.f32 %v4446, %v4524
      %v4585 = vadd.f32 %v4447, %v4526
      %v4586 = vadd.f32 %v4448, %v4527
      %v4587 = vadd.f32 %v4449, %v4528
      %v4588 = vadd.f32 %v4450, %v4524
      %v4589 = vadd.f32 %v4451, %v4526
      %v4590 = vadd.f32 %v4452, %v4527
      %v4591 = vadd.f32 %v4453, %v4528
      %v4592 = vadd.f32 %v4454, %v4524
      %v4593 = vadd.f32 %v4455, %v4526
      %v4594 = vadd.f32 %v4456, %v4527
      %v4595 = vadd.f32 %v4457, %v4528
      %v4596 = vadd.f32 %v4458, %v4524
      %v4597 = vadd.f32 %v4459, %v4526
      %v4598 = vadd.f32 %v4460, %v4527
      %v4599 = vadd.f32 %v4461, %v4528
      %v4600 = vadd.f32 %v4462, %v4524
      %v4601 = vadd.f32 %v4463, %v4526
      %v4602 = vadd.f32 %v4464, %v4527
      %v4603 = vadd.f32 %v4465, %v4528
      %v4604 = vadd.f32 %v4466, %v4524
      %v4605 = vadd.f32 %v4467, %v4526
      %v4606 = vadd.f32 %v4468, %v4527
      %v4607 = vadd.f32 %v4469, %v4528
      %v4608 = vadd.f32 %v4470, %v4524
      %v4609 = vadd.f32 %v4471, %v4526
      %v4610 = vadd.f32 %v4472, %v4527
      %v4611 = vadd.f32 %v4473, %v4528
      %v4612 = vadd.f32 %v4474, %v4524
      %v4613 = vadd.f32 %v4475, %v4526
      %v4614 = vadd.f32 %v4476, %v4527
      %v4615 = vadd.f32 %v4477, %v4528
      %v4616 = vadd.f32 %v4478, %v4524
      %v4617 = vadd.f32 %v4479, %v4526
      %v4618 = vadd.f32 %v4480, %v4527
      %v4619 = vadd.f32 %v4481, %v4528
      %v4620 = vadd.f32 %v4482, %v4524
      %v4621 = vadd.f32 %v4483, %v4526
      %v4622 = vadd.f32 %v4484, %v4527
      %v4623 = vadd.f32 %v4485, %v4528
      %v4624 = vadd.f32 %v4486, %v4524
      %v4625 = vadd.f32 %v4487, %v4526
      %v4626 = vadd.f32 %v4488, %v4527
      %v4627 = vadd.f32 %v4489, %v4528
      %v4628 = vadd.f32 %v4490, %v4524
      %v4629 = vadd.f32 %v4491, %v4526
      %v4630 = vadd.f32 %v4492, %v4527
      %v4631 = vadd.f32 %v4493, %v4528
      %v4632 = vadd.f32 %v4494, %v4524
      %v4633 = vadd.f32 %v4495, %v4526
      %v4634 = vadd.f32 %v4496, %v4527
      %v4635 = vadd.f32 %v4497, %v4528
      %v4636 = vadd.f32 %v4498, %v4524
      %v4637 = vadd.f32 %v4499, %v4526
      %v4638 = vadd.f32 %v4500, %v4527
      %v4639 = vadd.f32 %v4501, %v4528
      %v4640 = vadd.f32 %v4502, %v4524
      %v4641 = vadd.f32 %v4503, %v4526
      %v4642 = vadd.f32 %v4504, %v4527
      %v4643 = vadd.f32 %v4505, %v4528
      %v4644 = vadd.f32 %v4506, %v4524
      %v4645 = vadd.f32 %v4507, %v4526
      %v4646 = vadd.f32 %v4508, %v4527
      %v4647 = vadd.f32 %v4509, %v4528
      %v4648 = vadd.f32 %v4510, %v4524
      %v4649 = vadd.f32 %v4511, %v4526
      %v4650 = vadd.f32 %v4512, %v4527
      %v4651 = vadd.f32 %v4513, %v4528
      %v4652 = vadd.f32 %v4514, %v4524
      %v4653 = vadd.f32 %v4515, %v4526
      %v4654 = vadd.f32 %v4516, %v4527
      %v4655 = vadd.f32 %v4517, %v4528
      %v4656 = vadd.f32 %v4518, %v4524
      %v4657 = vadd.f32 %v4519, %v4526
      %v4658 = vadd.f32 %v4520, %v4527
      %v4659 = vadd.f32 %v4521, %v4528
      %v4660 = vmax.f32 %v4532, 0.0
      %v4661 = vmax.f32 %v4533, 0.0
      %v4662 = vmax.f32 %v4534, 0.0
      %v4663 = vmax.f32 %v4535, 0.0
      %v4664 = vmax.f32 %v4536, 0.0
      %v4665 = vmax.f32 %v4537, 0.0
      %v4666 = vmax.f32 %v4538, 0.0
      %v4667 = vmax.f32 %v4539, 0.0
      %v4668 = vmax.f32 %v4540, 0.0
      %v4669 = vmax.f32 %v4541, 0.0
      %v4670 = vmax.f32 %v4542, 0.0
      %v4671 = vmax.f32 %v4543, 0.0
      %v4672 = vmax.f32 %v4544, 0.0
      %v4673 = vmax.f32 %v4545, 0.0
      %v4674 = vmax.f32 %v4546, 0.0
      %v4675 = vmax.f32 %v4547, 0.0
      %v4676 = vmax.f32 %v4548, 0.0
      %v4677 = vmax.f32 %v4549, 0.0
      %v4678 = vmax.f32 %v4550, 0.0
      %v4679 = vmax.f32 %v4551, 0.0
      %v4680 = vmax.f32 %v4552, 0.0
      %v4681 = vmax.f32 %v4553, 0.0
      %v4682 = vmax.f32 %v4554, 0.0
      %v4683 = vmax.f32 %v4555, 0.0
      %v4684 = vmax.f32 %v4556, 0.0
      %v4685 = vmax.f32 %v4557, 0.0
      %v4686 = vmax.f32 %v4558, 0.0
      %v4687 = vmax.f32 %v4559, 0.0
      %v4688 = vmax.f32 %v4560, 0.0
      %v4689 = vmax.f32 %v4561, 0.0
      %v4690 = vmax.f32 %v4562, 0.0
      %v4691 = vmax.f32 %v4563, 0.0
      %v4692 = vmax.f32 %v4564, 0.0
      %v4693 = vmax.f32 %v4565, 0.0
      %v4694 = vmax.f32 %v4566, 0.0
      %v4695 = vmax.f32 %v4567, 0.0
      %v4696 = vmax.f32 %v4568, 0.0
      %v4697 = vmax.f32 %v4569, 0.0
      %v4698 = vmax.f32 %v4570, 0.0
      %v4699 = vmax.f32 %v4571, 0.0
      %v4700 = vmax.f32 %v4572, 0.0
      %v4701 = vmax.f32 %v4573, 0.0
      %v4702 = vmax.f32 %v4574, 0.0
      %v4703 = vmax.f32 %v4575, 0.0
      %v4704 = vmax.f32 %v4576, 0.0
      %v4705 = vmax.f32 %v4577, 0.0
      %v4706 = vmax.f32 %v4578, 0.0
      %v4707 = vmax.f32 %v4579, 0.0
      %v4708 = vmax.f32 %v4580, 0.0
      %v4709 = vmax.f32 %v4581, 0.0
      %v4710 = vmax.f32 %v4582, 0.0
      %v4711 = vmax.f32 %v4583, 0.0
      %v4712 = vmax.f32 %v4584, 0.0
      %v4713 = vmax.f32 %v4585, 0.0
      %v4714 = vmax.f32 %v4586, 0.0
      %v4715 = vmax.f32 %v4587, 0.0
      %v4716 = vmax.f32 %v4588, 0.0
      %v4717 = vmax.f32 %v4589, 0.0
      %v4718 = vmax.f32 %v4590, 0.0
      %v4719 = vmax.f32 %v4591, 0.0
      %v4720 = vmax.f32 %v4592, 0.0
      %v4721 = vmax.f32 %v4593, 0.0
      %v4722 = vmax.f32 %v4594, 0.0
      %v4723 = vmax.f32 %v4595, 0.0
      %v4724 = vmax.f32 %v4596, 0.0
      %v4725 = vmax.f32 %v4597, 0.0
      %v4726 = vmax.f32 %v4598, 0.0
      %v4727 = vmax.f32 %v4599, 0.0
      %v4728 = vmax.f32 %v4600, 0.0
      %v4729 = vmax.f32 %v4601, 0.0
      %v4730 = vmax.f32 %v4602, 0.0
      %v4731 = vmax.f32 %v4603, 0.0
      %v4732 = vmax.f32 %v4604, 0.0
      %v4733 = vmax.f32 %v4605, 0.0
      %v4734 = vmax.f32 %v4606, 0.0
      %v4735 = vmax.f32 %v4607, 0.0
      %v4736 = vmax.f32 %v4608, 0.0
      %v4737 = vmax.f32 %v4609, 0.0
      %v4738 = vmax.f32 %v4610, 0.0
      %v4739 = vmax.f32 %v4611, 0.0
      %v4740 = vmax.f32 %v4612, 0.0
      %v4741 = vmax.f32 %v4613, 0.0
      %v4742 = vmax.f32 %v4614, 0.0
      %v4743 = vmax.f32 %v4615, 0.0
      %v4744 = vmax.f32 %v4616, 0.0
      %v4745 = vmax.f32 %v4617, 0.0
      %v4746 = vmax.f32 %v4618, 0.0
      %v4747 = vmax.f32 %v4619, 0.0
      %v4748 = vmax.f32 %v4620, 0.0
      %v4749 = vmax.f32 %v4621, 0.0
      %v4750 = vmax.f32 %v4622, 0.0
      %v4751 = vmax.f32 %v4623, 0.0
      %v4752 = vmax.f32 %v4624, 0.0
      %v4753 = vmax.f32 %v4625, 0.0
      %v4754 = vmax.f32 %v4626, 0.0
      %v4755 = vmax.f32 %v4627, 0.0
      %v4756 = vmax.f32 %v4628, 0.0
      %v4757 = vmax.f32 %v4629, 0.0
      %v4758 = vmax.f32 %v4630, 0.0
      %v4759 = vmax.f32 %v4631, 0.0
      %v4760 = vmax.f32 %v4632, 0.0
      %v4761 = vmax.f32 %v4633, 0.0
      %v4762 = vmax.f32 %v4634, 0.0
      %v4763 = vmax.f32 %v4635, 0.0
      %v4764 = vmax.f32 %v4636, 0.0
      %v4765 = vmax.f32 %v4637, 0.0
      %v4766 = vmax.f32 %v4638, 0.0
      %v4767 = vmax.f32 %v4639, 0.0
      %v4768 = vmax.f32 %v4640, 0.0
      %v4769 = vmax.f32 %v4641, 0.0
      %v4770 = vmax.f32 %v4642, 0.0
      %v4771 = vmax.f32 %v4643, 0.0
      %v4772 = vmax.f32 %v4644, 0.0
      %v4773 = vmax.f32 %v4645, 0.0
      %v4774 = vmax.f32 %v4646, 0.0
      %v4775 = vmax.f32 %v4647, 0.0
      %v4776 = vmax.f32 %v4648, 0.0
      %v4777 = vmax.f32 %v4649, 0.0
      %v4778 = vmax.f32 %v4650, 0.0
      %v4779 = vmax.f32 %v4651, 0.0
      %v4780 = vmax.f32 %v4652, 0.0
      %v4781 = vmax.f32 %v4653, 0.0
      %v4782 = vmax.f32 %v4654, 0.0
      %v4783 = vmax.f32 %v4655, 0.0
      %v4784 = vmax.f32 %v4656, 0.0
      %v4785 = vmax.f32 %v4657, 0.0
      %v4786 = vmax.f32 %v4658, 0.0
      %v4787 = vmax.f32 %v4659, 0.0
      %4916 = vst [vmem:[#allocation1] ss:$4 sm:$0xff] %v4660
      %s4917 = scalar_lea.vmem [#allocation1], 1
      %4918 = vst [vmem:[%s4917] ss:$4 sm:$0xff] %v4661
      %s4919 = scalar_lea.vmem [#allocation1], 2
      %4920 = vst [vmem:[%s4919] ss:$4 sm:$0xff] %v4662
      %s4921 = scalar_lea.vmem [#allocation1], 3
      %4922 = vst [vmem:[%s4921] ss:$4 sm:$0xff] %v4663
      %s4923 = scalar_lea.vmem [#allocation1], 32
      %4924 = vst [vmem:[%s4923] ss:$4 sm:$0xff] %v4664
      %s4925 = scalar_lea.vmem [#allocation1], 33
      %4926 = vst [vmem:[%s4925] ss:$4 sm:$0xff] %v4665
      %s4927 = scalar_lea.vmem [#allocation1], 34
      %4928 = vst [vmem:[%s4927] ss:$4 sm:$0xff] %v4666
      %s4929 = scalar_lea.vmem [#allocation1], 35
      %4930 = vst [vmem:[%s4929] ss:$4 sm:$0xff] %v4667
      %v4931 = vld.sshfl [vmem:[#allocation1] sm:$0xff pattern:$0x73625140]
      %v4932 = vld.sshfl [vmem:[#allocation1 + $0x20] sm:$0xff pattern:$0x73625140]
      %4933 = vst [vmem:[#allocation1] ss:$4 sm:$0xff] %v4668
      %4934 = vst [vmem:[%s4917] ss:$4 sm:$0xff] %v4669
      %4935 = vst [vmem:[%s4919] ss:$4 sm:$0xff] %v4670
      %4936 = vst [vmem:[%s4921] ss:$4 sm:$0xff] %v4671
      %4937 = vst [vmem:[%s4923] ss:$4 sm:$0xff] %v4672
      %4938 = vst [vmem:[%s4925] ss:$4 sm:$0xff] %v4673
      %4939 = vst [vmem:[%s4927] ss:$4 sm:$0xff] %v4674
      %4940 = vst [vmem:[%s4929] ss:$4 sm:$0xff] %v4675
      %v4941 = vld.sshfl [vmem:[#allocation1] sm:$0xff pattern:$0x73625140]
      %v4942 = vld.sshfl [vmem:[#allocation1 + $0x20] sm:$0xff pattern:$0x73625140]
      %4943 = vst [vmem:[#allocation1] ss:$4 sm:$0xff] %v4676
      %4944 = vst [vmem:[%s4917] ss:$4 sm:$0xff] %v4677
      %4945 = vst [vmem:[%s4919] ss:$4 sm:$0xff] %v4678
      %4946 = vst [vmem:[%s4921] ss:$4 sm:$0xff] %v4679
      %4947 = vst [vmem:[%s4923] ss:$4 sm:$0xff] %v4680
      %4948 = vst [vmem:[%s4925] ss:$4 sm:$0xff] %v4681
      %4949 = vst [vmem:[%s4927] ss:$4 sm:$0xff] %v4682
      %4950 = vst [vmem:[%s4929] ss:$4 sm:$0xff] %v4683
      %v4951 = vld.sshfl [vmem:[#allocation1] sm:$0xff pattern:$0x73625140]
      %v4952 = vld.sshfl [vmem:[#allocation1 + $0x20] sm:$0xff pattern:$0x73625140]
      %4953 = vst [vmem:[#allocation1] ss:$4 sm:$0xff] %v4684
      %4954 = vst [vmem:[%s4917] ss:$4 sm:$0xff] %v4685
      %4955 = vst [vmem:[%s4919] ss:$4 sm:$0xff] %v4686
      %4956 = vst [vmem:[%s4921] ss:$4 sm:$0xff] %v4687
      %4957 = vst [vmem:[%s4923] ss:$4 sm:$0xff] %v4688
      %4958 = vst [vmem:[%s4925] ss:$4 sm:$0xff] %v4689
      %4959 = vst [vmem:[%s4927] ss:$4 sm:$0xff] %v4690
      %4960 = vst [vmem:[%s4929] ss:$4 sm:$0xff] %v4691
      %v4961 = vld.sshfl [vmem:[#allocation1] sm:$0xff pattern:$0x73625140]
      %v4962 = vld.sshfl [vmem:[#allocation1 + $0x20] sm:$0xff pattern:$0x73625140]
      %4963 = vst [vmem:[#allocation1] ss:$4 sm:$0xff] %v4692
      %4964 = vst [vmem:[%s4917] ss:$4 sm:$0xff] %v4693
      %4965 = vst [vmem:[%s4919] ss:$4 sm:$0xff] %v4694
      %4966 = vst [vmem:[%s4921] ss:$4 sm:$0xff] %v4695
      %4967 = vst [vmem:[%s4923] ss:$4 sm:$0xff] %v4696
      %4968 = vst [vmem:[%s4925] ss:$4 sm:$0xff] %v4697
      %4969 = vst [vmem:[%s4927] ss:$4 sm:$0xff] %v4698
      %4970 = vst [vmem:[%s4929] ss:$4 sm:$0xff] %v4699
      %v4971 = vld.sshfl [vmem:[#allocation1] sm:$0xff pattern:$0x73625140]
      %v4972 = vld.sshfl [vmem:[#allocation1 + $0x20] sm:$0xff pattern:$0x73625140]
      %4973 = vst [vmem:[#allocation1] ss:$4 sm:$0xff] %v4700
      %4974 = vst [vmem:[%s4917] ss:$4 sm:$0xff] %v4701
      %4975 = vst [vmem:[%s4919] ss:$4 sm:$0xff] %v4702
      %4976 = vst [vmem:[%s4921] ss:$4 sm:$0xff] %v4703
      %4977 = vst [vmem:[%s4923] ss:$4 sm:$0xff] %v4704
      %4978 = vst [vmem:[%s4925] ss:$4 sm:$0xff] %v4705
      %4979 = vst [vmem:[%s4927] ss:$4 sm:$0xff] %v4706
      %4980 = vst [vmem:[%s4929] ss:$4 sm:$0xff] %v4707
      %v4981 = vld.sshfl [vmem:[#allocation1] sm:$0xff pattern:$0x73625140]
      %v4982 = vld.sshfl [vmem:[#allocation1 + $0x20] sm:$0xff pattern:$0x73625140]
      %4983 = vst [vmem:[#allocation1] ss:$4 sm:$0xff] %v4708
      %4984 = vst [vmem:[%s4917] ss:$4 sm:$0xff] %v4709
      %4985 = vst [vmem:[%s4919] ss:$4 sm:$0xff] %v4710
      %4986 = vst [vmem:[%s4921] ss:$4 sm:$0xff] %v4711
      %4987 = vst [vmem:[%s4923] ss:$4 sm:$0xff] %v4712
      %4988 = vst [vmem:[%s4925] ss:$4 sm:$0xff] %v4713
      %4989 = vst [vmem:[%s4927] ss:$4 sm:$0xff] %v4714
      %4990 = vst [vmem:[%s4929] ss:$4 sm:$0xff] %v4715
      %v4991 = vld.sshfl [vmem:[#allocation1] sm:$0xff pattern:$0x73625140]
      %v4992 = vld.sshfl [vmem:[#allocation1 + $0x20] sm:$0xff pattern:$0x73625140]
      %4993 = vst [vmem:[#allocation1] ss:$4 sm:$0xff] %v4716
      %4994 = vst [vmem:[%s4917] ss:$4 sm:$0xff] %v4717
      %4995 = vst [vmem:[%s4919] ss:$4 sm:$0xff] %v4718
      %4996 = vst [vmem:[%s4921] ss:$4 sm:$0xff] %v4719
      %4997 = vst [vmem:[%s4923] ss:$4 sm:$0xff] %v4720
      %4998 = vst [vmem:[%s4925] ss:$4 sm:$0xff] %v4721
      %4999 = vst [vmem:[%s4927] ss:$4 sm:$0xff] %v4722
      %5000 = vst [vmem:[%s4929] ss:$4 sm:$0xff] %v4723
      %v5001 = vld.sshfl [vmem:[#allocation1] sm:$0xff pattern:$0x73625140]
      %v5002 = vld.sshfl [vmem:[#allocation1 + $0x20] sm:$0xff pattern:$0x73625140]
      %5003 = vst [vmem:[#allocation1] ss:$4 sm:$0xff] %v4724
      %5004 = vst [vmem:[%s4917] ss:$4 sm:$0xff] %v4725
      %5005 = vst [vmem:[%s4919] ss:$4 sm:$0xff] %v4726
      %5006 = vst [vmem:[%s4921] ss:$4 sm:$0xff] %v4727
      %5007 = vst [vmem:[%s4923] ss:$4 sm:$0xff] %v4728
      %5008 = vst [vmem:[%s4925] ss:$4 sm:$0xff] %v4729
      %5009 = vst [vmem:[%s4927] ss:$4 sm:$0xff] %v4730
      %5010 = vst [vmem:[%s4929] ss:$4 sm:$0xff] %v4731
      %v5011 = vld.sshfl [vmem:[#allocation1] sm:$0xff pattern:$0x73625140]
      %v5012 = vld.sshfl [vmem:[#allocation1 + $0x20] sm:$0xff pattern:$0x73625140]
      %5013 = vst [vmem:[#allocation1] ss:$4 sm:$0xff] %v4732
      %5014 = vst [vmem:[%s4917] ss:$4 sm:$0xff] %v4733
      %5015 = vst [vmem:[%s4919] ss:$4 sm:$0xff] %v4734
      %5016 = vst [vmem:[%s4921] ss:$4 sm:$0xff] %v4735
      %5017 = vst [vmem:[%s4923] ss:$4 sm:$0xff] %v4736
      %5018 = vst [vmem:[%s4925] ss:$4 sm:$0xff] %v4737
      %5019 = vst [vmem:[%s4927] ss:$4 sm:$0xff] %v4738
      %5020 = vst [vmem:[%s4929] ss:$4 sm:$0xff] %v4739
      %v5021 = vld.sshfl [vmem:[#allocation1] sm:$0xff pattern:$0x73625140]
      %v5022 = vld.sshfl [vmem:[#allocation1 + $0x20] sm:$0xff pattern:$0x73625140]
      %5023 = vst [vmem:[#allocation1] ss:$4 sm:$0xff] %v4740
      %5024 = vst [vmem:[%s4917] ss:$4 sm:$0xff] %v4741
      %5025 = vst [vmem:[%s4919] ss:$4 sm:$0xff] %v4742
      %5026 = vst [vmem:[%s4921] ss:$4 sm:$0xff] %v4743
      %5027 = vst [vmem:[%s4923] ss:$4 sm:$0xff] %v4744
      %5028 = vst [vmem:[%s4925] ss:$4 sm:$0xff] %v4745
      %5029 = vst [vmem:[%s4927] ss:$4 sm:$0xff] %v4746
      %5030 = vst [vmem:[%s4929] ss:$4 sm:$0xff] %v4747
      %v5031 = vld.sshfl [vmem:[#allocation1] sm:$0xff pattern:$0x73625140]
      %v5032 = vld.sshfl [vmem:[#allocation1 + $0x20] sm:$0xff pattern:$0x73625140]
      %5033 = vst [vmem:[#allocation1] ss:$4 sm:$0xff] %v4748
      %5034 = vst [vmem:[%s4917] ss:$4 sm:$0xff] %v4749
      %5035 = vst [vmem:[%s4919] ss:$4 sm:$0xff] %v4750
      %5036 = vst [vmem:[%s4921] ss:$4 sm:$0xff] %v4751
      %5037 = vst [vmem:[%s4923] ss:$4 sm:$0xff] %v4752
      %5038 = vst [vmem:[%s4925] ss:$4 sm:$0xff] %v4753
      %5039 = vst [vmem:[%s4927] ss:$4 sm:$0xff] %v4754
      %5040 = vst [vmem:[%s4929] ss:$4 sm:$0xff] %v4755
      %v5041 = vld.sshfl [vmem:[#allocation1] sm:$0xff pattern:$0x73625140]
      %v5042 = vld.sshfl [vmem:[#allocation1 + $0x20] sm:$0xff pattern:$0x73625140]
      %5043 = vst [vmem:[#allocation1] ss:$4 sm:$0xff] %v4756
      %5044 = vst [vmem:[%s4917] ss:$4 sm:$0xff] %v4757
      %5045 = vst [vmem:[%s4919] ss:$4 sm:$0xff] %v4758
      %5046 = vst [vmem:[%s4921] ss:$4 sm:$0xff] %v4759
      %5047 = vst [vmem:[%s4923] ss:$4 sm:$0xff] %v4760
      %5048 = vst [vmem:[%s4925] ss:$4 sm:$0xff] %v4761
      %5049 = vst [vmem:[%s4927] ss:$4 sm:$0xff] %v4762
      %5050 = vst [vmem:[%s4929] ss:$4 sm:$0xff] %v4763
      %v5051 = vld.sshfl [vmem:[#allocation1] sm:$0xff pattern:$0x73625140]
      %v5052 = vld.sshfl [vmem:[#allocation1 + $0x20] sm:$0xff pattern:$0x73625140]
      %5053 = vst [vmem:[#allocation1] ss:$4 sm:$0xff] %v4764
      %5054 = vst [vmem:[%s4917] ss:$4 sm:$0xff] %v4765
      %5055 = vst [vmem:[%s4919] ss:$4 sm:$0xff] %v4766
      %5056 = vst [vmem:[%s4921] ss:$4 sm:$0xff] %v4767
      %5057 = vst [vmem:[%s4923] ss:$4 sm:$0xff] %v4768
      %5058 = vst [vmem:[%s4925] ss:$4 sm:$0xff] %v4769
      %5059 = vst [vmem:[%s4927] ss:$4 sm:$0xff] %v4770
      %5060 = vst [vmem:[%s4929] ss:$4 sm:$0xff] %v4771
      %v5061 = vld.sshfl [vmem:[#allocation1] sm:$0xff pattern:$0x73625140]
      %v5062 = vld.sshfl [vmem:[#allocation1 + $0x20] sm:$0xff pattern:$0x73625140]
      %5063 = vst [vmem:[#allocation1] ss:$4 sm:$0xff] %v4772
      %5064 = vst [vmem:[%s4917] ss:$4 sm:$0xff] %v4773
      %5065 = vst [vmem:[%s4919] ss:$4 sm:$0xff] %v4774
      %5066 = vst [vmem:[%s4921] ss:$4 sm:$0xff] %v4775
      %5067 = vst [vmem:[%s4923] ss:$4 sm:$0xff] %v4776
      %5068 = vst [vmem:[%s4925] ss:$4 sm:$0xff] %v4777
      %5069 = vst [vmem:[%s4927] ss:$4 sm:$0xff] %v4778
      %5070 = vst [vmem:[%s4929] ss:$4 sm:$0xff] %v4779
      %v5071 = vld.sshfl [vmem:[#allocation1] sm:$0xff pattern:$0x73625140]
      %v5072 = vld.sshfl [vmem:[#allocation1 + $0x20] sm:$0xff pattern:$0x73625140]
      %5073 = vst [vmem:[#allocation1] ss:$4 sm:$0xff] %v4780
      %5074 = vst [vmem:[%s4917] ss:$4 sm:$0xff] %v4781
      %5075 = vst [vmem:[%s4919] ss:$4 sm:$0xff] %v4782
      %5076 = vst [vmem:[%s4921] ss:$4 sm:$0xff] %v4783
      %5077 = vst [vmem:[%s4923] ss:$4 sm:$0xff] %v4784
      %5078 = vst [vmem:[%s4925] ss:$4 sm:$0xff] %v4785
      %5079 = vst [vmem:[%s4927] ss:$4 sm:$0xff] %v4786
      %5080 = vst [vmem:[%s4929] ss:$4 sm:$0xff] %v4787
      %v5081 = vld.sshfl [vmem:[#allocation1] sm:$0xff pattern:$0x73625140]
      %v5082 = vld.sshfl [vmem:[#allocation1 + $0x20] sm:$0xff pattern:$0x73625140]
      %v5115 = vpack.c.bf16 %v4931, %v4931
      %v5116 = vpack.c.bf16 %v4932, %v4932
      %v5117 = vpack.c.bf16 %v4941, %v4941
      %v5118 = vpack.c.bf16 %v4942, %v4942
      %v5119 = vpack.c.bf16 %v4951, %v4951
      %v5120 = vpack.c.bf16 %v4952, %v4952
      %v5121 = vpack.c.bf16 %v4961, %v4961
      %v5122 = vpack.c.bf16 %v4962, %v4962
      %v5123 = vpack.c.bf16 %v4971, %v4971
      %v5124 = vpack.c.bf16 %v4972, %v4972
      %v5125 = vpack.c.bf16 %v4981, %v4981
      %v5126 = vpack.c.bf16 %v4982, %v4982
      %v5127 = vpack.c.bf16 %v4991, %v4991
      %v5128 = vpack.c.bf16 %v4992, %v4992
      %v5129 = vpack.c.bf16 %v5001, %v5001
      %v5130 = vpack.c.bf16 %v5002, %v5002
      %v5131 = vpack.c.bf16 %v5011, %v5011
      %v5132 = vpack.c.bf16 %v5012, %v5012
      %v5133 = vpack.c.bf16 %v5021, %v5021
      %v5134 = vpack.c.bf16 %v5022, %v5022
      %v5135 = vpack.c.bf16 %v5031, %v5031
      %v5136 = vpack.c.bf16 %v5032, %v5032
      %v5137 = vpack.c.bf16 %v5041, %v5041
      %v5138 = vpack.c.bf16 %v5042, %v5042
      %v5139 = vpack.c.bf16 %v5051, %v5051
      %v5140 = vpack.c.bf16 %v5052, %v5052
      %v5141 = vpack.c.bf16 %v5061, %v5061
      %v5142 = vpack.c.bf16 %v5062, %v5062
      %v5143 = vpack.c.bf16 %v5071, %v5071
      %v5144 = vpack.c.bf16 %v5072, %v5072
      %v5145 = vpack.c.bf16 %v5081, %v5081
      %v5146 = vpack.c.bf16 %v5082, %v5082
      %v5147 = vld [vmem:[#allocation3] sm:$0x1]
      %v5148 = vsel %vm314, 0, %v5147
      %5149 = vst [vmem:[#allocation3] sm:$0x1] %v5148
      %v5150 = vld [vmem:[#allocation3 + $0xc] sm:$0x1]
      %v5151 = vsel %vm314, 0, %v5150
      %5152 = vst [vmem:[#allocation3 + $0xc] sm:$0x1] %v5151
      %v5153 = vld [vmem:[#allocation3 + $0x18] sm:$0x1]
      %v5154 = vsel %vm314, 0, %v5153
      %5155 = vst [vmem:[#allocation3 + $0x18] sm:$0x1] %v5154
      %v5156 = vld [vmem:[#allocation3 + $0x24] sm:$0x1]
      %v5157 = vsel %vm314, 0, %v5156
      %5158 = vst [vmem:[#allocation3 + $0x24] sm:$0x1] %v5157
      %v5159 = vld [vmem:[#allocation3 + $0x30] sm:$0x1]
      %v5160 = vsel %vm314, 0, %v5159
      %5161 = vst [vmem:[#allocation3 + $0x30] sm:$0x1] %v5160
      %v5162 = vld [vmem:[#allocation3 + $0x3c] sm:$0x1]
      %v5163 = vsel %vm314, 0, %v5162
      %5164 = vst [vmem:[#allocation3 + $0x3c] sm:$0x1] %v5163
      %v5165 = vld [vmem:[#allocation3 + $0x48] sm:$0x1]
      %v5166 = vsel %vm314, 0, %v5165
      %5167 = vst [vmem:[#allocation3 + $0x48] sm:$0x1] %v5166
      %v5168 = vld [vmem:[#allocation3 + $0x54] sm:$0x1]
      %v5169 = vsel %vm314, 0, %v5168
      %5170 = vst [vmem:[#allocation3 + $0x54] sm:$0x1] %v5169
      %v5171 = vld [vmem:[#allocation3 + $0x60] sm:$0x1]
      %v5172 = vsel %vm314, 0, %v5171
      %5173 = vst [vmem:[#allocation3 + $0x60] sm:$0x1] %v5172
      %v5174 = vld [vmem:[#allocation3 + $0x6c] sm:$0x1]
      %v5175 = vsel %vm314, 0, %v5174
      %5176 = vst [vmem:[#allocation3 + $0x6c] sm:$0x1] %v5175
      %v5177 = vld [vmem:[#allocation3 + $0x78] sm:$0x1]
      %v5178 = vsel %vm314, 0, %v5177
      %5179 = vst [vmem:[#allocation3 + $0x78] sm:$0x1] %v5178
      %v5180 = vld [vmem:[#allocation3 + $0x84] sm:$0x1]
      %v5181 = vsel %vm314, 0, %v5180
      %5182 = vst [vmem:[#allocation3 + $0x84] sm:$0x1] %v5181
      %v5183 = vld [vmem:[#allocation3 + $0x90] sm:$0x1]
      %v5184 = vsel %vm314, 0, %v5183
      %5185 = vst [vmem:[#allocation3 + $0x90] sm:$0x1] %v5184
      %v5186 = vld [vmem:[#allocation3 + $0x9c] sm:$0x1]
      %v5187 = vsel %vm314, 0, %v5186
      %5188 = vst [vmem:[#allocation3 + $0x9c] sm:$0x1] %v5187
      %v5189 = vld [vmem:[#allocation3 + $0xa8] sm:$0x1]
      %v5190 = vsel %vm314, 0, %v5189
      %5191 = vst [vmem:[#allocation3 + $0xa8] sm:$0x1] %v5190
      %v5192 = vld [vmem:[#allocation3 + $0xb4] sm:$0x1]
      %v5193 = vsel %vm314, 0, %v5192
      %5194 = vst [vmem:[#allocation3 + $0xb4] sm:$0x1] %v5193
      %v5195 = vld [vmem:[#allocation3 + $0x8] sm:$0x1]
      %v5196 = vsel %vm364, 0, %v5195
      %5197 = vst [vmem:[#allocation3 + $0x8] sm:$0x1] %v5196
      %v5198 = vld [vmem:[#allocation3 + $0x14] sm:$0x1]
      %v5199 = vsel %vm364, 0, %v5198
      %5200 = vst [vmem:[#allocation3 + $0x14] sm:$0x1] %v5199
      %v5201 = vld [vmem:[#allocation3 + $0x20] sm:$0x1]
      %v5202 = vsel %vm364, 0, %v5201
      %5203 = vst [vmem:[#allocation3 + $0x20] sm:$0x1] %v5202
      %v5204 = vld [vmem:[#allocation3 + $0x2c] sm:$0x1]
      %v5205 = vsel %vm364, 0, %v5204
      %5206 = vst [vmem:[#allocation3 + $0x2c] sm:$0x1] %v5205
      %v5207 = vld [vmem:[#allocation3 + $0x38] sm:$0x1]
      %v5208 = vsel %vm364, 0, %v5207
      %5209 = vst [vmem:[#allocation3 + $0x38] sm:$0x1] %v5208
      %v5210 = vld [vmem:[#allocation3 + $0x44] sm:$0x1]
      %v5211 = vsel %vm364, 0, %v5210
      %5212 = vst [vmem:[#allocation3 + $0x44] sm:$0x1] %v5211
      %v5213 = vld [vmem:[#allocation3 + $0x50] sm:$0x1]
      %v5214 = vsel %vm364, 0, %v5213
      %5215 = vst [vmem:[#allocation3 + $0x50] sm:$0x1] %v5214
      %v5216 = vld [vmem:[#allocation3 + $0x5c] sm:$0x1]
      %v5217 = vsel %vm364, 0, %v5216
      %5218 = vst [vmem:[#allocation3 + $0x5c] sm:$0x1] %v5217
      %v5219 = vld [vmem:[#allocation3 + $0x68] sm:$0x1]
      %v5220 = vsel %vm364, 0, %v5219
      %5221 = vst [vmem:[#allocation3 + $0x68] sm:$0x1] %v5220
      %v5222 = vld [vmem:[#allocation3 + $0x74] sm:$0x1]
      %v5223 = vsel %vm364, 0, %v5222
      %5224 = vst [vmem:[#allocation3 + $0x74] sm:$0x1] %v5223
      %v5225 = vld [vmem:[#allocation3 + $0x80] sm:$0x1]
      %v5226 = vsel %vm364, 0, %v5225
      %5227 = vst [vmem:[#allocation3 + $0x80] sm:$0x1] %v5226
      %v5228 = vld [vmem:[#allocation3 + $0x8c] sm:$0x1]
      %v5229 = vsel %vm364, 0, %v5228
      %5230 = vst [vmem:[#allocation3 + $0x8c] sm:$0x1] %v5229
      %v5231 = vld [vmem:[#allocation3 + $0x98] sm:$0x1]
      %v5232 = vsel %vm364, 0, %v5231
      %5233 = vst [vmem:[#allocation3 + $0x98] sm:$0x1] %v5232
      %v5234 = vld [vmem:[#allocation3 + $0xa4] sm:$0x1]
      %v5235 = vsel %vm364, 0, %v5234
      %5236 = vst [vmem:[#allocation3 + $0xa4] sm:$0x1] %v5235
      %v5237 = vld [vmem:[#allocation3 + $0xb0] sm:$0x1]
      %v5238 = vsel %vm364, 0, %v5237
      %5239 = vst [vmem:[#allocation3 + $0xb0] sm:$0x1] %v5238
      %v5240 = vld [vmem:[#allocation3 + $0xbc] sm:$0x1]
      %v5241 = vsel %vm364, 0, %v5240
      %5242 = vst [vmem:[#allocation3 + $0xbc] sm:$0x1] %v5241
      %5243 = vst.msk [vmem:[#allocation3] sm:$0xf] %vm413, 0
      %5244 = vst.msk [vmem:[#allocation3 + $0x4] sm:$0xf] %vm413, 0
      %5245 = vst.msk [vmem:[#allocation3 + $0x8] sm:$0x1] %vm416, 0
      %s5246 = scalar_lea.vmem [#allocation3], 180
      %5247 = vst.msk [vmem:[%s5246] sm:$0xf] %vm419, 0
      %5248 = vst.msk [vmem:[%s5246 + $0x4] sm:$0xf] %vm419, 0
      %5249 = vst.msk [vmem:[%s5246 + $0x8] sm:$0x1] %vm422, 0
      %v5251 = vshrl.u32 %v5115, 16
      %v5253 = vrot.slane %v5251, 7
      %v5254 = vshll.u32 %v5115, 16
      %v5256 = vor.u32 %v5253, %v5254
      %v5257 = vrot.slane %v5253, 4
      %v5259 = vshrl.u32 %v5116, 16
      %v5261 = vrot.slane %v5259, 7
      %v5262 = vshll.u32 %v5116, 16
      %v5264 = vor.u32 %v5261, %v5262
      %v5265 = vsel %vm425, %v5257, %v5264
      %v5266 = vrot.slane %v5261, 4
      %v5268 = vshrl.u32 %v5117, 16
      %v5270 = vrot.slane %v5268, 7
      %v5271 = vshll.u32 %v5117, 16
      %v5273 = vor.u32 %v5270, %v5271
      %v5274 = vrot.slane %v5270, 4
      %v5276 = vshrl.u32 %v5118, 16
      %v5278 = vrot.slane %v5276, 7
      %v5279 = vshll.u32 %v5118, 16
      %v5281 = vor.u32 %v5278, %v5279
      %v5282 = vsel %vm425, %v5274, %v5281
      %v5283 = vrot.slane %v5278, 4
      %v5285 = vshrl.u32 %v5119, 16
      %v5287 = vrot.slane %v5285, 7
      %v5288 = vshll.u32 %v5119, 16
      %v5290 = vor.u32 %v5287, %v5288
      %v5291 = vrot.slane %v5287, 4
      %v5293 = vshrl.u32 %v5120, 16
      %v5295 = vrot.slane %v5293, 7
      %v5296 = vshll.u32 %v5120, 16
      %v5298 = vor.u32 %v5295, %v5296
      %v5299 = vsel %vm425, %v5291, %v5298
      %v5300 = vrot.slane %v5295, 4
      %v5302 = vshrl.u32 %v5121, 16
      %v5304 = vrot.slane %v5302, 7
      %v5305 = vshll.u32 %v5121, 16
      %v5307 = vor.u32 %v5304, %v5305
      %v5308 = vrot.slane %v5304, 4
      %v5310 = vshrl.u32 %v5122, 16
      %v5312 = vrot.slane %v5310, 7
      %v5313 = vshll.u32 %v5122, 16
      %v5315 = vor.u32 %v5312, %v5313
      %v5316 = vsel %vm425, %v5308, %v5315
      %v5317 = vrot.slane %v5312, 4
      %v5319 = vshrl.u32 %v5123, 16
      %v5321 = vrot.slane %v5319, 7
      %v5322 = vshll.u32 %v5123, 16
      %v5324 = vor.u32 %v5321, %v5322
      %v5325 = vrot.slane %v5321, 4
      %v5327 = vshrl.u32 %v5124, 16
      %v5329 = vrot.slane %v5327, 7
      %v5330 = vshll.u32 %v5124, 16
      %v5332 = vor.u32 %v5329, %v5330
      %v5333 = vsel %vm425, %v5325, %v5332
      %v5334 = vrot.slane %v5329, 4
      %v5336 = vshrl.u32 %v5125, 16
      %v5338 = vrot.slane %v5336, 7
      %v5339 = vshll.u32 %v5125, 16
      %v5341 = vor.u32 %v5338, %v5339
      %v5342 = vrot.slane %v5338, 4
      %v5344 = vshrl.u32 %v5126, 16
      %v5346 = vrot.slane %v5344, 7
      %v5347 = vshll.u32 %v5126, 16
      %v5349 = vor.u32 %v5346, %v5347
      %v5350 = vsel %vm425, %v5342, %v5349
      %v5351 = vrot.slane %v5346, 4
      %v5353 = vshrl.u32 %v5127, 16
      %v5355 = vrot.slane %v5353, 7
      %v5356 = vshll.u32 %v5127, 16
      %v5358 = vor.u32 %v5355, %v5356
      %v5359 = vrot.slane %v5355, 4
      %v5361 = vshrl.u32 %v5128, 16
      %v5363 = vrot.slane %v5361, 7
      %v5364 = vshll.u32 %v5128, 16
      %v5366 = vor.u32 %v5363, %v5364
      %v5367 = vsel %vm425, %v5359, %v5366
      %v5368 = vrot.slane %v5363, 4
      %v5370 = vshrl.u32 %v5129, 16
      %v5372 = vrot.slane %v5370, 7
      %v5373 = vshll.u32 %v5129, 16
      %v5375 = vor.u32 %v5372, %v5373
      %v5376 = vrot.slane %v5372, 4
      %v5378 = vshrl.u32 %v5130, 16
      %v5380 = vrot.slane %v5378, 7
      %v5381 = vshll.u32 %v5130, 16
      %v5383 = vor.u32 %v5380, %v5381
      %v5384 = vsel %vm425, %v5376, %v5383
      %v5385 = vrot.slane %v5380, 4
      %v5387 = vshrl.u32 %v5131, 16
      %v5389 = vrot.slane %v5387, 7
      %v5390 = vshll.u32 %v5131, 16
      %v5392 = vor.u32 %v5389, %v5390
      %v5393 = vrot.slane %v5389, 4
      %v5395 = vshrl.u32 %v5132, 16
      %v5397 = vrot.slane %v5395, 7
      %v5398 = vshll.u32 %v5132, 16
      %v5400 = vor.u32 %v5397, %v5398
      %v5401 = vsel %vm425, %v5393, %v5400
      %v5402 = vrot.slane %v5397, 4
      %v5404 = vshrl.u32 %v5133, 16
      %v5406 = vrot.slane %v5404, 7
      %v5407 = vshll.u32 %v5133, 16
      %v5409 = vor.u32 %v5406, %v5407
      %v5410 = vrot.slane %v5406, 4
      %v5412 = vshrl.u32 %v5134, 16
      %v5414 = vrot.slane %v5412, 7
      %v5415 = vshll.u32 %v5134, 16
      %v5417 = vor.u32 %v5414, %v5415
      %v5418 = vsel %vm425, %v5410, %v5417
      %v5419 = vrot.slane %v5414, 4
      %v5421 = vshrl.u32 %v5135, 16
      %v5423 = vrot.slane %v5421, 7
      %v5424 = vshll.u32 %v5135, 16
      %v5426 = vor.u32 %v5423, %v5424
      %v5427 = vrot.slane %v5423, 4
      %v5429 = vshrl.u32 %v5136, 16
      %v5431 = vrot.slane %v5429, 7
      %v5432 = vshll.u32 %v5136, 16
      %v5434 = vor.u32 %v5431, %v5432
      %v5435 = vsel %vm425, %v5427, %v5434
      %v5436 = vrot.slane %v5431, 4
      %v5438 = vshrl.u32 %v5137, 16
      %v5440 = vrot.slane %v5438, 7
      %v5441 = vshll.u32 %v5137, 16
      %v5443 = vor.u32 %v5440, %v5441
      %v5444 = vrot.slane %v5440, 4
      %v5446 = vshrl.u32 %v5138, 16
      %v5448 = vrot.slane %v5446, 7
      %v5449 = vshll.u32 %v5138, 16
      %v5451 = vor.u32 %v5448, %v5449
      %v5452 = vsel %vm425, %v5444, %v5451
      %v5453 = vrot.slane %v5448, 4
      %v5455 = vshrl.u32 %v5139, 16
      %v5457 = vrot.slane %v5455, 7
      %v5458 = vshll.u32 %v5139, 16
      %v5460 = vor.u32 %v5457, %v5458
      %v5461 = vrot.slane %v5457, 4
      %v5463 = vshrl.u32 %v5140, 16
      %v5465 = vrot.slane %v5463, 7
      %v5466 = vshll.u32 %v5140, 16
      %v5468 = vor.u32 %v5465, %v5466
      %v5469 = vsel %vm425, %v5461, %v5468
      %v5470 = vrot.slane %v5465, 4
      %v5472 = vshrl.u32 %v5141, 16
      %v5474 = vrot.slane %v5472, 7
      %v5475 = vshll.u32 %v5141, 16
      %v5477 = vor.u32 %v5474, %v5475
      %v5478 = vrot.slane %v5474, 4
      %v5480 = vshrl.u32 %v5142, 16
      %v5482 = vrot.slane %v5480, 7
      %v5483 = vshll.u32 %v5142, 16
      %v5485 = vor.u32 %v5482, %v5483
      %v5486 = vsel %vm425, %v5478, %v5485
      %v5487 = vrot.slane %v5482, 4
      %v5489 = vshrl.u32 %v5143, 16
      %v5491 = vrot.slane %v5489, 7
      %v5492 = vshll.u32 %v5143, 16
      %v5494 = vor.u32 %v5491, %v5492
      %v5495 = vrot.slane %v5491, 4
      %v5497 = vshrl.u32 %v5144, 16
      %v5499 = vrot.slane %v5497, 7
      %v5500 = vshll.u32 %v5144, 16
      %v5502 = vor.u32 %v5499, %v5500
      %v5503 = vsel %vm425, %v5495, %v5502
      %v5504 = vrot.slane %v5499, 4
      %s5550 = scalar_lea.vmem [#allocation3], 12
      %v5551 = vld [vmem:[%s5550] sm:$0xf]
      %v5552 = vsel %vm728, %v5256, %v5551
      %5553 = vst [vmem:[%s5550] sm:$0xf] %v5552
      %5554 = vst.msk [vmem:[%s5550 + $0x4] sm:$0xf] %vm413, %v5265
      %v5555 = vld [vmem:[%s5550 + $0x8] sm:$0x1]
      %v5556 = vsel %vm734, %v5266, %v5555
      %5557 = vst [vmem:[%s5550 + $0x8] sm:$0x1] %v5556
      %v5558 = vld [vmem:[%s5550 + $0xc] sm:$0xf]
      %v5559 = vsel %vm728, %v5273, %v5558
      %5560 = vst [vmem:[%s5550 + $0xc] sm:$0xf] %v5559
      %5561 = vst.msk [vmem:[%s5550 + $0x10] sm:$0xf] %vm413, %v5282
      %v5562 = vld [vmem:[%s5550 + $0x14] sm:$0x1]
      %v5563 = vsel %vm734, %v5283, %v5562
      %5564 = vst [vmem:[%s5550 + $0x14] sm:$0x1] %v5563
      %v5565 = vld [vmem:[%s5550 + $0x18] sm:$0xf]
      %v5566 = vsel %vm728, %v5290, %v5565
      %5567 = vst [vmem:[%s5550 + $0x18] sm:$0xf] %v5566
      %5568 = vst.msk [vmem:[%s5550 + $0x1c] sm:$0xf] %vm413, %v5299
      %v5569 = vld [vmem:[%s5550 + $0x20] sm:$0x1]
      %v5570 = vsel %vm734, %v5300, %v5569
      %5571 = vst [vmem:[%s5550 + $0x20] sm:$0x1] %v5570
      %v5572 = vld [vmem:[%s5550 + $0x24] sm:$0xf]
      %v5573 = vsel %vm728, %v5307, %v5572
      %5574 = vst [vmem:[%s5550 + $0x24] sm:$0xf] %v5573
      %5575 = vst.msk [vmem:[%s5550 + $0x28] sm:$0xf] %vm413, %v5316
      %v5576 = vld [vmem:[%s5550 + $0x2c] sm:$0x1]
      %v5577 = vsel %vm734, %v5317, %v5576
      %5578 = vst [vmem:[%s5550 + $0x2c] sm:$0x1] %v5577
      %v5579 = vld [vmem:[%s5550 + $0x30] sm:$0xf]
      %v5580 = vsel %vm728, %v5324, %v5579
      %5581 = vst [vmem:[%s5550 + $0x30] sm:$0xf] %v5580
      %5582 = vst.msk [vmem:[%s5550 + $0x34] sm:$0xf] %vm413, %v5333
      %v5583 = vld [vmem:[%s5550 + $0x38] sm:$0x1]
      %v5584 = vsel %vm734, %v5334, %v5583
      %5585 = vst [vmem:[%s5550 + $0x38] sm:$0x1] %v5584
      %v5586 = vld [vmem:[%s5550 + $0x3c] sm:$0xf]
      %v5587 = vsel %vm728, %v5341, %v5586
      %5588 = vst [vmem:[%s5550 + $0x3c] sm:$0xf] %v5587
      %5589 = vst.msk [vmem:[%s5550 + $0x40] sm:$0xf] %vm413, %v5350
      %v5590 = vld [vmem:[%s5550 + $0x44] sm:$0x1]
      %v5591 = vsel %vm734, %v5351, %v5590
      %5592 = vst [vmem:[%s5550 + $0x44] sm:$0x1] %v5591
      %v5593 = vld [vmem:[%s5550 + $0x48] sm:$0xf]
      %v5594 = vsel %vm728, %v5358, %v5593
      %5595 = vst [vmem:[%s5550 + $0x48] sm:$0xf] %v5594
      %5596 = vst.msk [vmem:[%s5550 + $0x4c] sm:$0xf] %vm413, %v5367
      %v5597 = vld [vmem:[%s5550 + $0x50] sm:$0x1]
      %v5598 = vsel %vm734, %v5368, %v5597
      %5599 = vst [vmem:[%s5550 + $0x50] sm:$0x1] %v5598
      %v5600 = vld [vmem:[%s5550 + $0x54] sm:$0xf]
      %v5601 = vsel %vm728, %v5375, %v5600
      %5602 = vst [vmem:[%s5550 + $0x54] sm:$0xf] %v5601
      %5603 = vst.msk [vmem:[%s5550 + $0x58] sm:$0xf] %vm413, %v5384
      %v5604 = vld [vmem:[%s5550 + $0x5c] sm:$0x1]
      %v5605 = vsel %vm734, %v5385, %v5604
      %5606 = vst [vmem:[%s5550 + $0x5c] sm:$0x1] %v5605
      %v5607 = vld [vmem:[%s5550 + $0x60] sm:$0xf]
      %v5608 = vsel %vm728, %v5392, %v5607
      %5609 = vst [vmem:[%s5550 + $0x60] sm:$0xf] %v5608
      %5610 = vst.msk [vmem:[%s5550 + $0x64] sm:$0xf] %vm413, %v5401
      %v5611 = vld [vmem:[%s5550 + $0x68] sm:$0x1]
      %v5612 = vsel %vm734, %v5402, %v5611
      %5613 = vst [vmem:[%s5550 + $0x68] sm:$0x1] %v5612
      %v5614 = vld [vmem:[%s5550 + $0x6c] sm:$0xf]
      %v5615 = vsel %vm728, %v5409, %v5614
      %5616 = vst [vmem:[%s5550 + $0x6c] sm:$0xf] %v5615
      %5617 = vst.msk [vmem:[%s5550 + $0x70] sm:$0xf] %vm413, %v5418
      %v5618 = vld [vmem:[%s5550 + $0x74] sm:$0x1]
      %v5619 = vsel %vm734, %v5419, %v5618
      %5620 = vst [vmem:[%s5550 + $0x74] sm:$0x1] %v5619
      %v5621 = vld [vmem:[%s5550 + $0x78] sm:$0xf]
      %v5622 = vsel %vm728, %v5426, %v5621
      %5623 = vst [vmem:[%s5550 + $0x78] sm:$0xf] %v5622
      %5624 = vst.msk [vmem:[%s5550 + $0x7c] sm:$0xf] %vm413, %v5435
      %v5625 = vld [vmem:[%s5550 + $0x80] sm:$0x1]
      %v5626 = vsel %vm734, %v5436, %v5625
      %5627 = vst [vmem:[%s5550 + $0x80] sm:$0x1] %v5626
      %v5628 = vld [vmem:[%s5550 + $0x84] sm:$0xf]
      %v5629 = vsel %vm728, %v5443, %v5628
      %5630 = vst [vmem:[%s5550 + $0x84] sm:$0xf] %v5629
      %5631 = vst.msk [vmem:[%s5550 + $0x88] sm:$0xf] %vm413, %v5452
      %v5632 = vld [vmem:[%s5550 + $0x8c] sm:$0x1]
      %v5633 = vsel %vm734, %v5453, %v5632
      %5634 = vst [vmem:[%s5550 + $0x8c] sm:$0x1] %v5633
      %v5635 = vld [vmem:[%s5550 + $0x90] sm:$0xf]
      %v5636 = vsel %vm728, %v5460, %v5635
      %5637 = vst [vmem:[%s5550 + $0x90] sm:$0xf] %v5636
      %5638 = vst.msk [vmem:[%s5550 + $0x94] sm:$0xf] %vm413, %v5469
      %v5639 = vld [vmem:[%s5550 + $0x98] sm:$0x1]
      %v5640 = vsel %vm734, %v5470, %v5639
      %5641 = vst [vmem:[%s5550 + $0x98] sm:$0x1] %v5640
      %v5642 = vld [vmem:[%s5550 + $0x9c] sm:$0xf]
      %v5643 = vsel %vm728, %v5477, %v5642
      %5644 = vst [vmem:[%s5550 + $0x9c] sm:$0xf] %v5643
      %5645 = vst.msk [vmem:[%s5550 + $0xa0] sm:$0xf] %vm413, %v5486
      %v5646 = vld [vmem:[%s5550 + $0xa4] sm:$0x1]
      %v5647 = vsel %vm734, %v5487, %v5646
      %5648 = vst [vmem:[%s5550 + $0xa4] sm:$0x1] %v5647
      %v5649 = vld [vmem:[%s5550 + $0xa8] sm:$0xf]
      %v5650 = vsel %vm728, %v5494, %v5649
      %5651 = vst [vmem:[%s5550 + $0xa8] sm:$0xf] %v5650
      %5652 = vst.msk [vmem:[%s5550 + $0xac] sm:$0xf] %vm413, %v5503
      %v5653 = vld [vmem:[%s5550 + $0xb0] sm:$0x1]
      %v5654 = vsel %vm734, %v5504, %v5653
      %5655 = vst [vmem:[%s5550 + $0xb0] sm:$0x1] %v5654
      %v5657 = vshrl.u32 %v5145, 16
      %v5659 = vrot.slane %v5657, 7
      %v5660 = vshll.u32 %v5145, 16
      %v5662 = vor.u32 %v5659, %v5660
      %v5663 = vrot.slane %v5659, 4
      %v5665 = vshrl.u32 %v5146, 16
      %v5667 = vrot.slane %v5665, 7
      %v5668 = vshll.u32 %v5146, 16
      %v5670 = vor.u32 %v5667, %v5668
      %v5671 = vsel %vm425, %v5663, %v5670
      %v5672 = vrot.slane %v5667, 4
      %5673 = vrot.lane.b32.xlu0 %v5256, 8
      %v5674 = vpop.permute.xlu0 %5673
      %5675 = vrot.lane.b32.xlu0 %v5265, 8
      %v5676 = vpop.permute.xlu0 %5675
      %5677 = vrot.lane.b32.xlu0 %v5266, 8
      %v5678 = vpop.permute.xlu0 %5677
      %5679 = vrot.lane.b32.xlu0 %v5273, 8
      %v5680 = vpop.permute.xlu0 %5679
      %5681 = vrot.lane.b32.xlu0 %v5282, 8
      %v5682 = vpop.permute.xlu0 %5681
      %5683 = vrot.lane.b32.xlu0 %v5283, 8
      %v5684 = vpop.permute.xlu0 %5683
      %5685 = vrot.lane.b32.xlu0 %v5290, 8
      %v5686 = vpop.permute.xlu0 %5685
      %5687 = vrot.lane.b32.xlu0 %v5299, 8
      %v5688 = vpop.permute.xlu0 %5687
      %5689 = vrot.lane.b32.xlu0 %v5300, 8
      %v5690 = vpop.permute.xlu0 %5689
      %5691 = vrot.lane.b32.xlu0 %v5307, 8
      %v5692 = vpop.permute.xlu0 %5691
      %5693 = vrot.lane.b32.xlu0 %v5316, 8
      %v5694 = vpop.permute.xlu0 %5693
      %5695 = vrot.lane.b32.xlu0 %v5317, 8
      %v5696 = vpop.permute.xlu0 %5695
      %5697 = vrot.lane.b32.xlu0 %v5324, 8
      %v5698 = vpop.permute.xlu0 %5697
      %5699 = vrot.lane.b32.xlu0 %v5333, 8
      %v5700 = vpop.permute.xlu0 %5699
      %5701 = vrot.lane.b32.xlu0 %v5334, 8
      %v5702 = vpop.permute.xlu0 %5701
      %5703 = vrot.lane.b32.xlu0 %v5341, 8
      %v5704 = vpop.permute.xlu0 %5703
      %5705 = vrot.lane.b32.xlu0 %v5350, 8
      %v5706 = vpop.permute.xlu0 %5705
      %5707 = vrot.lane.b32.xlu0 %v5351, 8
      %v5708 = vpop.permute.xlu0 %5707
      %5709 = vrot.lane.b32.xlu0 %v5358, 8
      %v5710 = vpop.permute.xlu0 %5709
      %5711 = vrot.lane.b32.xlu0 %v5367, 8
      %v5712 = vpop.permute.xlu0 %5711
      %5713 = vrot.lane.b32.xlu0 %v5368, 8
      %v5714 = vpop.permute.xlu0 %5713
      %5715 = vrot.lane.b32.xlu0 %v5375, 8
      %v5716 = vpop.permute.xlu0 %5715
      %5717 = vrot.lane.b32.xlu0 %v5384, 8
      %v5718 = vpop.permute.xlu0 %5717
      %5719 = vrot.lane.b32.xlu0 %v5385, 8
      %v5720 = vpop.permute.xlu0 %5719
      %5721 = vrot.lane.b32.xlu0 %v5392, 8
      %v5722 = vpop.permute.xlu0 %5721
      %5723 = vrot.lane.b32.xlu0 %v5401, 8
      %v5724 = vpop.permute.xlu0 %5723
      %5725 = vrot.lane.b32.xlu0 %v5402, 8
      %v5726 = vpop.permute.xlu0 %5725
      %5727 = vrot.lane.b32.xlu0 %v5409, 8
      %v5728 = vpop.permute.xlu0 %5727
      %5729 = vrot.lane.b32.xlu0 %v5418, 8
      %v5730 = vpop.permute.xlu0 %5729
      %5731 = vrot.lane.b32.xlu0 %v5419, 8
      %v5732 = vpop.permute.xlu0 %5731
      %5733 = vrot.lane.b32.xlu0 %v5426, 8
      %v5734 = vpop.permute.xlu0 %5733
      %5735 = vrot.lane.b32.xlu0 %v5435, 8
      %v5736 = vpop.permute.xlu0 %5735
      %5737 = vrot.lane.b32.xlu0 %v5436, 8
      %v5738 = vpop.permute.xlu0 %5737
      %5739 = vrot.lane.b32.xlu0 %v5443, 8
      %v5740 = vpop.permute.xlu0 %5739
      %5741 = vrot.lane.b32.xlu0 %v5452, 8
      %v5742 = vpop.permute.xlu0 %5741
      %5743 = vrot.lane.b32.xlu0 %v5453, 8
      %v5744 = vpop.permute.xlu0 %5743
      %5745 = vrot.lane.b32.xlu0 %v5460, 8
      %v5746 = vpop.permute.xlu0 %5745
      %5747 = vrot.lane.b32.xlu0 %v5469, 8
      %v5748 = vpop.permute.xlu0 %5747
      %5749 = vrot.lane.b32.xlu0 %v5470, 8
      %v5750 = vpop.permute.xlu0 %5749
      %5751 = vrot.lane.b32.xlu0 %v5477, 8
      %v5752 = vpop.permute.xlu0 %5751
      %5753 = vrot.lane.b32.xlu0 %v5486, 8
      %v5754 = vpop.permute.xlu0 %5753
      %5755 = vrot.lane.b32.xlu0 %v5487, 8
      %v5756 = vpop.permute.xlu0 %5755
      %5757 = vrot.lane.b32.xlu0 %v5494, 8
      %v5758 = vpop.permute.xlu0 %5757
      %5759 = vrot.lane.b32.xlu0 %v5503, 8
      %v5760 = vpop.permute.xlu0 %5759
      %5761 = vrot.lane.b32.xlu0 %v5504, 8
      %v5762 = vpop.permute.xlu0 %5761
      %5763 = vrot.lane.b32.xlu0 %v5662, 8
      %v5764 = vpop.permute.xlu0 %5763
      %5765 = vrot.lane.b32.xlu0 %v5671, 8
      %v5766 = vpop.permute.xlu0 %5765
      %5767 = vrot.lane.b32.xlu0 %v5672, 8
      %v5768 = vpop.permute.xlu0 %5767
      %v5817 = vld [vmem:[#allocation3] sm:$0xf]
      %v5818 = vsel %vm998, %v5674, %v5817
      %5819 = vst [vmem:[#allocation3] sm:$0xf] %v5818
      %5820 = vst.msk [vmem:[#allocation3 + $0x4] sm:$0xf] %vm1002, %v5676
      %v5821 = vld [vmem:[#allocation3 + $0x8] sm:$0x1]
      %v5822 = vsel %vm1005, %v5678, %v5821
      %5823 = vst [vmem:[#allocation3 + $0x8] sm:$0x1] %v5822
      %v5824 = vld [vmem:[#allocation3 + $0xc] sm:$0xf]
      %v5825 = vsel %vm998, %v5680, %v5824
      %5826 = vst [vmem:[#allocation3 + $0xc] sm:$0xf] %v5825
      %5827 = vst.msk [vmem:[#allocation3 + $0x10] sm:$0xf] %vm1002, %v5682
      %v5828 = vld [vmem:[#allocation3 + $0x14] sm:$0x1]
      %v5829 = vsel %vm1005, %v5684, %v5828
      %5830 = vst [vmem:[#allocation3 + $0x14] sm:$0x1] %v5829
      %v5831 = vld [vmem:[#allocation3 + $0x18] sm:$0xf]
      %v5832 = vsel %vm998, %v5686, %v5831
      %5833 = vst [vmem:[#allocation3 + $0x18] sm:$0xf] %v5832
      %5834 = vst.msk [vmem:[#allocation3 + $0x1c] sm:$0xf] %vm1002, %v5688
      %v5835 = vld [vmem:[#allocation3 + $0x20] sm:$0x1]
      %v5836 = vsel %vm1005, %v5690, %v5835
      %5837 = vst [vmem:[#allocation3 + $0x20] sm:$0x1] %v5836
      %v5838 = vld [vmem:[#allocation3 + $0x24] sm:$0xf]
      %v5839 = vsel %vm998, %v5692, %v5838
      %5840 = vst [vmem:[#allocation3 + $0x24] sm:$0xf] %v5839
      %5841 = vst.msk [vmem:[#allocation3 + $0x28] sm:$0xf] %vm1002, %v5694
      %v5842 = vld [vmem:[#allocation3 + $0x2c] sm:$0x1]
      %v5843 = vsel %vm1005, %v5696, %v5842
      %5844 = vst [vmem:[#allocation3 + $0x2c] sm:$0x1] %v5843
      %v5845 = vld [vmem:[#allocation3 + $0x30] sm:$0xf]
      %v5846 = vsel %vm998, %v5698, %v5845
      %5847 = vst [vmem:[#allocation3 + $0x30] sm:$0xf] %v5846
      %5848 = vst.msk [vmem:[#allocation3 + $0x34] sm:$0xf] %vm1002, %v5700
      %v5849 = vld [vmem:[#allocation3 + $0x38] sm:$0x1]
      %v5850 = vsel %vm1005, %v5702, %v5849
      %5851 = vst [vmem:[#allocation3 + $0x38] sm:$0x1] %v5850
      %v5852 = vld [vmem:[#allocation3 + $0x3c] sm:$0xf]
      %v5853 = vsel %vm998, %v5704, %v5852
      %5854 = vst [vmem:[#allocation3 + $0x3c] sm:$0xf] %v5853
      %5855 = vst.msk [vmem:[#allocation3 + $0x40] sm:$0xf] %vm1002, %v5706
      %v5856 = vld [vmem:[#allocation3 + $0x44] sm:$0x1]
      %v5857 = vsel %vm1005, %v5708, %v5856
      %5858 = vst [vmem:[#allocation3 + $0x44] sm:$0x1] %v5857
      %v5859 = vld [vmem:[#allocation3 + $0x48] sm:$0xf]
      %v5860 = vsel %vm998, %v5710, %v5859
      %5861 = vst [vmem:[#allocation3 + $0x48] sm:$0xf] %v5860
      %5862 = vst.msk [vmem:[#allocation3 + $0x4c] sm:$0xf] %vm1002, %v5712
      %v5863 = vld [vmem:[#allocation3 + $0x50] sm:$0x1]
      %v5864 = vsel %vm1005, %v5714, %v5863
      %5865 = vst [vmem:[#allocation3 + $0x50] sm:$0x1] %v5864
      %v5866 = vld [vmem:[#allocation3 + $0x54] sm:$0xf]
      %v5867 = vsel %vm998, %v5716, %v5866
      %5868 = vst [vmem:[#allocation3 + $0x54] sm:$0xf] %v5867
      %5869 = vst.msk [vmem:[#allocation3 + $0x58] sm:$0xf] %vm1002, %v5718
      %v5870 = vld [vmem:[#allocation3 + $0x5c] sm:$0x1]
      %v5871 = vsel %vm1005, %v5720, %v5870
      %5872 = vst [vmem:[#allocation3 + $0x5c] sm:$0x1] %v5871
      %v5873 = vld [vmem:[#allocation3 + $0x60] sm:$0xf]
      %v5874 = vsel %vm998, %v5722, %v5873
      %5875 = vst [vmem:[#allocation3 + $0x60] sm:$0xf] %v5874
      %5876 = vst.msk [vmem:[#allocation3 + $0x64] sm:$0xf] %vm1002, %v5724
      %v5877 = vld [vmem:[#allocation3 + $0x68] sm:$0x1]
      %v5878 = vsel %vm1005, %v5726, %v5877
      %5879 = vst [vmem:[#allocation3 + $0x68] sm:$0x1] %v5878
      %v5880 = vld [vmem:[#allocation3 + $0x6c] sm:$0xf]
      %v5881 = vsel %vm998, %v5728, %v5880
      %5882 = vst [vmem:[#allocation3 + $0x6c] sm:$0xf] %v5881
      %5883 = vst.msk [vmem:[#allocation3 + $0x70] sm:$0xf] %vm1002, %v5730
      %v5884 = vld [vmem:[#allocation3 + $0x74] sm:$0x1]
      %v5885 = vsel %vm1005, %v5732, %v5884
      %5886 = vst [vmem:[#allocation3 + $0x74] sm:$0x1] %v5885
      %v5887 = vld [vmem:[#allocation3 + $0x78] sm:$0xf]
      %v5888 = vsel %vm998, %v5734, %v5887
      %5889 = vst [vmem:[#allocation3 + $0x78] sm:$0xf] %v5888
      %5890 = vst.msk [vmem:[#allocation3 + $0x7c] sm:$0xf] %vm1002, %v5736
      %v5891 = vld [vmem:[#allocation3 + $0x80] sm:$0x1]
      %v5892 = vsel %vm1005, %v5738, %v5891
      %5893 = vst [vmem:[#allocation3 + $0x80] sm:$0x1] %v5892
      %v5894 = vld [vmem:[#allocation3 + $0x84] sm:$0xf]
      %v5895 = vsel %vm998, %v5740, %v5894
      %5896 = vst [vmem:[#allocation3 + $0x84] sm:$0xf] %v5895
      %5897 = vst.msk [vmem:[#allocation3 + $0x88] sm:$0xf] %vm1002, %v5742
      %v5898 = vld [vmem:[#allocation3 + $0x8c] sm:$0x1]
      %v5899 = vsel %vm1005, %v5744, %v5898
      %5900 = vst [vmem:[#allocation3 + $0x8c] sm:$0x1] %v5899
      %v5901 = vld [vmem:[#allocation3 + $0x90] sm:$0xf]
      %v5902 = vsel %vm998, %v5746, %v5901
      %5903 = vst [vmem:[#allocation3 + $0x90] sm:$0xf] %v5902
      %5904 = vst.msk [vmem:[#allocation3 + $0x94] sm:$0xf] %vm1002, %v5748
      %v5905 = vld [vmem:[#allocation3 + $0x98] sm:$0x1]
      %v5906 = vsel %vm1005, %v5750, %v5905
      %5907 = vst [vmem:[#allocation3 + $0x98] sm:$0x1] %v5906
      %v5908 = vld [vmem:[#allocation3 + $0x9c] sm:$0xf]
      %v5909 = vsel %vm998, %v5752, %v5908
      %5910 = vst [vmem:[#allocation3 + $0x9c] sm:$0xf] %v5909
      %5911 = vst.msk [vmem:[#allocation3 + $0xa0] sm:$0xf] %vm1002, %v5754
      %v5912 = vld [vmem:[#allocation3 + $0xa4] sm:$0x1]
      %v5913 = vsel %vm1005, %v5756, %v5912
      %5914 = vst [vmem:[#allocation3 + $0xa4] sm:$0x1] %v5913
      %v5915 = vld [vmem:[#allocation3 + $0xa8] sm:$0xf]
      %v5916 = vsel %vm998, %v5758, %v5915
      %5917 = vst [vmem:[#allocation3 + $0xa8] sm:$0xf] %v5916
      %5918 = vst.msk [vmem:[#allocation3 + $0xac] sm:$0xf] %vm1002, %v5760
      %v5919 = vld [vmem:[#allocation3 + $0xb0] sm:$0x1]
      %v5920 = vsel %vm1005, %v5762, %v5919
      %5921 = vst [vmem:[#allocation3 + $0xb0] sm:$0x1] %v5920
      %v5922 = vld [vmem:[#allocation3 + $0xb4] sm:$0xf]
      %v5923 = vsel %vm998, %v5764, %v5922
      %5924 = vst [vmem:[#allocation3 + $0xb4] sm:$0xf] %v5923
      %5925 = vst.msk [vmem:[#allocation3 + $0xb8] sm:$0xf] %vm1002, %v5766
      %v5926 = vld [vmem:[#allocation3 + $0xbc] sm:$0x1]
      %v5927 = vsel %vm1005, %v5768, %v5926
      %5928 = vst [vmem:[#allocation3 + $0xbc] sm:$0x1] %v5927
      %5929 = vrot.lane.b32.xlu0 %v5273, 16
      %v5930 = vpop.permute.xlu0 %5929
      %5931 = vrot.lane.b32.xlu0 %v5282, 16
      %v5932 = vpop.permute.xlu0 %5931
      %5933 = vrot.lane.b32.xlu0 %v5283, 16
      %v5934 = vpop.permute.xlu0 %5933
      %5935 = vrot.lane.b32.xlu0 %v5290, 16
      %v5936 = vpop.permute.xlu0 %5935
      %5937 = vrot.lane.b32.xlu0 %v5299, 16
      %v5938 = vpop.permute.xlu0 %5937
      %5939 = vrot.lane.b32.xlu0 %v5300, 16
      %v5940 = vpop.permute.xlu0 %5939
      %5941 = vrot.lane.b32.xlu0 %v5307, 16
      %v5942 = vpop.permute.xlu0 %5941
      %5943 = vrot.lane.b32.xlu0 %v5316, 16
      %v5944 = vpop.permute.xlu0 %5943
      %5945 = vrot.lane.b32.xlu0 %v5317, 16
      %v5946 = vpop.permute.xlu0 %5945
      %5947 = vrot.lane.b32.xlu0 %v5324, 16
      %v5948 = vpop.permute.xlu0 %5947
      %5949 = vrot.lane.b32.xlu0 %v5333, 16
      %v5950 = vpop.permute.xlu0 %5949
      %5951 = vrot.lane.b32.xlu0 %v5334, 16
      %v5952 = vpop.permute.xlu0 %5951
      %5953 = vrot.lane.b32.xlu0 %v5341, 16
      %v5954 = vpop.permute.xlu0 %5953
      %5955 = vrot.lane.b32.xlu0 %v5350, 16
      %v5956 = vpop.permute.xlu0 %5955
      %5957 = vrot.lane.b32.xlu0 %v5351, 16
      %v5958 = vpop.permute.xlu0 %5957
      %5959 = vrot.lane.b32.xlu0 %v5358, 16
      %v5960 = vpop.permute.xlu0 %5959
      %5961 = vrot.lane.b32.xlu0 %v5367, 16
      %v5962 = vpop.permute.xlu0 %5961
      %5963 = vrot.lane.b32.xlu0 %v5368, 16
      %v5964 = vpop.permute.xlu0 %5963
      %5965 = vrot.lane.b32.xlu0 %v5375, 16
      %v5966 = vpop.permute.xlu0 %5965
      %5967 = vrot.lane.b32.xlu0 %v5384, 16
      %v5968 = vpop.permute.xlu0 %5967
      %5969 = vrot.lane.b32.xlu0 %v5385, 16
      %v5970 = vpop.permute.xlu0 %5969
      %5971 = vrot.lane.b32.xlu0 %v5392, 16
      %v5972 = vpop.permute.xlu0 %5971
      %5973 = vrot.lane.b32.xlu0 %v5401, 16
      %v5974 = vpop.permute.xlu0 %5973
      %5975 = vrot.lane.b32.xlu0 %v5402, 16
      %v5976 = vpop.permute.xlu0 %5975
      %5977 = vrot.lane.b32.xlu0 %v5409, 16
      %v5978 = vpop.permute.xlu0 %5977
      %5979 = vrot.lane.b32.xlu0 %v5418, 16
      %v5980 = vpop.permute.xlu0 %5979
      %5981 = vrot.lane.b32.xlu0 %v5419, 16
      %v5982 = vpop.permute.xlu0 %5981
      %5983 = vrot.lane.b32.xlu0 %v5426, 16
      %v5984 = vpop.permute.xlu0 %5983
      %5985 = vrot.lane.b32.xlu0 %v5435, 16
      %v5986 = vpop.permute.xlu0 %5985
      %5987 = vrot.lane.b32.xlu0 %v5436, 16
      %v5988 = vpop.permute.xlu0 %5987
      %5989 = vrot.lane.b32.xlu0 %v5443, 16
      %v5990 = vpop.permute.xlu0 %5989
      %5991 = vrot.lane.b32.xlu0 %v5452, 16
      %v5992 = vpop.permute.xlu0 %5991
      %5993 = vrot.lane.b32.xlu0 %v5453, 16
      %v5994 = vpop.permute.xlu0 %5993
      %5995 = vrot.lane.b32.xlu0 %v5460, 16
      %v5996 = vpop.permute.xlu0 %5995
      %5997 = vrot.lane.b32.xlu0 %v5469, 16
      %v5998 = vpop.permute.xlu0 %5997
      %5999 = vrot.lane.b32.xlu0 %v5470, 16
      %v6000 = vpop.permute.xlu0 %5999
      %6001 = vrot.lane.b32.xlu0 %v5477, 16
      %v6002 = vpop.permute.xlu0 %6001
      %6003 = vrot.lane.b32.xlu0 %v5486, 16
      %v6004 = vpop.permute.xlu0 %6003
      %6005 = vrot.lane.b32.xlu0 %v5487, 16
      %v6006 = vpop.permute.xlu0 %6005
      %6007 = vrot.lane.b32.xlu0 %v5494, 16
      %v6008 = vpop.permute.xlu0 %6007
      %6009 = vrot.lane.b32.xlu0 %v5503, 16
      %v6010 = vpop.permute.xlu0 %6009
      %6011 = vrot.lane.b32.xlu0 %v5504, 16
      %v6012 = vpop.permute.xlu0 %6011
      %6013 = vrot.lane.b32.xlu0 %v5662, 16
      %v6014 = vpop.permute.xlu0 %6013
      %6015 = vrot.lane.b32.xlu0 %v5671, 16
      %v6016 = vpop.permute.xlu0 %6015
      %6017 = vrot.lane.b32.xlu0 %v5672, 16
      %v6018 = vpop.permute.xlu0 %6017
      %v6064 = vld [vmem:[#allocation3] sm:$0xf]
      %v6065 = vsel %vm1250, %v5930, %v6064
      %6066 = vst [vmem:[#allocation3] sm:$0xf] %v6065
      %6067 = vst.msk [vmem:[#allocation3 + $0x4] sm:$0xf] %vm419, %v5932
      %v6068 = vld [vmem:[#allocation3 + $0x8] sm:$0x1]
      %v6069 = vsel %vm1256, %v5934, %v6068
      %6070 = vst [vmem:[#allocation3 + $0x8] sm:$0x1] %v6069
      %v6071 = vld [vmem:[#allocation3 + $0xc] sm:$0xf]
      %v6072 = vsel %vm1250, %v5936, %v6071
      %6073 = vst [vmem:[#allocation3 + $0xc] sm:$0xf] %v6072
      %6074 = vst.msk [vmem:[#allocation3 + $0x10] sm:$0xf] %vm419, %v5938
      %v6075 = vld [vmem:[#allocation3 + $0x14] sm:$0x1]
      %v6076 = vsel %vm1256, %v5940, %v6075
      %6077 = vst [vmem:[#allocation3 + $0x14] sm:$0x1] %v6076
      %v6078 = vld [vmem:[#allocation3 + $0x18] sm:$0xf]
      %v6079 = vsel %vm1250, %v5942, %v6078
      %6080 = vst [vmem:[#allocation3 + $0x18] sm:$0xf] %v6079
      %6081 = vst.msk [vmem:[#allocation3 + $0x1c] sm:$0xf] %vm419, %v5944
      %v6082 = vld [vmem:[#allocation3 + $0x20] sm:$0x1]
      %v6083 = vsel %vm1256, %v5946, %v6082
      %6084 = vst [vmem:[#allocation3 + $0x20] sm:$0x1] %v6083
      %v6085 = vld [vmem:[#allocation3 + $0x24] sm:$0xf]
      %v6086 = vsel %vm1250, %v5948, %v6085
      %6087 = vst [vmem:[#allocation3 + $0x24] sm:$0xf] %v6086
      %6088 = vst.msk [vmem:[#allocation3 + $0x28] sm:$0xf] %vm419, %v5950
      %v6089 = vld [vmem:[#allocation3 + $0x2c] sm:$0x1]
      %v6090 = vsel %vm1256, %v5952, %v6089
      %6091 = vst [vmem:[#allocation3 + $0x2c] sm:$0x1] %v6090
      %v6092 = vld [vmem:[#allocation3 + $0x30] sm:$0xf]
      %v6093 = vsel %vm1250, %v5954, %v6092
      %6094 = vst [vmem:[#allocation3 + $0x30] sm:$0xf] %v6093
      %6095 = vst.msk [vmem:[#allocation3 + $0x34] sm:$0xf] %vm419, %v5956
      %v6096 = vld [vmem:[#allocation3 + $0x38] sm:$0x1]
      %v6097 = vsel %vm1256, %v5958, %v6096
      %6098 = vst [vmem:[#allocation3 + $0x38] sm:$0x1] %v6097
      %v6099 = vld [vmem:[#allocation3 + $0x3c] sm:$0xf]
      %v6100 = vsel %vm1250, %v5960, %v6099
      %6101 = vst [vmem:[#allocation3 + $0x3c] sm:$0xf] %v6100
      %6102 = vst.msk [vmem:[#allocation3 + $0x40] sm:$0xf] %vm419, %v5962
      %v6103 = vld [vmem:[#allocation3 + $0x44] sm:$0x1]
      %v6104 = vsel %vm1256, %v5964, %v6103
      %6105 = vst [vmem:[#allocation3 + $0x44] sm:$0x1] %v6104
      %v6106 = vld [vmem:[#allocation3 + $0x48] sm:$0xf]
      %v6107 = vsel %vm1250, %v5966, %v6106
      %6108 = vst [vmem:[#allocation3 + $0x48] sm:$0xf] %v6107
      %6109 = vst.msk [vmem:[#allocation3 + $0x4c] sm:$0xf] %vm419, %v5968
      %v6110 = vld [vmem:[#allocation3 + $0x50] sm:$0x1]
      %v6111 = vsel %vm1256, %v5970, %v6110
      %6112 = vst [vmem:[#allocation3 + $0x50] sm:$0x1] %v6111
      %v6113 = vld [vmem:[#allocation3 + $0x54] sm:$0xf]
      %v6114 = vsel %vm1250, %v5972, %v6113
      %6115 = vst [vmem:[#allocation3 + $0x54] sm:$0xf] %v6114
      %6116 = vst.msk [vmem:[#allocation3 + $0x58] sm:$0xf] %vm419, %v5974
      %v6117 = vld [vmem:[#allocation3 + $0x5c] sm:$0x1]
      %v6118 = vsel %vm1256, %v5976, %v6117
      %6119 = vst [vmem:[#allocation3 + $0x5c] sm:$0x1] %v6118
      %v6120 = vld [vmem:[#allocation3 + $0x60] sm:$0xf]
      %v6121 = vsel %vm1250, %v5978, %v6120
      %6122 = vst [vmem:[#allocation3 + $0x60] sm:$0xf] %v6121
      %6123 = vst.msk [vmem:[#allocation3 + $0x64] sm:$0xf] %vm419, %v5980
      %v6124 = vld [vmem:[#allocation3 + $0x68] sm:$0x1]
      %v6125 = vsel %vm1256, %v5982, %v6124
      %6126 = vst [vmem:[#allocation3 + $0x68] sm:$0x1] %v6125
      %v6127 = vld [vmem:[#allocation3 + $0x6c] sm:$0xf]
      %v6128 = vsel %vm1250, %v5984, %v6127
      %6129 = vst [vmem:[#allocation3 + $0x6c] sm:$0xf] %v6128
      %6130 = vst.msk [vmem:[#allocation3 + $0x70] sm:$0xf] %vm419, %v5986
      %v6131 = vld [vmem:[#allocation3 + $0x74] sm:$0x1]
      %v6132 = vsel %vm1256, %v5988, %v6131
      %6133 = vst [vmem:[#allocation3 + $0x74] sm:$0x1] %v6132
      %v6134 = vld [vmem:[#allocation3 + $0x78] sm:$0xf]
      %v6135 = vsel %vm1250, %v5990, %v6134
      %6136 = vst [vmem:[#allocation3 + $0x78] sm:$0xf] %v6135
      %6137 = vst.msk [vmem:[#allocation3 + $0x7c] sm:$0xf] %vm419, %v5992
      %v6138 = vld [vmem:[#allocation3 + $0x80] sm:$0x1]
      %v6139 = vsel %vm1256, %v5994, %v6138
      %6140 = vst [vmem:[#allocation3 + $0x80] sm:$0x1] %v6139
      %v6141 = vld [vmem:[#allocation3 + $0x84] sm:$0xf]
      %v6142 = vsel %vm1250, %v5996, %v6141
      %6143 = vst [vmem:[#allocation3 + $0x84] sm:$0xf] %v6142
      %6144 = vst.msk [vmem:[#allocation3 + $0x88] sm:$0xf] %vm419, %v5998
      %v6145 = vld [vmem:[#allocation3 + $0x8c] sm:$0x1]
      %v6146 = vsel %vm1256, %v6000, %v6145
      %6147 = vst [vmem:[#allocation3 + $0x8c] sm:$0x1] %v6146
      %v6148 = vld [vmem:[#allocation3 + $0x90] sm:$0xf]
      %v6149 = vsel %vm1250, %v6002, %v6148
      %6150 = vst [vmem:[#allocation3 + $0x90] sm:$0xf] %v6149
      %6151 = vst.msk [vmem:[#allocation3 + $0x94] sm:$0xf] %vm419, %v6004
      %v6152 = vld [vmem:[#allocation3 + $0x98] sm:$0x1]
      %v6153 = vsel %vm1256, %v6006, %v6152
      %6154 = vst [vmem:[#allocation3 + $0x98] sm:$0x1] %v6153
      %v6155 = vld [vmem:[#allocation3 + $0x9c] sm:$0xf]
      %v6156 = vsel %vm1250, %v6008, %v6155
      %6157 = vst [vmem:[#allocation3 + $0x9c] sm:$0xf] %v6156
      %6158 = vst.msk [vmem:[#allocation3 + $0xa0] sm:$0xf] %vm419, %v6010
      %v6159 = vld [vmem:[#allocation3 + $0xa4] sm:$0x1]
      %v6160 = vsel %vm1256, %v6012, %v6159
      %6161 = vst [vmem:[#allocation3 + $0xa4] sm:$0x1] %v6160
      %v6162 = vld [vmem:[#allocation3 + $0xa8] sm:$0xf]
      %v6163 = vsel %vm1250, %v6014, %v6162
      %6164 = vst [vmem:[#allocation3 + $0xa8] sm:$0xf] %v6163
      %6165 = vst.msk [vmem:[#allocation3 + $0xac] sm:$0xf] %vm419, %v6016
      %v6166 = vld [vmem:[#allocation3 + $0xb0] sm:$0x1]
      %v6167 = vsel %vm1256, %v6018, %v6166
      %6168 = vst [vmem:[#allocation3 + $0xb0] sm:$0x1] %v6167
      %v6169 = vld [vmem:[#allocation3] sm:$0xf]
      %v6170 = vld [vmem:[#allocation3 + $0x4] sm:$0xf]
      %v6171 = vld [vmem:[#allocation3 + $0x8] sm:$0x1]
      %v6172 = vld [vmem:[#allocation3 + $0xc] sm:$0xf]
      %v6173 = vld [vmem:[#allocation3 + $0x10] sm:$0xf]
      %v6174 = vld [vmem:[#allocation3 + $0x14] sm:$0x1]
      %v6175 = vld [vmem:[#allocation3 + $0x18] sm:$0xf]
      %v6176 = vld [vmem:[#allocation3 + $0x1c] sm:$0xf]
      %v6177 = vld [vmem:[#allocation3 + $0x20] sm:$0x1]
      %v6178 = vld [vmem:[#allocation3 + $0x24] sm:$0xf]
      %v6179 = vld [vmem:[#allocation3 + $0x28] sm:$0xf]
      %v6180 = vld [vmem:[#allocation3 + $0x2c] sm:$0x1]
      %v6181 = vld [vmem:[#allocation3 + $0x30] sm:$0xf]
      %v6182 = vld [vmem:[#allocation3 + $0x34] sm:$0xf]
      %v6183 = vld [vmem:[#allocation3 + $0x38] sm:$0x1]
      %v6184 = vld [vmem:[#allocation3 + $0x3c] sm:$0xf]
      %v6185 = vld [vmem:[#allocation3 + $0x40] sm:$0xf]
      %v6186 = vld [vmem:[#allocation3 + $0x44] sm:$0x1]
      %v6187 = vld [vmem:[#allocation3 + $0x48] sm:$0xf]
      %v6188 = vld [vmem:[#allocation3 + $0x4c] sm:$0xf]
      %v6189 = vld [vmem:[#allocation3 + $0x50] sm:$0x1]
      %v6190 = vld [vmem:[#allocation3 + $0x54] sm:$0xf]
      %v6191 = vld [vmem:[#allocation3 + $0x58] sm:$0xf]
      %v6192 = vld [vmem:[#allocation3 + $0x5c] sm:$0x1]
      %v6193 = vld [vmem:[#allocation3 + $0x60] sm:$0xf]
      %v6194 = vld [vmem:[#allocation3 + $0x64] sm:$0xf]
      %v6195 = vld [vmem:[#allocation3 + $0x68] sm:$0x1]
      %v6196 = vld [vmem:[#allocation3 + $0x6c] sm:$0xf]
      %v6197 = vld [vmem:[#allocation3 + $0x70] sm:$0xf]
      %v6198 = vld [vmem:[#allocation3 + $0x74] sm:$0x1]
      %v6199 = vld [vmem:[#allocation3 + $0x78] sm:$0xf]
      %v6200 = vld [vmem:[#allocation3 + $0x7c] sm:$0xf]
      %v6201 = vld [vmem:[#allocation3 + $0x80] sm:$0x1]
      %v6202 = vld [vmem:[#allocation3 + $0x84] sm:$0xf]
      %v6203 = vld [vmem:[#allocation3 + $0x88] sm:$0xf]
      %v6204 = vld [vmem:[#allocation3 + $0x8c] sm:$0x1]
      %v6205 = vld [vmem:[#allocation3 + $0x90] sm:$0xf]
      %v6206 = vld [vmem:[#allocation3 + $0x94] sm:$0xf]
      %v6207 = vld [vmem:[#allocation3 + $0x98] sm:$0x1]
      %v6208 = vld [vmem:[#allocation3 + $0x9c] sm:$0xf]
      %v6209 = vld [vmem:[#allocation3 + $0xa0] sm:$0xf]
      %v6210 = vld [vmem:[#allocation3 + $0xa4] sm:$0x1]
      %v6211 = vld [vmem:[#allocation3 + $0xa8] sm:$0xf]
      %v6212 = vld [vmem:[#allocation3 + $0xac] sm:$0xf]
      %v6213 = vld [vmem:[#allocation3 + $0xb0] sm:$0x1]
      %v6214 = vld [vmem:[#allocation3 + $0xb4] sm:$0xf]
      %v6215 = vld [vmem:[#allocation3 + $0xb8] sm:$0xf]
      %v6216 = vld [vmem:[#allocation3 + $0xbc] sm:$0x1]
      %v6265 = vrot.slane %v6169, 3
      %v6266 = vrot.slane %v6170, 3
      %v6267 = vrot.slane %v6171, 3
      %v6268 = vrot.slane %v6172, 3
      %v6269 = vrot.slane %v6173, 3
      %v6270 = vrot.slane %v6174, 3
      %v6271 = vrot.slane %v6175, 3
      %v6272 = vrot.slane %v6176, 3
      %v6273 = vrot.slane %v6177, 3
      %v6274 = vrot.slane %v6178, 3
      %v6275 = vrot.slane %v6179, 3
      %v6276 = vrot.slane %v6180, 3
      %v6277 = vrot.slane %v6181, 3
      %v6278 = vrot.slane %v6182, 3
      %v6279 = vrot.slane %v6183, 3
      %v6280 = vrot.slane %v6184, 3
      %v6281 = vrot.slane %v6185, 3
      %v6282 = vrot.slane %v6186, 3
      %v6283 = vrot.slane %v6187, 3
      %v6284 = vrot.slane %v6188, 3
      %v6285 = vrot.slane %v6189, 3
      %v6286 = vrot.slane %v6190, 3
      %v6287 = vrot.slane %v6191, 3
      %v6288 = vrot.slane %v6192, 3
      %v6289 = vrot.slane %v6193, 3
      %v6290 = vrot.slane %v6194, 3
      %v6291 = vrot.slane %v6195, 3
      %v6292 = vrot.slane %v6196, 3
      %v6293 = vrot.slane %v6197, 3
      %v6294 = vrot.slane %v6198, 3
      %v6295 = vrot.slane %v6199, 3
      %v6296 = vrot.slane %v6200, 3
      %v6297 = vrot.slane %v6201, 3
      %v6298 = vrot.slane %v6202, 3
      %v6299 = vrot.slane %v6203, 3
      %v6300 = vrot.slane %v6204, 3
      %v6301 = vrot.slane %v6205, 3
      %v6302 = vrot.slane %v6206, 3
      %v6303 = vrot.slane %v6207, 3
      %v6304 = vrot.slane %v6208, 3
      %v6305 = vrot.slane %v6209, 3
      %v6306 = vrot.slane %v6210, 3
      %v6307 = vrot.slane %v6211, 3
      %v6308 = vrot.slane %v6212, 3
      %v6309 = vrot.slane %v6213, 3
      %v6310 = vrot.slane %v6214, 3
      %v6311 = vrot.slane %v6215, 3
      %v6312 = vrot.slane %v6216, 3
      %v6315 = vsel %vm1502, %v6169, %v6265
      %v6316 = vsel %vm1506, %v6169, %v6265
      %v6318 = vrot.slane %v6316, 1
      %v6319 = vsel %vm1510, %v6169, %v6265
      %v6321 = vrot.slane %v6319, 2
      %v6322 = vsel %vm1514, %v6169, %v6265
      %v6324 = vrot.slane %v6322, 3
      %v6327 = vsel %vm1502, %v6170, %v6266
      %v6328 = vsel %vm1506, %v6170, %v6266
      %v6330 = vrot.slane %v6328, 1
      %v6331 = vsel %vm1510, %v6170, %v6266
      %v6333 = vrot.slane %v6331, 2
      %v6334 = vsel %vm1514, %v6170, %v6266
      %v6336 = vrot.slane %v6334, 3
      %v6339 = vsel %vm1502, %v6171, %v6267
      %v6342 = vsel %vm1502, %v6172, %v6268
      %v6343 = vsel %vm1506, %v6172, %v6268
      %v6345 = vrot.slane %v6343, 1
      %v6346 = vsel %vm1510, %v6172, %v6268
      %v6348 = vrot.slane %v6346, 2
      %v6349 = vsel %vm1514, %v6172, %v6268
      %v6351 = vrot.slane %v6349, 3
      %v6354 = vsel %vm1502, %v6173, %v6269
      %v6355 = vsel %vm1506, %v6173, %v6269
      %v6357 = vrot.slane %v6355, 1
      %v6358 = vsel %vm1510, %v6173, %v6269
      %v6360 = vrot.slane %v6358, 2
      %v6361 = vsel %vm1514, %v6173, %v6269
      %v6363 = vrot.slane %v6361, 3
      %v6366 = vsel %vm1502, %v6174, %v6270
      %v6369 = vsel %vm1502, %v6175, %v6271
      %v6370 = vsel %vm1506, %v6175, %v6271
      %v6372 = vrot.slane %v6370, 1
      %v6373 = vsel %vm1510, %v6175, %v6271
      %v6375 = vrot.slane %v6373, 2
      %v6376 = vsel %vm1514, %v6175, %v6271
      %v6378 = vrot.slane %v6376, 3
      %v6381 = vsel %vm1502, %v6176, %v6272
      %v6382 = vsel %vm1506, %v6176, %v6272
      %v6384 = vrot.slane %v6382, 1
      %v6385 = vsel %vm1510, %v6176, %v6272
      %v6387 = vrot.slane %v6385, 2
      %v6388 = vsel %vm1514, %v6176, %v6272
      %v6390 = vrot.slane %v6388, 3
      %v6393 = vsel %vm1502, %v6177, %v6273
      %v6396 = vsel %vm1502, %v6178, %v6274
      %v6397 = vsel %vm1506, %v6178, %v6274
      %v6399 = vrot.slane %v6397, 1
      %v6400 = vsel %vm1510, %v6178, %v6274
      %v6402 = vrot.slane %v6400, 2
      %v6403 = vsel %vm1514, %v6178, %v6274
      %v6405 = vrot.slane %v6403, 3
      %v6408 = vsel %vm1502, %v6179, %v6275
      %v6409 = vsel %vm1506, %v6179, %v6275
      %v6411 = vrot.slane %v6409, 1
      %v6412 = vsel %vm1510, %v6179, %v6275
      %v6414 = vrot.slane %v6412, 2
      %v6415 = vsel %vm1514, %v6179, %v6275
      %v6417 = vrot.slane %v6415, 3
      %v6420 = vsel %vm1502, %v6180, %v6276
      %v6423 = vsel %vm1502, %v6181, %v6277
      %v6424 = vsel %vm1506, %v6181, %v6277
      %v6426 = vrot.slane %v6424, 1
      %v6427 = vsel %vm1510, %v6181, %v6277
      %v6429 = vrot.slane %v6427, 2
      %v6430 = vsel %vm1514, %v6181, %v6277
      %v6432 = vrot.slane %v6430, 3
      %v6435 = vsel %vm1502, %v6182, %v6278
      %v6436 = vsel %vm1506, %v6182, %v6278
      %v6438 = vrot.slane %v6436, 1
      %v6439 = vsel %vm1510, %v6182, %v6278
      %v6441 = vrot.slane %v6439, 2
      %v6442 = vsel %vm1514, %v6182, %v6278
      %v6444 = vrot.slane %v6442, 3
      %v6447 = vsel %vm1502, %v6183, %v6279
      %v6450 = vsel %vm1502, %v6184, %v6280
      %v6451 = vsel %vm1506, %v6184, %v6280
      %v6453 = vrot.slane %v6451, 1
      %v6454 = vsel %vm1510, %v6184, %v6280
      %v6456 = vrot.slane %v6454, 2
      %v6457 = vsel %vm1514, %v6184, %v6280
      %v6459 = vrot.slane %v6457, 3
      %v6462 = vsel %vm1502, %v6185, %v6281
      %v6463 = vsel %vm1506, %v6185, %v6281
      %v6465 = vrot.slane %v6463, 1
      %v6466 = vsel %vm1510, %v6185, %v6281
      %v6468 = vrot.slane %v6466, 2
      %v6469 = vsel %vm1514, %v6185, %v6281
      %v6471 = vrot.slane %v6469, 3
      %v6474 = vsel %vm1502, %v6186, %v6282
      %v6477 = vsel %vm1502, %v6187, %v6283
      %v6478 = vsel %vm1506, %v6187, %v6283
      %v6480 = vrot.slane %v6478, 1
      %v6481 = vsel %vm1510, %v6187, %v6283
      %v6483 = vrot.slane %v6481, 2
      %v6484 = vsel %vm1514, %v6187, %v6283
      %v6486 = vrot.slane %v6484, 3
      %v6489 = vsel %vm1502, %v6188, %v6284
      %v6490 = vsel %vm1506, %v6188, %v6284
      %v6492 = vrot.slane %v6490, 1
      %v6493 = vsel %vm1510, %v6188, %v6284
      %v6495 = vrot.slane %v6493, 2
      %v6496 = vsel %vm1514, %v6188, %v6284
      %v6498 = vrot.slane %v6496, 3
      %v6501 = vsel %vm1502, %v6189, %v6285
      %v6504 = vsel %vm1502, %v6190, %v6286
      %v6505 = vsel %vm1506, %v6190, %v6286
      %v6507 = vrot.slane %v6505, 1
      %v6508 = vsel %vm1510, %v6190, %v6286
      %v6510 = vrot.slane %v6508, 2
      %v6511 = vsel %vm1514, %v6190, %v6286
      %v6513 = vrot.slane %v6511, 3
      %v6516 = vsel %vm1502, %v6191, %v6287
      %v6517 = vsel %vm1506, %v6191, %v6287
      %v6519 = vrot.slane %v6517, 1
      %v6520 = vsel %vm1510, %v6191, %v6287
      %v6522 = vrot.slane %v6520, 2
      %v6523 = vsel %vm1514, %v6191, %v6287
      %v6525 = vrot.slane %v6523, 3
      %v6528 = vsel %vm1502, %v6192, %v6288
      %v6531 = vsel %vm1502, %v6193, %v6289
      %v6532 = vsel %vm1506, %v6193, %v6289
      %v6534 = vrot.slane %v6532, 1
      %v6535 = vsel %vm1510, %v6193, %v6289
      %v6537 = vrot.slane %v6535, 2
      %v6538 = vsel %vm1514, %v6193, %v6289
      %v6540 = vrot.slane %v6538, 3
      %v6543 = vsel %vm1502, %v6194, %v6290
      %v6544 = vsel %vm1506, %v6194, %v6290
      %v6546 = vrot.slane %v6544, 1
      %v6547 = vsel %vm1510, %v6194, %v6290
      %v6549 = vrot.slane %v6547, 2
      %v6550 = vsel %vm1514, %v6194, %v6290
      %v6552 = vrot.slane %v6550, 3
      %v6555 = vsel %vm1502, %v6195, %v6291
      %v6558 = vsel %vm1502, %v6196, %v6292
      %v6559 = vsel %vm1506, %v6196, %v6292
      %v6561 = vrot.slane %v6559, 1
      %v6562 = vsel %vm1510, %v6196, %v6292
      %v6564 = vrot.slane %v6562, 2
      %v6565 = vsel %vm1514, %v6196, %v6292
      %v6567 = vrot.slane %v6565, 3
      %v6570 = vsel %vm1502, %v6197, %v6293
      %v6571 = vsel %vm1506, %v6197, %v6293
      %v6573 = vrot.slane %v6571, 1
      %v6574 = vsel %vm1510, %v6197, %v6293
      %v6576 = vrot.slane %v6574, 2
      %v6577 = vsel %vm1514, %v6197, %v6293
      %v6579 = vrot.slane %v6577, 3
      %v6582 = vsel %vm1502, %v6198, %v6294
      %v6585 = vsel %vm1502, %v6199, %v6295
      %v6586 = vsel %vm1506, %v6199, %v6295
      %v6588 = vrot.slane %v6586, 1
      %v6589 = vsel %vm1510, %v6199, %v6295
      %v6591 = vrot.slane %v6589, 2
      %v6592 = vsel %vm1514, %v6199, %v6295
      %v6594 = vrot.slane %v6592, 3
      %v6597 = vsel %vm1502, %v6200, %v6296
      %v6598 = vsel %vm1506, %v6200, %v6296
      %v6600 = vrot.slane %v6598, 1
      %v6601 = vsel %vm1510, %v6200, %v6296
      %v6603 = vrot.slane %v6601, 2
      %v6604 = vsel %vm1514, %v6200, %v6296
      %v6606 = vrot.slane %v6604, 3
      %v6609 = vsel %vm1502, %v6201, %v6297
      %v6612 = vsel %vm1502, %v6202, %v6298
      %v6613 = vsel %vm1506, %v6202, %v6298
      %v6615 = vrot.slane %v6613, 1
      %v6616 = vsel %vm1510, %v6202, %v6298
      %v6618 = vrot.slane %v6616, 2
      %v6619 = vsel %vm1514, %v6202, %v6298
      %v6621 = vrot.slane %v6619, 3
      %v6624 = vsel %vm1502, %v6203, %v6299
      %v6625 = vsel %vm1506, %v6203, %v6299
      %v6627 = vrot.slane %v6625, 1
      %v6628 = vsel %vm1510, %v6203, %v6299
      %v6630 = vrot.slane %v6628, 2
      %v6631 = vsel %vm1514, %v6203, %v6299
      %v6633 = vrot.slane %v6631, 3
      %v6636 = vsel %vm1502, %v6204, %v6300
      %v6639 = vsel %vm1502, %v6205, %v6301
      %v6640 = vsel %vm1506, %v6205, %v6301
      %v6642 = vrot.slane %v6640, 1
      %v6643 = vsel %vm1510, %v6205, %v6301
      %v6645 = vrot.slane %v6643, 2
      %v6646 = vsel %vm1514, %v6205, %v6301
      %v6648 = vrot.slane %v6646, 3
      %v6651 = vsel %vm1502, %v6206, %v6302
      %v6652 = vsel %vm1506, %v6206, %v6302
      %v6654 = vrot.slane %v6652, 1
      %v6655 = vsel %vm1510, %v6206, %v6302
      %v6657 = vrot.slane %v6655, 2
      %v6658 = vsel %vm1514, %v6206, %v6302
      %v6660 = vrot.slane %v6658, 3
      %v6663 = vsel %vm1502, %v6207, %v6303
      %v6666 = vsel %vm1502, %v6208, %v6304
      %v6667 = vsel %vm1506, %v6208, %v6304
      %v6669 = vrot.slane %v6667, 1
      %v6670 = vsel %vm1510, %v6208, %v6304
      %v6672 = vrot.slane %v6670, 2
      %v6673 = vsel %vm1514, %v6208, %v6304
      %v6675 = vrot.slane %v6673, 3
      %v6678 = vsel %vm1502, %v6209, %v6305
      %v6679 = vsel %vm1506, %v6209, %v6305
      %v6681 = vrot.slane %v6679, 1
      %v6682 = vsel %vm1510, %v6209, %v6305
      %v6684 = vrot.slane %v6682, 2
      %v6685 = vsel %vm1514, %v6209, %v6305
      %v6687 = vrot.slane %v6685, 3
      %v6690 = vsel %vm1502, %v6210, %v6306
      %v6693 = vsel %vm1502, %v6211, %v6307
      %v6694 = vsel %vm1506, %v6211, %v6307
      %v6696 = vrot.slane %v6694, 1
      %v6697 = vsel %vm1510, %v6211, %v6307
      %v6699 = vrot.slane %v6697, 2
      %v6700 = vsel %vm1514, %v6211, %v6307
      %v6702 = vrot.slane %v6700, 3
      %v6705 = vsel %vm1502, %v6212, %v6308
      %v6706 = vsel %vm1506, %v6212, %v6308
      %v6708 = vrot.slane %v6706, 1
      %v6709 = vsel %vm1510, %v6212, %v6308
      %v6711 = vrot.slane %v6709, 2
      %v6712 = vsel %vm1514, %v6212, %v6308
      %v6714 = vrot.slane %v6712, 3
      %v6717 = vsel %vm1502, %v6213, %v6309
      %v6720 = vsel %vm1502, %v6214, %v6310
      %v6721 = vsel %vm1506, %v6214, %v6310
      %v6723 = vrot.slane %v6721, 1
      %v6724 = vsel %vm1510, %v6214, %v6310
      %v6726 = vrot.slane %v6724, 2
      %v6727 = vsel %vm1514, %v6214, %v6310
      %v6729 = vrot.slane %v6727, 3
      %v6732 = vsel %vm1502, %v6215, %v6311
      %v6733 = vsel %vm1506, %v6215, %v6311
      %v6735 = vrot.slane %v6733, 1
      %v6736 = vsel %vm1510, %v6215, %v6311
      %v6738 = vrot.slane %v6736, 2
      %v6739 = vsel %vm1514, %v6215, %v6311
      %v6741 = vrot.slane %v6739, 3
      %v6744 = vsel %vm1502, %v6216, %v6312
      %v6745 = vld [vmem:[%s4] sm:$0xf]
      %v6746 = vld [vmem:[%s4 + $0x4] sm:$0xf]
      %v6747 = vld [vmem:[%s4 + $0x8] sm:$0xf]
      %6748 = vst [vmem:[#allocation1] ss:$9 sm:$0xff] %v6315
      %s6750 = scalar_lea.vmem [#allocation1], 1
      %6751 = vst [vmem:[%s6750] ss:$9 sm:$0xff] %v6318
      %s6753 = scalar_lea.vmem [#allocation1], 2
      %6754 = vst [vmem:[%s6753] ss:$9 sm:$0xff] %v6321
      %s6756 = scalar_lea.vmem [#allocation1], 3
      %6757 = vst [vmem:[%s6756] ss:$9 sm:$0xff] %v6324
      %s6758 = scalar_lea.vmem [#allocation1], 4
      %6759 = vst [vmem:[%s6758] ss:$9 sm:$0xff] %v6327
      %s6761 = scalar_lea.vmem [#allocation1], 5
      %6762 = vst [vmem:[%s6761] ss:$9 sm:$0xff] %v6330
      %s6764 = scalar_lea.vmem [#allocation1], 6
      %6765 = vst [vmem:[%s6764] ss:$9 sm:$0xff] %v6333
      %s6767 = scalar_lea.vmem [#allocation1], 7
      %6768 = vst [vmem:[%s6767] ss:$9 sm:$0xff] %v6336
      %v6769 = vld [vmem:[#allocation1] sm:$0xff]
      %6770 = vst [vmem:[#allocation1] ss:$9 sm:$0xff] %v6339
      %6771 = vst [vmem:[%s6750] ss:$9 sm:$0xff] %v6342
      %6773 = vst [vmem:[%s6753] ss:$9 sm:$0xff] %v6345
      %6775 = vst [vmem:[%s6756] ss:$9 sm:$0xff] %v6348
      %6777 = vst [vmem:[%s6758] ss:$9 sm:$0xff] %v6351
      %6778 = vst [vmem:[%s6761] ss:$9 sm:$0xff] %v6354
      %6780 = vst [vmem:[%s6764] ss:$9 sm:$0xff] %v6357
      %6782 = vst [vmem:[%s6767] ss:$9 sm:$0xff] %v6360
      %v6783 = vld [vmem:[#allocation1] sm:$0xff]
      %6785 = vst [vmem:[#allocation1] ss:$9 sm:$0xff] %v6363
      %6786 = vst [vmem:[%s6750] ss:$9 sm:$0xff] %v6366
      %6787 = vst [vmem:[%s6753] ss:$9 sm:$0xff] %v6369
      %6789 = vst [vmem:[%s6756] ss:$9 sm:$0xff] %v6372
      %6791 = vst [vmem:[%s6758] ss:$9 sm:$0xff] %v6375
      %6793 = vst [vmem:[%s6761] ss:$9 sm:$0xff] %v6378
      %6794 = vst [vmem:[%s6764] ss:$9 sm:$0xff] %v6381
      %6796 = vst [vmem:[%s6767] ss:$9 sm:$0xff] %v6384
      %v6797 = vld [vmem:[#allocation1] sm:$0xff]
      %6799 = vst [vmem:[#allocation1] ss:$9 sm:$0xff] %v6387
      %6801 = vst [vmem:[%s6750] ss:$9 sm:$0xff] %v6390
      %6802 = vst [vmem:[%s6753] ss:$9 sm:$0xff] %v6393
      %6803 = vst [vmem:[%s6756] ss:$9 sm:$0xff] %v6396
      %6805 = vst [vmem:[%s6758] ss:$9 sm:$0xff] %v6399
      %6807 = vst [vmem:[%s6761] ss:$9 sm:$0xff] %v6402
      %6809 = vst [vmem:[%s6764] ss:$9 sm:$0xff] %v6405
      %6810 = vst [vmem:[%s6767] ss:$9 sm:$0xff] %v6408
      %v6811 = vld [vmem:[#allocation1] sm:$0xff]
      %6813 = vst [vmem:[#allocation1] ss:$9 sm:$0xff] %v6411
      %6815 = vst [vmem:[%s6750] ss:$9 sm:$0xff] %v6414
      %6817 = vst [vmem:[%s6753] ss:$9 sm:$0xff] %v6417
      %6818 = vst [vmem:[%s6756] ss:$9 sm:$0xff] %v6420
      %6819 = vst [vmem:[%s6758] ss:$9 sm:$0xff] %v6423
      %6821 = vst [vmem:[%s6761] ss:$9 sm:$0xff] %v6426
      %6823 = vst [vmem:[%s6764] ss:$9 sm:$0xff] %v6429
      %6825 = vst [vmem:[%s6767] ss:$9 sm:$0xff] %v6432
      %v6826 = vld [vmem:[#allocation1] sm:$0xff]
      %6827 = vst [vmem:[#allocation1] ss:$9 sm:$0xff] %v6435
      %6829 = vst [vmem:[%s6750] ss:$9 sm:$0xff] %v6438
      %6831 = vst [vmem:[%s6753] ss:$9 sm:$0xff] %v6441
      %6833 = vst [vmem:[%s6756] ss:$9 sm:$0xff] %v6444
      %6834 = vst [vmem:[%s6758] ss:$9 sm:$0xff] %v6447
      %6835 = vst [vmem:[%s6761] ss:$9 sm:$0xff] %v6450
      %6837 = vst [vmem:[%s6764] ss:$9 sm:$0xff] %v6453
      %6839 = vst [vmem:[%s6767] ss:$9 sm:$0xff] %v6456
      %v6840 = vld [vmem:[#allocation1] sm:$0xff]
      %6842 = vst [vmem:[#allocation1] ss:$9 sm:$0xff] %v6459
      %6843 = vst [vmem:[%s6750] ss:$9 sm:$0xff] %v6462
      %6845 = vst [vmem:[%s6753] ss:$9 sm:$0xff] %v6465
      %6847 = vst [vmem:[%s6756] ss:$9 sm:$0xff] %v6468
      %6849 = vst [vmem:[%s6758] ss:$9 sm:$0xff] %v6471
      %6850 = vst [vmem:[%s6761] ss:$9 sm:$0xff] %v6474
      %6851 = vst [vmem:[%s6764] ss:$9 sm:$0xff] %v6477
      %6853 = vst [vmem:[%s6767] ss:$9 sm:$0xff] %v6480
      %v6854 = vld [vmem:[#allocation1] sm:$0xff]
      %6856 = vst [vmem:[#allocation1] ss:$9 sm:$0xff] %v6483
      %6858 = vst [vmem:[%s6750] ss:$9 sm:$0xff] %v6486
      %6859 = vst [vmem:[%s6753] ss:$9 sm:$0xff] %v6489
      %6861 = vst [vmem:[%s6756] ss:$9 sm:$0xff] %v6492
      %6863 = vst [vmem:[%s6758] ss:$9 sm:$0xff] %v6495
      %6865 = vst [vmem:[%s6761] ss:$9 sm:$0xff] %v6498
      %6866 = vst [vmem:[%s6764] ss:$9 sm:$0xff] %v6501
      %6867 = vst [vmem:[%s6767] ss:$9 sm:$0xff] %v6504
      %v6868 = vld [vmem:[#allocation1] sm:$0xff]
      %6870 = vst [vmem:[#allocation1] ss:$9 sm:$0xff] %v6507
      %6872 = vst [vmem:[%s6750] ss:$9 sm:$0xff] %v6510
      %6874 = vst [vmem:[%s6753] ss:$9 sm:$0xff] %v6513
      %6875 = vst [vmem:[%s6756] ss:$9 sm:$0xff] %v6516
      %6877 = vst [vmem:[%s6758] ss:$9 sm:$0xff] %v6519
      %6879 = vst [vmem:[%s6761] ss:$9 sm:$0xff] %v6522
      %6881 = vst [vmem:[%s6764] ss:$9 sm:$0xff] %v6525
      %6882 = vst [vmem:[%s6767] ss:$9 sm:$0xff] %v6528
      %v6883 = vld [vmem:[#allocation1] sm:$0xff]
      %6884 = vst [vmem:[#allocation1] ss:$9 sm:$0xff] %v6531
      %6886 = vst [vmem:[%s6750] ss:$9 sm:$0xff] %v6534
      %6888 = vst [vmem:[%s6753] ss:$9 sm:$0xff] %v6537
      %6890 = vst [vmem:[%s6756] ss:$9 sm:$0xff] %v6540
      %6891 = vst [vmem:[%s6758] ss:$9 sm:$0xff] %v6543
      %6893 = vst [vmem:[%s6761] ss:$9 sm:$0xff] %v6546
      %6895 = vst [vmem:[%s6764] ss:$9 sm:$0xff] %v6549
      %6897 = vst [vmem:[%s6767] ss:$9 sm:$0xff] %v6552
      %v6898 = vld [vmem:[#allocation1] sm:$0xff]
      %6899 = vst [vmem:[#allocation1] ss:$9 sm:$0xff] %v6555
      %6900 = vst [vmem:[%s6750] ss:$9 sm:$0xff] %v6558
      %6902 = vst [vmem:[%s6753] ss:$9 sm:$0xff] %v6561
      %6904 = vst [vmem:[%s6756] ss:$9 sm:$0xff] %v6564
      %6906 = vst [vmem:[%s6758] ss:$9 sm:$0xff] %v6567
      %6907 = vst [vmem:[%s6761] ss:$9 sm:$0xff] %v6570
      %6909 = vst [vmem:[%s6764] ss:$9 sm:$0xff] %v6573
      %6911 = vst [vmem:[%s6767] ss:$9 sm:$0xff] %v6576
      %v6912 = vld [vmem:[#allocation1] sm:$0xff]
      %6914 = vst [vmem:[#allocation1] ss:$9 sm:$0xff] %v6579
      %6915 = vst [vmem:[%s6750] ss:$9 sm:$0xff] %v6582
      %6916 = vst [vmem:[%s6753] ss:$9 sm:$0xff] %v6585
      %6918 = vst [vmem:[%s6756] ss:$9 sm:$0xff] %v6588
      %6920 = vst [vmem:[%s6758] ss:$9 sm:$0xff] %v6591
      %6922 = vst [vmem:[%s6761] ss:$9 sm:$0xff] %v6594
      %6923 = vst [vmem:[%s6764] ss:$9 sm:$0xff] %v6597
      %6925 = vst [vmem:[%s6767] ss:$9 sm:$0xff] %v6600
      %v6926 = vld [vmem:[#allocation1] sm:$0xff]
      %6928 = vst [vmem:[#allocation1] ss:$9 sm:$0xff] %v6603
      %6930 = vst [vmem:[%s6750] ss:$9 sm:$0xff] %v6606
      %6931 = vst [vmem:[%s6753] ss:$9 sm:$0xff] %v6609
      %6932 = vst [vmem:[%s6756] ss:$9 sm:$0xff] %v6612
      %6934 = vst [vmem:[%s6758] ss:$9 sm:$0xff] %v6615
      %6936 = vst [vmem:[%s6761] ss:$9 sm:$0xff] %v6618
      %6938 = vst [vmem:[%s6764] ss:$9 sm:$0xff] %v6621
      %6939 = vst [vmem:[%s6767] ss:$9 sm:$0xff] %v6624
      %v6940 = vld [vmem:[#allocation1] sm:$0xff]
      %6942 = vst [vmem:[#allocation1] ss:$9 sm:$0xff] %v6627
      %6944 = vst [vmem:[%s6750] ss:$9 sm:$0xff] %v6630
      %6946 = vst [vmem:[%s6753] ss:$9 sm:$0xff] %v6633
      %6947 = vst [vmem:[%s6756] ss:$9 sm:$0xff] %v6636
      %6948 = vst [vmem:[%s6758] ss:$9 sm:$0xff] %v6639
      %6950 = vst [vmem:[%s6761] ss:$9 sm:$0xff] %v6642
      %6952 = vst [vmem:[%s6764] ss:$9 sm:$0xff] %v6645
      %6954 = vst [vmem:[%s6767] ss:$9 sm:$0xff] %v6648
      %v6955 = vld [vmem:[#allocation1] sm:$0xff]
      %6956 = vst [vmem:[#allocation1] ss:$9 sm:$0xff] %v6651
      %6958 = vst [vmem:[%s6750] ss:$9 sm:$0xff] %v6654
      %6960 = vst [vmem:[%s6753] ss:$9 sm:$0xff] %v6657
      %6962 = vst [vmem:[%s6756] ss:$9 sm:$0xff] %v6660
      %6963 = vst [vmem:[%s6758] ss:$9 sm:$0xff] %v6663
      %6964 = vst [vmem:[%s6761] ss:$9 sm:$0xff] %v6666
      %6966 = vst [vmem:[%s6764] ss:$9 sm:$0xff] %v6669
      %6968 = vst [vmem:[%s6767] ss:$9 sm:$0xff] %v6672
      %v6969 = vld [vmem:[#allocation1] sm:$0xff]
      %6971 = vst [vmem:[#allocation1] ss:$9 sm:$0xff] %v6675
      %6972 = vst [vmem:[%s6750] ss:$9 sm:$0xff] %v6678
      %6974 = vst [vmem:[%s6753] ss:$9 sm:$0xff] %v6681
      %6976 = vst [vmem:[%s6756] ss:$9 sm:$0xff] %v6684
      %6978 = vst [vmem:[%s6758] ss:$9 sm:$0xff] %v6687
      %6979 = vst [vmem:[%s6761] ss:$9 sm:$0xff] %v6690
      %6980 = vst [vmem:[%s6764] ss:$9 sm:$0xff] %v6693
      %6982 = vst [vmem:[%s6767] ss:$9 sm:$0xff] %v6696
      %v6983 = vld [vmem:[#allocation1] sm:$0xff]
      %6985 = vst [vmem:[#allocation1] ss:$9 sm:$0xff] %v6699
      %6987 = vst [vmem:[%s6750] ss:$9 sm:$0xff] %v6702
      %6988 = vst [vmem:[%s6753] ss:$9 sm:$0xff] %v6705
      %6990 = vst [vmem:[%s6756] ss:$9 sm:$0xff] %v6708
      %6992 = vst [vmem:[%s6758] ss:$9 sm:$0xff] %v6711
      %6994 = vst [vmem:[%s6761] ss:$9 sm:$0xff] %v6714
      %6995 = vst [vmem:[%s6764] ss:$9 sm:$0xff] %v6717
      %6996 = vst [vmem:[%s6767] ss:$9 sm:$0xff] %v6720
      %v6997 = vld [vmem:[#allocation1] sm:$0xff]
      %6999 = vst [vmem:[#allocation1] ss:$9 sm:$0xff] %v6723
      %7001 = vst [vmem:[%s6750] ss:$9 sm:$0xff] %v6726
      %7003 = vst [vmem:[%s6753] ss:$9 sm:$0xff] %v6729
      %7004 = vst [vmem:[%s6756] ss:$9 sm:$0xff] %v6732
      %7006 = vst [vmem:[%s6758] ss:$9 sm:$0xff] %v6735
      %7008 = vst [vmem:[%s6761] ss:$9 sm:$0xff] %v6738
      %7010 = vst [vmem:[%s6764] ss:$9 sm:$0xff] %v6741
      %7011 = vst [vmem:[%s6767] ss:$9 sm:$0xff] %v6744
      %v7012 = vld [vmem:[#allocation1] sm:$0xff]
      %v7016 = vunpack.c.l.b16 %v6745
      %v7017 = vunpack.c.l.b16 %v6746
      %v7018 = vunpack.c.l.b16 %v6747
      %v7019 = vpack.c.b16 %v7017, %v7016
      %v7020 = vpack.c.b16 %v7018, %v7018
      %v7022 = vsel %vm2215, %v6769, 0
      %v7024 = vsel %vm2215, %v6783, 0
      %v7026 = vsel %vm2215, %v6797, 0
      %v7028 = vsel %vm2215, %v6811, 0
      %v7030 = vsel %vm2215, %v6826, 0
      %v7032 = vsel %vm2215, %v6840, 0
      %v7034 = vsel %vm2215, %v6854, 0
      %v7036 = vsel %vm2215, %v6868, 0
      %v7038 = vsel %vm2215, %v6883, 0
      %v7040 = vsel %vm2215, %v6898, 0
      %v7042 = vsel %vm2215, %v6912, 0
      %v7044 = vsel %vm2215, %v6926, 0
      %v7046 = vsel %vm2215, %v6940, 0
      %v7048 = vsel %vm2215, %v6955, 0
      %v7050 = vsel %vm2215, %v6969, 0
      %v7052 = vsel %vm2215, %v6983, 0
      %v7054 = vsel %vm2215, %v6997, 0
      %v7056 = vsel %vm2215, %v7012, 0
      %v7059 = vsel %vm2252, %v7020, 0
      %7061 = vmatpush.bf16.msra.mxu0 0
      %7062 = vmatpush.bf16.msra.mxu0 0
      %7063 = vmatpush.bf16.msra.mxu0 0
      %7064 = vmatpush.bf16.msra.mxu0 0
      %7065 = vmatpush.bf16.msra.mxu0 0
      %7066 = vmatpush.bf16.msra.mxu0 0
      %7067 = vmatpush.bf16.msra.mxu0 %v7059
      %7068 = vmatpush.bf16.msra.mxu0 %v7019
      %7069 = vmatmul.bf16.gmra.mxu0 %v7022
      %v7070 = vpop.f32.mrf.mxu0
      %v7071 = vadd.f32 0.0, %v7070
      %v7072 = vpop.f32.mrf.mxu0
      %v7073 = vadd.f32 0.0, %v7072
      %7074 = vmatmul.bf16.gmra.mxu0 %v7024
      %v7075 = vpop.f32.mrf.mxu0
      %v7076 = vadd.f32 0.0, %v7075
      %v7077 = vpop.f32.mrf.mxu0
      %v7078 = vadd.f32 0.0, %v7077
      %7079 = vmatmul.bf16.gmra.mxu0 %v7026
      %v7080 = vpop.f32.mrf.mxu0
      %v7081 = vadd.f32 0.0, %v7080
      %v7082 = vpop.f32.mrf.mxu0
      %v7083 = vadd.f32 0.0, %v7082
      %7084 = vmatmul.bf16.gmra.mxu0 %v7028
      %v7085 = vpop.f32.mrf.mxu0
      %v7086 = vadd.f32 0.0, %v7085
      %v7087 = vpop.f32.mrf.mxu0
      %v7088 = vadd.f32 0.0, %v7087
      %7089 = vmatmul.bf16.gmra.mxu0 %v7030
      %v7090 = vpop.f32.mrf.mxu0
      %v7091 = vadd.f32 0.0, %v7090
      %v7092 = vpop.f32.mrf.mxu0
      %v7093 = vadd.f32 0.0, %v7092
      %7094 = vmatmul.bf16.gmra.mxu0 %v7032
      %v7095 = vpop.f32.mrf.mxu0
      %v7096 = vadd.f32 0.0, %v7095
      %v7097 = vpop.f32.mrf.mxu0
      %v7098 = vadd.f32 0.0, %v7097
      %7099 = vmatmul.bf16.gmra.mxu0 %v7034
      %v7100 = vpop.f32.mrf.mxu0
      %v7101 = vadd.f32 0.0, %v7100
      %v7102 = vpop.f32.mrf.mxu0
      %v7103 = vadd.f32 0.0, %v7102
      %7104 = vmatmul.bf16.gmra.mxu0 %v7036
      %v7105 = vpop.f32.mrf.mxu0
      %v7106 = vadd.f32 0.0, %v7105
      %v7107 = vpop.f32.mrf.mxu0
      %v7108 = vadd.f32 0.0, %v7107
      %7109 = vmatmul.bf16.gmra.mxu0 %v7038
      %v7110 = vpop.f32.mrf.mxu0
      %v7111 = vadd.f32 0.0, %v7110
      %v7112 = vpop.f32.mrf.mxu0
      %v7113 = vadd.f32 0.0, %v7112
      %7114 = vmatmul.bf16.gmra.mxu0 %v7040
      %v7115 = vpop.f32.mrf.mxu0
      %v7116 = vadd.f32 0.0, %v7115
      %v7117 = vpop.f32.mrf.mxu0
      %v7118 = vadd.f32 0.0, %v7117
      %7119 = vmatmul.bf16.gmra.mxu0 %v7042
      %v7120 = vpop.f32.mrf.mxu0
      %v7121 = vadd.f32 0.0, %v7120
      %v7122 = vpop.f32.mrf.mxu0
      %v7123 = vadd.f32 0.0, %v7122
      %7124 = vmatmul.bf16.gmra.mxu0 %v7044
      %v7125 = vpop.f32.mrf.mxu0
      %v7126 = vadd.f32 0.0, %v7125
      %v7127 = vpop.f32.mrf.mxu0
      %v7128 = vadd.f32 0.0, %v7127
      %7129 = vmatmul.bf16.gmra.mxu0 %v7046
      %v7130 = vpop.f32.mrf.mxu0
      %v7131 = vadd.f32 0.0, %v7130
      %v7132 = vpop.f32.mrf.mxu0
      %v7133 = vadd.f32 0.0, %v7132
      %7134 = vmatmul.bf16.gmra.mxu0 %v7048
      %v7135 = vpop.f32.mrf.mxu0
      %v7136 = vadd.f32 0.0, %v7135
      %v7137 = vpop.f32.mrf.mxu0
      %v7138 = vadd.f32 0.0, %v7137
      %7139 = vmatmul.bf16.gmra.mxu0 %v7050
      %v7140 = vpop.f32.mrf.mxu0
      %v7141 = vadd.f32 0.0, %v7140
      %v7142 = vpop.f32.mrf.mxu0
      %v7143 = vadd.f32 0.0, %v7142
      %7144 = vmatmul.bf16.gmra.mxu0 %v7052
      %v7145 = vpop.f32.mrf.mxu0
      %v7146 = vadd.f32 0.0, %v7145
      %v7147 = vpop.f32.mrf.mxu0
      %v7148 = vadd.f32 0.0, %v7147
      %7149 = vmatmul.bf16.gmra.mxu0 %v7054
      %v7150 = vpop.f32.mrf.mxu0
      %v7151 = vadd.f32 0.0, %v7150
      %v7152 = vpop.f32.mrf.mxu0
      %v7153 = vadd.f32 0.0, %v7152
      %7154 = vmatmul.bf16.gmra.mxu0 %v7056
      %v7155 = vpop.f32.mrf.mxu0
      %v7156 = vadd.f32 0.0, %v7155
      %v7157 = vpop.f32.mrf.mxu0
      %v7158 = vadd.f32 0.0, %v7157
      %7159 = vdwg.mxu0
      %v7196 = vrot.slane %v7071, 2
      %v7197 = vrot.slane %v7071, 4
      %v7198 = vrot.slane %v7071, 6
      %v7199 = vrot.slane %v7073, 2
      %v7200 = vrot.slane %v7073, 4
      %v7201 = vrot.slane %v7073, 6
      %v7202 = vrot.slane %v7076, 2
      %v7203 = vrot.slane %v7076, 4
      %v7204 = vrot.slane %v7076, 6
      %v7205 = vrot.slane %v7078, 2
      %v7206 = vrot.slane %v7078, 4
      %v7207 = vrot.slane %v7078, 6
      %v7208 = vrot.slane %v7081, 4
      %v7209 = vrot.slane %v7081, 6
      %v7210 = vrot.slane %v7083, 2
      %v7211 = vrot.slane %v7083, 4
      %v7212 = vrot.slane %v7083, 6
      %v7213 = vrot.slane %v7086, 2
      %v7214 = vrot.slane %v7086, 6
      %v7215 = vrot.slane %v7088, 2
      %v7216 = vrot.slane %v7088, 4
      %v7217 = vrot.slane %v7088, 6
      %v7218 = vrot.slane %v7091, 2
      %v7219 = vrot.slane %v7091, 4
      %v7220 = vrot.slane %v7093, 2
      %v7221 = vrot.slane %v7093, 4
      %v7222 = vrot.slane %v7093, 6
      %v7223 = vrot.slane %v7096, 2
      %v7224 = vrot.slane %v7096, 4
      %v7225 = vrot.slane %v7096, 6
      %v7226 = vrot.slane %v7098, 2
      %v7227 = vrot.slane %v7098, 4
      %v7228 = vrot.slane %v7098, 6
      %v7229 = vrot.slane %v7101, 2
      %v7230 = vrot.slane %v7101, 4
      %v7231 = vrot.slane %v7101, 6
      %v7232 = vrot.slane %v7103, 4
      %v7233 = vrot.slane %v7103, 6
      %v7234 = vrot.slane %v7106, 2
      %v7235 = vrot.slane %v7106, 4
      %v7236 = vrot.slane %v7106, 6
      %v7237 = vrot.slane %v7108, 2
      %v7238 = vrot.slane %v7108, 6
      %v7239 = vrot.slane %v7111, 2
      %v7240 = vrot.slane %v7111, 4
      %v7241 = vrot.slane %v7111, 6
      %v7242 = vrot.slane %v7113, 2
      %v7243 = vrot.slane %v7113, 4
      %v7244 = vrot.slane %v7116, 2
      %v7245 = vrot.slane %v7116, 4
      %v7246 = vrot.slane %v7116, 6
      %v7247 = vrot.slane %v7118, 2
      %v7248 = vrot.slane %v7118, 4
      %v7249 = vrot.slane %v7118, 6
      %v7250 = vrot.slane %v7121, 2
      %v7251 = vrot.slane %v7121, 4
      %v7252 = vrot.slane %v7121, 6
      %v7253 = vrot.slane %v7123, 2
      %v7254 = vrot.slane %v7123, 4
      %v7255 = vrot.slane %v7123, 6
      %v7256 = vrot.slane %v7126, 4
      %v7257 = vrot.slane %v7126, 6
      %v7258 = vrot.slane %v7128, 2
      %v7259 = vrot.slane %v7128, 4
      %v7260 = vrot.slane %v7128, 6
      %v7261 = vrot.slane %v7131, 2
      %v7262 = vrot.slane %v7131, 6
      %v7263 = vrot.slane %v7133, 2
      %v7264 = vrot.slane %v7133, 4
      %v7265 = vrot.slane %v7133, 6
      %v7266 = vrot.slane %v7136, 2
      %v7267 = vrot.slane %v7136, 4
      %v7268 = vrot.slane %v7138, 2
      %v7269 = vrot.slane %v7138, 4
      %v7270 = vrot.slane %v7138, 6
      %v7271 = vrot.slane %v7141, 2
      %v7272 = vrot.slane %v7141, 4
      %v7273 = vrot.slane %v7141, 6
      %v7274 = vrot.slane %v7143, 2
      %v7275 = vrot.slane %v7143, 4
      %v7276 = vrot.slane %v7143, 6
      %v7277 = vrot.slane %v7146, 2
      %v7278 = vrot.slane %v7146, 4
      %v7279 = vrot.slane %v7146, 6
      %v7280 = vrot.slane %v7148, 4
      %v7281 = vrot.slane %v7148, 6
      %v7282 = vrot.slane %v7151, 2
      %v7283 = vrot.slane %v7151, 4
      %v7284 = vrot.slane %v7151, 6
      %v7285 = vrot.slane %v7153, 2
      %v7286 = vrot.slane %v7153, 6
      %v7287 = vrot.slane %v7156, 2
      %v7288 = vrot.slane %v7156, 4
      %v7289 = vrot.slane %v7156, 6
      %v7290 = vrot.slane %v7158, 2
      %v7291 = vrot.slane %v7158, 4
      %s7388 = scalar_lea.vmem %s4, 12
      %v7389 = vld [vmem:[%s7388] sm:$0xf]
      %v7390 = vld [vmem:[%s7388 + $0x4] sm:$0xf]
      %v7391 = vld [vmem:[%s7388 + $0x8] sm:$0xf]
      %7392 = vst [vmem:[#allocation1] ss:$9 sm:$0xff] %v6315
      %s7393 = scalar_lea.vmem [#allocation1], 1
      %7394 = vst [vmem:[%s7393] ss:$9 sm:$0xff] %v6318
      %s7395 = scalar_lea.vmem [#allocation1], 2
      %7396 = vst [vmem:[%s7395] ss:$9 sm:$0xff] %v6321
      %s7397 = scalar_lea.vmem [#allocation1], 3
      %7398 = vst [vmem:[%s7397] ss:$9 sm:$0xff] %v6324
      %s7399 = scalar_lea.vmem [#allocation1], 4
      %7400 = vst [vmem:[%s7399] ss:$9 sm:$0xff] %v6327
      %s7401 = scalar_lea.vmem [#allocation1], 5
      %7402 = vst [vmem:[%s7401] ss:$9 sm:$0xff] %v6330
      %s7403 = scalar_lea.vmem [#allocation1], 6
      %7404 = vst [vmem:[%s7403] ss:$9 sm:$0xff] %v6333
      %s7405 = scalar_lea.vmem [#allocation1], 7
      %7406 = vst [vmem:[%s7405] ss:$9 sm:$0xff] %v6336
      %v7407 = vld [vmem:[#allocation1] sm:$0xff]
      %7408 = vst [vmem:[#allocation1] ss:$9 sm:$0xff] %v6339
      %7409 = vst [vmem:[%s7393] ss:$9 sm:$0xff] %v6342
      %7410 = vst [vmem:[%s7395] ss:$9 sm:$0xff] %v6345
      %7411 = vst [vmem:[%s7397] ss:$9 sm:$0xff] %v6348
      %7412 = vst [vmem:[%s7399] ss:$9 sm:$0xff] %v6351
      %7413 = vst [vmem:[%s7401] ss:$9 sm:$0xff] %v6354
      %7414 = vst [vmem:[%s7403] ss:$9 sm:$0xff] %v6357
      %7415 = vst [vmem:[%s7405] ss:$9 sm:$0xff] %v6360
      %v7416 = vld [vmem:[#allocation1] sm:$0xff]
      %7417 = vst [vmem:[#allocation1] ss:$9 sm:$0xff] %v6363
      %7418 = vst [vmem:[%s7393] ss:$9 sm:$0xff] %v6366
      %7419 = vst [vmem:[%s7395] ss:$9 sm:$0xff] %v6369
      %7420 = vst [vmem:[%s7397] ss:$9 sm:$0xff] %v6372
      %7421 = vst [vmem:[%s7399] ss:$9 sm:$0xff] %v6375
      %7422 = vst [vmem:[%s7401] ss:$9 sm:$0xff] %v6378
      %7423 = vst [vmem:[%s7403] ss:$9 sm:$0xff] %v6381
      %7424 = vst [vmem:[%s7405] ss:$9 sm:$0xff] %v6384
      %v7425 = vld [vmem:[#allocation1] sm:$0xff]
      %7426 = vst [vmem:[#allocation1] ss:$9 sm:$0xff] %v6387
      %7427 = vst [vmem:[%s7393] ss:$9 sm:$0xff] %v6390
      %7428 = vst [vmem:[%s7395] ss:$9 sm:$0xff] %v6393
      %7429 = vst [vmem:[%s7397] ss:$9 sm:$0xff] %v6396
      %7430 = vst [vmem:[%s7399] ss:$9 sm:$0xff] %v6399
      %7431 = vst [vmem:[%s7401] ss:$9 sm:$0xff] %v6402
      %7432 = vst [vmem:[%s7403] ss:$9 sm:$0xff] %v6405
      %7433 = vst [vmem:[%s7405] ss:$9 sm:$0xff] %v6408
      %v7434 = vld [vmem:[#allocation1] sm:$0xff]
      %7435 = vst [vmem:[#allocation1] ss:$9 sm:$0xff] %v6411
      %7436 = vst [vmem:[%s7393] ss:$9 sm:$0xff] %v6414
      %7437 = vst [vmem:[%s7395] ss:$9 sm:$0xff] %v6417
      %7438 = vst [vmem:[%s7397] ss:$9 sm:$0xff] %v6420
      %7439 = vst [vmem:[%s7399] ss:$9 sm:$0xff] %v6423
      %7440 = vst [vmem:[%s7401] ss:$9 sm:$0xff] %v6426
      %7441 = vst [vmem:[%s7403] ss:$9 sm:$0xff] %v6429
      %7442 = vst [vmem:[%s7405] ss:$9 sm:$0xff] %v6432
      %v7443 = vld [vmem:[#allocation1] sm:$0xff]
      %7444 = vst [vmem:[#allocation1] ss:$9 sm:$0xff] %v6435
      %7445 = vst [vmem:[%s7393] ss:$9 sm:$0xff] %v6438
      %7446 = vst [vmem:[%s7395] ss:$9 sm:$0xff] %v6441
      %7447 = vst [vmem:[%s7397] ss:$9 sm:$0xff] %v6444
      %7448 = vst [vmem:[%s7399] ss:$9 sm:$0xff] %v6447
      %7449 = vst [vmem:[%s7401] ss:$9 sm:$0xff] %v6450
      %7450 = vst [vmem:[%s7403] ss:$9 sm:$0xff] %v6453
      %7451 = vst [vmem:[%s7405] ss:$9 sm:$0xff] %v6456
      %v7452 = vld [vmem:[#allocation1] sm:$0xff]
      %7453 = vst [vmem:[#allocation1] ss:$9 sm:$0xff] %v6459
      %7454 = vst [vmem:[%s7393] ss:$9 sm:$0xff] %v6462
      %7455 = vst [vmem:[%s7395] ss:$9 sm:$0xff] %v6465
      %7456 = vst [vmem:[%s7397] ss:$9 sm:$0xff] %v6468
      %7457 = vst [vmem:[%s7399] ss:$9 sm:$0xff] %v6471
      %7458 = vst [vmem:[%s7401] ss:$9 sm:$0xff] %v6474
      %7459 = vst [vmem:[%s7403] ss:$9 sm:$0xff] %v6477
      %7460 = vst [vmem:[%s7405] ss:$9 sm:$0xff] %v6480
      %v7461 = vld [vmem:[#allocation1] sm:$0xff]
      %7462 = vst [vmem:[#allocation1] ss:$9 sm:$0xff] %v6483
      %7463 = vst [vmem:[%s7393] ss:$9 sm:$0xff] %v6486
      %7464 = vst [vmem:[%s7395] ss:$9 sm:$0xff] %v6489
      %7465 = vst [vmem:[%s7397] ss:$9 sm:$0xff] %v6492
      %7466 = vst [vmem:[%s7399] ss:$9 sm:$0xff] %v6495
      %7467 = vst [vmem:[%s7401] ss:$9 sm:$0xff] %v6498
      %7468 = vst [vmem:[%s7403] ss:$9 sm:$0xff] %v6501
      %7469 = vst [vmem:[%s7405] ss:$9 sm:$0xff] %v6504
      %v7470 = vld [vmem:[#allocation1] sm:$0xff]
      %7471 = vst [vmem:[#allocation1] ss:$9 sm:$0xff] %v6507
      %7472 = vst [vmem:[%s7393] ss:$9 sm:$0xff] %v6510
      %7473 = vst [vmem:[%s7395] ss:$9 sm:$0xff] %v6513
      %7474 = vst [vmem:[%s7397] ss:$9 sm:$0xff] %v6516
      %7475 = vst [vmem:[%s7399] ss:$9 sm:$0xff] %v6519
      %7476 = vst [vmem:[%s7401] ss:$9 sm:$0xff] %v6522
      %7477 = vst [vmem:[%s7403] ss:$9 sm:$0xff] %v6525
      %7478 = vst [vmem:[%s7405] ss:$9 sm:$0xff] %v6528
      %v7479 = vld [vmem:[#allocation1] sm:$0xff]
      %7480 = vst [vmem:[#allocation1] ss:$9 sm:$0xff] %v6531
      %7481 = vst [vmem:[%s7393] ss:$9 sm:$0xff] %v6534
      %7482 = vst [vmem:[%s7395] ss:$9 sm:$0xff] %v6537
      %7483 = vst [vmem:[%s7397] ss:$9 sm:$0xff] %v6540
      %7484 = vst [vmem:[%s7399] ss:$9 sm:$0xff] %v6543
      %7485 = vst [vmem:[%s7401] ss:$9 sm:$0xff] %v6546
      %7486 = vst [vmem:[%s7403] ss:$9 sm:$0xff] %v6549
      %7487 = vst [vmem:[%s7405] ss:$9 sm:$0xff] %v6552
      %v7488 = vld [vmem:[#allocation1] sm:$0xff]
      %7489 = vst [vmem:[#allocation1] ss:$9 sm:$0xff] %v6555
      %7490 = vst [vmem:[%s7393] ss:$9 sm:$0xff] %v6558
      %7491 = vst [vmem:[%s7395] ss:$9 sm:$0xff] %v6561
      %7492 = vst [vmem:[%s7397] ss:$9 sm:$0xff] %v6564
      %7493 = vst [vmem:[%s7399] ss:$9 sm:$0xff] %v6567
      %7494 = vst [vmem:[%s7401] ss:$9 sm:$0xff] %v6570
      %7495 = vst [vmem:[%s7403] ss:$9 sm:$0xff] %v6573
      %7496 = vst [vmem:[%s7405] ss:$9 sm:$0xff] %v6576
      %v7497 = vld [vmem:[#allocation1] sm:$0xff]
      %7498 = vst [vmem:[#allocation1] ss:$9 sm:$0xff] %v6579
      %7499 = vst [vmem:[%s7393] ss:$9 sm:$0xff] %v6582
      %7500 = vst [vmem:[%s7395] ss:$9 sm:$0xff] %v6585
      %7501 = vst [vmem:[%s7397] ss:$9 sm:$0xff] %v6588
      %7502 = vst [vmem:[%s7399] ss:$9 sm:$0xff] %v6591
      %7503 = vst [vmem:[%s7401] ss:$9 sm:$0xff] %v6594
      %7504 = vst [vmem:[%s7403] ss:$9 sm:$0xff] %v6597
      %7505 = vst [vmem:[%s7405] ss:$9 sm:$0xff] %v6600
      %v7506 = vld [vmem:[#allocation1] sm:$0xff]
      %7507 = vst [vmem:[#allocation1] ss:$9 sm:$0xff] %v6603
      %7508 = vst [vmem:[%s7393] ss:$9 sm:$0xff] %v6606
      %7509 = vst [vmem:[%s7395] ss:$9 sm:$0xff] %v6609
      %7510 = vst [vmem:[%s7397] ss:$9 sm:$0xff] %v6612
      %7511 = vst [vmem:[%s7399] ss:$9 sm:$0xff] %v6615
      %7512 = vst [vmem:[%s7401] ss:$9 sm:$0xff] %v6618
      %7513 = vst [vmem:[%s7403] ss:$9 sm:$0xff] %v6621
      %7514 = vst [vmem:[%s7405] ss:$9 sm:$0xff] %v6624
      %v7515 = vld [vmem:[#allocation1] sm:$0xff]
      %7516 = vst [vmem:[#allocation1] ss:$9 sm:$0xff] %v6627
      %7517 = vst [vmem:[%s7393] ss:$9 sm:$0xff] %v6630
      %7518 = vst [vmem:[%s7395] ss:$9 sm:$0xff] %v6633
      %7519 = vst [vmem:[%s7397] ss:$9 sm:$0xff] %v6636
      %7520 = vst [vmem:[%s7399] ss:$9 sm:$0xff] %v6639
      %7521 = vst [vmem:[%s7401] ss:$9 sm:$0xff] %v6642
      %7522 = vst [vmem:[%s7403] ss:$9 sm:$0xff] %v6645
      %7523 = vst [vmem:[%s7405] ss:$9 sm:$0xff] %v6648
      %v7524 = vld [vmem:[#allocation1] sm:$0xff]
      %7525 = vst [vmem:[#allocation1] ss:$9 sm:$0xff] %v6651
      %7526 = vst [vmem:[%s7393] ss:$9 sm:$0xff] %v6654
      %7527 = vst [vmem:[%s7395] ss:$9 sm:$0xff] %v6657
      %7528 = vst [vmem:[%s7397] ss:$9 sm:$0xff] %v6660
      %7529 = vst [vmem:[%s7399] ss:$9 sm:$0xff] %v6663
      %7530 = vst [vmem:[%s7401] ss:$9 sm:$0xff] %v6666
      %7531 = vst [vmem:[%s7403] ss:$9 sm:$0xff] %v6669
      %7532 = vst [vmem:[%s7405] ss:$9 sm:$0xff] %v6672
      %v7533 = vld [vmem:[#allocation1] sm:$0xff]
      %7534 = vst [vmem:[#allocation1] ss:$9 sm:$0xff] %v6675
      %7535 = vst [vmem:[%s7393] ss:$9 sm:$0xff] %v6678
      %7536 = vst [vmem:[%s7395] ss:$9 sm:$0xff] %v6681
      %7537 = vst [vmem:[%s7397] ss:$9 sm:$0xff] %v6684
      %7538 = vst [vmem:[%s7399] ss:$9 sm:$0xff] %v6687
      %7539 = vst [vmem:[%s7401] ss:$9 sm:$0xff] %v6690
      %7540 = vst [vmem:[%s7403] ss:$9 sm:$0xff] %v6693
      %7541 = vst [vmem:[%s7405] ss:$9 sm:$0xff] %v6696
      %v7542 = vld [vmem:[#allocation1] sm:$0xff]
      %7543 = vst [vmem:[#allocation1] ss:$9 sm:$0xff] %v6699
      %7544 = vst [vmem:[%s7393] ss:$9 sm:$0xff] %v6702
      %7545 = vst [vmem:[%s7395] ss:$9 sm:$0xff] %v6705
      %7546 = vst [vmem:[%s7397] ss:$9 sm:$0xff] %v6708
      %7547 = vst [vmem:[%s7399] ss:$9 sm:$0xff] %v6711
      %7548 = vst [vmem:[%s7401] ss:$9 sm:$0xff] %v6714
      %7549 = vst [vmem:[%s7403] ss:$9 sm:$0xff] %v6717
      %7550 = vst [vmem:[%s7405] ss:$9 sm:$0xff] %v6720
      %v7551 = vld [vmem:[#allocation1] sm:$0xff]
      %7552 = vst [vmem:[#allocation1] ss:$9 sm:$0xff] %v6723
      %7553 = vst [vmem:[%s7393] ss:$9 sm:$0xff] %v6726
      %7554 = vst [vmem:[%s7395] ss:$9 sm:$0xff] %v6729
      %7555 = vst [vmem:[%s7397] ss:$9 sm:$0xff] %v6732
      %7556 = vst [vmem:[%s7399] ss:$9 sm:$0xff] %v6735
      %7557 = vst [vmem:[%s7401] ss:$9 sm:$0xff] %v6738
      %7558 = vst [vmem:[%s7403] ss:$9 sm:$0xff] %v6741
      %7559 = vst [vmem:[%s7405] ss:$9 sm:$0xff] %v6744
      %v7560 = vld [vmem:[#allocation1] sm:$0xff]
      %v7564 = vunpack.c.l.b16 %v7389
      %v7565 = vunpack.c.l.b16 %v7390
      %v7566 = vunpack.c.l.b16 %v7391
      %v7567 = vpack.c.b16 %v7565, %v7564
      %v7568 = vpack.c.b16 %v7566, %v7566
      %v7570 = vsel %vm2215, %v7407, 0
      %v7572 = vsel %vm2215, %v7416, 0
      %v7574 = vsel %vm2215, %v7425, 0
      %v7576 = vsel %vm2215, %v7434, 0
      %v7578 = vsel %vm2215, %v7443, 0
      %v7580 = vsel %vm2215, %v7452, 0
      %v7582 = vsel %vm2215, %v7461, 0
      %v7584 = vsel %vm2215, %v7470, 0
      %v7586 = vsel %vm2215, %v7479, 0
      %v7588 = vsel %vm2215, %v7488, 0
      %v7590 = vsel %vm2215, %v7497, 0
      %v7592 = vsel %vm2215, %v7506, 0
      %v7594 = vsel %vm2215, %v7515, 0
      %v7596 = vsel %vm2215, %v7524, 0
      %v7598 = vsel %vm2215, %v7533, 0
      %v7600 = vsel %vm2215, %v7542, 0
      %v7602 = vsel %vm2215, %v7551, 0
      %v7604 = vsel %vm2215, %v7560, 0
      %v7607 = vsel %vm2252, %v7568, 0
      %7609 = vmatpush.bf16.msra.mxu0 0
      %7610 = vmatpush.bf16.msra.mxu0 0
      %7611 = vmatpush.bf16.msra.mxu0 0
      %7612 = vmatpush.bf16.msra.mxu0 0
      %7613 = vmatpush.bf16.msra.mxu0 0
      %7614 = vmatpush.bf16.msra.mxu0 0
      %7615 = vmatpush.bf16.msra.mxu0 %v7607
      %7616 = vmatpush.bf16.msra.mxu0 %v7567
      %7617 = vmatmul.bf16.gmra.mxu0 %v7570
      %v7618 = vpop.f32.mrf.mxu0
      %v7619 = vadd.f32 0.0, %v7618
      %v7620 = vpop.f32.mrf.mxu0
      %v7621 = vadd.f32 0.0, %v7620
      %7622 = vmatmul.bf16.gmra.mxu0 %v7572
      %v7623 = vpop.f32.mrf.mxu0
      %v7624 = vadd.f32 0.0, %v7623
      %v7625 = vpop.f32.mrf.mxu0
      %v7626 = vadd.f32 0.0, %v7625
      %7627 = vmatmul.bf16.gmra.mxu0 %v7574
      %v7628 = vpop.f32.mrf.mxu0
      %v7629 = vadd.f32 0.0, %v7628
      %v7630 = vpop.f32.mrf.mxu0
      %v7631 = vadd.f32 0.0, %v7630
      %7632 = vmatmul.bf16.gmra.mxu0 %v7576
      %v7633 = vpop.f32.mrf.mxu0
      %v7634 = vadd.f32 0.0, %v7633
      %v7635 = vpop.f32.mrf.mxu0
      %v7636 = vadd.f32 0.0, %v7635
      %7637 = vmatmul.bf16.gmra.mxu0 %v7578
      %v7638 = vpop.f32.mrf.mxu0
      %v7639 = vadd.f32 0.0, %v7638
      %v7640 = vpop.f32.mrf.mxu0
      %v7641 = vadd.f32 0.0, %v7640
      %7642 = vmatmul.bf16.gmra.mxu0 %v7580
      %v7643 = vpop.f32.mrf.mxu0
      %v7644 = vadd.f32 0.0, %v7643
      %v7645 = vpop.f32.mrf.mxu0
      %v7646 = vadd.f32 0.0, %v7645
      %7647 = vmatmul.bf16.gmra.mxu0 %v7582
      %v7648 = vpop.f32.mrf.mxu0
      %v7649 = vadd.f32 0.0, %v7648
      %v7650 = vpop.f32.mrf.mxu0
      %v7651 = vadd.f32 0.0, %v7650
      %7652 = vmatmul.bf16.gmra.mxu0 %v7584
      %v7653 = vpop.f32.mrf.mxu0
      %v7654 = vadd.f32 0.0, %v7653
      %v7655 = vpop.f32.mrf.mxu0
      %v7656 = vadd.f32 0.0, %v7655
      %7657 = vmatmul.bf16.gmra.mxu0 %v7586
      %v7658 = vpop.f32.mrf.mxu0
      %v7659 = vadd.f32 0.0, %v7658
      %v7660 = vpop.f32.mrf.mxu0
      %v7661 = vadd.f32 0.0, %v7660
      %7662 = vmatmul.bf16.gmra.mxu0 %v7588
      %v7663 = vpop.f32.mrf.mxu0
      %v7664 = vadd.f32 0.0, %v7663
      %v7665 = vpop.f32.mrf.mxu0
      %v7666 = vadd.f32 0.0, %v7665
      %7667 = vmatmul.bf16.gmra.mxu0 %v7590
      %v7668 = vpop.f32.mrf.mxu0
      %v7669 = vadd.f32 0.0, %v7668
      %v7670 = vpop.f32.mrf.mxu0
      %v7671 = vadd.f32 0.0, %v7670
      %7672 = vmatmul.bf16.gmra.mxu0 %v7592
      %v7673 = vpop.f32.mrf.mxu0
      %v7674 = vadd.f32 0.0, %v7673
      %v7675 = vpop.f32.mrf.mxu0
      %v7676 = vadd.f32 0.0, %v7675
      %7677 = vmatmul.bf16.gmra.mxu0 %v7594
      %v7678 = vpop.f32.mrf.mxu0
      %v7679 = vadd.f32 0.0, %v7678
      %v7680 = vpop.f32.mrf.mxu0
      %v7681 = vadd.f32 0.0, %v7680
      %7682 = vmatmul.bf16.gmra.mxu0 %v7596
      %v7683 = vpop.f32.mrf.mxu0
      %v7684 = vadd.f32 0.0, %v7683
      %v7685 = vpop.f32.mrf.mxu0
      %v7686 = vadd.f32 0.0, %v7685
      %7687 = vmatmul.bf16.gmra.mxu0 %v7598
      %v7688 = vpop.f32.mrf.mxu0
      %v7689 = vadd.f32 0.0, %v7688
      %v7690 = vpop.f32.mrf.mxu0
      %v7691 = vadd.f32 0.0, %v7690
      %7692 = vmatmul.bf16.gmra.mxu0 %v7600
      %v7693 = vpop.f32.mrf.mxu0
      %v7694 = vadd.f32 0.0, %v7693
      %v7695 = vpop.f32.mrf.mxu0
      %v7696 = vadd.f32 0.0, %v7695
      %7697 = vmatmul.bf16.gmra.mxu0 %v7602
      %v7698 = vpop.f32.mrf.mxu0
      %v7699 = vadd.f32 0.0, %v7698
      %v7700 = vpop.f32.mrf.mxu0
      %v7701 = vadd.f32 0.0, %v7700
      %7702 = vmatmul.bf16.gmra.mxu0 %v7604
      %v7703 = vpop.f32.mrf.mxu0
      %v7704 = vadd.f32 0.0, %v7703
      %v7705 = vpop.f32.mrf.mxu0
      %v7706 = vadd.f32 0.0, %v7705
      %7707 = vdwg.mxu0
      %v7744 = vrot.slane %v7619, 2
      %v7745 = vrot.slane %v7619, 4
      %v7746 = vrot.slane %v7619, 6
      %v7747 = vrot.slane %v7621, 2
      %v7748 = vrot.slane %v7621, 4
      %v7749 = vrot.slane %v7621, 6
      %v7750 = vrot.slane %v7624, 2
      %v7751 = vrot.slane %v7624, 4
      %v7752 = vrot.slane %v7624, 6
      %v7753 = vrot.slane %v7626, 2
      %v7754 = vrot.slane %v7626, 4
      %v7755 = vrot.slane %v7626, 6
      %v7756 = vrot.slane %v7629, 2
      %v7757 = vrot.slane %v7629, 4
      %v7758 = vrot.slane %v7629, 6
      %v7759 = vrot.slane %v7631, 2
      %v7760 = vrot.slane %v7631, 4
      %v7761 = vrot.slane %v7631, 6
      %v7762 = vrot.slane %v7634, 2
      %v7763 = vrot.slane %v7634, 4
      %v7764 = vrot.slane %v7634, 6
      %v7765 = vrot.slane %v7636, 2
      %v7766 = vrot.slane %v7636, 4
      %v7767 = vrot.slane %v7636, 6
      %v7768 = vrot.slane %v7639, 2
      %v7769 = vrot.slane %v7639, 4
      %v7770 = vrot.slane %v7639, 6
      %v7771 = vrot.slane %v7641, 2
      %v7772 = vrot.slane %v7641, 4
      %v7773 = vrot.slane %v7641, 6
      %v7774 = vrot.slane %v7644, 2
      %v7775 = vrot.slane %v7644, 4
      %v7776 = vrot.slane %v7644, 6
      %v7777 = vrot.slane %v7646, 2
      %v7778 = vrot.slane %v7646, 4
      %v7779 = vrot.slane %v7646, 6
      %v7780 = vrot.slane %v7649, 2
      %v7781 = vrot.slane %v7649, 4
      %v7782 = vrot.slane %v7649, 6
      %v7783 = vrot.slane %v7651, 2
      %v7784 = vrot.slane %v7651, 4
      %v7785 = vrot.slane %v7651, 6
      %v7786 = vrot.slane %v7654, 2
      %v7787 = vrot.slane %v7654, 4
      %v7788 = vrot.slane %v7654, 6
      %v7789 = vrot.slane %v7656, 2
      %v7790 = vrot.slane %v7656, 4
      %v7791 = vrot.slane %v7656, 6
      %v7792 = vrot.slane %v7659, 2
      %v7793 = vrot.slane %v7659, 4
      %v7794 = vrot.slane %v7659, 6
      %v7795 = vrot.slane %v7661, 2
      %v7796 = vrot.slane %v7661, 4
      %v7797 = vrot.slane %v7661, 6
      %v7798 = vrot.slane %v7664, 2
      %v7799 = vrot.slane %v7664, 4
      %v7800 = vrot.slane %v7664, 6
      %v7801 = vrot.slane %v7666, 2
      %v7802 = vrot.slane %v7666, 4
      %v7803 = vrot.slane %v7666, 6
      %v7804 = vrot.slane %v7669, 2
      %v7805 = vrot.slane %v7669, 4
      %v7806 = vrot.slane %v7669, 6
      %v7807 = vrot.slane %v7671, 2
      %v7808 = vrot.slane %v7671, 4
      %v7809 = vrot.slane %v7671, 6
      %v7810 = vrot.slane %v7674, 2
      %v7811 = vrot.slane %v7674, 4
      %v7812 = vrot.slane %v7674, 6
      %v7813 = vrot.slane %v7676, 2
      %v7814 = vrot.slane %v7676, 4
      %v7815 = vrot.slane %v7676, 6
      %v7816 = vrot.slane %v7679, 2
      %v7817 = vrot.slane %v7679, 4
      %v7818 = vrot.slane %v7679, 6
      %v7819 = vrot.slane %v7681, 2
      %v7820 = vrot.slane %v7681, 4
      %v7821 = vrot.slane %v7681, 6
      %v7822 = vrot.slane %v7684, 2
      %v7823 = vrot.slane %v7684, 4
      %v7824 = vrot.slane %v7684, 6
      %v7825 = vrot.slane %v7686, 2
      %v7826 = vrot.slane %v7686, 4
      %v7827 = vrot.slane %v7686, 6
      %v7828 = vrot.slane %v7689, 2
      %v7829 = vrot.slane %v7689, 4
      %v7830 = vrot.slane %v7689, 6
      %v7831 = vrot.slane %v7691, 2
      %v7832 = vrot.slane %v7691, 4
      %v7833 = vrot.slane %v7691, 6
      %v7834 = vrot.slane %v7694, 2
      %v7835 = vrot.slane %v7694, 4
      %v7836 = vrot.slane %v7694, 6
      %v7837 = vrot.slane %v7696, 2
      %v7838 = vrot.slane %v7696, 4
      %v7839 = vrot.slane %v7696, 6
      %v7840 = vrot.slane %v7699, 2
      %v7841 = vrot.slane %v7699, 4
      %v7842 = vrot.slane %v7699, 6
      %v7843 = vrot.slane %v7701, 2
      %v7844 = vrot.slane %v7701, 4
      %v7845 = vrot.slane %v7701, 6
      %v7846 = vrot.slane %v7704, 2
      %v7847 = vrot.slane %v7704, 4
      %v7848 = vrot.slane %v7704, 6
      %v7849 = vrot.slane %v7706, 2
      %v7850 = vrot.slane %v7706, 4
      %v7851 = vrot.slane %v7706, 6
      %v7852 = vrot.slane %v7619, 7
      %v7853 = vrot.slane %v7852, 2
      %v7854 = vrot.slane %v7744, 7
      %v7855 = vsel %vm3051, %v7853, %v7854
      %v7856 = vrot.slane %v7854, 2
      %v7857 = vrot.slane %v7745, 7
      %v7858 = vsel %vm3051, %v7856, %v7857
      %v7859 = vrot.slane %v7857, 2
      %v7860 = vrot.slane %v7746, 7
      %v7861 = vsel %vm3051, %v7859, %v7860
      %v7862 = vrot.slane %v7860, 2
      %v7863 = vrot.slane %v7621, 7
      %v7864 = vsel %vm3051, %v7862, %v7863
      %v7865 = vrot.slane %v7863, 2
      %v7866 = vrot.slane %v7747, 7
      %v7867 = vsel %vm3051, %v7865, %v7866
      %v7868 = vrot.slane %v7866, 2
      %v7869 = vrot.slane %v7748, 7
      %v7870 = vsel %vm3051, %v7868, %v7869
      %v7871 = vrot.slane %v7869, 2
      %v7872 = vrot.slane %v7749, 7
      %v7873 = vsel %vm3051, %v7871, %v7872
      %v7874 = vrot.slane %v7872, 2
      %v7875 = vrot.slane %v7624, 7
      %v7876 = vsel %vm3051, %v7874, %v7875
      %v7877 = vrot.slane %v7750, 7
      %v7878 = vrot.slane %v7877, 2
      %v7879 = vrot.slane %v7751, 7
      %v7880 = vsel %vm3051, %v7878, %v7879
      %v7881 = vrot.slane %v7879, 2
      %v7882 = vrot.slane %v7752, 7
      %v7883 = vsel %vm3051, %v7881, %v7882
      %v7884 = vrot.slane %v7882, 2
      %v7885 = vrot.slane %v7626, 7
      %v7886 = vsel %vm3051, %v7884, %v7885
      %v7887 = vrot.slane %v7885, 2
      %v7888 = vrot.slane %v7753, 7
      %v7889 = vsel %vm3051, %v7887, %v7888
      %v7890 = vrot.slane %v7888, 2
      %v7891 = vrot.slane %v7754, 7
      %v7892 = vsel %vm3051, %v7890, %v7891
      %v7893 = vrot.slane %v7891, 2
      %v7894 = vrot.slane %v7755, 7
      %v7895 = vsel %vm3051, %v7893, %v7894
      %v7896 = vrot.slane %v7894, 2
      %v7897 = vrot.slane %v7629, 7
      %v7898 = vsel %vm3051, %v7896, %v7897
      %v7899 = vrot.slane %v7897, 2
      %v7900 = vrot.slane %v7756, 7
      %v7901 = vsel %vm3051, %v7899, %v7900
      %v7902 = vrot.slane %v7757, 7
      %v7903 = vrot.slane %v7902, 2
      %v7904 = vrot.slane %v7758, 7
      %v7905 = vsel %vm3051, %v7903, %v7904
      %v7906 = vrot.slane %v7904, 2
      %v7907 = vrot.slane %v7631, 7
      %v7908 = vsel %vm3051, %v7906, %v7907
      %v7909 = vrot.slane %v7907, 2
      %v7910 = vrot.slane %v7759, 7
      %v7911 = vsel %vm3051, %v7909, %v7910
      %v7912 = vrot.slane %v7910, 2
      %v7913 = vrot.slane %v7760, 7
      %v7914 = vsel %vm3051, %v7912, %v7913
      %v7915 = vrot.slane %v7913, 2
      %v7916 = vrot.slane %v7761, 7
      %v7917 = vsel %vm3051, %v7915, %v7916
      %v7918 = vrot.slane %v7916, 2
      %v7919 = vrot.slane %v7634, 7
      %v7920 = vsel %vm3051, %v7918, %v7919
      %v7921 = vrot.slane %v7919, 2
      %v7922 = vrot.slane %v7762, 7
      %v7923 = vsel %vm3051, %v7921, %v7922
      %v7924 = vrot.slane %v7922, 2
      %v7925 = vrot.slane %v7763, 7
      %v7926 = vsel %vm3051, %v7924, %v7925
      %v7927 = vrot.slane %v7764, 7
      %v7928 = vrot.slane %v7927, 2
      %v7929 = vrot.slane %v7636, 7
      %v7930 = vsel %vm3051, %v7928, %v7929
      %v7931 = vrot.slane %v7929, 2
      %v7932 = vrot.slane %v7765, 7
      %v7933 = vsel %vm3051, %v7931, %v7932
      %v7934 = vrot.slane %v7932, 2
      %v7935 = vrot.slane %v7766, 7
      %v7936 = vsel %vm3051, %v7934, %v7935
      %v7937 = vrot.slane %v7935, 2
      %v7938 = vrot.slane %v7767, 7
      %v7939 = vsel %vm3051, %v7937, %v7938
      %v7940 = vrot.slane %v7938, 2
      %v7941 = vrot.slane %v7639, 7
      %v7942 = vsel %vm3051, %v7940, %v7941
      %v7943 = vrot.slane %v7941, 2
      %v7944 = vrot.slane %v7768, 7
      %v7945 = vsel %vm3051, %v7943, %v7944
      %v7946 = vrot.slane %v7944, 2
      %v7947 = vrot.slane %v7769, 7
      %v7948 = vsel %vm3051, %v7946, %v7947
      %v7949 = vrot.slane %v7947, 2
      %v7950 = vrot.slane %v7770, 7
      %v7951 = vsel %vm3051, %v7949, %v7950
      %v7952 = vrot.slane %v7641, 7
      %v7953 = vrot.slane %v7952, 2
      %v7954 = vrot.slane %v7771, 7
      %v7955 = vsel %vm3051, %v7953, %v7954
      %v7956 = vrot.slane %v7954, 2
      %v7957 = vrot.slane %v7772, 7
      %v7958 = vsel %vm3051, %v7956, %v7957
      %v7959 = vrot.slane %v7957, 2
      %v7960 = vrot.slane %v7773, 7
      %v7961 = vsel %vm3051, %v7959, %v7960
      %v7962 = vrot.slane %v7960, 2
      %v7963 = vrot.slane %v7644, 7
      %v7964 = vsel %vm3051, %v7962, %v7963
      %v7965 = vrot.slane %v7963, 2
      %v7966 = vrot.slane %v7774, 7
      %v7967 = vsel %vm3051, %v7965, %v7966
      %v7968 = vrot.slane %v7966, 2
      %v7969 = vrot.slane %v7775, 7
      %v7970 = vsel %vm3051, %v7968, %v7969
      %v7971 = vrot.slane %v7969, 2
      %v7972 = vrot.slane %v7776, 7
      %v7973 = vsel %vm3051, %v7971, %v7972
      %v7974 = vrot.slane %v7972, 2
      %v7975 = vrot.slane %v7646, 7
      %v7976 = vsel %vm3051, %v7974, %v7975
      %v7977 = vrot.slane %v7777, 7
      %v7978 = vrot.slane %v7977, 2
      %v7979 = vrot.slane %v7778, 7
      %v7980 = vsel %vm3051, %v7978, %v7979
      %v7981 = vrot.slane %v7979, 2
      %v7982 = vrot.slane %v7779, 7
      %v7983 = vsel %vm3051, %v7981, %v7982
      %v7984 = vrot.slane %v7982, 2
      %v7985 = vrot.slane %v7649, 7
      %v7986 = vsel %vm3051, %v7984, %v7985
      %v7987 = vrot.slane %v7985, 2
      %v7988 = vrot.slane %v7780, 7
      %v7989 = vsel %vm3051, %v7987, %v7988
      %v7990 = vrot.slane %v7988, 2
      %v7991 = vrot.slane %v7781, 7
      %v7992 = vsel %vm3051, %v7990, %v7991
      %v7993 = vrot.slane %v7991, 2
      %v7994 = vrot.slane %v7782, 7
      %v7995 = vsel %vm3051, %v7993, %v7994
      %v7996 = vrot.slane %v7994, 2
      %v7997 = vrot.slane %v7651, 7
      %v7998 = vsel %vm3051, %v7996, %v7997
      %v7999 = vrot.slane %v7997, 2
      %v8000 = vrot.slane %v7783, 7
      %v8001 = vsel %vm3051, %v7999, %v8000
      %v8002 = vrot.slane %v7784, 7
      %v8003 = vrot.slane %v8002, 2
      %v8004 = vrot.slane %v7785, 7
      %v8005 = vsel %vm3051, %v8003, %v8004
      %v8006 = vrot.slane %v8004, 2
      %v8007 = vrot.slane %v7654, 7
      %v8008 = vsel %vm3051, %v8006, %v8007
      %v8009 = vrot.slane %v8007, 2
      %v8010 = vrot.slane %v7786, 7
      %v8011 = vsel %vm3051, %v8009, %v8010
      %v8012 = vrot.slane %v8010, 2
      %v8013 = vrot.slane %v7787, 7
      %v8014 = vsel %vm3051, %v8012, %v8013
      %v8015 = vrot.slane %v8013, 2
      %v8016 = vrot.slane %v7788, 7
      %v8017 = vsel %vm3051, %v8015, %v8016
      %v8018 = vrot.slane %v8016, 2
      %v8019 = vrot.slane %v7656, 7
      %v8020 = vsel %vm3051, %v8018, %v8019
      %v8021 = vrot.slane %v8019, 2
      %v8022 = vrot.slane %v7789, 7
      %v8023 = vsel %vm3051, %v8021, %v8022
      %v8024 = vrot.slane %v8022, 2
      %v8025 = vrot.slane %v7790, 7
      %v8026 = vsel %vm3051, %v8024, %v8025
      %v8027 = vrot.slane %v7791, 7
      %v8028 = vrot.slane %v8027, 2
      %v8029 = vrot.slane %v7659, 7
      %v8030 = vsel %vm3051, %v8028, %v8029
      %v8031 = vrot.slane %v8029, 2
      %v8032 = vrot.slane %v7792, 7
      %v8033 = vsel %vm3051, %v8031, %v8032
      %v8034 = vrot.slane %v8032, 2
      %v8035 = vrot.slane %v7793, 7
      %v8036 = vsel %vm3051, %v8034, %v8035
      %v8037 = vrot.slane %v8035, 2
      %v8038 = vrot.slane %v7794, 7
      %v8039 = vsel %vm3051, %v8037, %v8038
      %v8040 = vrot.slane %v8038, 2
      %v8041 = vrot.slane %v7661, 7
      %v8042 = vsel %vm3051, %v8040, %v8041
      %v8043 = vrot.slane %v8041, 2
      %v8044 = vrot.slane %v7795, 7
      %v8045 = vsel %vm3051, %v8043, %v8044
      %v8046 = vrot.slane %v8044, 2
      %v8047 = vrot.slane %v7796, 7
      %v8048 = vsel %vm3051, %v8046, %v8047
      %v8049 = vrot.slane %v8047, 2
      %v8050 = vrot.slane %v7797, 7
      %v8051 = vsel %vm3051, %v8049, %v8050
      %v8052 = vrot.slane %v7664, 7
      %v8053 = vrot.slane %v8052, 2
      %v8054 = vrot.slane %v7798, 7
      %v8055 = vsel %vm3051, %v8053, %v8054
      %v8056 = vrot.slane %v8054, 2
      %v8057 = vrot.slane %v7799, 7
      %v8058 = vsel %vm3051, %v8056, %v8057
      %v8059 = vrot.slane %v8057, 2
      %v8060 = vrot.slane %v7800, 7
      %v8061 = vsel %vm3051, %v8059, %v8060
      %v8062 = vrot.slane %v8060, 2
      %v8063 = vrot.slane %v7666, 7
      %v8064 = vsel %vm3051, %v8062, %v8063
      %v8065 = vrot.slane %v8063, 2
      %v8066 = vrot.slane %v7801, 7
      %v8067 = vsel %vm3051, %v8065, %v8066
      %v8068 = vrot.slane %v8066, 2
      %v8069 = vrot.slane %v7802, 7
      %v8070 = vsel %vm3051, %v8068, %v8069
      %v8071 = vrot.slane %v8069, 2
      %v8072 = vrot.slane %v7803, 7
      %v8073 = vsel %vm3051, %v8071, %v8072
      %v8074 = vrot.slane %v8072, 2
      %v8075 = vrot.slane %v7669, 7
      %v8076 = vsel %vm3051, %v8074, %v8075
      %v8077 = vrot.slane %v7804, 7
      %v8078 = vrot.slane %v8077, 2
      %v8079 = vrot.slane %v7805, 7
      %v8080 = vsel %vm3051, %v8078, %v8079
      %v8081 = vrot.slane %v8079, 2
      %v8082 = vrot.slane %v7806, 7
      %v8083 = vsel %vm3051, %v8081, %v8082
      %v8084 = vrot.slane %v8082, 2
      %v8085 = vrot.slane %v7671, 7
      %v8086 = vsel %vm3051, %v8084, %v8085
      %v8087 = vrot.slane %v8085, 2
      %v8088 = vrot.slane %v7807, 7
      %v8089 = vsel %vm3051, %v8087, %v8088
      %v8090 = vrot.slane %v8088, 2
      %v8091 = vrot.slane %v7808, 7
      %v8092 = vsel %vm3051, %v8090, %v8091
      %v8093 = vrot.slane %v8091, 2
      %v8094 = vrot.slane %v7809, 7
      %v8095 = vsel %vm3051, %v8093, %v8094
      %v8096 = vrot.slane %v8094, 2
      %v8097 = vrot.slane %v7674, 7
      %v8098 = vsel %vm3051, %v8096, %v8097
      %v8099 = vrot.slane %v8097, 2
      %v8100 = vrot.slane %v7810, 7
      %v8101 = vsel %vm3051, %v8099, %v8100
      %v8102 = vrot.slane %v7811, 7
      %v8103 = vrot.slane %v8102, 2
      %v8104 = vrot.slane %v7812, 7
      %v8105 = vsel %vm3051, %v8103, %v8104
      %v8106 = vrot.slane %v8104, 2
      %v8107 = vrot.slane %v7676, 7
      %v8108 = vsel %vm3051, %v8106, %v8107
      %v8109 = vrot.slane %v8107, 2
      %v8110 = vrot.slane %v7813, 7
      %v8111 = vsel %vm3051, %v8109, %v8110
      %v8112 = vrot.slane %v8110, 2
      %v8113 = vrot.slane %v7814, 7
      %v8114 = vsel %vm3051, %v8112, %v8113
      %v8115 = vrot.slane %v8113, 2
      %v8116 = vrot.slane %v7815, 7
      %v8117 = vsel %vm3051, %v8115, %v8116
      %v8118 = vrot.slane %v8116, 2
      %v8119 = vrot.slane %v7679, 7
      %v8120 = vsel %vm3051, %v8118, %v8119
      %v8121 = vrot.slane %v8119, 2
      %v8122 = vrot.slane %v7816, 7
      %v8123 = vsel %vm3051, %v8121, %v8122
      %v8124 = vrot.slane %v8122, 2
      %v8125 = vrot.slane %v7817, 7
      %v8126 = vsel %vm3051, %v8124, %v8125
      %v8127 = vrot.slane %v7818, 7
      %v8128 = vrot.slane %v8127, 2
      %v8129 = vrot.slane %v7681, 7
      %v8130 = vsel %vm3051, %v8128, %v8129
      %v8131 = vrot.slane %v8129, 2
      %v8132 = vrot.slane %v7819, 7
      %v8133 = vsel %vm3051, %v8131, %v8132
      %v8134 = vrot.slane %v8132, 2
      %v8135 = vrot.slane %v7820, 7
      %v8136 = vsel %vm3051, %v8134, %v8135
      %v8137 = vrot.slane %v8135, 2
      %v8138 = vrot.slane %v7821, 7
      %v8139 = vsel %vm3051, %v8137, %v8138
      %v8140 = vrot.slane %v8138, 2
      %v8141 = vrot.slane %v7684, 7
      %v8142 = vsel %vm3051, %v8140, %v8141
      %v8143 = vrot.slane %v8141, 2
      %v8144 = vrot.slane %v7822, 7
      %v8145 = vsel %vm3051, %v8143, %v8144
      %v8146 = vrot.slane %v8144, 2
      %v8147 = vrot.slane %v7823, 7
      %v8148 = vsel %vm3051, %v8146, %v8147
      %v8149 = vrot.slane %v8147, 2
      %v8150 = vrot.slane %v7824, 7
      %v8151 = vsel %vm3051, %v8149, %v8150
      %v8152 = vrot.slane %v7686, 7
      %v8153 = vrot.slane %v8152, 2
      %v8154 = vrot.slane %v7825, 7
      %v8155 = vsel %vm3051, %v8153, %v8154
      %v8156 = vrot.slane %v8154, 2
      %v8157 = vrot.slane %v7826, 7
      %v8158 = vsel %vm3051, %v8156, %v8157
      %v8159 = vrot.slane %v8157, 2
      %v8160 = vrot.slane %v7827, 7
      %v8161 = vsel %vm3051, %v8159, %v8160
      %v8162 = vrot.slane %v8160, 2
      %v8163 = vrot.slane %v7689, 7
      %v8164 = vsel %vm3051, %v8162, %v8163
      %v8165 = vrot.slane %v8163, 2
      %v8166 = vrot.slane %v7828, 7
      %v8167 = vsel %vm3051, %v8165, %v8166
      %v8168 = vrot.slane %v8166, 2
      %v8169 = vrot.slane %v7829, 7
      %v8170 = vsel %vm3051, %v8168, %v8169
      %v8171 = vrot.slane %v8169, 2
      %v8172 = vrot.slane %v7830, 7
      %v8173 = vsel %vm3051, %v8171, %v8172
      %v8174 = vrot.slane %v8172, 2
      %v8175 = vrot.slane %v7691, 7
      %v8176 = vsel %vm3051, %v8174, %v8175
      %v8177 = vrot.slane %v7831, 7
      %v8178 = vrot.slane %v8177, 2
      %v8179 = vrot.slane %v7832, 7
      %v8180 = vsel %vm3051, %v8178, %v8179
      %v8181 = vrot.slane %v8179, 2
      %v8182 = vrot.slane %v7833, 7
      %v8183 = vsel %vm3051, %v8181, %v8182
      %v8184 = vrot.slane %v8182, 2
      %v8185 = vrot.slane %v7694, 7
      %v8186 = vsel %vm3051, %v8184, %v8185
      %v8187 = vrot.slane %v8185, 2
      %v8188 = vrot.slane %v7834, 7
      %v8189 = vsel %vm3051, %v8187, %v8188
      %v8190 = vrot.slane %v8188, 2
      %v8191 = vrot.slane %v7835, 7
      %v8192 = vsel %vm3051, %v8190, %v8191
      %v8193 = vrot.slane %v8191, 2
      %v8194 = vrot.slane %v7836, 7
      %v8195 = vsel %vm3051, %v8193, %v8194
      %v8196 = vrot.slane %v8194, 2
      %v8197 = vrot.slane %v7696, 7
      %v8198 = vsel %vm3051, %v8196, %v8197
      %v8199 = vrot.slane %v8197, 2
      %v8200 = vrot.slane %v7837, 7
      %v8201 = vsel %vm3051, %v8199, %v8200
      %v8202 = vrot.slane %v7838, 7
      %v8203 = vrot.slane %v8202, 2
      %v8204 = vrot.slane %v7839, 7
      %v8205 = vsel %vm3051, %v8203, %v8204
      %v8206 = vrot.slane %v8204, 2
      %v8207 = vrot.slane %v7699, 7
      %v8208 = vsel %vm3051, %v8206, %v8207
      %v8209 = vrot.slane %v8207, 2
      %v8210 = vrot.slane %v7840, 7
      %v8211 = vsel %vm3051, %v8209, %v8210
      %v8212 = vrot.slane %v8210, 2
      %v8213 = vrot.slane %v7841, 7
      %v8214 = vsel %vm3051, %v8212, %v8213
      %v8215 = vrot.slane %v8213, 2
      %v8216 = vrot.slane %v7842, 7
      %v8217 = vsel %vm3051, %v8215, %v8216
      %v8218 = vrot.slane %v8216, 2
      %v8219 = vrot.slane %v7701, 7
      %v8220 = vsel %vm3051, %v8218, %v8219
      %v8221 = vrot.slane %v8219, 2
      %v8222 = vrot.slane %v7843, 7
      %v8223 = vsel %vm3051, %v8221, %v8222
      %v8224 = vrot.slane %v8222, 2
      %v8225 = vrot.slane %v7844, 7
      %v8226 = vsel %vm3051, %v8224, %v8225
      %v8227 = vrot.slane %v7845, 7
      %v8228 = vrot.slane %v8227, 2
      %v8229 = vrot.slane %v7704, 7
      %v8230 = vsel %vm3051, %v8228, %v8229
      %v8231 = vrot.slane %v8229, 2
      %v8232 = vrot.slane %v7846, 7
      %v8233 = vsel %vm3051, %v8231, %v8232
      %v8234 = vrot.slane %v8232, 2
      %v8235 = vrot.slane %v7847, 7
      %v8236 = vsel %vm3051, %v8234, %v8235
      %v8237 = vrot.slane %v8235, 2
      %v8238 = vrot.slane %v7848, 7
      %v8239 = vsel %vm3051, %v8237, %v8238
      %v8240 = vrot.slane %v8238, 2
      %v8241 = vrot.slane %v7706, 7
      %v8242 = vsel %vm3051, %v8240, %v8241
      %v8243 = vrot.slane %v8241, 2
      %v8244 = vrot.slane %v7849, 7
      %v8245 = vsel %vm3051, %v8243, %v8244
      %v8246 = vrot.slane %v8244, 2
      %v8247 = vrot.slane %v7850, 7
      %v8248 = vsel %vm3051, %v8246, %v8247
      %v8249 = vrot.slane %v8247, 2
      %v8250 = vrot.slane %v7851, 7
      %v8251 = vsel %vm3051, %v8249, %v8250
      %v8380 = vadd.f32 %v7071, %v7855
      %v8381 = vadd.f32 %v7196, %v7858
      %v8382 = vadd.f32 %v7197, %v7861
      %v8383 = vadd.f32 %v7198, %v7864
      %v8384 = vadd.f32 %v7073, %v7867
      %v8385 = vadd.f32 %v7199, %v7870
      %v8386 = vadd.f32 %v7200, %v7873
      %v8387 = vadd.f32 %v7201, %v7876
      %v8388 = vadd.f32 %v7202, %v7880
      %v8389 = vadd.f32 %v7203, %v7883
      %v8390 = vadd.f32 %v7204, %v7886
      %v8391 = vadd.f32 %v7078, %v7889
      %v8392 = vadd.f32 %v7205, %v7892
      %v8393 = vadd.f32 %v7206, %v7895
      %v8394 = vadd.f32 %v7207, %v7898
      %v8395 = vadd.f32 %v7081, %v7901
      %v8396 = vadd.f32 %v7208, %v7905
      %v8397 = vadd.f32 %v7209, %v7908
      %v8398 = vadd.f32 %v7083, %v7911
      %v8399 = vadd.f32 %v7210, %v7914
      %v8400 = vadd.f32 %v7211, %v7917
      %v8401 = vadd.f32 %v7212, %v7920
      %v8402 = vadd.f32 %v7086, %v7923
      %v8403 = vadd.f32 %v7213, %v7926
      %v8404 = vadd.f32 %v7214, %v7930
      %v8405 = vadd.f32 %v7088, %v7933
      %v8406 = vadd.f32 %v7215, %v7936
      %v8407 = vadd.f32 %v7216, %v7939
      %v8408 = vadd.f32 %v7217, %v7942
      %v8409 = vadd.f32 %v7091, %v7945
      %v8410 = vadd.f32 %v7218, %v7948
      %v8411 = vadd.f32 %v7219, %v7951
      %v8412 = vadd.f32 %v7093, %v7955
      %v8413 = vadd.f32 %v7220, %v7958
      %v8414 = vadd.f32 %v7221, %v7961
      %v8415 = vadd.f32 %v7222, %v7964
      %v8416 = vadd.f32 %v7096, %v7967
      %v8417 = vadd.f32 %v7223, %v7970
      %v8418 = vadd.f32 %v7224, %v7973
      %v8419 = vadd.f32 %v7225, %v7976
      %v8420 = vadd.f32 %v7226, %v7980
      %v8421 = vadd.f32 %v7227, %v7983
      %v8422 = vadd.f32 %v7228, %v7986
      %v8423 = vadd.f32 %v7101, %v7989
      %v8424 = vadd.f32 %v7229, %v7992
      %v8425 = vadd.f32 %v7230, %v7995
      %v8426 = vadd.f32 %v7231, %v7998
      %v8427 = vadd.f32 %v7103, %v8001
      %v8428 = vadd.f32 %v7232, %v8005
      %v8429 = vadd.f32 %v7233, %v8008
      %v8430 = vadd.f32 %v7106, %v8011
      %v8431 = vadd.f32 %v7234, %v8014
      %v8432 = vadd.f32 %v7235, %v8017
      %v8433 = vadd.f32 %v7236, %v8020
      %v8434 = vadd.f32 %v7108, %v8023
      %v8435 = vadd.f32 %v7237, %v8026
      %v8436 = vadd.f32 %v7238, %v8030
      %v8437 = vadd.f32 %v7111, %v8033
      %v8438 = vadd.f32 %v7239, %v8036
      %v8439 = vadd.f32 %v7240, %v8039
      %v8440 = vadd.f32 %v7241, %v8042
      %v8441 = vadd.f32 %v7113, %v8045
      %v8442 = vadd.f32 %v7242, %v8048
      %v8443 = vadd.f32 %v7243, %v8051
      %v8444 = vadd.f32 %v7116, %v8055
      %v8445 = vadd.f32 %v7244, %v8058
      %v8446 = vadd.f32 %v7245, %v8061
      %v8447 = vadd.f32 %v7246, %v8064
      %v8448 = vadd.f32 %v7118, %v8067
      %v8449 = vadd.f32 %v7247, %v8070
      %v8450 = vadd.f32 %v7248, %v8073
      %v8451 = vadd.f32 %v7249, %v8076
      %v8452 = vadd.f32 %v7250, %v8080
      %v8453 = vadd.f32 %v7251, %v8083
      %v8454 = vadd.f32 %v7252, %v8086
      %v8455 = vadd.f32 %v7123, %v8089
      %v8456 = vadd.f32 %v7253, %v8092
      %v8457 = vadd.f32 %v7254, %v8095
      %v8458 = vadd.f32 %v7255, %v8098
      %v8459 = vadd.f32 %v7126, %v8101
      %v8460 = vadd.f32 %v7256, %v8105
      %v8461 = vadd.f32 %v7257, %v8108
      %v8462 = vadd.f32 %v7128, %v8111
      %v8463 = vadd.f32 %v7258, %v8114
      %v8464 = vadd.f32 %v7259, %v8117
      %v8465 = vadd.f32 %v7260, %v8120
      %v8466 = vadd.f32 %v7131, %v8123
      %v8467 = vadd.f32 %v7261, %v8126
      %v8468 = vadd.f32 %v7262, %v8130
      %v8469 = vadd.f32 %v7133, %v8133
      %v8470 = vadd.f32 %v7263, %v8136
      %v8471 = vadd.f32 %v7264, %v8139
      %v8472 = vadd.f32 %v7265, %v8142
      %v8473 = vadd.f32 %v7136, %v8145
      %v8474 = vadd.f32 %v7266, %v8148
      %v8475 = vadd.f32 %v7267, %v8151
      %v8476 = vadd.f32 %v7138, %v8155
      %v8477 = vadd.f32 %v7268, %v8158
      %v8478 = vadd.f32 %v7269, %v8161
      %v8479 = vadd.f32 %v7270, %v8164
      %v8480 = vadd.f32 %v7141, %v8167
      %v8481 = vadd.f32 %v7271, %v8170
      %v8482 = vadd.f32 %v7272, %v8173
      %v8483 = vadd.f32 %v7273, %v8176
      %v8484 = vadd.f32 %v7274, %v8180
      %v8485 = vadd.f32 %v7275, %v8183
      %v8486 = vadd.f32 %v7276, %v8186
      %v8487 = vadd.f32 %v7146, %v8189
      %v8488 = vadd.f32 %v7277, %v8192
      %v8489 = vadd.f32 %v7278, %v8195
      %v8490 = vadd.f32 %v7279, %v8198
      %v8491 = vadd.f32 %v7148, %v8201
      %v8492 = vadd.f32 %v7280, %v8205
      %v8493 = vadd.f32 %v7281, %v8208
      %v8494 = vadd.f32 %v7151, %v8211
      %v8495 = vadd.f32 %v7282, %v8214
      %v8496 = vadd.f32 %v7283, %v8217
      %v8497 = vadd.f32 %v7284, %v8220
      %v8498 = vadd.f32 %v7153, %v8223
      %v8499 = vadd.f32 %v7285, %v8226
      %v8500 = vadd.f32 %v7286, %v8230
      %v8501 = vadd.f32 %v7156, %v8233
      %v8502 = vadd.f32 %v7287, %v8236
      %v8503 = vadd.f32 %v7288, %v8239
      %v8504 = vadd.f32 %v7289, %v8242
      %v8505 = vadd.f32 %v7158, %v8245
      %v8506 = vadd.f32 %v7290, %v8248
      %v8507 = vadd.f32 %v7291, %v8251
      %s8508 = scalar_lea.vmem %s4, 24
      %v8509 = vld [vmem:[%s8508] sm:$0xf]
      %v8510 = vld [vmem:[%s8508 + $0x4] sm:$0xf]
      %v8511 = vld [vmem:[%s8508 + $0x8] sm:$0xf]
      %8512 = vst [vmem:[#allocation1] ss:$9 sm:$0xff] %v6315
      %s8513 = scalar_lea.vmem [#allocation1], 1
      %8514 = vst [vmem:[%s8513] ss:$9 sm:$0xff] %v6318
      %s8515 = scalar_lea.vmem [#allocation1], 2
      %8516 = vst [vmem:[%s8515] ss:$9 sm:$0xff] %v6321
      %s8517 = scalar_lea.vmem [#allocation1], 3
      %8518 = vst [vmem:[%s8517] ss:$9 sm:$0xff] %v6324
      %s8519 = scalar_lea.vmem [#allocation1], 4
      %8520 = vst [vmem:[%s8519] ss:$9 sm:$0xff] %v6327
      %s8521 = scalar_lea.vmem [#allocation1], 5
      %8522 = vst [vmem:[%s8521] ss:$9 sm:$0xff] %v6330
      %s8523 = scalar_lea.vmem [#allocation1], 6
      %8524 = vst [vmem:[%s8523] ss:$9 sm:$0xff] %v6333
      %s8525 = scalar_lea.vmem [#allocation1], 7
      %8526 = vst [vmem:[%s8525] ss:$9 sm:$0xff] %v6336
      %v8527 = vld [vmem:[#allocation1] sm:$0xff]
      %8528 = vst [vmem:[#allocation1] ss:$9 sm:$0xff] %v6339
      %8529 = vst [vmem:[%s8513] ss:$9 sm:$0xff] %v6342
      %8530 = vst [vmem:[%s8515] ss:$9 sm:$0xff] %v6345
      %8531 = vst [vmem:[%s8517] ss:$9 sm:$0xff] %v6348
      %8532 = vst [vmem:[%s8519] ss:$9 sm:$0xff] %v6351
      %8533 = vst [vmem:[%s8521] ss:$9 sm:$0xff] %v6354
      %8534 = vst [vmem:[%s8523] ss:$9 sm:$0xff] %v6357
      %8535 = vst [vmem:[%s8525] ss:$9 sm:$0xff] %v6360
      %v8536 = vld [vmem:[#allocation1] sm:$0xff]
      %8537 = vst [vmem:[#allocation1] ss:$9 sm:$0xff] %v6363
      %8538 = vst [vmem:[%s8513] ss:$9 sm:$0xff] %v6366
      %8539 = vst [vmem:[%s8515] ss:$9 sm:$0xff] %v6369
      %8540 = vst [vmem:[%s8517] ss:$9 sm:$0xff] %v6372
      %8541 = vst [vmem:[%s8519] ss:$9 sm:$0xff] %v6375
      %8542 = vst [vmem:[%s8521] ss:$9 sm:$0xff] %v6378
      %8543 = vst [vmem:[%s8523] ss:$9 sm:$0xff] %v6381
      %8544 = vst [vmem:[%s8525] ss:$9 sm:$0xff] %v6384
      %v8545 = vld [vmem:[#allocation1] sm:$0xff]
      %8546 = vst [vmem:[#allocation1] ss:$9 sm:$0xff] %v6387
      %8547 = vst [vmem:[%s8513] ss:$9 sm:$0xff] %v6390
      %8548 = vst [vmem:[%s8515] ss:$9 sm:$0xff] %v6393
      %8549 = vst [vmem:[%s8517] ss:$9 sm:$0xff] %v6396
      %8550 = vst [vmem:[%s8519] ss:$9 sm:$0xff] %v6399
      %8551 = vst [vmem:[%s8521] ss:$9 sm:$0xff] %v6402
      %8552 = vst [vmem:[%s8523] ss:$9 sm:$0xff] %v6405
      %8553 = vst [vmem:[%s8525] ss:$9 sm:$0xff] %v6408
      %v8554 = vld [vmem:[#allocation1] sm:$0xff]
      %8555 = vst [vmem:[#allocation1] ss:$9 sm:$0xff] %v6411
      %8556 = vst [vmem:[%s8513] ss:$9 sm:$0xff] %v6414
      %8557 = vst [vmem:[%s8515] ss:$9 sm:$0xff] %v6417
      %8558 = vst [vmem:[%s8517] ss:$9 sm:$0xff] %v6420
      %8559 = vst [vmem:[%s8519] ss:$9 sm:$0xff] %v6423
      %8560 = vst [vmem:[%s8521] ss:$9 sm:$0xff] %v6426
      %8561 = vst [vmem:[%s8523] ss:$9 sm:$0xff] %v6429
      %8562 = vst [vmem:[%s8525] ss:$9 sm:$0xff] %v6432
      %v8563 = vld [vmem:[#allocation1] sm:$0xff]
      %8564 = vst [vmem:[#allocation1] ss:$9 sm:$0xff] %v6435
      %8565 = vst [vmem:[%s8513] ss:$9 sm:$0xff] %v6438
      %8566 = vst [vmem:[%s8515] ss:$9 sm:$0xff] %v6441
      %8567 = vst [vmem:[%s8517] ss:$9 sm:$0xff] %v6444
      %8568 = vst [vmem:[%s8519] ss:$9 sm:$0xff] %v6447
      %8569 = vst [vmem:[%s8521] ss:$9 sm:$0xff] %v6450
      %8570 = vst [vmem:[%s8523] ss:$9 sm:$0xff] %v6453
      %8571 = vst [vmem:[%s8525] ss:$9 sm:$0xff] %v6456
      %v8572 = vld [vmem:[#allocation1] sm:$0xff]
      %8573 = vst [vmem:[#allocation1] ss:$9 sm:$0xff] %v6459
      %8574 = vst [vmem:[%s8513] ss:$9 sm:$0xff] %v6462
      %8575 = vst [vmem:[%s8515] ss:$9 sm:$0xff] %v6465
      %8576 = vst [vmem:[%s8517] ss:$9 sm:$0xff] %v6468
      %8577 = vst [vmem:[%s8519] ss:$9 sm:$0xff] %v6471
      %8578 = vst [vmem:[%s8521] ss:$9 sm:$0xff] %v6474
      %8579 = vst [vmem:[%s8523] ss:$9 sm:$0xff] %v6477
      %8580 = vst [vmem:[%s8525] ss:$9 sm:$0xff] %v6480
      %v8581 = vld [vmem:[#allocation1] sm:$0xff]
      %8582 = vst [vmem:[#allocation1] ss:$9 sm:$0xff] %v6483
      %8583 = vst [vmem:[%s8513] ss:$9 sm:$0xff] %v6486
      %8584 = vst [vmem:[%s8515] ss:$9 sm:$0xff] %v6489
      %8585 = vst [vmem:[%s8517] ss:$9 sm:$0xff] %v6492
      %8586 = vst [vmem:[%s8519] ss:$9 sm:$0xff] %v6495
      %8587 = vst [vmem:[%s8521] ss:$9 sm:$0xff] %v6498
      %8588 = vst [vmem:[%s8523] ss:$9 sm:$0xff] %v6501
      %8589 = vst [vmem:[%s8525] ss:$9 sm:$0xff] %v6504
      %v8590 = vld [vmem:[#allocation1] sm:$0xff]
      %8591 = vst [vmem:[#allocation1] ss:$9 sm:$0xff] %v6507
      %8592 = vst [vmem:[%s8513] ss:$9 sm:$0xff] %v6510
      %8593 = vst [vmem:[%s8515] ss:$9 sm:$0xff] %v6513
      %8594 = vst [vmem:[%s8517] ss:$9 sm:$0xff] %v6516
      %8595 = vst [vmem:[%s8519] ss:$9 sm:$0xff] %v6519
      %8596 = vst [vmem:[%s8521] ss:$9 sm:$0xff] %v6522
      %8597 = vst [vmem:[%s8523] ss:$9 sm:$0xff] %v6525
      %8598 = vst [vmem:[%s8525] ss:$9 sm:$0xff] %v6528
      %v8599 = vld [vmem:[#allocation1] sm:$0xff]
      %8600 = vst [vmem:[#allocation1] ss:$9 sm:$0xff] %v6531
      %8601 = vst [vmem:[%s8513] ss:$9 sm:$0xff] %v6534
      %8602 = vst [vmem:[%s8515] ss:$9 sm:$0xff] %v6537
      %8603 = vst [vmem:[%s8517] ss:$9 sm:$0xff] %v6540
      %8604 = vst [vmem:[%s8519] ss:$9 sm:$0xff] %v6543
      %8605 = vst [vmem:[%s8521] ss:$9 sm:$0xff] %v6546
      %8606 = vst [vmem:[%s8523] ss:$9 sm:$0xff] %v6549
      %8607 = vst [vmem:[%s8525] ss:$9 sm:$0xff] %v6552
      %v8608 = vld [vmem:[#allocation1] sm:$0xff]
      %8609 = vst [vmem:[#allocation1] ss:$9 sm:$0xff] %v6555
      %8610 = vst [vmem:[%s8513] ss:$9 sm:$0xff] %v6558
      %8611 = vst [vmem:[%s8515] ss:$9 sm:$0xff] %v6561
      %8612 = vst [vmem:[%s8517] ss:$9 sm:$0xff] %v6564
      %8613 = vst [vmem:[%s8519] ss:$9 sm:$0xff] %v6567
      %8614 = vst [vmem:[%s8521] ss:$9 sm:$0xff] %v6570
      %8615 = vst [vmem:[%s8523] ss:$9 sm:$0xff] %v6573
      %8616 = vst [vmem:[%s8525] ss:$9 sm:$0xff] %v6576
      %v8617 = vld [vmem:[#allocation1] sm:$0xff]
      %8618 = vst [vmem:[#allocation1] ss:$9 sm:$0xff] %v6579
      %8619 = vst [vmem:[%s8513] ss:$9 sm:$0xff] %v6582
      %8620 = vst [vmem:[%s8515] ss:$9 sm:$0xff] %v6585
      %8621 = vst [vmem:[%s8517] ss:$9 sm:$0xff] %v6588
      %8622 = vst [vmem:[%s8519] ss:$9 sm:$0xff] %v6591
      %8623 = vst [vmem:[%s8521] ss:$9 sm:$0xff] %v6594
      %8624 = vst [vmem:[%s8523] ss:$9 sm:$0xff] %v6597
      %8625 = vst [vmem:[%s8525] ss:$9 sm:$0xff] %v6600
      %v8626 = vld [vmem:[#allocation1] sm:$0xff]
      %8627 = vst [vmem:[#allocation1] ss:$9 sm:$0xff] %v6603
      %8628 = vst [vmem:[%s8513] ss:$9 sm:$0xff] %v6606
      %8629 = vst [vmem:[%s8515] ss:$9 sm:$0xff] %v6609
      %8630 = vst [vmem:[%s8517] ss:$9 sm:$0xff] %v6612
      %8631 = vst [vmem:[%s8519] ss:$9 sm:$0xff] %v6615
      %8632 = vst [vmem:[%s8521] ss:$9 sm:$0xff] %v6618
      %8633 = vst [vmem:[%s8523] ss:$9 sm:$0xff] %v6621
      %8634 = vst [vmem:[%s8525] ss:$9 sm:$0xff] %v6624
      %v8635 = vld [vmem:[#allocation1] sm:$0xff]
      %8636 = vst [vmem:[#allocation1] ss:$9 sm:$0xff] %v6627
      %8637 = vst [vmem:[%s8513] ss:$9 sm:$0xff] %v6630
      %8638 = vst [vmem:[%s8515] ss:$9 sm:$0xff] %v6633
      %8639 = vst [vmem:[%s8517] ss:$9 sm:$0xff] %v6636
      %8640 = vst [vmem:[%s8519] ss:$9 sm:$0xff] %v6639
      %8641 = vst [vmem:[%s8521] ss:$9 sm:$0xff] %v6642
      %8642 = vst [vmem:[%s8523] ss:$9 sm:$0xff] %v6645
      %8643 = vst [vmem:[%s8525] ss:$9 sm:$0xff] %v6648
      %v8644 = vld [vmem:[#allocation1] sm:$0xff]
      %8645 = vst [vmem:[#allocation1] ss:$9 sm:$0xff] %v6651
      %8646 = vst [vmem:[%s8513] ss:$9 sm:$0xff] %v6654
      %8647 = vst [vmem:[%s8515] ss:$9 sm:$0xff] %v6657
      %8648 = vst [vmem:[%s8517] ss:$9 sm:$0xff] %v6660
      %8649 = vst [vmem:[%s8519] ss:$9 sm:$0xff] %v6663
      %8650 = vst [vmem:[%s8521] ss:$9 sm:$0xff] %v6666
      %8651 = vst [vmem:[%s8523] ss:$9 sm:$0xff] %v6669
      %8652 = vst [vmem:[%s8525] ss:$9 sm:$0xff] %v6672
      %v8653 = vld [vmem:[#allocation1] sm:$0xff]
      %8654 = vst [vmem:[#allocation1] ss:$9 sm:$0xff] %v6675
      %8655 = vst [vmem:[%s8513] ss:$9 sm:$0xff] %v6678
      %8656 = vst [vmem:[%s8515] ss:$9 sm:$0xff] %v6681
      %8657 = vst [vmem:[%s8517] ss:$9 sm:$0xff] %v6684
      %8658 = vst [vmem:[%s8519] ss:$9 sm:$0xff] %v6687
      %8659 = vst [vmem:[%s8521] ss:$9 sm:$0xff] %v6690
      %8660 = vst [vmem:[%s8523] ss:$9 sm:$0xff] %v6693
      %8661 = vst [vmem:[%s8525] ss:$9 sm:$0xff] %v6696
      %v8662 = vld [vmem:[#allocation1] sm:$0xff]
      %8663 = vst [vmem:[#allocation1] ss:$9 sm:$0xff] %v6699
      %8664 = vst [vmem:[%s8513] ss:$9 sm:$0xff] %v6702
      %8665 = vst [vmem:[%s8515] ss:$9 sm:$0xff] %v6705
      %8666 = vst [vmem:[%s8517] ss:$9 sm:$0xff] %v6708
      %8667 = vst [vmem:[%s8519] ss:$9 sm:$0xff] %v6711
      %8668 = vst [vmem:[%s8521] ss:$9 sm:$0xff] %v6714
      %8669 = vst [vmem:[%s8523] ss:$9 sm:$0xff] %v6717
      %8670 = vst [vmem:[%s8525] ss:$9 sm:$0xff] %v6720
      %v8671 = vld [vmem:[#allocation1] sm:$0xff]
      %8672 = vst [vmem:[#allocation1] ss:$9 sm:$0xff] %v6723
      %8673 = vst [vmem:[%s8513] ss:$9 sm:$0xff] %v6726
      %8674 = vst [vmem:[%s8515] ss:$9 sm:$0xff] %v6729
      %8675 = vst [vmem:[%s8517] ss:$9 sm:$0xff] %v6732
      %8676 = vst [vmem:[%s8519] ss:$9 sm:$0xff] %v6735
      %8677 = vst [vmem:[%s8521] ss:$9 sm:$0xff] %v6738
      %8678 = vst [vmem:[%s8523] ss:$9 sm:$0xff] %v6741
      %8679 = vst [vmem:[%s8525] ss:$9 sm:$0xff] %v6744
      %v8680 = vld [vmem:[#allocation1] sm:$0xff]
      %v8684 = vunpack.c.l.b16 %v8509
      %v8685 = vunpack.c.l.b16 %v8510
      %v8686 = vunpack.c.l.b16 %v8511
      %v8687 = vpack.c.b16 %v8685, %v8684
      %v8688 = vpack.c.b16 %v8686, %v8686
      %v8690 = vsel %vm2215, %v8527, 0
      %v8692 = vsel %vm2215, %v8536, 0
      %v8694 = vsel %vm2215, %v8545, 0
      %v8696 = vsel %vm2215, %v8554, 0
      %v8698 = vsel %vm2215, %v8563, 0
      %v8700 = vsel %vm2215, %v8572, 0
      %v8702 = vsel %vm2215, %v8581, 0
      %v8704 = vsel %vm2215, %v8590, 0
      %v8706 = vsel %vm2215, %v8599, 0
      %v8708 = vsel %vm2215, %v8608, 0
      %v8710 = vsel %vm2215, %v8617, 0
      %v8712 = vsel %vm2215, %v8626, 0
      %v8714 = vsel %vm2215, %v8635, 0
      %v8716 = vsel %vm2215, %v8644, 0
      %v8718 = vsel %vm2215, %v8653, 0
      %v8720 = vsel %vm2215, %v8662, 0
      %v8722 = vsel %vm2215, %v8671, 0
      %v8724 = vsel %vm2215, %v8680, 0
      %v8727 = vsel %vm2252, %v8688, 0
      %8729 = vmatpush.bf16.msra.mxu0 0
      %8730 = vmatpush.bf16.msra.mxu0 0
      %8731 = vmatpush.bf16.msra.mxu0 0
      %8732 = vmatpush.bf16.msra.mxu0 0
      %8733 = vmatpush.bf16.msra.mxu0 0
      %8734 = vmatpush.bf16.msra.mxu0 0
      %8735 = vmatpush.bf16.msra.mxu0 %v8727
      %8736 = vmatpush.bf16.msra.mxu0 %v8687
      %8737 = vmatmul.bf16.gmra.mxu0 %v8690
      %v8738 = vpop.f32.mrf.mxu0
      %v8739 = vadd.f32 0.0, %v8738
      %v8740 = vpop.f32.mrf.mxu0
      %v8741 = vadd.f32 0.0, %v8740
      %8742 = vmatmul.bf16.gmra.mxu0 %v8692
      %v8743 = vpop.f32.mrf.mxu0
      %v8744 = vadd.f32 0.0, %v8743
      %v8745 = vpop.f32.mrf.mxu0
      %v8746 = vadd.f32 0.0, %v8745
      %8747 = vmatmul.bf16.gmra.mxu0 %v8694
      %v8748 = vpop.f32.mrf.mxu0
      %v8749 = vadd.f32 0.0, %v8748
      %v8750 = vpop.f32.mrf.mxu0
      %v8751 = vadd.f32 0.0, %v8750
      %8752 = vmatmul.bf16.gmra.mxu0 %v8696
      %v8753 = vpop.f32.mrf.mxu0
      %v8754 = vadd.f32 0.0, %v8753
      %v8755 = vpop.f32.mrf.mxu0
      %v8756 = vadd.f32 0.0, %v8755
      %8757 = vmatmul.bf16.gmra.mxu0 %v8698
      %v8758 = vpop.f32.mrf.mxu0
      %v8759 = vadd.f32 0.0, %v8758
      %v8760 = vpop.f32.mrf.mxu0
      %v8761 = vadd.f32 0.0, %v8760
      %8762 = vmatmul.bf16.gmra.mxu0 %v8700
      %v8763 = vpop.f32.mrf.mxu0
      %v8764 = vadd.f32 0.0, %v8763
      %v8765 = vpop.f32.mrf.mxu0
      %v8766 = vadd.f32 0.0, %v8765
      %8767 = vmatmul.bf16.gmra.mxu0 %v8702
      %v8768 = vpop.f32.mrf.mxu0
      %v8769 = vadd.f32 0.0, %v8768
      %v8770 = vpop.f32.mrf.mxu0
      %v8771 = vadd.f32 0.0, %v8770
      %8772 = vmatmul.bf16.gmra.mxu0 %v8704
      %v8773 = vpop.f32.mrf.mxu0
      %v8774 = vadd.f32 0.0, %v8773
      %v8775 = vpop.f32.mrf.mxu0
      %v8776 = vadd.f32 0.0, %v8775
      %8777 = vmatmul.bf16.gmra.mxu0 %v8706
      %v8778 = vpop.f32.mrf.mxu0
      %v8779 = vadd.f32 0.0, %v8778
      %v8780 = vpop.f32.mrf.mxu0
      %v8781 = vadd.f32 0.0, %v8780
      %8782 = vmatmul.bf16.gmra.mxu0 %v8708
      %v8783 = vpop.f32.mrf.mxu0
      %v8784 = vadd.f32 0.0, %v8783
      %v8785 = vpop.f32.mrf.mxu0
      %v8786 = vadd.f32 0.0, %v8785
      %8787 = vmatmul.bf16.gmra.mxu0 %v8710
      %v8788 = vpop.f32.mrf.mxu0
      %v8789 = vadd.f32 0.0, %v8788
      %v8790 = vpop.f32.mrf.mxu0
      %v8791 = vadd.f32 0.0, %v8790
      %8792 = vmatmul.bf16.gmra.mxu0 %v8712
      %v8793 = vpop.f32.mrf.mxu0
      %v8794 = vadd.f32 0.0, %v8793
      %v8795 = vpop.f32.mrf.mxu0
      %v8796 = vadd.f32 0.0, %v8795
      %8797 = vmatmul.bf16.gmra.mxu0 %v8714
      %v8798 = vpop.f32.mrf.mxu0
      %v8799 = vadd.f32 0.0, %v8798
      %v8800 = vpop.f32.mrf.mxu0
      %v8801 = vadd.f32 0.0, %v8800
      %8802 = vmatmul.bf16.gmra.mxu0 %v8716
      %v8803 = vpop.f32.mrf.mxu0
      %v8804 = vadd.f32 0.0, %v8803
      %v8805 = vpop.f32.mrf.mxu0
      %v8806 = vadd.f32 0.0, %v8805
      %8807 = vmatmul.bf16.gmra.mxu0 %v8718
      %v8808 = vpop.f32.mrf.mxu0
      %v8809 = vadd.f32 0.0, %v8808
      %v8810 = vpop.f32.mrf.mxu0
      %v8811 = vadd.f32 0.0, %v8810
      %8812 = vmatmul.bf16.gmra.mxu0 %v8720
      %v8813 = vpop.f32.mrf.mxu0
      %v8814 = vadd.f32 0.0, %v8813
      %v8815 = vpop.f32.mrf.mxu0
      %v8816 = vadd.f32 0.0, %v8815
      %8817 = vmatmul.bf16.gmra.mxu0 %v8722
      %v8818 = vpop.f32.mrf.mxu0
      %v8819 = vadd.f32 0.0, %v8818
      %v8820 = vpop.f32.mrf.mxu0
      %v8821 = vadd.f32 0.0, %v8820
      %8822 = vmatmul.bf16.gmra.mxu0 %v8724
      %v8823 = vpop.f32.mrf.mxu0
      %v8824 = vadd.f32 0.0, %v8823
      %v8825 = vpop.f32.mrf.mxu0
      %v8826 = vadd.f32 0.0, %v8825
      %8827 = vdwg.mxu0
      %v8864 = vrot.slane %v8739, 2
      %v8865 = vrot.slane %v8739, 4
      %v8866 = vrot.slane %v8739, 6
      %v8867 = vrot.slane %v8741, 2
      %v8868 = vrot.slane %v8741, 4
      %v8869 = vrot.slane %v8741, 6
      %v8870 = vrot.slane %v8744, 4
      %v8871 = vrot.slane %v8744, 6
      %v8872 = vrot.slane %v8746, 2
      %v8873 = vrot.slane %v8746, 4
      %v8874 = vrot.slane %v8746, 6
      %v8875 = vrot.slane %v8749, 2
      %v8876 = vrot.slane %v8749, 6
      %v8877 = vrot.slane %v8751, 2
      %v8878 = vrot.slane %v8751, 4
      %v8879 = vrot.slane %v8751, 6
      %v8880 = vrot.slane %v8754, 2
      %v8881 = vrot.slane %v8754, 4
      %v8882 = vrot.slane %v8756, 2
      %v8883 = vrot.slane %v8756, 4
      %v8884 = vrot.slane %v8756, 6
      %v8885 = vrot.slane %v8759, 2
      %v8886 = vrot.slane %v8759, 4
      %v8887 = vrot.slane %v8759, 6
      %v8888 = vrot.slane %v8761, 2
      %v8889 = vrot.slane %v8761, 4
      %v8890 = vrot.slane %v8761, 6
      %v8891 = vrot.slane %v8764, 2
      %v8892 = vrot.slane %v8764, 4
      %v8893 = vrot.slane %v8764, 6
      %v8894 = vrot.slane %v8766, 4
      %v8895 = vrot.slane %v8766, 6
      %v8896 = vrot.slane %v8769, 2
      %v8897 = vrot.slane %v8769, 4
      %v8898 = vrot.slane %v8769, 6
      %v8899 = vrot.slane %v8771, 2
      %v8900 = vrot.slane %v8771, 6
      %v8901 = vrot.slane %v8774, 2
      %v8902 = vrot.slane %v8774, 4
      %v8903 = vrot.slane %v8774, 6
      %v8904 = vrot.slane %v8776, 2
      %v8905 = vrot.slane %v8776, 4
      %v8906 = vrot.slane %v8779, 2
      %v8907 = vrot.slane %v8779, 4
      %v8908 = vrot.slane %v8779, 6
      %v8909 = vrot.slane %v8781, 2
      %v8910 = vrot.slane %v8781, 4
      %v8911 = vrot.slane %v8781, 6
      %v8912 = vrot.slane %v8784, 2
      %v8913 = vrot.slane %v8784, 4
      %v8914 = vrot.slane %v8784, 6
      %v8915 = vrot.slane %v8786, 2
      %v8916 = vrot.slane %v8786, 4
      %v8917 = vrot.slane %v8786, 6
      %v8918 = vrot.slane %v8789, 4
      %v8919 = vrot.slane %v8789, 6
      %v8920 = vrot.slane %v8791, 2
      %v8921 = vrot.slane %v8791, 4
      %v8922 = vrot.slane %v8791, 6
      %v8923 = vrot.slane %v8794, 2
      %v8924 = vrot.slane %v8794, 6
      %v8925 = vrot.slane %v8796, 2
      %v8926 = vrot.slane %v8796, 4
      %v8927 = vrot.slane %v8796, 6
      %v8928 = vrot.slane %v8799, 2
      %v8929 = vrot.slane %v8799, 4
      %v8930 = vrot.slane %v8801, 2
      %v8931 = vrot.slane %v8801, 4
      %v8932 = vrot.slane %v8801, 6
      %v8933 = vrot.slane %v8804, 2
      %v8934 = vrot.slane %v8804, 4
      %v8935 = vrot.slane %v8804, 6
      %v8936 = vrot.slane %v8806, 2
      %v8937 = vrot.slane %v8806, 4
      %v8938 = vrot.slane %v8806, 6
      %v8939 = vrot.slane %v8809, 2
      %v8940 = vrot.slane %v8809, 4
      %v8941 = vrot.slane %v8809, 6
      %v8942 = vrot.slane %v8811, 4
      %v8943 = vrot.slane %v8811, 6
      %v8944 = vrot.slane %v8814, 2
      %v8945 = vrot.slane %v8814, 4
      %v8946 = vrot.slane %v8814, 6
      %v8947 = vrot.slane %v8816, 2
      %v8948 = vrot.slane %v8816, 6
      %v8949 = vrot.slane %v8819, 2
      %v8950 = vrot.slane %v8819, 4
      %v8951 = vrot.slane %v8819, 6
      %v8952 = vrot.slane %v8821, 2
      %v8953 = vrot.slane %v8821, 4
      %v8954 = vrot.slane %v8824, 2
      %v8955 = vrot.slane %v8824, 4
      %v8956 = vrot.slane %v8824, 6
      %v8957 = vrot.slane %v8826, 2
      %v8958 = vrot.slane %v8826, 4
      %v8959 = vrot.slane %v8826, 6
      %v9056 = vadd.f32 %v8380, %v8864
      %v9057 = vadd.f32 %v8381, %v8865
      %v9058 = vadd.f32 %v8382, %v8866
      %v9059 = vadd.f32 %v8383, %v8741
      %v9060 = vadd.f32 %v8384, %v8867
      %v9061 = vadd.f32 %v8385, %v8868
      %v9062 = vadd.f32 %v8386, %v8869
      %v9063 = vadd.f32 %v8387, %v8744
      %v9064 = vadd.f32 %v8388, %v8870
      %v9065 = vadd.f32 %v8389, %v8871
      %v9066 = vadd.f32 %v8390, %v8746
      %v9067 = vadd.f32 %v8391, %v8872
      %v9068 = vadd.f32 %v8392, %v8873
      %v9069 = vadd.f32 %v8393, %v8874
      %v9070 = vadd.f32 %v8394, %v8749
      %v9071 = vadd.f32 %v8395, %v8875
      %v9072 = vadd.f32 %v8396, %v8876
      %v9073 = vadd.f32 %v8397, %v8751
      %v9074 = vadd.f32 %v8398, %v8877
      %v9075 = vadd.f32 %v8399, %v8878
      %v9076 = vadd.f32 %v8400, %v8879
      %v9077 = vadd.f32 %v8401, %v8754
      %v9078 = vadd.f32 %v8402, %v8880
      %v9079 = vadd.f32 %v8403, %v8881
      %v9080 = vadd.f32 %v8404, %v8756
      %v9081 = vadd.f32 %v8405, %v8882
      %v9082 = vadd.f32 %v8406, %v8883
      %v9083 = vadd.f32 %v8407, %v8884
      %v9084 = vadd.f32 %v8408, %v8759
      %v9085 = vadd.f32 %v8409, %v8885
      %v9086 = vadd.f32 %v8410, %v8886
      %v9087 = vadd.f32 %v8411, %v8887
      %v9088 = vadd.f32 %v8412, %v8888
      %v9089 = vadd.f32 %v8413, %v8889
      %v9090 = vadd.f32 %v8414, %v8890
      %v9091 = vadd.f32 %v8415, %v8764
      %v9092 = vadd.f32 %v8416, %v8891
      %v9093 = vadd.f32 %v8417, %v8892
      %v9094 = vadd.f32 %v8418, %v8893
      %v9095 = vadd.f32 %v8419, %v8766
      %v9096 = vadd.f32 %v8420, %v8894
      %v9097 = vadd.f32 %v8421, %v8895
      %v9098 = vadd.f32 %v8422, %v8769
      %v9099 = vadd.f32 %v8423, %v8896
      %v9100 = vadd.f32 %v8424, %v8897
      %v9101 = vadd.f32 %v8425, %v8898
      %v9102 = vadd.f32 %v8426, %v8771
      %v9103 = vadd.f32 %v8427, %v8899
      %v9104 = vadd.f32 %v8428, %v8900
      %v9105 = vadd.f32 %v8429, %v8774
      %v9106 = vadd.f32 %v8430, %v8901
      %v9107 = vadd.f32 %v8431, %v8902
      %v9108 = vadd.f32 %v8432, %v8903
      %v9109 = vadd.f32 %v8433, %v8776
      %v9110 = vadd.f32 %v8434, %v8904
      %v9111 = vadd.f32 %v8435, %v8905
      %v9112 = vadd.f32 %v8436, %v8779
      %v9113 = vadd.f32 %v8437, %v8906
      %v9114 = vadd.f32 %v8438, %v8907
      %v9115 = vadd.f32 %v8439, %v8908
      %v9116 = vadd.f32 %v8440, %v8781
      %v9117 = vadd.f32 %v8441, %v8909
      %v9118 = vadd.f32 %v8442, %v8910
      %v9119 = vadd.f32 %v8443, %v8911
      %v9120 = vadd.f32 %v8444, %v8912
      %v9121 = vadd.f32 %v8445, %v8913
      %v9122 = vadd.f32 %v8446, %v8914
      %v9123 = vadd.f32 %v8447, %v8786
      %v9124 = vadd.f32 %v8448, %v8915
      %v9125 = vadd.f32 %v8449, %v8916
      %v9126 = vadd.f32 %v8450, %v8917
      %v9127 = vadd.f32 %v8451, %v8789
      %v9128 = vadd.f32 %v8452, %v8918
      %v9129 = vadd.f32 %v8453, %v8919
      %v9130 = vadd.f32 %v8454, %v8791
      %v9131 = vadd.f32 %v8455, %v8920
      %v9132 = vadd.f32 %v8456, %v8921
      %v9133 = vadd.f32 %v8457, %v8922
      %v9134 = vadd.f32 %v8458, %v8794
      %v9135 = vadd.f32 %v8459, %v8923
      %v9136 = vadd.f32 %v8460, %v8924
      %v9137 = vadd.f32 %v8461, %v8796
      %v9138 = vadd.f32 %v8462, %v8925
      %v9139 = vadd.f32 %v8463, %v8926
      %v9140 = vadd.f32 %v8464, %v8927
      %v9141 = vadd.f32 %v8465, %v8799
      %v9142 = vadd.f32 %v8466, %v8928
      %v9143 = vadd.f32 %v8467, %v8929
      %v9144 = vadd.f32 %v8468, %v8801
      %v9145 = vadd.f32 %v8469, %v8930
      %v9146 = vadd.f32 %v8470, %v8931
      %v9147 = vadd.f32 %v8471, %v8932
      %v9148 = vadd.f32 %v8472, %v8804
      %v9149 = vadd.f32 %v8473, %v8933
      %v9150 = vadd.f32 %v8474, %v8934
      %v9151 = vadd.f32 %v8475, %v8935
      %v9152 = vadd.f32 %v8476, %v8936
      %v9153 = vadd.f32 %v8477, %v8937
      %v9154 = vadd.f32 %v8478, %v8938
      %v9155 = vadd.f32 %v8479, %v8809
      %v9156 = vadd.f32 %v8480, %v8939
      %v9157 = vadd.f32 %v8481, %v8940
      %v9158 = vadd.f32 %v8482, %v8941
      %v9159 = vadd.f32 %v8483, %v8811
      %v9160 = vadd.f32 %v8484, %v8942
      %v9161 = vadd.f32 %v8485, %v8943
      %v9162 = vadd.f32 %v8486, %v8814
      %v9163 = vadd.f32 %v8487, %v8944
      %v9164 = vadd.f32 %v8488, %v8945
      %v9165 = vadd.f32 %v8489, %v8946
      %v9166 = vadd.f32 %v8490, %v8816
      %v9167 = vadd.f32 %v8491, %v8947
      %v9168 = vadd.f32 %v8492, %v8948
      %v9169 = vadd.f32 %v8493, %v8819
      %v9170 = vadd.f32 %v8494, %v8949
      %v9171 = vadd.f32 %v8495, %v8950
      %v9172 = vadd.f32 %v8496, %v8951
      %v9173 = vadd.f32 %v8497, %v8821
      %v9174 = vadd.f32 %v8498, %v8952
      %v9175 = vadd.f32 %v8499, %v8953
      %v9176 = vadd.f32 %v8500, %v8824
      %v9177 = vadd.f32 %v8501, %v8954
      %v9178 = vadd.f32 %v8502, %v8955
      %v9179 = vadd.f32 %v8503, %v8956
      %v9180 = vadd.f32 %v8504, %v8826
      %v9181 = vadd.f32 %v8505, %v8957
      %v9182 = vadd.f32 %v8506, %v8958
      %v9183 = vadd.f32 %v8507, %v8959
      %v9184 = vld [vmem:[%s5] sm:$0x1]
      %v9186 = vperm.slane %v9184, 0
      %v9188 = vrot.slane %v9186, 2
      %v9189 = vrot.slane %v9186, 4
      %v9190 = vrot.slane %v9186, 6
      %v9194 = vmul.f32 %v9056, %v9186
      %v9195 = vmul.f32 %v9057, %v9188
      %v9196 = vmul.f32 %v9058, %v9189
      %v9197 = vmul.f32 %v9059, %v9190
      %v9198 = vmul.f32 %v9060, %v9186
      %v9199 = vmul.f32 %v9061, %v9188
      %v9200 = vmul.f32 %v9062, %v9189
      %v9201 = vmul.f32 %v9063, %v9190
      %v9202 = vmul.f32 %v9064, %v9186
      %v9203 = vmul.f32 %v9065, %v9188
      %v9204 = vmul.f32 %v9066, %v9189
      %v9205 = vmul.f32 %v9067, %v9190
      %v9206 = vmul.f32 %v9068, %v9186
      %v9207 = vmul.f32 %v9069, %v9188
      %v9208 = vmul.f32 %v9070, %v9189
      %v9209 = vmul.f32 %v9071, %v9190
      %v9210 = vmul.f32 %v9072, %v9186
      %v9211 = vmul.f32 %v9073, %v9188
      %v9212 = vmul.f32 %v9074, %v9189
      %v9213 = vmul.f32 %v9075, %v9190
      %v9214 = vmul.f32 %v9076, %v9186
      %v9215 = vmul.f32 %v9077, %v9188
      %v9216 = vmul.f32 %v9078, %v9189
      %v9217 = vmul.f32 %v9079, %v9190
      %v9218 = vmul.f32 %v9080, %v9186
      %v9219 = vmul.f32 %v9081, %v9188
      %v9220 = vmul.f32 %v9082, %v9189
      %v9221 = vmul.f32 %v9083, %v9190
      %v9222 = vmul.f32 %v9084, %v9186
      %v9223 = vmul.f32 %v9085, %v9188
      %v9224 = vmul.f32 %v9086, %v9189
      %v9225 = vmul.f32 %v9087, %v9190
      %v9226 = vmul.f32 %v9088, %v9186
      %v9227 = vmul.f32 %v9089, %v9188
      %v9228 = vmul.f32 %v9090, %v9189
      %v9229 = vmul.f32 %v9091, %v9190
      %v9230 = vmul.f32 %v9092, %v9186
      %v9231 = vmul.f32 %v9093, %v9188
      %v9232 = vmul.f32 %v9094, %v9189
      %v9233 = vmul.f32 %v9095, %v9190
      %v9234 = vmul.f32 %v9096, %v9186
      %v9235 = vmul.f32 %v9097, %v9188
      %v9236 = vmul.f32 %v9098, %v9189
      %v9237 = vmul.f32 %v9099, %v9190
      %v9238 = vmul.f32 %v9100, %v9186
      %v9239 = vmul.f32 %v9101, %v9188
      %v9240 = vmul.f32 %v9102, %v9189
      %v9241 = vmul.f32 %v9103, %v9190
      %v9242 = vmul.f32 %v9104, %v9186
      %v9243 = vmul.f32 %v9105, %v9188
      %v9244 = vmul.f32 %v9106, %v9189
      %v9245 = vmul.f32 %v9107, %v9190
      %v9246 = vmul.f32 %v9108, %v9186
      %v9247 = vmul.f32 %v9109, %v9188
      %v9248 = vmul.f32 %v9110, %v9189
      %v9249 = vmul.f32 %v9111, %v9190
      %v9250 = vmul.f32 %v9112, %v9186
      %v9251 = vmul.f32 %v9113, %v9188
      %v9252 = vmul.f32 %v9114, %v9189
      %v9253 = vmul.f32 %v9115, %v9190
      %v9254 = vmul.f32 %v9116, %v9186
      %v9255 = vmul.f32 %v9117, %v9188
      %v9256 = vmul.f32 %v9118, %v9189
      %v9257 = vmul.f32 %v9119, %v9190
      %v9258 = vmul.f32 %v9120, %v9186
      %v9259 = vmul.f32 %v9121, %v9188
      %v9260 = vmul.f32 %v9122, %v9189
      %v9261 = vmul.f32 %v9123, %v9190
      %v9262 = vmul.f32 %v9124, %v9186
      %v9263 = vmul.f32 %v9125, %v9188
      %v9264 = vmul.f32 %v9126, %v9189
      %v9265 = vmul.f32 %v9127, %v9190
      %v9266 = vmul.f32 %v9128, %v9186
      %v9267 = vmul.f32 %v9129, %v9188
      %v9268 = vmul.f32 %v9130, %v9189
      %v9269 = vmul.f32 %v9131, %v9190
      %v9270 = vmul.f32 %v9132, %v9186
      %v9271 = vmul.f32 %v9133, %v9188
      %v9272 = vmul.f32 %v9134, %v9189
      %v9273 = vmul.f32 %v9135, %v9190
      %v9274 = vmul.f32 %v9136, %v9186
      %v9275 = vmul.f32 %v9137, %v9188
      %v9276 = vmul.f32 %v9138, %v9189
      %v9277 = vmul.f32 %v9139, %v9190
      %v9278 = vmul.f32 %v9140, %v9186
      %v9279 = vmul.f32 %v9141, %v9188
      %v9280 = vmul.f32 %v9142, %v9189
      %v9281 = vmul.f32 %v9143, %v9190
      %v9282 = vmul.f32 %v9144, %v9186
      %v9283 = vmul.f32 %v9145, %v9188
      %v9284 = vmul.f32 %v9146, %v9189
      %v9285 = vmul.f32 %v9147, %v9190
      %v9286 = vmul.f32 %v9148, %v9186
      %v9287 = vmul.f32 %v9149, %v9188
      %v9288 = vmul.f32 %v9150, %v9189
      %v9289 = vmul.f32 %v9151, %v9190
      %v9290 = vmul.f32 %v9152, %v9186
      %v9291 = vmul.f32 %v9153, %v9188
      %v9292 = vmul.f32 %v9154, %v9189
      %v9293 = vmul.f32 %v9155, %v9190
      %v9294 = vmul.f32 %v9156, %v9186
      %v9295 = vmul.f32 %v9157, %v9188
      %v9296 = vmul.f32 %v9158, %v9189
      %v9297 = vmul.f32 %v9159, %v9190
      %v9298 = vmul.f32 %v9160, %v9186
      %v9299 = vmul.f32 %v9161, %v9188
      %v9300 = vmul.f32 %v9162, %v9189
      %v9301 = vmul.f32 %v9163, %v9190
      %v9302 = vmul.f32 %v9164, %v9186
      %v9303 = vmul.f32 %v9165, %v9188
      %v9304 = vmul.f32 %v9166, %v9189
      %v9305 = vmul.f32 %v9167, %v9190
      %v9306 = vmul.f32 %v9168, %v9186
      %v9307 = vmul.f32 %v9169, %v9188
      %v9308 = vmul.f32 %v9170, %v9189
      %v9309 = vmul.f32 %v9171, %v9190
      %v9310 = vmul.f32 %v9172, %v9186
      %v9311 = vmul.f32 %v9173, %v9188
      %v9312 = vmul.f32 %v9174, %v9189
      %v9313 = vmul.f32 %v9175, %v9190
      %v9314 = vmul.f32 %v9176, %v9186
      %v9315 = vmul.f32 %v9177, %v9188
      %v9316 = vmul.f32 %v9178, %v9189
      %v9317 = vmul.f32 %v9179, %v9190
      %v9318 = vmul.f32 %v9180, %v9186
      %v9319 = vmul.f32 %v9181, %v9188
      %v9320 = vmul.f32 %v9182, %v9189
      %v9321 = vmul.f32 %v9183, %v9190
      %v9322 = vld [vmem:[%s6] sm:$0x1]
      %v9324 = vperm.slane %v9322, 0
      %v9326 = vrot.slane %v9324, 2
      %v9327 = vrot.slane %v9324, 4
      %v9328 = vrot.slane %v9324, 6
      %v9332 = vadd.f32 %v9194, %v9324
      %v9333 = vadd.f32 %v9195, %v9326
      %v9334 = vadd.f32 %v9196, %v9327
      %v9335 = vadd.f32 %v9197, %v9328
      %v9336 = vadd.f32 %v9198, %v9324
      %v9337 = vadd.f32 %v9199, %v9326
      %v9338 = vadd.f32 %v9200, %v9327
      %v9339 = vadd.f32 %v9201, %v9328
      %v9340 = vadd.f32 %v9202, %v9324
      %v9341 = vadd.f32 %v9203, %v9326
      %v9342 = vadd.f32 %v9204, %v9327
      %v9343 = vadd.f32 %v9205, %v9328
      %v9344 = vadd.f32 %v9206, %v9324
      %v9345 = vadd.f32 %v9207, %v9326
      %v9346 = vadd.f32 %v9208, %v9327
      %v9347 = vadd.f32 %v9209, %v9328
      %v9348 = vadd.f32 %v9210, %v9324
      %v9349 = vadd.f32 %v9211, %v9326
      %v9350 = vadd.f32 %v9212, %v9327
      %v9351 = vadd.f32 %v9213, %v9328
      %v9352 = vadd.f32 %v9214, %v9324
      %v9353 = vadd.f32 %v9215, %v9326
      %v9354 = vadd.f32 %v9216, %v9327
      %v9355 = vadd.f32 %v9217, %v9328
      %v9356 = vadd.f32 %v9218, %v9324
      %v9357 = vadd.f32 %v9219, %v9326
      %v9358 = vadd.f32 %v9220, %v9327
      %v9359 = vadd.f32 %v9221, %v9328
      %v9360 = vadd.f32 %v9222, %v9324
      %v9361 = vadd.f32 %v9223, %v9326
      %v9362 = vadd.f32 %v9224, %v9327
      %v9363 = vadd.f32 %v9225, %v9328
      %v9364 = vadd.f32 %v9226, %v9324
      %v9365 = vadd.f32 %v9227, %v9326
      %v9366 = vadd.f32 %v9228, %v9327
      %v9367 = vadd.f32 %v9229, %v9328
      %v9368 = vadd.f32 %v9230, %v9324
      %v9369 = vadd.f32 %v9231, %v9326
      %v9370 = vadd.f32 %v9232, %v9327
      %v9371 = vadd.f32 %v9233, %v9328
      %v9372 = vadd.f32 %v9234, %v9324
      %v9373 = vadd.f32 %v9235, %v9326
      %v9374 = vadd.f32 %v9236, %v9327
      %v9375 = vadd.f32 %v9237, %v9328
      %v9376 = vadd.f32 %v9238, %v9324
      %v9377 = vadd.f32 %v9239, %v9326
      %v9378 = vadd.f32 %v9240, %v9327
      %v9379 = vadd.f32 %v9241, %v9328
      %v9380 = vadd.f32 %v9242, %v9324
      %v9381 = vadd.f32 %v9243, %v9326
      %v9382 = vadd.f32 %v9244, %v9327
      %v9383 = vadd.f32 %v9245, %v9328
      %v9384 = vadd.f32 %v9246, %v9324
      %v9385 = vadd.f32 %v9247, %v9326
      %v9386 = vadd.f32 %v9248, %v9327
      %v9387 = vadd.f32 %v9249, %v9328
      %v9388 = vadd.f32 %v9250, %v9324
      %v9389 = vadd.f32 %v9251, %v9326
      %v9390 = vadd.f32 %v9252, %v9327
      %v9391 = vadd.f32 %v9253, %v9328
      %v9392 = vadd.f32 %v9254, %v9324
      %v9393 = vadd.f32 %v9255, %v9326
      %v9394 = vadd.f32 %v9256, %v9327
      %v9395 = vadd.f32 %v9257, %v9328
      %v9396 = vadd.f32 %v9258, %v9324
      %v9397 = vadd.f32 %v9259, %v9326
      %v9398 = vadd.f32 %v9260, %v9327
      %v9399 = vadd.f32 %v9261, %v9328
      %v9400 = vadd.f32 %v9262, %v9324
      %v9401 = vadd.f32 %v9263, %v9326
      %v9402 = vadd.f32 %v9264, %v9327
      %v9403 = vadd.f32 %v9265, %v9328
      %v9404 = vadd.f32 %v9266, %v9324
      %v9405 = vadd.f32 %v9267, %v9326
      %v9406 = vadd.f32 %v9268, %v9327
      %v9407 = vadd.f32 %v9269, %v9328
      %v9408 = vadd.f32 %v9270, %v9324
      %v9409 = vadd.f32 %v9271, %v9326
      %v9410 = vadd.f32 %v9272, %v9327
      %v9411 = vadd.f32 %v9273, %v9328
      %v9412 = vadd.f32 %v9274, %v9324
      %v9413 = vadd.f32 %v9275, %v9326
      %v9414 = vadd.f32 %v9276, %v9327
      %v9415 = vadd.f32 %v9277, %v9328
      %v9416 = vadd.f32 %v9278, %v9324
      %v9417 = vadd.f32 %v9279, %v9326
      %v9418 = vadd.f32 %v9280, %v9327
      %v9419 = vadd.f32 %v9281, %v9328
      %v9420 = vadd.f32 %v9282, %v9324
      %v9421 = vadd.f32 %v9283, %v9326
      %v9422 = vadd.f32 %v9284, %v9327
      %v9423 = vadd.f32 %v9285, %v9328
      %v9424 = vadd.f32 %v9286, %v9324
      %v9425 = vadd.f32 %v9287, %v9326
      %v9426 = vadd.f32 %v9288, %v9327
      %v9427 = vadd.f32 %v9289, %v9328
      %v9428 = vadd.f32 %v9290, %v9324
      %v9429 = vadd.f32 %v9291, %v9326
      %v9430 = vadd.f32 %v9292, %v9327
      %v9431 = vadd.f32 %v9293, %v9328
      %v9432 = vadd.f32 %v9294, %v9324
      %v9433 = vadd.f32 %v9295, %v9326
      %v9434 = vadd.f32 %v9296, %v9327
      %v9435 = vadd.f32 %v9297, %v9328
      %v9436 = vadd.f32 %v9298, %v9324
      %v9437 = vadd.f32 %v9299, %v9326
      %v9438 = vadd.f32 %v9300, %v9327
      %v9439 = vadd.f32 %v9301, %v9328
      %v9440 = vadd.f32 %v9302, %v9324
      %v9441 = vadd.f32 %v9303, %v9326
      %v9442 = vadd.f32 %v9304, %v9327
      %v9443 = vadd.f32 %v9305, %v9328
      %v9444 = vadd.f32 %v9306, %v9324
      %v9445 = vadd.f32 %v9307, %v9326
      %v9446 = vadd.f32 %v9308, %v9327
      %v9447 = vadd.f32 %v9309, %v9328
      %v9448 = vadd.f32 %v9310, %v9324
      %v9449 = vadd.f32 %v9311, %v9326
      %v9450 = vadd.f32 %v9312, %v9327
      %v9451 = vadd.f32 %v9313, %v9328
      %v9452 = vadd.f32 %v9314, %v9324
      %v9453 = vadd.f32 %v9315, %v9326
      %v9454 = vadd.f32 %v9316, %v9327
      %v9455 = vadd.f32 %v9317, %v9328
      %v9456 = vadd.f32 %v9318, %v9324
      %v9457 = vadd.f32 %v9319, %v9326
      %v9458 = vadd.f32 %v9320, %v9327
      %v9459 = vadd.f32 %v9321, %v9328
      %v9460 = vld [vmem:[%s273] sm:$0xf]
      %v9461 = vld [vmem:[%s273 + $0x4] sm:$0xf]
      %v9462 = vld [vmem:[%s273 + $0x8] sm:$0xf]
      %v9463 = vld [vmem:[%s273 + $0xc] sm:$0xf]
      %v9464 = vld [vmem:[%s273 + $0x10] sm:$0xf]
      %v9465 = vld [vmem:[%s273 + $0x14] sm:$0xf]
      %v9466 = vld [vmem:[%s273 + $0x18] sm:$0xf]
      %v9467 = vld [vmem:[%s273 + $0x1c] sm:$0xf]
      %v9468 = vld [vmem:[%s273 + $0x20] sm:$0xf]
      %v9469 = vld [vmem:[%s273 + $0x24] sm:$0xf]
      %v9470 = vld [vmem:[%s273 + $0x28] sm:$0xf]
      %v9471 = vld [vmem:[%s273 + $0x2c] sm:$0xf]
      %v9472 = vld [vmem:[%s273 + $0x30] sm:$0xf]
      %v9473 = vld [vmem:[%s273 + $0x34] sm:$0xf]
      %v9474 = vld [vmem:[%s273 + $0x38] sm:$0xf]
      %v9475 = vld [vmem:[%s273 + $0x3c] sm:$0xf]
      %v9476 = vld [vmem:[%s273 + $0x40] sm:$0xf]
      %v9477 = vld [vmem:[%s273 + $0x44] sm:$0xf]
      %v9478 = vld [vmem:[%s273 + $0x48] sm:$0xf]
      %v9479 = vld [vmem:[%s273 + $0x4c] sm:$0xf]
      %v9480 = vld [vmem:[%s273 + $0x50] sm:$0xf]
      %v9481 = vld [vmem:[%s273 + $0x54] sm:$0xf]
      %v9482 = vld [vmem:[%s273 + $0x58] sm:$0xf]
      %v9483 = vld [vmem:[%s273 + $0x5c] sm:$0xf]
      %v9484 = vld [vmem:[%s273 + $0x60] sm:$0xf]
      %v9485 = vld [vmem:[%s273 + $0x64] sm:$0xf]
      %v9486 = vld [vmem:[%s273 + $0x68] sm:$0xf]
      %v9487 = vld [vmem:[%s273 + $0x6c] sm:$0xf]
      %v9488 = vld [vmem:[%s273 + $0x70] sm:$0xf]
      %v9489 = vld [vmem:[%s273 + $0x74] sm:$0xf]
      %v9490 = vld [vmem:[%s273 + $0x78] sm:$0xf]
      %v9491 = vld [vmem:[%s273 + $0x7c] sm:$0xf]
      %v9492 = vunpack.c.l.bf16 %v9460
      %v9493 = vunpack.c.l.bf16 %v9461
      %v9494 = vunpack.c.l.bf16 %v9462
      %v9495 = vunpack.c.l.bf16 %v9463
      %v9496 = vunpack.c.l.bf16 %v9464
      %v9497 = vunpack.c.l.bf16 %v9465
      %v9498 = vunpack.c.l.bf16 %v9466
      %v9499 = vunpack.c.l.bf16 %v9467
      %v9500 = vunpack.c.l.bf16 %v9468
      %v9501 = vunpack.c.l.bf16 %v9469
      %v9502 = vunpack.c.l.bf16 %v9470
      %v9503 = vunpack.c.l.bf16 %v9471
      %v9504 = vunpack.c.l.bf16 %v9472
      %v9505 = vunpack.c.l.bf16 %v9473
      %v9506 = vunpack.c.l.bf16 %v9474
      %v9507 = vunpack.c.l.bf16 %v9475
      %v9508 = vunpack.c.l.bf16 %v9476
      %v9509 = vunpack.c.l.bf16 %v9477
      %v9510 = vunpack.c.l.bf16 %v9478
      %v9511 = vunpack.c.l.bf16 %v9479
      %v9512 = vunpack.c.l.bf16 %v9480
      %v9513 = vunpack.c.l.bf16 %v9481
      %v9514 = vunpack.c.l.bf16 %v9482
      %v9515 = vunpack.c.l.bf16 %v9483
      %v9516 = vunpack.c.l.bf16 %v9484
      %v9517 = vunpack.c.l.bf16 %v9485
      %v9518 = vunpack.c.l.bf16 %v9486
      %v9519 = vunpack.c.l.bf16 %v9487
      %v9520 = vunpack.c.l.bf16 %v9488
      %v9521 = vunpack.c.l.bf16 %v9489
      %v9522 = vunpack.c.l.bf16 %v9490
      %v9523 = vunpack.c.l.bf16 %v9491
      %v9556 = vrot.slane %v9492, 2
      %v9557 = vrot.slane %v9492, 4
      %v9558 = vrot.slane %v9492, 6
      %v9559 = vrot.slane %v9493, 2
      %v9560 = vrot.slane %v9493, 4
      %v9561 = vrot.slane %v9493, 6
      %v9562 = vrot.slane %v9494, 2
      %v9563 = vrot.slane %v9494, 4
      %v9564 = vrot.slane %v9494, 6
      %v9565 = vrot.slane %v9495, 2
      %v9566 = vrot.slane %v9495, 4
      %v9567 = vrot.slane %v9495, 6
      %v9568 = vrot.slane %v9496, 2
      %v9569 = vrot.slane %v9496, 4
      %v9570 = vrot.slane %v9496, 6
      %v9571 = vrot.slane %v9497, 2
      %v9572 = vrot.slane %v9497, 4
      %v9573 = vrot.slane %v9497, 6
      %v9574 = vrot.slane %v9498, 2
      %v9575 = vrot.slane %v9498, 4
      %v9576 = vrot.slane %v9498, 6
      %v9577 = vrot.slane %v9499, 2
      %v9578 = vrot.slane %v9499, 4
      %v9579 = vrot.slane %v9499, 6
      %v9580 = vrot.slane %v9500, 2
      %v9581 = vrot.slane %v9500, 4
      %v9582 = vrot.slane %v9500, 6
      %v9583 = vrot.slane %v9501, 2
      %v9584 = vrot.slane %v9501, 4
      %v9585 = vrot.slane %v9501, 6
      %v9586 = vrot.slane %v9502, 2
      %v9587 = vrot.slane %v9502, 4
      %v9588 = vrot.slane %v9502, 6
      %v9589 = vrot.slane %v9503, 2
      %v9590 = vrot.slane %v9503, 4
      %v9591 = vrot.slane %v9503, 6
      %v9592 = vrot.slane %v9504, 2
      %v9593 = vrot.slane %v9504, 4
      %v9594 = vrot.slane %v9504, 6
      %v9595 = vrot.slane %v9505, 2
      %v9596 = vrot.slane %v9505, 4
      %v9597 = vrot.slane %v9505, 6
      %v9598 = vrot.slane %v9506, 2
      %v9599 = vrot.slane %v9506, 4
      %v9600 = vrot.slane %v9506, 6
      %v9601 = vrot.slane %v9507, 2
      %v9602 = vrot.slane %v9507, 4
      %v9603 = vrot.slane %v9507, 6
      %v9604 = vrot.slane %v9508, 2
      %v9605 = vrot.slane %v9508, 4
      %v9606 = vrot.slane %v9508, 6
      %v9607 = vrot.slane %v9509, 2
      %v9608 = vrot.slane %v9509, 4
      %v9609 = vrot.slane %v9509, 6
      %v9610 = vrot.slane %v9510, 2
      %v9611 = vrot.slane %v9510, 4
      %v9612 = vrot.slane %v9510, 6
      %v9613 = vrot.slane %v9511, 2
      %v9614 = vrot.slane %v9511, 4
      %v9615 = vrot.slane %v9511, 6
      %v9616 = vrot.slane %v9512, 2
      %v9617 = vrot.slane %v9512, 4
      %v9618 = vrot.slane %v9512, 6
      %v9619 = vrot.slane %v9513, 2
      %v9620 = vrot.slane %v9513, 4
      %v9621 = vrot.slane %v9513, 6
      %v9622 = vrot.slane %v9514, 2
      %v9623 = vrot.slane %v9514, 4
      %v9624 = vrot.slane %v9514, 6
      %v9625 = vrot.slane %v9515, 2
      %v9626 = vrot.slane %v9515, 4
      %v9627 = vrot.slane %v9515, 6
      %v9628 = vrot.slane %v9516, 2
      %v9629 = vrot.slane %v9516, 4
      %v9630 = vrot.slane %v9516, 6
      %v9631 = vrot.slane %v9517, 2
      %v9632 = vrot.slane %v9517, 4
      %v9633 = vrot.slane %v9517, 6
      %v9634 = vrot.slane %v9518, 2
      %v9635 = vrot.slane %v9518, 4
      %v9636 = vrot.slane %v9518, 6
      %v9637 = vrot.slane %v9519, 2
      %v9638 = vrot.slane %v9519, 4
      %v9639 = vrot.slane %v9519, 6
      %v9640 = vrot.slane %v9520, 2
      %v9641 = vrot.slane %v9520, 4
      %v9642 = vrot.slane %v9520, 6
      %v9643 = vrot.slane %v9521, 2
      %v9644 = vrot.slane %v9521, 4
      %v9645 = vrot.slane %v9521, 6
      %v9646 = vrot.slane %v9522, 2
      %v9647 = vrot.slane %v9522, 4
      %v9648 = vrot.slane %v9522, 6
      %v9649 = vrot.slane %v9523, 2
      %v9650 = vrot.slane %v9523, 4
      %v9651 = vrot.slane %v9523, 6
      %v9748 = vadd.f32 %v9332, %v9492
      %v9749 = vadd.f32 %v9333, %v9556
      %v9750 = vadd.f32 %v9334, %v9557
      %v9751 = vadd.f32 %v9335, %v9558
      %v9752 = vadd.f32 %v9336, %v9493
      %v9753 = vadd.f32 %v9337, %v9559
      %v9754 = vadd.f32 %v9338, %v9560
      %v9755 = vadd.f32 %v9339, %v9561
      %v9756 = vadd.f32 %v9340, %v9494
      %v9757 = vadd.f32 %v9341, %v9562
      %v9758 = vadd.f32 %v9342, %v9563
      %v9759 = vadd.f32 %v9343, %v9564
      %v9760 = vadd.f32 %v9344, %v9495
      %v9761 = vadd.f32 %v9345, %v9565
      %v9762 = vadd.f32 %v9346, %v9566
      %v9763 = vadd.f32 %v9347, %v9567
      %v9764 = vadd.f32 %v9348, %v9496
      %v9765 = vadd.f32 %v9349, %v9568
      %v9766 = vadd.f32 %v9350, %v9569
      %v9767 = vadd.f32 %v9351, %v9570
      %v9768 = vadd.f32 %v9352, %v9497
      %v9769 = vadd.f32 %v9353, %v9571
      %v9770 = vadd.f32 %v9354, %v9572
      %v9771 = vadd.f32 %v9355, %v9573
      %v9772 = vadd.f32 %v9356, %v9498
      %v9773 = vadd.f32 %v9357, %v9574
      %v9774 = vadd.f32 %v9358, %v9575
      %v9775 = vadd.f32 %v9359, %v9576
      %v9776 = vadd.f32 %v9360, %v9499
      %v9777 = vadd.f32 %v9361, %v9577
      %v9778 = vadd.f32 %v9362, %v9578
      %v9779 = vadd.f32 %v9363, %v9579
      %v9780 = vadd.f32 %v9364, %v9500
      %v9781 = vadd.f32 %v9365, %v9580
      %v9782 = vadd.f32 %v9366, %v9581
      %v9783 = vadd.f32 %v9367, %v9582
      %v9784 = vadd.f32 %v9368, %v9501
      %v9785 = vadd.f32 %v9369, %v9583
      %v9786 = vadd.f32 %v9370, %v9584
      %v9787 = vadd.f32 %v9371, %v9585
      %v9788 = vadd.f32 %v9372, %v9502
      %v9789 = vadd.f32 %v9373, %v9586
      %v9790 = vadd.f32 %v9374, %v9587
      %v9791 = vadd.f32 %v9375, %v9588
      %v9792 = vadd.f32 %v9376, %v9503
      %v9793 = vadd.f32 %v9377, %v9589
      %v9794 = vadd.f32 %v9378, %v9590
      %v9795 = vadd.f32 %v9379, %v9591
      %v9796 = vadd.f32 %v9380, %v9504
      %v9797 = vadd.f32 %v9381, %v9592
      %v9798 = vadd.f32 %v9382, %v9593
      %v9799 = vadd.f32 %v9383, %v9594
      %v9800 = vadd.f32 %v9384, %v9505
      %v9801 = vadd.f32 %v9385, %v9595
      %v9802 = vadd.f32 %v9386, %v9596
      %v9803 = vadd.f32 %v9387, %v9597
      %v9804 = vadd.f32 %v9388, %v9506
      %v9805 = vadd.f32 %v9389, %v9598
      %v9806 = vadd.f32 %v9390, %v9599
      %v9807 = vadd.f32 %v9391, %v9600
      %v9808 = vadd.f32 %v9392, %v9507
      %v9809 = vadd.f32 %v9393, %v9601
      %v9810 = vadd.f32 %v9394, %v9602
      %v9811 = vadd.f32 %v9395, %v9603
      %v9812 = vadd.f32 %v9396, %v9508
      %v9813 = vadd.f32 %v9397, %v9604
      %v9814 = vadd.f32 %v9398, %v9605
      %v9815 = vadd.f32 %v9399, %v9606
      %v9816 = vadd.f32 %v9400, %v9509
      %v9817 = vadd.f32 %v9401, %v9607
      %v9818 = vadd.f32 %v9402, %v9608
      %v9819 = vadd.f32 %v9403, %v9609
      %v9820 = vadd.f32 %v9404, %v9510
      %v9821 = vadd.f32 %v9405, %v9610
      %v9822 = vadd.f32 %v9406, %v9611
      %v9823 = vadd.f32 %v9407, %v9612
      %v9824 = vadd.f32 %v9408, %v9511
      %v9825 = vadd.f32 %v9409, %v9613
      %v9826 = vadd.f32 %v9410, %v9614
      %v9827 = vadd.f32 %v9411, %v9615
      %v9828 = vadd.f32 %v9412, %v9512
      %v9829 = vadd.f32 %v9413, %v9616
      %v9830 = vadd.f32 %v9414, %v9617
      %v9831 = vadd.f32 %v9415, %v9618
      %v9832 = vadd.f32 %v9416, %v9513
      %v9833 = vadd.f32 %v9417, %v9619
      %v9834 = vadd.f32 %v9418, %v9620
      %v9835 = vadd.f32 %v9419, %v9621
      %v9836 = vadd.f32 %v9420, %v9514
      %v9837 = vadd.f32 %v9421, %v9622
      %v9838 = vadd.f32 %v9422, %v9623
      %v9839 = vadd.f32 %v9423, %v9624
      %v9840 = vadd.f32 %v9424, %v9515
      %v9841 = vadd.f32 %v9425, %v9625
      %v9842 = vadd.f32 %v9426, %v9626
      %v9843 = vadd.f32 %v9427, %v9627
      %v9844 = vadd.f32 %v9428, %v9516
      %v9845 = vadd.f32 %v9429, %v9628
      %v9846 = vadd.f32 %v9430, %v9629
      %v9847 = vadd.f32 %v9431, %v9630
      %v9848 = vadd.f32 %v9432, %v9517
      %v9849 = vadd.f32 %v9433, %v9631
      %v9850 = vadd.f32 %v9434, %v9632
      %v9851 = vadd.f32 %v9435, %v9633
      %v9852 = vadd.f32 %v9436, %v9518
      %v9853 = vadd.f32 %v9437, %v9634
      %v9854 = vadd.f32 %v9438, %v9635
      %v9855 = vadd.f32 %v9439, %v9636
      %v9856 = vadd.f32 %v9440, %v9519
      %v9857 = vadd.f32 %v9441, %v9637
      %v9858 = vadd.f32 %v9442, %v9638
      %v9859 = vadd.f32 %v9443, %v9639
      %v9860 = vadd.f32 %v9444, %v9520
      %v9861 = vadd.f32 %v9445, %v9640
      %v9862 = vadd.f32 %v9446, %v9641
      %v9863 = vadd.f32 %v9447, %v9642
      %v9864 = vadd.f32 %v9448, %v9521
      %v9865 = vadd.f32 %v9449, %v9643
      %v9866 = vadd.f32 %v9450, %v9644
      %v9867 = vadd.f32 %v9451, %v9645
      %v9868 = vadd.f32 %v9452, %v9522
      %v9869 = vadd.f32 %v9453, %v9646
      %v9870 = vadd.f32 %v9454, %v9647
      %v9871 = vadd.f32 %v9455, %v9648
      %v9872 = vadd.f32 %v9456, %v9523
      %v9873 = vadd.f32 %v9457, %v9649
      %v9874 = vadd.f32 %v9458, %v9650
      %v9875 = vadd.f32 %v9459, %v9651
      %v9876 = vmax.f32 %v9748, 0.0
      %v9877 = vmax.f32 %v9749, 0.0
      %v9878 = vmax.f32 %v9750, 0.0
      %v9879 = vmax.f32 %v9751, 0.0
      %v9880 = vmax.f32 %v9752, 0.0
      %v9881 = vmax.f32 %v9753, 0.0
      %v9882 = vmax.f32 %v9754, 0.0
      %v9883 = vmax.f32 %v9755, 0.0
      %v9884 = vmax.f32 %v9756, 0.0
      %v9885 = vmax.f32 %v9757, 0.0
      %v9886 = vmax.f32 %v9758, 0.0
      %v9887 = vmax.f32 %v9759, 0.0
      %v9888 = vmax.f32 %v9760, 0.0
      %v9889 = vmax.f32 %v9761, 0.0
      %v9890 = vmax.f32 %v9762, 0.0
      %v9891 = vmax.f32 %v9763, 0.0
      %v9892 = vmax.f32 %v9764, 0.0
      %v9893 = vmax.f32 %v9765, 0.0
      %v9894 = vmax.f32 %v9766, 0.0
      %v9895 = vmax.f32 %v9767, 0.0
      %v9896 = vmax.f32 %v9768, 0.0
      %v9897 = vmax.f32 %v9769, 0.0
      %v9898 = vmax.f32 %v9770, 0.0
      %v9899 = vmax.f32 %v9771, 0.0
      %v9900 = vmax.f32 %v9772, 0.0
      %v9901 = vmax.f32 %v9773, 0.0
      %v9902 = vmax.f32 %v9774, 0.0
      %v9903 = vmax.f32 %v9775, 0.0
      %v9904 = vmax.f32 %v9776, 0.0
      %v9905 = vmax.f32 %v9777, 0.0
      %v9906 = vmax.f32 %v9778, 0.0
      %v9907 = vmax.f32 %v9779, 0.0
      %v9908 = vmax.f32 %v9780, 0.0
      %v9909 = vmax.f32 %v9781, 0.0
      %v9910 = vmax.f32 %v9782, 0.0
      %v9911 = vmax.f32 %v9783, 0.0
      %v9912 = vmax.f32 %v9784, 0.0
      %v9913 = vmax.f32 %v9785, 0.0
      %v9914 = vmax.f32 %v9786, 0.0
      %v9915 = vmax.f32 %v9787, 0.0
      %v9916 = vmax.f32 %v9788, 0.0
      %v9917 = vmax.f32 %v9789, 0.0
      %v9918 = vmax.f32 %v9790, 0.0
      %v9919 = vmax.f32 %v9791, 0.0
      %v9920 = vmax.f32 %v9792, 0.0
      %v9921 = vmax.f32 %v9793, 0.0
      %v9922 = vmax.f32 %v9794, 0.0
      %v9923 = vmax.f32 %v9795, 0.0
      %v9924 = vmax.f32 %v9796, 0.0
      %v9925 = vmax.f32 %v9797, 0.0
      %v9926 = vmax.f32 %v9798, 0.0
      %v9927 = vmax.f32 %v9799, 0.0
      %v9928 = vmax.f32 %v9800, 0.0
      %v9929 = vmax.f32 %v9801, 0.0
      %v9930 = vmax.f32 %v9802, 0.0
      %v9931 = vmax.f32 %v9803, 0.0
      %v9932 = vmax.f32 %v9804, 0.0
      %v9933 = vmax.f32 %v9805, 0.0
      %v9934 = vmax.f32 %v9806, 0.0
      %v9935 = vmax.f32 %v9807, 0.0
      %v9936 = vmax.f32 %v9808, 0.0
      %v9937 = vmax.f32 %v9809, 0.0
      %v9938 = vmax.f32 %v9810, 0.0
      %v9939 = vmax.f32 %v9811, 0.0
      %v9940 = vmax.f32 %v9812, 0.0
      %v9941 = vmax.f32 %v9813, 0.0
      %v9942 = vmax.f32 %v9814, 0.0
      %v9943 = vmax.f32 %v9815, 0.0
      %v9944 = vmax.f32 %v9816, 0.0
      %v9945 = vmax.f32 %v9817, 0.0
      %v9946 = vmax.f32 %v9818, 0.0
      %v9947 = vmax.f32 %v9819, 0.0
      %v9948 = vmax.f32 %v9820, 0.0
      %v9949 = vmax.f32 %v9821, 0.0
      %v9950 = vmax.f32 %v9822, 0.0
      %v9951 = vmax.f32 %v9823, 0.0
      %v9952 = vmax.f32 %v9824, 0.0
      %v9953 = vmax.f32 %v9825, 0.0
      %v9954 = vmax.f32 %v9826, 0.0
      %v9955 = vmax.f32 %v9827, 0.0
      %v9956 = vmax.f32 %v9828, 0.0
      %v9957 = vmax.f32 %v9829, 0.0
      %v9958 = vmax.f32 %v9830, 0.0
      %v9959 = vmax.f32 %v9831, 0.0
      %v9960 = vmax.f32 %v9832, 0.0
      %v9961 = vmax.f32 %v9833, 0.0
      %v9962 = vmax.f32 %v9834, 0.0
      %v9963 = vmax.f32 %v9835, 0.0
      %v9964 = vmax.f32 %v9836, 0.0
      %v9965 = vmax.f32 %v9837, 0.0
      %v9966 = vmax.f32 %v9838, 0.0
      %v9967 = vmax.f32 %v9839, 0.0
      %v9968 = vmax.f32 %v9840, 0.0
      %v9969 = vmax.f32 %v9841, 0.0
      %v9970 = vmax.f32 %v9842, 0.0
      %v9971 = vmax.f32 %v9843, 0.0
      %v9972 = vmax.f32 %v9844, 0.0
      %v9973 = vmax.f32 %v9845, 0.0
      %v9974 = vmax.f32 %v9846, 0.0
      %v9975 = vmax.f32 %v9847, 0.0
      %v9976 = vmax.f32 %v9848, 0.0
      %v9977 = vmax.f32 %v9849, 0.0
      %v9978 = vmax.f32 %v9850, 0.0
      %v9979 = vmax.f32 %v9851, 0.0
      %v9980 = vmax.f32 %v9852, 0.0
      %v9981 = vmax.f32 %v9853, 0.0
      %v9982 = vmax.f32 %v9854, 0.0
      %v9983 = vmax.f32 %v9855, 0.0
      %v9984 = vmax.f32 %v9856, 0.0
      %v9985 = vmax.f32 %v9857, 0.0
      %v9986 = vmax.f32 %v9858, 0.0
      %v9987 = vmax.f32 %v9859, 0.0
      %v9988 = vmax.f32 %v9860, 0.0
      %v9989 = vmax.f32 %v9861, 0.0
      %v9990 = vmax.f32 %v9862, 0.0
      %v9991 = vmax.f32 %v9863, 0.0
      %v9992 = vmax.f32 %v9864, 0.0
      %v9993 = vmax.f32 %v9865, 0.0
      %v9994 = vmax.f32 %v9866, 0.0
      %v9995 = vmax.f32 %v9867, 0.0
      %v9996 = vmax.f32 %v9868, 0.0
      %v9997 = vmax.f32 %v9869, 0.0
      %v9998 = vmax.f32 %v9870, 0.0
      %v9999 = vmax.f32 %v9871, 0.0
      %v10000 = vmax.f32 %v9872, 0.0
      %v10001 = vmax.f32 %v9873, 0.0
      %v10002 = vmax.f32 %v9874, 0.0
      %v10003 = vmax.f32 %v9875, 0.0
      %10132 = vst [vmem:[#allocation1] ss:$4 sm:$0xff] %v9876
      %s10133 = scalar_lea.vmem [#allocation1], 1
      %10134 = vst [vmem:[%s10133] ss:$4 sm:$0xff] %v9877
      %s10135 = scalar_lea.vmem [#allocation1], 2
      %10136 = vst [vmem:[%s10135] ss:$4 sm:$0xff] %v9878
      %s10137 = scalar_lea.vmem [#allocation1], 3
      %10138 = vst [vmem:[%s10137] ss:$4 sm:$0xff] %v9879
      %s10139 = scalar_lea.vmem [#allocation1], 32
      %10140 = vst [vmem:[%s10139] ss:$4 sm:$0xff] %v9880
      %s10141 = scalar_lea.vmem [#allocation1], 33
      %10142 = vst [vmem:[%s10141] ss:$4 sm:$0xff] %v9881
      %s10143 = scalar_lea.vmem [#allocation1], 34
      %10144 = vst [vmem:[%s10143] ss:$4 sm:$0xff] %v9882
      %s10145 = scalar_lea.vmem [#allocation1], 35
      %10146 = vst [vmem:[%s10145] ss:$4 sm:$0xff] %v9883
      %v10147 = vld.sshfl [vmem:[#allocation1] sm:$0xff pattern:$0x73625140]
      %v10148 = vld.sshfl [vmem:[#allocation1 + $0x20] sm:$0xff pattern:$0x73625140]
      %10149 = vst [vmem:[#allocation1] ss:$4 sm:$0xff] %v9884
      %10150 = vst [vmem:[%s10133] ss:$4 sm:$0xff] %v9885
      %10151 = vst [vmem:[%s10135] ss:$4 sm:$0xff] %v9886
      %10152 = vst [vmem:[%s10137] ss:$4 sm:$0xff] %v9887
      %10153 = vst [vmem:[%s10139] ss:$4 sm:$0xff] %v9888
      %10154 = vst [vmem:[%s10141] ss:$4 sm:$0xff] %v9889
      %10155 = vst [vmem:[%s10143] ss:$4 sm:$0xff] %v9890
      %10156 = vst [vmem:[%s10145] ss:$4 sm:$0xff] %v9891
      %v10157 = vld.sshfl [vmem:[#allocation1] sm:$0xff pattern:$0x73625140]
      %v10158 = vld.sshfl [vmem:[#allocation1 + $0x20] sm:$0xff pattern:$0x73625140]
      %10159 = vst [vmem:[#allocation1] ss:$4 sm:$0xff] %v9892
      %10160 = vst [vmem:[%s10133] ss:$4 sm:$0xff] %v9893
      %10161 = vst [vmem:[%s10135] ss:$4 sm:$0xff] %v9894
      %10162 = vst [vmem:[%s10137] ss:$4 sm:$0xff] %v9895
      %10163 = vst [vmem:[%s10139] ss:$4 sm:$0xff] %v9896
      %10164 = vst [vmem:[%s10141] ss:$4 sm:$0xff] %v9897
      %10165 = vst [vmem:[%s10143] ss:$4 sm:$0xff] %v9898
      %10166 = vst [vmem:[%s10145] ss:$4 sm:$0xff] %v9899
      %v10167 = vld.sshfl [vmem:[#allocation1] sm:$0xff pattern:$0x73625140]
      %v10168 = vld.sshfl [vmem:[#allocation1 + $0x20] sm:$0xff pattern:$0x73625140]
      %10169 = vst [vmem:[#allocation1] ss:$4 sm:$0xff] %v9900
      %10170 = vst [vmem:[%s10133] ss:$4 sm:$0xff] %v9901
      %10171 = vst [vmem:[%s10135] ss:$4 sm:$0xff] %v9902
      %10172 = vst [vmem:[%s10137] ss:$4 sm:$0xff] %v9903
      %10173 = vst [vmem:[%s10139] ss:$4 sm:$0xff] %v9904
      %10174 = vst [vmem:[%s10141] ss:$4 sm:$0xff] %v9905
      %10175 = vst [vmem:[%s10143] ss:$4 sm:$0xff] %v9906
      %10176 = vst [vmem:[%s10145] ss:$4 sm:$0xff] %v9907
      %v10177 = vld.sshfl [vmem:[#allocation1] sm:$0xff pattern:$0x73625140]
      %v10178 = vld.sshfl [vmem:[#allocation1 + $0x20] sm:$0xff pattern:$0x73625140]
      %10179 = vst [vmem:[#allocation1] ss:$4 sm:$0xff] %v9908
      %10180 = vst [vmem:[%s10133] ss:$4 sm:$0xff] %v9909
      %10181 = vst [vmem:[%s10135] ss:$4 sm:$0xff] %v9910
      %10182 = vst [vmem:[%s10137] ss:$4 sm:$0xff] %v9911
      %10183 = vst [vmem:[%s10139] ss:$4 sm:$0xff] %v9912
      %10184 = vst [vmem:[%s10141] ss:$4 sm:$0xff] %v9913
      %10185 = vst [vmem:[%s10143] ss:$4 sm:$0xff] %v9914
      %10186 = vst [vmem:[%s10145] ss:$4 sm:$0xff] %v9915
      %v10187 = vld.sshfl [vmem:[#allocation1] sm:$0xff pattern:$0x73625140]
      %v10188 = vld.sshfl [vmem:[#allocation1 + $0x20] sm:$0xff pattern:$0x73625140]
      %10189 = vst [vmem:[#allocation1] ss:$4 sm:$0xff] %v9916
      %10190 = vst [vmem:[%s10133] ss:$4 sm:$0xff] %v9917
      %10191 = vst [vmem:[%s10135] ss:$4 sm:$0xff] %v9918
      %10192 = vst [vmem:[%s10137] ss:$4 sm:$0xff] %v9919
      %10193 = vst [vmem:[%s10139] ss:$4 sm:$0xff] %v9920
      %10194 = vst [vmem:[%s10141] ss:$4 sm:$0xff] %v9921
      %10195 = vst [vmem:[%s10143] ss:$4 sm:$0xff] %v9922
      %10196 = vst [vmem:[%s10145] ss:$4 sm:$0xff] %v9923
      %v10197 = vld.sshfl [vmem:[#allocation1] sm:$0xff pattern:$0x73625140]
      %v10198 = vld.sshfl [vmem:[#allocation1 + $0x20] sm:$0xff pattern:$0x73625140]
      %10199 = vst [vmem:[#allocation1] ss:$4 sm:$0xff] %v9924
      %10200 = vst [vmem:[%s10133] ss:$4 sm:$0xff] %v9925
      %10201 = vst [vmem:[%s10135] ss:$4 sm:$0xff] %v9926
      %10202 = vst [vmem:[%s10137] ss:$4 sm:$0xff] %v9927
      %10203 = vst [vmem:[%s10139] ss:$4 sm:$0xff] %v9928
      %10204 = vst [vmem:[%s10141] ss:$4 sm:$0xff] %v9929
      %10205 = vst [vmem:[%s10143] ss:$4 sm:$0xff] %v9930
      %10206 = vst [vmem:[%s10145] ss:$4 sm:$0xff] %v9931
      %v10207 = vld.sshfl [vmem:[#allocation1] sm:$0xff pattern:$0x73625140]
      %v10208 = vld.sshfl [vmem:[#allocation1 + $0x20] sm:$0xff pattern:$0x73625140]
      %10209 = vst [vmem:[#allocation1] ss:$4 sm:$0xff] %v9932
      %10210 = vst [vmem:[%s10133] ss:$4 sm:$0xff] %v9933
      %10211 = vst [vmem:[%s10135] ss:$4 sm:$0xff] %v9934
      %10212 = vst [vmem:[%s10137] ss:$4 sm:$0xff] %v9935
      %10213 = vst [vmem:[%s10139] ss:$4 sm:$0xff] %v9936
      %10214 = vst [vmem:[%s10141] ss:$4 sm:$0xff] %v9937
      %10215 = vst [vmem:[%s10143] ss:$4 sm:$0xff] %v9938
      %10216 = vst [vmem:[%s10145] ss:$4 sm:$0xff] %v9939
      %v10217 = vld.sshfl [vmem:[#allocation1] sm:$0xff pattern:$0x73625140]
      %v10218 = vld.sshfl [vmem:[#allocation1 + $0x20] sm:$0xff pattern:$0x73625140]
      %10219 = vst [vmem:[#allocation1] ss:$4 sm:$0xff] %v9940
      %10220 = vst [vmem:[%s10133] ss:$4 sm:$0xff] %v9941
      %10221 = vst [vmem:[%s10135] ss:$4 sm:$0xff] %v9942
      %10222 = vst [vmem:[%s10137] ss:$4 sm:$0xff] %v9943
      %10223 = vst [vmem:[%s10139] ss:$4 sm:$0xff] %v9944
      %10224 = vst [vmem:[%s10141] ss:$4 sm:$0xff] %v9945
      %10225 = vst [vmem:[%s10143] ss:$4 sm:$0xff] %v9946
      %10226 = vst [vmem:[%s10145] ss:$4 sm:$0xff] %v9947
      %v10227 = vld.sshfl [vmem:[#allocation1] sm:$0xff pattern:$0x73625140]
      %v10228 = vld.sshfl [vmem:[#allocation1 + $0x20] sm:$0xff pattern:$0x73625140]
      %10229 = vst [vmem:[#allocation1] ss:$4 sm:$0xff] %v9948
      %10230 = vst [vmem:[%s10133] ss:$4 sm:$0xff] %v9949
      %10231 = vst [vmem:[%s10135] ss:$4 sm:$0xff] %v9950
      %10232 = vst [vmem:[%s10137] ss:$4 sm:$0xff] %v9951
      %10233 = vst [vmem:[%s10139] ss:$4 sm:$0xff] %v9952
      %10234 = vst [vmem:[%s10141] ss:$4 sm:$0xff] %v9953
      %10235 = vst [vmem:[%s10143] ss:$4 sm:$0xff] %v9954
      %10236 = vst [vmem:[%s10145] ss:$4 sm:$0xff] %v9955
      %v10237 = vld.sshfl [vmem:[#allocation1] sm:$0xff pattern:$0x73625140]
      %v10238 = vld.sshfl [vmem:[#allocation1 + $0x20] sm:$0xff pattern:$0x73625140]
      %10239 = vst [vmem:[#allocation1] ss:$4 sm:$0xff] %v9956
      %10240 = vst [vmem:[%s10133] ss:$4 sm:$0xff] %v9957
      %10241 = vst [vmem:[%s10135] ss:$4 sm:$0xff] %v9958
      %10242 = vst [vmem:[%s10137] ss:$4 sm:$0xff] %v9959
      %10243 = vst [vmem:[%s10139] ss:$4 sm:$0xff] %v9960
      %10244 = vst [vmem:[%s10141] ss:$4 sm:$0xff] %v9961
      %10245 = vst [vmem:[%s10143] ss:$4 sm:$0xff] %v9962
      %10246 = vst [vmem:[%s10145] ss:$4 sm:$0xff] %v9963
      %v10247 = vld.sshfl [vmem:[#allocation1] sm:$0xff pattern:$0x73625140]
      %v10248 = vld.sshfl [vmem:[#allocation1 + $0x20] sm:$0xff pattern:$0x73625140]
      %10249 = vst [vmem:[#allocation1] ss:$4 sm:$0xff] %v9964
      %10250 = vst [vmem:[%s10133] ss:$4 sm:$0xff] %v9965
      %10251 = vst [vmem:[%s10135] ss:$4 sm:$0xff] %v9966
      %10252 = vst [vmem:[%s10137] ss:$4 sm:$0xff] %v9967
      %10253 = vst [vmem:[%s10139] ss:$4 sm:$0xff] %v9968
      %10254 = vst [vmem:[%s10141] ss:$4 sm:$0xff] %v9969
      %10255 = vst [vmem:[%s10143] ss:$4 sm:$0xff] %v9970
      %10256 = vst [vmem:[%s10145] ss:$4 sm:$0xff] %v9971
      %v10257 = vld.sshfl [vmem:[#allocation1] sm:$0xff pattern:$0x73625140]
      %v10258 = vld.sshfl [vmem:[#allocation1 + $0x20] sm:$0xff pattern:$0x73625140]
      %10259 = vst [vmem:[#allocation1] ss:$4 sm:$0xff] %v9972
      %10260 = vst [vmem:[%s10133] ss:$4 sm:$0xff] %v9973
      %10261 = vst [vmem:[%s10135] ss:$4 sm:$0xff] %v9974
      %10262 = vst [vmem:[%s10137] ss:$4 sm:$0xff] %v9975
      %10263 = vst [vmem:[%s10139] ss:$4 sm:$0xff] %v9976
      %10264 = vst [vmem:[%s10141] ss:$4 sm:$0xff] %v9977
      %10265 = vst [vmem:[%s10143] ss:$4 sm:$0xff] %v9978
      %10266 = vst [vmem:[%s10145] ss:$4 sm:$0xff] %v9979
      %v10267 = vld.sshfl [vmem:[#allocation1] sm:$0xff pattern:$0x73625140]
      %v10268 = vld.sshfl [vmem:[#allocation1 + $0x20] sm:$0xff pattern:$0x73625140]
      %10269 = vst [vmem:[#allocation1] ss:$4 sm:$0xff] %v9980
      %10270 = vst [vmem:[%s10133] ss:$4 sm:$0xff] %v9981
      %10271 = vst [vmem:[%s10135] ss:$4 sm:$0xff] %v9982
      %10272 = vst [vmem:[%s10137] ss:$4 sm:$0xff] %v9983
      %10273 = vst [vmem:[%s10139] ss:$4 sm:$0xff] %v9984
      %10274 = vst [vmem:[%s10141] ss:$4 sm:$0xff] %v9985
      %10275 = vst [vmem:[%s10143] ss:$4 sm:$0xff] %v9986
      %10276 = vst [vmem:[%s10145] ss:$4 sm:$0xff] %v9987
      %v10277 = vld.sshfl [vmem:[#allocation1] sm:$0xff pattern:$0x73625140]
      %v10278 = vld.sshfl [vmem:[#allocation1 + $0x20] sm:$0xff pattern:$0x73625140]
      %10279 = vst [vmem:[#allocation1] ss:$4 sm:$0xff] %v9988
      %10280 = vst [vmem:[%s10133] ss:$4 sm:$0xff] %v9989
      %10281 = vst [vmem:[%s10135] ss:$4 sm:$0xff] %v9990
      %10282 = vst [vmem:[%s10137] ss:$4 sm:$0xff] %v9991
      %10283 = vst [vmem:[%s10139] ss:$4 sm:$0xff] %v9992
      %10284 = vst [vmem:[%s10141] ss:$4 sm:$0xff] %v9993
      %10285 = vst [vmem:[%s10143] ss:$4 sm:$0xff] %v9994
      %10286 = vst [vmem:[%s10145] ss:$4 sm:$0xff] %v9995
      %v10287 = vld.sshfl [vmem:[#allocation1] sm:$0xff pattern:$0x73625140]
      %v10288 = vld.sshfl [vmem:[#allocation1 + $0x20] sm:$0xff pattern:$0x73625140]
      %10289 = vst [vmem:[#allocation1] ss:$4 sm:$0xff] %v9996
      %10290 = vst [vmem:[%s10133] ss:$4 sm:$0xff] %v9997
      %10291 = vst [vmem:[%s10135] ss:$4 sm:$0xff] %v9998
      %10292 = vst [vmem:[%s10137] ss:$4 sm:$0xff] %v9999
      %10293 = vst [vmem:[%s10139] ss:$4 sm:$0xff] %v10000
      %10294 = vst [vmem:[%s10141] ss:$4 sm:$0xff] %v10001
      %10295 = vst [vmem:[%s10143] ss:$4 sm:$0xff] %v10002
      %10296 = vst [vmem:[%s10145] ss:$4 sm:$0xff] %v10003
      %v10297 = vld.sshfl [vmem:[#allocation1] sm:$0xff pattern:$0x73625140]
      %v10298 = vld.sshfl [vmem:[#allocation1 + $0x20] sm:$0xff pattern:$0x73625140]
      %vm10331 = vcmask 64512
      %10332 = vst.msk [vmem:[%s278] sm:$0xff] %vm10331, %v10147
      %10333 = vst.msk [vmem:[%s278 + $0x8] sm:$0xff] %vm10331, %v10148
      %10334 = vst.msk [vmem:[%s278 + $0x10] sm:$0xff] %vm10331, %v10157
      %10335 = vst.msk [vmem:[%s278 + $0x18] sm:$0xff] %vm10331, %v10158
      %10336 = vst.msk [vmem:[%s278 + $0x20] sm:$0xff] %vm10331, %v10167
      %10337 = vst.msk [vmem:[%s278 + $0x28] sm:$0xff] %vm10331, %v10168
      %10338 = vst.msk [vmem:[%s278 + $0x30] sm:$0xff] %vm10331, %v10177
      %10339 = vst.msk [vmem:[%s278 + $0x38] sm:$0xff] %vm10331, %v10178
      %10340 = vst.msk [vmem:[%s278 + $0x40] sm:$0xff] %vm10331, %v10187
      %10341 = vst.msk [vmem:[%s278 + $0x48] sm:$0xff] %vm10331, %v10188
      %10342 = vst.msk [vmem:[%s278 + $0x50] sm:$0xff] %vm10331, %v10197
      %10343 = vst.msk [vmem:[%s278 + $0x58] sm:$0xff] %vm10331, %v10198
      %10344 = vst.msk [vmem:[%s278 + $0x60] sm:$0xff] %vm10331, %v10207
      %10345 = vst.msk [vmem:[%s278 + $0x68] sm:$0xff] %vm10331, %v10208
      %10346 = vst.msk [vmem:[%s278 + $0x70] sm:$0xff] %vm10331, %v10217
      %10347 = vst.msk [vmem:[%s278 + $0x78] sm:$0xff] %vm10331, %v10218
      %10348 = vst.msk [vmem:[%s278 + $0x80] sm:$0xff] %vm10331, %v10227
      %10349 = vst.msk [vmem:[%s278 + $0x88] sm:$0xff] %vm10331, %v10228
      %10350 = vst.msk [vmem:[%s278 + $0x90] sm:$0xff] %vm10331, %v10237
      %10351 = vst.msk [vmem:[%s278 + $0x98] sm:$0xff] %vm10331, %v10238
      %10352 = vst.msk [vmem:[%s278 + $0xa0] sm:$0xff] %vm10331, %v10247
      %10353 = vst.msk [vmem:[%s278 + $0xa8] sm:$0xff] %vm10331, %v10248
      %10354 = vst.msk [vmem:[%s278 + $0xb0] sm:$0xff] %vm10331, %v10257
      %10355 = vst.msk [vmem:[%s278 + $0xb8] sm:$0xff] %vm10331, %v10258
      %10356 = vst.msk [vmem:[%s278 + $0xc0] sm:$0xff] %vm10331, %v10267
      %10357 = vst.msk [vmem:[%s278 + $0xc8] sm:$0xff] %vm10331, %v10268
      %10358 = vst.msk [vmem:[%s278 + $0xd0] sm:$0xff] %vm10331, %v10277
      %10359 = vst.msk [vmem:[%s278 + $0xd8] sm:$0xff] %vm10331, %v10278
      %10360 = vst.msk [vmem:[%s278 + $0xe0] sm:$0xff] %vm10331, %v10287
      %10361 = vst.msk [vmem:[%s278 + $0xe8] sm:$0xff] %vm10331, %v10288
      %10362 = vst.msk [vmem:[%s278 + $0xf0] sm:$0xff] %vm10331, %v10297
      %10363 = vst.msk [vmem:[%s278 + $0xf8] sm:$0xff] %vm10331, %v10298
      %p10364 = scmp.lt.s32.totalorder %s18, 1
      %s10365 = scalar_select %p10364, %s18, 1
      %s10366 = smul.addr %s10365, 32
      %s10367 = smul.addr %s10366, 8
      %s10368 = scalar_lea.vmem %s7, %s10367
      // Predicated region
      $region49: #{basic_block_forward.1} parent=47 // pred_check
        %p10369 = pneg %p188
      $region50: #{basic_block_forward.1} parent=47 // pred_check_branch
        %10371 = sbr.rel (%p10369) target = $region52
      $region51: #{basic_block_forward.1} parent=47 // pred_region
        _
      $region52: #{basic_block_forward.1} parent=47 // pred_fallthru
        _
    $region48: #{basic_block_forward.1} parent=5 // pred_fallthru
      _
    %p10372 = scmp.le.s32.totalorder 2, %s13
    // Predicated region
    $region53: #{basic_block_forward.1} parent=5 // pred_check
      %p10373 = pneg %p10372
    $region54: #{basic_block_forward.1} parent=5 // pred_check_branch
      %10375 = sbr.rel (%p10373) target = $region56
    $region55: #{basic_block_forward.1} parent=5 // pred_region
      %s10376 = ssub.s32 %s13, 2
      // Predicated region
      $region57: #{basic_block_forward.1} parent=55 // pred_check
        %p10377 = pneg %p194
      $region58: #{basic_block_forward.1} parent=55 // pred_check_branch
        %10379 = sbr.rel (%p10377) target = $region60
      $region59: #{basic_block_forward.1} parent=55 // pred_region
        %p10380 = scmp.lt.s32.totalorder %s19, 1
        %s10381 = scalar_select %p10380, %s19, 1
        %s10382 = smul.addr %s10381, 32
        %s10383 = smul.addr %s10382, 8
        %s10384 = scalar_lea.vmem %s7, %s10383
      $region60: #{basic_block_forward.1} parent=55 // pred_fallthru
        _
    $region56: #{basic_block_forward.1} parent=5 // pred_fallthru
      _
  $region6: #{basic_block_forward.1} parent=0 // loop_footer
    %s17 = sadd.s32 1, %s13
  $region7: #{basic_block_forward.1} parent=0 // loop_footer_branch
    %12 = sbr.rel target = $region3
  $region8: #{basic_block_forward.1} parent=0 // loop_exit
    _

</llo_original>
